<compile_context>
chip_gen: v7x
topology: tpu7x:2x2x1
jax: 0.10.0
libtpu: 0.0.40
codegen_flags: <defaults>
</compile_context>

<pallas_src>
import math
import functools

import jax
import jax.numpy as jnp
from jax.experimental import pallas as pl
from jax.experimental.pallas import tpu as pltpu


# ----------------------------------------------------------------------------- kernel
def _encoder_layer_kernel(x_ref,
                          wq_ref, wk_ref, wv_ref, bq_ref, bk_ref, bv_ref,
                          wo_ref, bo_ref, g1_ref, be1_ref,
                          w1_ref, b1_ref, w2_ref, b2_ref, g2_ref, be2_ref,
                          o_ref, *, nhead):
    bb, C, S = x_ref.shape            # bb batches per grid step, caller layout (b, C, S)
    hd = C // nhead
    M = bb * S
    scale = 1.0 / math.sqrt(hd)

    # ---- entry transpose: (bb, C, S) -> folded (M, C) slab, done on tiny VMEM tiles
    rows = [x_ref[b].T for b in range(bb)]                       # bb x (S, C) 2-D transposes
    x = rows[0] if bb == 1 else jnp.concatenate(rows, axis=0)    # (M, C) f32 (sublane concat)
    x_bf = x.astype(jnp.bfloat16)

    # ---- self-attention: per-head, leading-dim-blocked weights --------------------
    # All lane slices are at offset 0 (per-head weights indexed on the leading dim);
    # head outputs are projection-accumulated, so there is no lane-axis concat.
    attn = jnp.zeros((M, C), jnp.float32)
    for h in range(nhead):                                        # static unroll (nhead small)
        q = (jnp.dot(x_bf, wq_ref[h], preferred_element_type=jnp.float32)
             + bq_ref[h]).reshape(bb, S, hd)
        k = (jnp.dot(x_bf, wk_ref[h], preferred_element_type=jnp.float32)
             + bk_ref[h]).reshape(bb, S, hd)
        v = (jnp.dot(x_bf, wv_ref[h], preferred_element_type=jnp.float32)
             + bv_ref[h]).reshape(bb, S, hd)
        s = jnp.einsum('bqd,bkd->bqk',
                       q.astype(jnp.bfloat16), k.astype(jnp.bfloat16),
                       preferred_element_type=jnp.float32) * scale       # (bb, S, S) f32
        m = jnp.max(s, axis=-1, keepdims=True)
        p = jnp.exp(s - m)                                        # f32 softmax (v5e-friendly)
        p = p * pl.reciprocal(jnp.sum(p, axis=-1, keepdims=True), approx=False)
        ctx = jnp.einsum('bqk,bkd->bqd',
                         p.astype(jnp.bfloat16), v.astype(jnp.bfloat16),
                         preferred_element_type=jnp.float32).reshape(M, hd)
        # projection-accumulate: replaces the lane-dim concat of head outputs
        attn = attn + jnp.dot(ctx.astype(jnp.bfloat16), wo_ref[h],
                              preferred_element_type=jnp.float32)
    attn = attn + bo_ref[...]

    def layer_norm(y, g, b):                                      # f32 throughout
        mu = jnp.mean(y, axis=-1, keepdims=True)
        var = jnp.mean((y - mu) ** 2, axis=-1, keepdims=True)
        return (y - mu) * jax.lax.rsqrt(var + 1e-5) * g + b

    # post-norm: norm1(x + SA(x))
    x1 = layer_norm(x + attn, g1_ref[...], be1_ref[...])

    # ---- feed-forward ---------------------------------------------------------------
    h1 = jnp.dot(x1.astype(jnp.bfloat16), w1_ref[...],
                 preferred_element_type=jnp.float32) + b1_ref[...]
    h1 = jnp.maximum(h1, 0.0).astype(jnp.bfloat16)                # keep largest live buffer bf16
    ff = jnp.dot(h1, w2_ref[...], preferred_element_type=jnp.float32) + b2_ref[...]

    # norm2(x1 + FFN(x1))
    x2 = layer_norm(x1 + ff, g2_ref[...], be2_ref[...])           # (M, C) f32

    # ---- exit transpose: (M, C) -> (bb, C, S), stays in the caller's layout ----------
    for b in range(bb):
        o_ref[b] = x2[b * S:(b + 1) * S, :].T


# ----------------------------------------------------------------------------- wrapper
def _tpu_generation_hints():
    """Best-effort per-generation knobs: (target_m_rows, max_rows, num_tcs, vmem_phys)."""
    target_m, max_rows, num_tcs, vmem_phys = 128, 2048, 1, 128 << 20   # v5e-safe defaults
    try:
        kind = jax.devices()[0].device_kind.lower()
    except Exception:
        kind = ""
    if "v6" in kind:
        target_m = 256                                    # feed the 256-wide MXU
    if "v7" in kind:
        target_m, max_rows, num_tcs, vmem_phys = 256, 1024, 2, 64 << 20
    return target_m, max_rows, num_tcs, vmem_phys


def _select_bb(B, S, *, target_m, max_rows, num_tcs):
    """Batches folded into one grid step (bb): fill M=bb*S up to target, respect VMEM
    cap, and on multi-TC chips keep at least num_tcs grid steps so both cores run."""
    bb = max(1, min(B, max(1, target_m // S)))
    bb = min(bb, max(1, max_rows // S))                   # per-step VMEM row cap
    if num_tcs > 1 and B >= num_tcs:
        bb = min(bb, max(1, B // num_tcs))                # grid_b >= num_tcs
    while bb > 1 and B % bb:
        bb -= 1
    if num_tcs > 1 and B % num_tcs == 0:
        while bb > 1 and (B // bb) % num_tcs:
            bb -= 1
    return bb


def prepare_params(params, nhead):
    """One-time packing (do at init, NOT per forward): per-head leading-dim blocked
    attention weights, bf16 matmul operands, 2-D bias / LayerNorm rows."""
    (wqkv, bqkv, wo, bo, g1, be1, w1, b1, w2, b2, g2, be2) = params
    C = wo.shape[0]
    hd = C // nhead

    def qkv_heads(w):     # torch (C_out, C_in) -> (nhead, C_in, hd) so q_h = x @ w[h]
        return jnp.transpose(w.reshape(nhead, hd, C), (0, 2, 1)).astype(jnp.bfloat16)

    def qkv_bias(b):      # (C,) -> (nhead, 1, hd)
        return b.reshape(nhead, 1, hd).astype(jnp.float32)

    wq, wk, wv = wqkv[:C], wqkv[C:2 * C], wqkv[2 * C:]
    bq, bk, bv = bqkv[:C], bqkv[C:2 * C], bqkv[2 * C:]

    return (
        qkv_heads(wq), qkv_heads(wk), qkv_heads(wv),
        qkv_bias(bq), qkv_bias(bk), qkv_bias(bv),
        # out-proj: ctx @ wo.T, contracting dim split per head -> (nhead, hd, C)
        wo.T.reshape(nhead, hd, C).astype(jnp.bfloat16),
        bo.reshape(1, C).astype(jnp.float32),
        g1.reshape(1, C).astype(jnp.float32), be1.reshape(1, C).astype(jnp.float32),
        w1.T.astype(jnp.bfloat16), b1.reshape(1, -1).astype(jnp.float32),
        w2.T.astype(jnp.bfloat16), b2.reshape(1, C).astype(jnp.float32),
        g2.reshape(1, C).astype(jnp.float32), be2.reshape(1, C).astype(jnp.float32),
    )


def transformer_block_forward(x_nchw, packed_params, nhead):
    """x_nchw: (B, C, H, W) f32; packed_params from prepare_params.  Returns (B,C,H,W)."""
    B, C, H, W = x_nchw.shape
    S = H * W
    # NCHW -> (B, C, S) is a pure reshape (no data movement); the (C,S)<->(S,C)
    # transposes happen on small tiles inside the kernel.
    x_bcs = x_nchw.reshape(B, C, S)

    target_m, max_rows, num_tcs, vmem_phys = _tpu_generation_hints()
    bb = _select_bb(B, S, target_m=target_m, max_rows=max_rows, num_tcs=num_tcs)
    grid_b = B // bb

    hd = C // nhead
    dff = packed_params[10].shape[1]          # w1_t: (C, dff)

    def full(a):
        n = a.ndim
        return pl.BlockSpec(a.shape, lambda b, n=n: (0,) * n)   # whole-array, grid-constant

    in_specs = [pl.BlockSpec((bb, C, S), lambda b: (b, 0, 0))]  # x: bb batches / step
    in_specs += [full(a) for a in packed_params]

    # Advisory cost model (FLOPs dominated by the two FFN matmuls).
    flops = (2 * B * S * C * (3 * C)          # q/k/v projections
             + 2 * B * S * C * C              # output projection
             + 4 * B * nhead * S * S * hd     # q@k^T and p@v
             + 4 * B * S * C * dff)           # two FFN matmuls
    weight_bytes = sum(int(a.size) * a.dtype.itemsize for a in packed_params)
    cost = pl.CostEstimate(
        flops=int(flops),
        transcendentals=int(B * nhead * S * S + 2 * B * S),
        bytes_accessed=int(2 * B * C * S * 4 + weight_bytes))

    # Explicit VMEM budget: generous for the per-step slab + bf16 h1, capped for v7x.
    slab_bytes = bb * C * S * 4
    h1_bytes = bb * S * dff * 2
    est = 2 * weight_bytes + 4 * slab_bytes + 4 * h1_bytes + (16 << 20)
    vmem_limit = int(min(int(0.75 * vmem_phys), max(32 << 20, est)))

    kernel = functools.partial(_encoder_layer_kernel, nhead=nhead)

    out_bcs = pl.pallas_call(
        kernel,
        out_shape=jax.ShapeDtypeStruct((B, C, S), jnp.float32),
        grid_spec=pltpu.PrefetchScalarGridSpec(
            num_scalar_prefetch=0,
            grid=(grid_b,),
            in_specs=in_specs,
            out_specs=pl.BlockSpec((bb, C, S), lambda b: (b, 0, 0)),
        ),
        compiler_params=pltpu.CompilerParams(
            dimension_semantics=("parallel",),          # batch-chunk axis shards across TCs
            vmem_limit_bytes=vmem_limit),
        cost_estimate=cost,
    )(x_bcs, *packed_params)

    # (B, C, S) -> (B, C, H, W) is again a pure reshape.
    return out_bcs.reshape(B, C, H, W)


# ----------------------------------------------------------------------------- params / reference
def init_params(key, d_model, dim_feedforward=2048):
    ks = jax.random.split(key, 6)
    wqkv = 0.05 * jax.random.normal(ks[0], (3 * d_model, d_model), jnp.float32)
    bqkv = jnp.zeros((3 * d_model,), jnp.float32)
    wo = 0.05 * jax.random.normal(ks[1], (d_model, d_model), jnp.float32)
    bo = jnp.zeros((d_model,), jnp.float32)
    g1 = jnp.ones((d_model,), jnp.float32)
    be1 = jnp.zeros((d_model,), jnp.float32)
    w1 = 0.05 * jax.random.normal(ks[2], (dim_feedforward, d_model), jnp.float32)
    b1 = 0.01 * jax.random.normal(ks[3], (dim_feedforward,), jnp.float32)
    w2 = 0.05 * jax.random.normal(ks[4], (d_model, dim_feedforward), jnp.float32)
    b2 = 0.01 * jax.random.normal(ks[5], (d_model,), jnp.float32)
    g2 = jnp.ones((d_model,), jnp.float32)
    be2 = jnp.zeros((d_model,), jnp.float32)
    return (wqkv, bqkv, wo, bo, g1, be1, w1, b1, w2, b2, g2, be2)


def _reference_forward(x_nchw, params, nhead):
    """Pure-JAX f32 reference of the same math, for a sanity check."""
    (wqkv, bqkv, wo, bo, g1, be1, w1, b1, w2, b2, g2, be2) = params
    B, C, H, W = x_nchw.shape
    S = H * W
    hd = C // nhead
    x = x_nchw.reshape(B, C, S).transpose(0, 2, 1)          # (B, S, C)
    qkv = x @ wqkv.T + bqkv
    q, k, v = qkv[..., :C], qkv[..., C:2 * C], qkv[..., 2 * C:]
    def heads(t):
        return t.reshape(B, S, nhead, hd).transpose(0, 2, 1, 3)
    q, k, v = heads(q), heads(k), heads(v)
    sc = jnp.einsum('bhqd,bhkd->bhqk', q, k) / math.sqrt(hd)
    p = jax.nn.softmax(sc, axis=-1)
    ctx = jnp.einsum('bhqk,bhkd->bhqd', p, v).transpose(0, 2, 1, 3).reshape(B, S, C)
    attn = ctx @ wo.T + bo
    def ln(y, g, b):
        mu = jnp.mean(y, -1, keepdims=True)
        var = jnp.mean((y - mu) ** 2, -1, keepdims=True)
        return (y - mu) / jnp.sqrt(var + 1e-5) * g + b
    x1 = ln(x + attn, g1, be1)
    ff = jnp.maximum(x1 @ w1.T + b1, 0.0) @ w2.T + b2
    x2 = ln(x1 + ff, g2, be2)
    return x2.transpose(0, 2, 1).reshape(B, C, H, W)


if __name__ == "__main__":
    B, C, H, W = 2, 32, 8, 8          # d_model = C = 32, S = H*W = 64
    nhead = 4                         # head_dim = 8
    dim_feedforward = 2048            # nn.TransformerEncoderLayer default

    key = jax.random.PRNGKey(0)
    kx, kp = jax.random.split(key)
    x = jax.random.normal(kx, (B, C, H, W), jnp.float32)
    params = init_params(kp, C, dim_feedforward)

    # One-time weight packing (kept out of the per-call forward path).
    packed = jax.block_until_ready(prepare_params(params, nhead))

    fwd = jax.jit(functools.partial(transformer_block_forward, nhead=nhead))
    out = jax.block_until_ready(fwd(x, packed))

    ref = _reference_forward(x, params, nhead)
    assert out.shape == (B, C, H, W)
    # Kernel matmuls use bf16 operands with f32 accumulation; softmax / LayerNorm are f32
    # and the softmax reciprocal is exact, so a ~1e-2-level tolerance is appropriate.
    err = float(jnp.max(jnp.abs(out - ref)))
    assert jnp.allclose(out, ref, atol=3e-2, rtol=3e-2), \
        f"mismatch vs reference, max|diff|={err}"

    print("KERNEL_OK")
</pallas_src>

<mosaic_0001>
module attributes {stable_mosaic.version = 11 : i64} {
  func.func @_encoder_layer_kernel(%arg0: i32, %arg1: memref<2x32x64xf32, #tpu.memory_space<vmem>>, %arg2: memref<4x32x8xbf16, #tpu.memory_space<vmem>>, %arg3: memref<4x32x8xbf16, #tpu.memory_space<vmem>>, %arg4: memref<4x32x8xbf16, #tpu.memory_space<vmem>>, %arg5: memref<4x1x8xf32, #tpu.memory_space<vmem>>, %arg6: memref<4x1x8xf32, #tpu.memory_space<vmem>>, %arg7: memref<4x1x8xf32, #tpu.memory_space<vmem>>, %arg8: memref<4x8x32xbf16, #tpu.memory_space<vmem>>, %arg9: memref<1x32xf32, #tpu.memory_space<vmem>>, %arg10: memref<1x32xf32, #tpu.memory_space<vmem>>, %arg11: memref<1x32xf32, #tpu.memory_space<vmem>>, %arg12: memref<32x2048xbf16, #tpu.memory_space<vmem>>, %arg13: memref<1x2048xf32, #tpu.memory_space<vmem>>, %arg14: memref<2048x32xbf16, #tpu.memory_space<vmem>>, %arg15: memref<1x32xf32, #tpu.memory_space<vmem>>, %arg16: memref<1x32xf32, #tpu.memory_space<vmem>>, %arg17: memref<1x32xf32, #tpu.memory_space<vmem>>, %arg18: memref<2x32x64xf32, #tpu.memory_space<vmem>>) attributes {dimension_semantics = [#tpu.dimension_semantics<parallel>], iteration_bounds = array<i64: 1>, scalar_prefetch = 0 : i64, scratch_operands = 0 : i64, tpu.core_type = #tpu.core_type<tc>, window_params = [{transform_indices = @transform_0, window_bounds = array<i64: 2, 32, 64>}, {pipeline_mode = #tpu.pipeline_mode<synchronous>, transform_indices = @transform_1, window_bounds = array<i64: 4, 32, 8>}, {pipeline_mode = #tpu.pipeline_mode<synchronous>, transform_indices = @transform_2, window_bounds = array<i64: 4, 32, 8>}, {pipeline_mode = #tpu.pipeline_mode<synchronous>, transform_indices = @transform_3, window_bounds = array<i64: 4, 32, 8>}, {pipeline_mode = #tpu.pipeline_mode<synchronous>, transform_indices = @transform_4, window_bounds = array<i64: 4, 1, 8>}, {pipeline_mode = #tpu.pipeline_mode<synchronous>, transform_indices = @transform_5, window_bounds = array<i64: 4, 1, 8>}, {pipeline_mode = #tpu.pipeline_mode<synchronous>, transform_indices = @transform_6, window_bounds = array<i64: 4, 1, 8>}, {pipeline_mode = #tpu.pipeline_mode<synchronous>, transform_indices = @transform_7, window_bounds = array<i64: 4, 8, 32>}, {pipeline_mode = #tpu.pipeline_mode<synchronous>, transform_indices = @transform_8, window_bounds = array<i64: 1, 32>}, {pipeline_mode = #tpu.pipeline_mode<synchronous>, transform_indices = @transform_9, window_bounds = array<i64: 1, 32>}, {pipeline_mode = #tpu.pipeline_mode<synchronous>, transform_indices = @transform_10, window_bounds = array<i64: 1, 32>}, {pipeline_mode = #tpu.pipeline_mode<synchronous>, transform_indices = @transform_11, window_bounds = array<i64: 32, 2048>}, {pipeline_mode = #tpu.pipeline_mode<synchronous>, transform_indices = @transform_12, window_bounds = array<i64: 1, 2048>}, {pipeline_mode = #tpu.pipeline_mode<synchronous>, transform_indices = @transform_13, window_bounds = array<i64: 2048, 32>}, {pipeline_mode = #tpu.pipeline_mode<synchronous>, transform_indices = @transform_14, window_bounds = array<i64: 1, 32>}, {pipeline_mode = #tpu.pipeline_mode<synchronous>, transform_indices = @transform_15, window_bounds = array<i64: 1, 32>}, {pipeline_mode = #tpu.pipeline_mode<synchronous>, transform_indices = @transform_16, window_bounds = array<i64: 1, 32>}, {transform_indices = @transform_17, window_bounds = array<i64: 2, 32, 64>}]} {
    %c0 = arith.constant 0 : index
    %c0_0 = arith.constant 0 : index
    %c0_1 = arith.constant 0 : index
    %0 = vector.load %arg1[%c0, %c0_0, %c0_1] : memref<2x32x64xf32, #tpu.memory_space<vmem>>, vector<1x32x64xf32>
    %1 = vector.shape_cast %0 : vector<1x32x64xf32> to vector<32x64xf32>
    %2 = tpu.transpose %1, [1, 0] : vector<32x64xf32> -> vector<64x32xf32>
    %c1 = arith.constant 1 : index
    %c0_2 = arith.constant 0 : index
    %c0_3 = arith.constant 0 : index
    %3 = vector.load %arg1[%c1, %c0_2, %c0_3] : memref<2x32x64xf32, #tpu.memory_space<vmem>>, vector<1x32x64xf32>
    %4 = vector.shape_cast %3 : vector<1x32x64xf32> to vector<32x64xf32>
    %5 = tpu.transpose %4, [1, 0] : vector<32x64xf32> -> vector<64x32xf32>
    %6 = tpu.concatenate %2, %5 in 0 : vector<64x32xf32>, vector<64x32xf32> -> vector<128x32xf32>
    %7 = arith.truncf %6 : vector<128x32xf32> to vector<128x32xbf16>
    %cst = arith.constant 0.000000e+00 : f32
    %8 = vector.broadcast %cst : f32 to vector<128x32xf32>
    %c0_4 = arith.constant 0 : index
    %c0_5 = arith.constant 0 : index
    %c0_6 = arith.constant 0 : index
    %9 = vector.load %arg2[%c0_4, %c0_5, %c0_6] : memref<4x32x8xbf16, #tpu.memory_space<vmem>>, vector<1x32x8xbf16>
    %10 = vector.shape_cast %9 : vector<1x32x8xbf16> to vector<32x8xbf16>
    %cst_7 = arith.constant dense<0.000000e+00> : vector<128x8xf32>
    %11 = tpu.matmul %7, %10, %cst_7 {dimension_numbers = #tpu.dot_dimension_numbers<[1], [0], [0], [1], [0, 0, 1, 1], [], []>} : vector<128x32xbf16>, vector<32x8xbf16>, vector<128x8xf32> -> vector<128x8xf32>
    %c0_8 = arith.constant 0 : index
    %c0_9 = arith.constant 0 : index
    %c0_10 = arith.constant 0 : index
    %12 = vector.load %arg5[%c0_8, %c0_9, %c0_10] : memref<4x1x8xf32, #tpu.memory_space<vmem>>, vector<1x1x8xf32>
    %13 = vector.shape_cast %12 : vector<1x1x8xf32> to vector<1x8xf32>
    %14 = vector.broadcast %13 : vector<1x8xf32> to vector<128x8xf32>
    %15 = arith.addf %11, %14 : vector<128x8xf32>
    %16 = vector.shape_cast %15 : vector<128x8xf32> to vector<2x64x8xf32>
    %c0_11 = arith.constant 0 : index
    %c0_12 = arith.constant 0 : index
    %c0_13 = arith.constant 0 : index
    %17 = vector.load %arg3[%c0_11, %c0_12, %c0_13] : memref<4x32x8xbf16, #tpu.memory_space<vmem>>, vector<1x32x8xbf16>
    %18 = vector.shape_cast %17 : vector<1x32x8xbf16> to vector<32x8xbf16>
    %cst_14 = arith.constant dense<0.000000e+00> : vector<128x8xf32>
    %19 = tpu.matmul %7, %18, %cst_14 {dimension_numbers = #tpu.dot_dimension_numbers<[1], [0], [0], [1], [0, 0, 1, 1], [], []>} : vector<128x32xbf16>, vector<32x8xbf16>, vector<128x8xf32> -> vector<128x8xf32>
    %c0_15 = arith.constant 0 : index
    %c0_16 = arith.constant 0 : index
    %c0_17 = arith.constant 0 : index
    %20 = vector.load %arg6[%c0_15, %c0_16, %c0_17] : memref<4x1x8xf32, #tpu.memory_space<vmem>>, vector<1x1x8xf32>
    %21 = vector.shape_cast %20 : vector<1x1x8xf32> to vector<1x8xf32>
    %22 = vector.broadcast %21 : vector<1x8xf32> to vector<128x8xf32>
    %23 = arith.addf %19, %22 : vector<128x8xf32>
    %24 = vector.shape_cast %23 : vector<128x8xf32> to vector<2x64x8xf32>
    %c0_18 = arith.constant 0 : index
    %c0_19 = arith.constant 0 : index
    %c0_20 = arith.constant 0 : index
    %25 = vector.load %arg4[%c0_18, %c0_19, %c0_20] : memref<4x32x8xbf16, #tpu.memory_space<vmem>>, vector<1x32x8xbf16>
    %26 = vector.shape_cast %25 : vector<1x32x8xbf16> to vector<32x8xbf16>
    %cst_21 = arith.constant dense<0.000000e+00> : vector<128x8xf32>
    %27 = tpu.matmul %7, %26, %cst_21 {dimension_numbers = #tpu.dot_dimension_numbers<[1], [0], [0], [1], [0, 0, 1, 1], [], []>} : vector<128x32xbf16>, vector<32x8xbf16>, vector<128x8xf32> -> vector<128x8xf32>
    %c0_22 = arith.constant 0 : index
    %c0_23 = arith.constant 0 : index
    %c0_24 = arith.constant 0 : index
    %28 = vector.load %arg7[%c0_22, %c0_23, %c0_24] : memref<4x1x8xf32, #tpu.memory_space<vmem>>, vector<1x1x8xf32>
    %29 = vector.shape_cast %28 : vector<1x1x8xf32> to vector<1x8xf32>
    %30 = vector.broadcast %29 : vector<1x8xf32> to vector<128x8xf32>
    %31 = arith.addf %27, %30 : vector<128x8xf32>
    %32 = vector.shape_cast %31 : vector<128x8xf32> to vector<2x64x8xf32>
    %33 = arith.truncf %16 : vector<2x64x8xf32> to vector<2x64x8xbf16>
    %34 = arith.truncf %24 : vector<2x64x8xf32> to vector<2x64x8xbf16>
    "tpu.trace_start"() <{level = 10 : i32, message = "bqd,bkd->bqk"}> : () -> ()
    %cst_25 = arith.constant dense<0.000000e+00> : vector<2x64x64xf32>
    %35 = tpu.matmul %33, %34, %cst_25 {dimension_numbers = #tpu.dot_dimension_numbers<[2], [2], [1], [1], [0, 0, 0, 1, 1, 1], [0], [0]>} : vector<2x64x8xbf16>, vector<2x64x8xbf16>, vector<2x64x64xf32> -> vector<2x64x64xf32>
    "tpu.trace_stop"() : () -> ()
    %cst_26 = arith.constant 0.353553385 : f32
    %36 = vector.broadcast %cst_26 : f32 to vector<2x64x64xf32>
    %37 = arith.mulf %35, %36 : vector<2x64x64xf32>
    %cst_27 = arith.constant dense<0xFF800000> : vector<2x64xf32>
    %38 = vector.multi_reduction <maximumf>, %37, %cst_27 [2] : vector<2x64x64xf32> to vector<2x64xf32>
    %39 = vector.shape_cast %38 : vector<2x64xf32> to vector<2x64x1xf32>
    %40 = vector.broadcast %39 : vector<2x64x1xf32> to vector<2x64x64xf32>
    %41 = arith.subf %37, %40 : vector<2x64x64xf32>
    %42 = math.exp %41 : vector<2x64x64xf32>
    %cst_28 = arith.constant dense<0.000000e+00> : vector<2x64xf32>
    %43 = vector.multi_reduction <add>, %42, %cst_28 [2] : vector<2x64x64xf32> to vector<2x64xf32>
    %44 = vector.shape_cast %43 : vector<2x64xf32> to vector<2x64x1xf32>
    %45 = tpu.reciprocal %44 : vector<2x64x1xf32> -> vector<2x64x1xf32>
    %46 = vector.broadcast %45 : vector<2x64x1xf32> to vector<2x64x64xf32>
    %47 = arith.mulf %42, %46 : vector<2x64x64xf32>
    %48 = arith.truncf %47 : vector<2x64x64xf32> to vector<2x64x64xbf16>
    %49 = arith.truncf %32 : vector<2x64x8xf32> to vector<2x64x8xbf16>
    "tpu.trace_start"() <{level = 10 : i32, message = "bqk,bkd->bqd"}> : () -> ()
    %cst_29 = arith.constant dense<0.000000e+00> : vector<2x64x8xf32>
    %50 = tpu.matmul %48, %49, %cst_29 {dimension_numbers = #tpu.dot_dimension_numbers<[2], [1], [1], [2], [0, 0, 0, 1, 1, 2], [0], [0]>} : vector<2x64x64xbf16>, vector<2x64x8xbf16>, vector<2x64x8xf32> -> vector<2x64x8xf32>
    "tpu.trace_stop"() : () -> ()
    %51 = vector.shape_cast %50 : vector<2x64x8xf32> to vector<128x8xf32>
    %52 = arith.truncf %51 : vector<128x8xf32> to vector<128x8xbf16>
    %c0_30 = arith.constant 0 : index
    %c0_31 = arith.constant 0 : index
    %c0_32 = arith.constant 0 : index
    %53 = vector.load %arg8[%c0_30, %c0_31, %c0_32] : memref<4x8x32xbf16, #tpu.memory_space<vmem>>, vector<1x8x32xbf16>
    %54 = vector.shape_cast %53 : vector<1x8x32xbf16> to vector<8x32xbf16>
    %cst_33 = arith.constant dense<0.000000e+00> : vector<128x32xf32>
    %55 = tpu.matmul %52, %54, %cst_33 {dimension_numbers = #tpu.dot_dimension_numbers<[1], [0], [0], [1], [0, 0, 1, 1], [], []>} : vector<128x8xbf16>, vector<8x32xbf16>, vector<128x32xf32> -> vector<128x32xf32>
    %56 = arith.addf %8, %55 : vector<128x32xf32>
    %c1_34 = arith.constant 1 : index
    %c0_35 = arith.constant 0 : index
    %c0_36 = arith.constant 0 : index
    %57 = vector.load %arg2[%c1_34, %c0_35, %c0_36] : memref<4x32x8xbf16, #tpu.memory_space<vmem>>, vector<1x32x8xbf16>
    %58 = vector.shape_cast %57 : vector<1x32x8xbf16> to vector<32x8xbf16>
    %cst_37 = arith.constant dense<0.000000e+00> : vector<128x8xf32>
    %59 = tpu.matmul %7, %58, %cst_37 {dimension_numbers = #tpu.dot_dimension_numbers<[1], [0], [0], [1], [0, 0, 1, 1], [], []>} : vector<128x32xbf16>, vector<32x8xbf16>, vector<128x8xf32> -> vector<128x8xf32>
    %c1_38 = arith.constant 1 : index
    %c0_39 = arith.constant 0 : index
    %c0_40 = arith.constant 0 : index
    %60 = vector.load %arg5[%c1_38, %c0_39, %c0_40] : memref<4x1x8xf32, #tpu.memory_space<vmem>>, vector<1x1x8xf32>
    %61 = vector.shape_cast %60 : vector<1x1x8xf32> to vector<1x8xf32>
    %62 = vector.broadcast %61 : vector<1x8xf32> to vector<128x8xf32>
    %63 = arith.addf %59, %62 : vector<128x8xf32>
    %64 = vector.shape_cast %63 : vector<128x8xf32> to vector<2x64x8xf32>
    %c1_41 = arith.constant 1 : index
    %c0_42 = arith.constant 0 : index
    %c0_43 = arith.constant 0 : index
    %65 = vector.load %arg3[%c1_41, %c0_42, %c0_43] : memref<4x32x8xbf16, #tpu.memory_space<vmem>>, vector<1x32x8xbf16>
    %66 = vector.shape_cast %65 : vector<1x32x8xbf16> to vector<32x8xbf16>
    %cst_44 = arith.constant dense<0.000000e+00> : vector<128x8xf32>
    %67 = tpu.matmul %7, %66, %cst_44 {dimension_numbers = #tpu.dot_dimension_numbers<[1], [0], [0], [1], [0, 0, 1, 1], [], []>} : vector<128x32xbf16>, vector<32x8xbf16>, vector<128x8xf32> -> vector<128x8xf32>
    %c1_45 = arith.constant 1 : index
    %c0_46 = arith.constant 0 : index
    %c0_47 = arith.constant 0 : index
    %68 = vector.load %arg6[%c1_45, %c0_46, %c0_47] : memref<4x1x8xf32, #tpu.memory_space<vmem>>, vector<1x1x8xf32>
    %69 = vector.shape_cast %68 : vector<1x1x8xf32> to vector<1x8xf32>
    %70 = vector.broadcast %69 : vector<1x8xf32> to vector<128x8xf32>
    %71 = arith.addf %67, %70 : vector<128x8xf32>
    %72 = vector.shape_cast %71 : vector<128x8xf32> to vector<2x64x8xf32>
    %c1_48 = arith.constant 1 : index
    %c0_49 = arith.constant 0 : index
    %c0_50 = arith.constant 0 : index
    %73 = vector.load %arg4[%c1_48, %c0_49, %c0_50] : memref<4x32x8xbf16, #tpu.memory_space<vmem>>, vector<1x32x8xbf16>
    %74 = vector.shape_cast %73 : vector<1x32x8xbf16> to vector<32x8xbf16>
    %cst_51 = arith.constant dense<0.000000e+00> : vector<128x8xf32>
    %75 = tpu.matmul %7, %74, %cst_51 {dimension_numbers = #tpu.dot_dimension_numbers<[1], [0], [0], [1], [0, 0, 1, 1], [], []>} : vector<128x32xbf16>, vector<32x8xbf16>, vector<128x8xf32> -> vector<128x8xf32>
    %c1_52 = arith.constant 1 : index
    %c0_53 = arith.constant 0 : index
    %c0_54 = arith.constant 0 : index
    %76 = vector.load %arg7[%c1_52, %c0_53, %c0_54] : memref<4x1x8xf32, #tpu.memory_space<vmem>>, vector<1x1x8xf32>
    %77 = vector.shape_cast %76 : vector<1x1x8xf32> to vector<1x8xf32>
    %78 = vector.broadcast %77 : vector<1x8xf32> to vector<128x8xf32>
    %79 = arith.addf %75, %78 : vector<128x8xf32>
    %80 = vector.shape_cast %79 : vector<128x8xf32> to vector<2x64x8xf32>
    %81 = arith.truncf %64 : vector<2x64x8xf32> to vector<2x64x8xbf16>
    %82 = arith.truncf %72 : vector<2x64x8xf32> to vector<2x64x8xbf16>
    "tpu.trace_start"() <{level = 10 : i32, message = "bqd,bkd->bqk"}> : () -> ()
    %cst_55 = arith.constant dense<0.000000e+00> : vector<2x64x64xf32>
    %83 = tpu.matmul %81, %82, %cst_55 {dimension_numbers = #tpu.dot_dimension_numbers<[2], [2], [1], [1], [0, 0, 0, 1, 1, 1], [0], [0]>} : vector<2x64x8xbf16>, vector<2x64x8xbf16>, vector<2x64x64xf32> -> vector<2x64x64xf32>
    "tpu.trace_stop"() : () -> ()
    %cst_56 = arith.constant 0.353553385 : f32
    %84 = vector.broadcast %cst_56 : f32 to vector<2x64x64xf32>
    %85 = arith.mulf %83, %84 : vector<2x64x64xf32>
    %cst_57 = arith.constant dense<0xFF800000> : vector<2x64xf32>
    %86 = vector.multi_reduction <maximumf>, %85, %cst_57 [2] : vector<2x64x64xf32> to vector<2x64xf32>
    %87 = vector.shape_cast %86 : vector<2x64xf32> to vector<2x64x1xf32>
    %88 = vector.broadcast %87 : vector<2x64x1xf32> to vector<2x64x64xf32>
    %89 = arith.subf %85, %88 : vector<2x64x64xf32>
    %90 = math.exp %89 : vector<2x64x64xf32>
    %cst_58 = arith.constant dense<0.000000e+00> : vector<2x64xf32>
    %91 = vector.multi_reduction <add>, %90, %cst_58 [2] : vector<2x64x64xf32> to vector<2x64xf32>
    %92 = vector.shape_cast %91 : vector<2x64xf32> to vector<2x64x1xf32>
    %93 = tpu.reciprocal %92 : vector<2x64x1xf32> -> vector<2x64x1xf32>
    %94 = vector.broadcast %93 : vector<2x64x1xf32> to vector<2x64x64xf32>
    %95 = arith.mulf %90, %94 : vector<2x64x64xf32>
    %96 = arith.truncf %95 : vector<2x64x64xf32> to vector<2x64x64xbf16>
    %97 = arith.truncf %80 : vector<2x64x8xf32> to vector<2x64x8xbf16>
    "tpu.trace_start"() <{level = 10 : i32, message = "bqk,bkd->bqd"}> : () -> ()
    %cst_59 = arith.constant dense<0.000000e+00> : vector<2x64x8xf32>
    %98 = tpu.matmul %96, %97, %cst_59 {dimension_numbers = #tpu.dot_dimension_numbers<[2], [1], [1], [2], [0, 0, 0, 1, 1, 2], [0], [0]>} : vector<2x64x64xbf16>, vector<2x64x8xbf16>, vector<2x64x8xf32> -> vector<2x64x8xf32>
    "tpu.trace_stop"() : () -> ()
    %99 = vector.shape_cast %98 : vector<2x64x8xf32> to vector<128x8xf32>
    %100 = arith.truncf %99 : vector<128x8xf32> to vector<128x8xbf16>
    %c1_60 = arith.constant 1 : index
    %c0_61 = arith.constant 0 : index
    %c0_62 = arith.constant 0 : index
    %101 = vector.load %arg8[%c1_60, %c0_61, %c0_62] : memref<4x8x32xbf16, #tpu.memory_space<vmem>>, vector<1x8x32xbf16>
    %102 = vector.shape_cast %101 : vector<1x8x32xbf16> to vector<8x32xbf16>
    %cst_63 = arith.constant dense<0.000000e+00> : vector<128x32xf32>
    %103 = tpu.matmul %100, %102, %cst_63 {dimension_numbers = #tpu.dot_dimension_numbers<[1], [0], [0], [1], [0, 0, 1, 1], [], []>} : vector<128x8xbf16>, vector<8x32xbf16>, vector<128x32xf32> -> vector<128x32xf32>
    %104 = arith.addf %56, %103 : vector<128x32xf32>
    %c2 = arith.constant 2 : index
    %c0_64 = arith.constant 0 : index
    %c0_65 = arith.constant 0 : index
    %105 = vector.load %arg2[%c2, %c0_64, %c0_65] : memref<4x32x8xbf16, #tpu.memory_space<vmem>>, vector<1x32x8xbf16>
    %106 = vector.shape_cast %105 : vector<1x32x8xbf16> to vector<32x8xbf16>
    %cst_66 = arith.constant dense<0.000000e+00> : vector<128x8xf32>
    %107 = tpu.matmul %7, %106, %cst_66 {dimension_numbers = #tpu.dot_dimension_numbers<[1], [0], [0], [1], [0, 0, 1, 1], [], []>} : vector<128x32xbf16>, vector<32x8xbf16>, vector<128x8xf32> -> vector<128x8xf32>
    %c2_67 = arith.constant 2 : index
    %c0_68 = arith.constant 0 : index
    %c0_69 = arith.constant 0 : index
    %108 = vector.load %arg5[%c2_67, %c0_68, %c0_69] : memref<4x1x8xf32, #tpu.memory_space<vmem>>, vector<1x1x8xf32>
    %109 = vector.shape_cast %108 : vector<1x1x8xf32> to vector<1x8xf32>
    %110 = vector.broadcast %109 : vector<1x8xf32> to vector<128x8xf32>
    %111 = arith.addf %107, %110 : vector<128x8xf32>
    %112 = vector.shape_cast %111 : vector<128x8xf32> to vector<2x64x8xf32>
    %c2_70 = arith.constant 2 : index
    %c0_71 = arith.constant 0 : index
    %c0_72 = arith.constant 0 : index
    %113 = vector.load %arg3[%c2_70, %c0_71, %c0_72] : memref<4x32x8xbf16, #tpu.memory_space<vmem>>, vector<1x32x8xbf16>
    %114 = vector.shape_cast %113 : vector<1x32x8xbf16> to vector<32x8xbf16>
    %cst_73 = arith.constant dense<0.000000e+00> : vector<128x8xf32>
    %115 = tpu.matmul %7, %114, %cst_73 {dimension_numbers = #tpu.dot_dimension_numbers<[1], [0], [0], [1], [0, 0, 1, 1], [], []>} : vector<128x32xbf16>, vector<32x8xbf16>, vector<128x8xf32> -> vector<128x8xf32>
    %c2_74 = arith.constant 2 : index
    %c0_75 = arith.constant 0 : index
    %c0_76 = arith.constant 0 : index
    %116 = vector.load %arg6[%c2_74, %c0_75, %c0_76] : memref<4x1x8xf32, #tpu.memory_space<vmem>>, vector<1x1x8xf32>
    %117 = vector.shape_cast %116 : vector<1x1x8xf32> to vector<1x8xf32>
    %118 = vector.broadcast %117 : vector<1x8xf32> to vector<128x8xf32>
    %119 = arith.addf %115, %118 : vector<128x8xf32>
    %120 = vector.shape_cast %119 : vector<128x8xf32> to vector<2x64x8xf32>
    %c2_77 = arith.constant 2 : index
    %c0_78 = arith.constant 0 : index
    %c0_79 = arith.constant 0 : index
    %121 = vector.load %arg4[%c2_77, %c0_78, %c0_79] : memref<4x32x8xbf16, #tpu.memory_space<vmem>>, vector<1x32x8xbf16>
    %122 = vector.shape_cast %121 : vector<1x32x8xbf16> to vector<32x8xbf16>
    %cst_80 = arith.constant dense<0.000000e+00> : vector<128x8xf32>
    %123 = tpu.matmul %7, %122, %cst_80 {dimension_numbers = #tpu.dot_dimension_numbers<[1], [0], [0], [1], [0, 0, 1, 1], [], []>} : vector<128x32xbf16>, vector<32x8xbf16>, vector<128x8xf32> -> vector<128x8xf32>
    %c2_81 = arith.constant 2 : index
    %c0_82 = arith.constant 0 : index
    %c0_83 = arith.constant 0 : index
    %124 = vector.load %arg7[%c2_81, %c0_82, %c0_83] : memref<4x1x8xf32, #tpu.memory_space<vmem>>, vector<1x1x8xf32>
    %125 = vector.shape_cast %124 : vector<1x1x8xf32> to vector<1x8xf32>
    %126 = vector.broadcast %125 : vector<1x8xf32> to vector<128x8xf32>
    %127 = arith.addf %123, %126 : vector<128x8xf32>
    %128 = vector.shape_cast %127 : vector<128x8xf32> to vector<2x64x8xf32>
    %129 = arith.truncf %112 : vector<2x64x8xf32> to vector<2x64x8xbf16>
    %130 = arith.truncf %120 : vector<2x64x8xf32> to vector<2x64x8xbf16>
    "tpu.trace_start"() <{level = 10 : i32, message = "bqd,bkd->bqk"}> : () -> ()
    %cst_84 = arith.constant dense<0.000000e+00> : vector<2x64x64xf32>
    %131 = tpu.matmul %129, %130, %cst_84 {dimension_numbers = #tpu.dot_dimension_numbers<[2], [2], [1], [1], [0, 0, 0, 1, 1, 1], [0], [0]>} : vector<2x64x8xbf16>, vector<2x64x8xbf16>, vector<2x64x64xf32> -> vector<2x64x64xf32>
    "tpu.trace_stop"() : () -> ()
    %cst_85 = arith.constant 0.353553385 : f32
    %132 = vector.broadcast %cst_85 : f32 to vector<2x64x64xf32>
    %133 = arith.mulf %131, %132 : vector<2x64x64xf32>
    %cst_86 = arith.constant dense<0xFF800000> : vector<2x64xf32>
    %134 = vector.multi_reduction <maximumf>, %133, %cst_86 [2] : vector<2x64x64xf32> to vector<2x64xf32>
    %135 = vector.shape_cast %134 : vector<2x64xf32> to vector<2x64x1xf32>
    %136 = vector.broadcast %135 : vector<2x64x1xf32> to vector<2x64x64xf32>
    %137 = arith.subf %133, %136 : vector<2x64x64xf32>
    %138 = math.exp %137 : vector<2x64x64xf32>
    %cst_87 = arith.constant dense<0.000000e+00> : vector<2x64xf32>
    %139 = vector.multi_reduction <add>, %138, %cst_87 [2] : vector<2x64x64xf32> to vector<2x64xf32>
    %140 = vector.shape_cast %139 : vector<2x64xf32> to vector<2x64x1xf32>
    %141 = tpu.reciprocal %140 : vector<2x64x1xf32> -> vector<2x64x1xf32>
    %142 = vector.broadcast %141 : vector<2x64x1xf32> to vector<2x64x64xf32>
    %143 = arith.mulf %138, %142 : vector<2x64x64xf32>
    %144 = arith.truncf %143 : vector<2x64x64xf32> to vector<2x64x64xbf16>
    %145 = arith.truncf %128 : vector<2x64x8xf32> to vector<2x64x8xbf16>
    "tpu.trace_start"() <{level = 10 : i32, message = "bqk,bkd->bqd"}> : () -> ()
    %cst_88 = arith.constant dense<0.000000e+00> : vector<2x64x8xf32>
    %146 = tpu.matmul %144, %145, %cst_88 {dimension_numbers = #tpu.dot_dimension_numbers<[2], [1], [1], [2], [0, 0, 0, 1, 1, 2], [0], [0]>} : vector<2x64x64xbf16>, vector<2x64x8xbf16>, vector<2x64x8xf32> -> vector<2x64x8xf32>
    "tpu.trace_stop"() : () -> ()
    %147 = vector.shape_cast %146 : vector<2x64x8xf32> to vector<128x8xf32>
    %148 = arith.truncf %147 : vector<128x8xf32> to vector<128x8xbf16>
    %c2_89 = arith.constant 2 : index
    %c0_90 = arith.constant 0 : index
    %c0_91 = arith.constant 0 : index
    %149 = vector.load %arg8[%c2_89, %c0_90, %c0_91] : memref<4x8x32xbf16, #tpu.memory_space<vmem>>, vector<1x8x32xbf16>
    %150 = vector.shape_cast %149 : vector<1x8x32xbf16> to vector<8x32xbf16>
    %cst_92 = arith.constant dense<0.000000e+00> : vector<128x32xf32>
    %151 = tpu.matmul %148, %150, %cst_92 {dimension_numbers = #tpu.dot_dimension_numbers<[1], [0], [0], [1], [0, 0, 1, 1], [], []>} : vector<128x8xbf16>, vector<8x32xbf16>, vector<128x32xf32> -> vector<128x32xf32>
    %152 = arith.addf %104, %151 : vector<128x32xf32>
    %c3 = arith.constant 3 : index
    %c0_93 = arith.constant 0 : index
    %c0_94 = arith.constant 0 : index
    %153 = vector.load %arg2[%c3, %c0_93, %c0_94] : memref<4x32x8xbf16, #tpu.memory_space<vmem>>, vector<1x32x8xbf16>
    %154 = vector.shape_cast %153 : vector<1x32x8xbf16> to vector<32x8xbf16>
    %cst_95 = arith.constant dense<0.000000e+00> : vector<128x8xf32>
    %155 = tpu.matmul %7, %154, %cst_95 {dimension_numbers = #tpu.dot_dimension_numbers<[1], [0], [0], [1], [0, 0, 1, 1], [], []>} : vector<128x32xbf16>, vector<32x8xbf16>, vector<128x8xf32> -> vector<128x8xf32>
    %c3_96 = arith.constant 3 : index
    %c0_97 = arith.constant 0 : index
    %c0_98 = arith.constant 0 : index
    %156 = vector.load %arg5[%c3_96, %c0_97, %c0_98] : memref<4x1x8xf32, #tpu.memory_space<vmem>>, vector<1x1x8xf32>
    %157 = vector.shape_cast %156 : vector<1x1x8xf32> to vector<1x8xf32>
    %158 = vector.broadcast %157 : vector<1x8xf32> to vector<128x8xf32>
    %159 = arith.addf %155, %158 : vector<128x8xf32>
    %160 = vector.shape_cast %159 : vector<128x8xf32> to vector<2x64x8xf32>
    %c3_99 = arith.constant 3 : index
    %c0_100 = arith.constant 0 : index
    %c0_101 = arith.constant 0 : index
    %161 = vector.load %arg3[%c3_99, %c0_100, %c0_101] : memref<4x32x8xbf16, #tpu.memory_space<vmem>>, vector<1x32x8xbf16>
    %162 = vector.shape_cast %161 : vector<1x32x8xbf16> to vector<32x8xbf16>
    %cst_102 = arith.constant dense<0.000000e+00> : vector<128x8xf32>
    %163 = tpu.matmul %7, %162, %cst_102 {dimension_numbers = #tpu.dot_dimension_numbers<[1], [0], [0], [1], [0, 0, 1, 1], [], []>} : vector<128x32xbf16>, vector<32x8xbf16>, vector<128x8xf32> -> vector<128x8xf32>
    %c3_103 = arith.constant 3 : index
    %c0_104 = arith.constant 0 : index
    %c0_105 = arith.constant 0 : index
    %164 = vector.load %arg6[%c3_103, %c0_104, %c0_105] : memref<4x1x8xf32, #tpu.memory_space<vmem>>, vector<1x1x8xf32>
    %165 = vector.shape_cast %164 : vector<1x1x8xf32> to vector<1x8xf32>
    %166 = vector.broadcast %165 : vector<1x8xf32> to vector<128x8xf32>
    %167 = arith.addf %163, %166 : vector<128x8xf32>
    %168 = vector.shape_cast %167 : vector<128x8xf32> to vector<2x64x8xf32>
    %c3_106 = arith.constant 3 : index
    %c0_107 = arith.constant 0 : index
    %c0_108 = arith.constant 0 : index
    %169 = vector.load %arg4[%c3_106, %c0_107, %c0_108] : memref<4x32x8xbf16, #tpu.memory_space<vmem>>, vector<1x32x8xbf16>
    %170 = vector.shape_cast %169 : vector<1x32x8xbf16> to vector<32x8xbf16>
    %cst_109 = arith.constant dense<0.000000e+00> : vector<128x8xf32>
    %171 = tpu.matmul %7, %170, %cst_109 {dimension_numbers = #tpu.dot_dimension_numbers<[1], [0], [0], [1], [0, 0, 1, 1], [], []>} : vector<128x32xbf16>, vector<32x8xbf16>, vector<128x8xf32> -> vector<128x8xf32>
    %c3_110 = arith.constant 3 : index
    %c0_111 = arith.constant 0 : index
    %c0_112 = arith.constant 0 : index
    %172 = vector.load %arg7[%c3_110, %c0_111, %c0_112] : memref<4x1x8xf32, #tpu.memory_space<vmem>>, vector<1x1x8xf32>
    %173 = vector.shape_cast %172 : vector<1x1x8xf32> to vector<1x8xf32>
    %174 = vector.broadcast %173 : vector<1x8xf32> to vector<128x8xf32>
    %175 = arith.addf %171, %174 : vector<128x8xf32>
    %176 = vector.shape_cast %175 : vector<128x8xf32> to vector<2x64x8xf32>
    %177 = arith.truncf %160 : vector<2x64x8xf32> to vector<2x64x8xbf16>
    %178 = arith.truncf %168 : vector<2x64x8xf32> to vector<2x64x8xbf16>
    "tpu.trace_start"() <{level = 10 : i32, message = "bqd,bkd->bqk"}> : () -> ()
    %cst_113 = arith.constant dense<0.000000e+00> : vector<2x64x64xf32>
    %179 = tpu.matmul %177, %178, %cst_113 {dimension_numbers = #tpu.dot_dimension_numbers<[2], [2], [1], [1], [0, 0, 0, 1, 1, 1], [0], [0]>} : vector<2x64x8xbf16>, vector<2x64x8xbf16>, vector<2x64x64xf32> -> vector<2x64x64xf32>
    "tpu.trace_stop"() : () -> ()
    %cst_114 = arith.constant 0.353553385 : f32
    %180 = vector.broadcast %cst_114 : f32 to vector<2x64x64xf32>
    %181 = arith.mulf %179, %180 : vector<2x64x64xf32>
    %cst_115 = arith.constant dense<0xFF800000> : vector<2x64xf32>
    %182 = vector.multi_reduction <maximumf>, %181, %cst_115 [2] : vector<2x64x64xf32> to vector<2x64xf32>
    %183 = vector.shape_cast %182 : vector<2x64xf32> to vector<2x64x1xf32>
    %184 = vector.broadcast %183 : vector<2x64x1xf32> to vector<2x64x64xf32>
    %185 = arith.subf %181, %184 : vector<2x64x64xf32>
    %186 = math.exp %185 : vector<2x64x64xf32>
    %cst_116 = arith.constant dense<0.000000e+00> : vector<2x64xf32>
    %187 = vector.multi_reduction <add>, %186, %cst_116 [2] : vector<2x64x64xf32> to vector<2x64xf32>
    %188 = vector.shape_cast %187 : vector<2x64xf32> to vector<2x64x1xf32>
    %189 = tpu.reciprocal %188 : vector<2x64x1xf32> -> vector<2x64x1xf32>
    %190 = vector.broadcast %189 : vector<2x64x1xf32> to vector<2x64x64xf32>
    %191 = arith.mulf %186, %190 : vector<2x64x64xf32>
    %192 = arith.truncf %191 : vector<2x64x64xf32> to vector<2x64x64xbf16>
    %193 = arith.truncf %176 : vector<2x64x8xf32> to vector<2x64x8xbf16>
    "tpu.trace_start"() <{level = 10 : i32, message = "bqk,bkd->bqd"}> : () -> ()
    %cst_117 = arith.constant dense<0.000000e+00> : vector<2x64x8xf32>
    %194 = tpu.matmul %192, %193, %cst_117 {dimension_numbers = #tpu.dot_dimension_numbers<[2], [1], [1], [2], [0, 0, 0, 1, 1, 2], [0], [0]>} : vector<2x64x64xbf16>, vector<2x64x8xbf16>, vector<2x64x8xf32> -> vector<2x64x8xf32>
    "tpu.trace_stop"() : () -> ()
    %195 = vector.shape_cast %194 : vector<2x64x8xf32> to vector<128x8xf32>
    %196 = arith.truncf %195 : vector<128x8xf32> to vector<128x8xbf16>
    %c3_118 = arith.constant 3 : index
    %c0_119 = arith.constant 0 : index
    %c0_120 = arith.constant 0 : index
    %197 = vector.load %arg8[%c3_118, %c0_119, %c0_120] : memref<4x8x32xbf16, #tpu.memory_space<vmem>>, vector<1x8x32xbf16>
    %198 = vector.shape_cast %197 : vector<1x8x32xbf16> to vector<8x32xbf16>
    %cst_121 = arith.constant dense<0.000000e+00> : vector<128x32xf32>
    %199 = tpu.matmul %196, %198, %cst_121 {dimension_numbers = #tpu.dot_dimension_numbers<[1], [0], [0], [1], [0, 0, 1, 1], [], []>} : vector<128x8xbf16>, vector<8x32xbf16>, vector<128x32xf32> -> vector<128x32xf32>
    %200 = arith.addf %152, %199 : vector<128x32xf32>
    %c0_122 = arith.constant 0 : index
    %c0_123 = arith.constant 0 : index
    %201 = vector.load %arg9[%c0_122, %c0_123] : memref<1x32xf32, #tpu.memory_space<vmem>>, vector<1x32xf32>
    %202 = vector.broadcast %201 : vector<1x32xf32> to vector<128x32xf32>
    %203 = arith.addf %200, %202 : vector<128x32xf32>
    %204 = arith.addf %6, %203 : vector<128x32xf32>
    %c0_124 = arith.constant 0 : index
    %c0_125 = arith.constant 0 : index
    %205 = vector.load %arg10[%c0_124, %c0_125] : memref<1x32xf32, #tpu.memory_space<vmem>>, vector<1x32xf32>
    %c0_126 = arith.constant 0 : index
    %c0_127 = arith.constant 0 : index
    %206 = vector.load %arg11[%c0_126, %c0_127] : memref<1x32xf32, #tpu.memory_space<vmem>>, vector<1x32xf32>
    %cst_128 = arith.constant dense<0.000000e+00> : vector<128xf32>
    %207 = vector.multi_reduction <add>, %204, %cst_128 [1] : vector<128x32xf32> to vector<128xf32>
    %208 = vector.shape_cast %207 : vector<128xf32> to vector<128x1xf32>
    %cst_129 = arith.constant 3.200000e+01 : f32
    %209 = vector.broadcast %cst_129 : f32 to vector<128x1xf32>
    %210 = arith.divf %208, %209 : vector<128x1xf32>
    %211 = vector.broadcast %210 : vector<128x1xf32> to vector<128x32xf32>
    %212 = arith.subf %204, %211 : vector<128x32xf32>
    %213 = arith.mulf %212, %212 : vector<128x32xf32>
    %cst_130 = arith.constant dense<0.000000e+00> : vector<128xf32>
    %214 = vector.multi_reduction <add>, %213, %cst_130 [1] : vector<128x32xf32> to vector<128xf32>
    %215 = vector.shape_cast %214 : vector<128xf32> to vector<128x1xf32>
    %cst_131 = arith.constant 3.200000e+01 : f32
    %216 = vector.broadcast %cst_131 : f32 to vector<128x1xf32>
    %217 = arith.divf %215, %216 : vector<128x1xf32>
    %218 = vector.broadcast %210 : vector<128x1xf32> to vector<128x32xf32>
    %219 = arith.subf %204, %218 : vector<128x32xf32>
    %cst_132 = arith.constant 9.99999974E-6 : f32
    %220 = vector.broadcast %cst_132 : f32 to vector<128x1xf32>
    %221 = arith.addf %217, %220 : vector<128x1xf32>
    %222 = math.rsqrt %221 : vector<128x1xf32>
    %223 = vector.broadcast %222 : vector<128x1xf32> to vector<128x32xf32>
    %224 = arith.mulf %219, %223 : vector<128x32xf32>
    %225 = vector.broadcast %205 : vector<1x32xf32> to vector<128x32xf32>
    %226 = arith.mulf %224, %225 : vector<128x32xf32>
    %227 = vector.broadcast %206 : vector<1x32xf32> to vector<128x32xf32>
    %228 = arith.addf %226, %227 : vector<128x32xf32>
    %229 = arith.truncf %228 : vector<128x32xf32> to vector<128x32xbf16>
    %c0_133 = arith.constant 0 : index
    %c0_134 = arith.constant 0 : index
    %230 = vector.load %arg12[%c0_133, %c0_134] : memref<32x2048xbf16, #tpu.memory_space<vmem>>, vector<32x2048xbf16>
    %cst_135 = arith.constant dense<0.000000e+00> : vector<128x2048xf32>
    %231 = tpu.matmul %229, %230, %cst_135 {dimension_numbers = #tpu.dot_dimension_numbers<[1], [0], [0], [1], [0, 0, 1, 1], [], []>} : vector<128x32xbf16>, vector<32x2048xbf16>, vector<128x2048xf32> -> vector<128x2048xf32>
    %c0_136 = arith.constant 0 : index
    %c0_137 = arith.constant 0 : index
    %232 = vector.load %arg13[%c0_136, %c0_137] : memref<1x2048xf32, #tpu.memory_space<vmem>>, vector<1x2048xf32>
    %233 = vector.broadcast %232 : vector<1x2048xf32> to vector<128x2048xf32>
    %234 = arith.addf %231, %233 : vector<128x2048xf32>
    %cst_138 = arith.constant 0.000000e+00 : f32
    %235 = vector.broadcast %cst_138 : f32 to vector<128x2048xf32>
    %236 = arith.maximumf %234, %235 : vector<128x2048xf32>
    %237 = arith.truncf %236 : vector<128x2048xf32> to vector<128x2048xbf16>
    %c0_139 = arith.constant 0 : index
    %c0_140 = arith.constant 0 : index
    %238 = vector.load %arg14[%c0_139, %c0_140] : memref<2048x32xbf16, #tpu.memory_space<vmem>>, vector<2048x32xbf16>
    %cst_141 = arith.constant dense<0.000000e+00> : vector<128x32xf32>
    %239 = tpu.matmul %237, %238, %cst_141 {dimension_numbers = #tpu.dot_dimension_numbers<[1], [0], [0], [1], [0, 0, 1, 1], [], []>} : vector<128x2048xbf16>, vector<2048x32xbf16>, vector<128x32xf32> -> vector<128x32xf32>
    %c0_142 = arith.constant 0 : index
    %c0_143 = arith.constant 0 : index
    %240 = vector.load %arg15[%c0_142, %c0_143] : memref<1x32xf32, #tpu.memory_space<vmem>>, vector<1x32xf32>
    %241 = vector.broadcast %240 : vector<1x32xf32> to vector<128x32xf32>
    %242 = arith.addf %239, %241 : vector<128x32xf32>
    %243 = arith.addf %228, %242 : vector<128x32xf32>
    %c0_144 = arith.constant 0 : index
    %c0_145 = arith.constant 0 : index
    %244 = vector.load %arg16[%c0_144, %c0_145] : memref<1x32xf32, #tpu.memory_space<vmem>>, vector<1x32xf32>
    %c0_146 = arith.constant 0 : index
    %c0_147 = arith.constant 0 : index
    %245 = vector.load %arg17[%c0_146, %c0_147] : memref<1x32xf32, #tpu.memory_space<vmem>>, vector<1x32xf32>
    %cst_148 = arith.constant dense<0.000000e+00> : vector<128xf32>
    %246 = vector.multi_reduction <add>, %243, %cst_148 [1] : vector<128x32xf32> to vector<128xf32>
    %247 = vector.shape_cast %246 : vector<128xf32> to vector<128x1xf32>
    %cst_149 = arith.constant 3.200000e+01 : f32
    %248 = vector.broadcast %cst_149 : f32 to vector<128x1xf32>
    %249 = arith.divf %247, %248 : vector<128x1xf32>
    %250 = vector.broadcast %249 : vector<128x1xf32> to vector<128x32xf32>
    %251 = arith.subf %243, %250 : vector<128x32xf32>
    %252 = arith.mulf %251, %251 : vector<128x32xf32>
    %cst_150 = arith.constant dense<0.000000e+00> : vector<128xf32>
    %253 = vector.multi_reduction <add>, %252, %cst_150 [1] : vector<128x32xf32> to vector<128xf32>
    %254 = vector.shape_cast %253 : vector<128xf32> to vector<128x1xf32>
    %cst_151 = arith.constant 3.200000e+01 : f32
    %255 = vector.broadcast %cst_151 : f32 to vector<128x1xf32>
    %256 = arith.divf %254, %255 : vector<128x1xf32>
    %257 = vector.broadcast %249 : vector<128x1xf32> to vector<128x32xf32>
    %258 = arith.subf %243, %257 : vector<128x32xf32>
    %cst_152 = arith.constant 9.99999974E-6 : f32
    %259 = vector.broadcast %cst_152 : f32 to vector<128x1xf32>
    %260 = arith.addf %256, %259 : vector<128x1xf32>
    %261 = math.rsqrt %260 : vector<128x1xf32>
    %262 = vector.broadcast %261 : vector<128x1xf32> to vector<128x32xf32>
    %263 = arith.mulf %258, %262 : vector<128x32xf32>
    %264 = vector.broadcast %244 : vector<1x32xf32> to vector<128x32xf32>
    %265 = arith.mulf %263, %264 : vector<128x32xf32>
    %266 = vector.broadcast %245 : vector<1x32xf32> to vector<128x32xf32>
    %267 = arith.addf %265, %266 : vector<128x32xf32>
    %268 = vector.extract_strided_slice %267 {offsets = [0, 0], sizes = [64, 32], strides = [1, 1]} : vector<128x32xf32> to vector<64x32xf32>
    %269 = tpu.transpose %268, [1, 0] : vector<64x32xf32> -> vector<32x64xf32>
    %c0_153 = arith.constant 0 : index
    %c0_154 = arith.constant 0 : index
    %c0_155 = arith.constant 0 : index
    %270 = vector.load %arg18[%c0_153, %c0_154, %c0_155] : memref<2x32x64xf32, #tpu.memory_space<vmem>>, vector<1x32x64xf32>
    %271 = vector.shape_cast %270 : vector<1x32x64xf32> to vector<32x64xf32>
    %272 = vector.shape_cast %269 : vector<32x64xf32> to vector<1x32x64xf32>
    tpu.vector_store %arg18[%c0_153, %c0_154, %c0_155], %272 {strides = array<i32>} : memref<2x32x64xf32, #tpu.memory_space<vmem>>, vector<1x32x64xf32>,
    %273 = vector.extract_strided_slice %267 {offsets = [64, 0], sizes = [64, 32], strides = [1, 1]} : vector<128x32xf32> to vector<64x32xf32>
    %274 = tpu.transpose %273, [1, 0] : vector<64x32xf32> -> vector<32x64xf32>
    %c1_156 = arith.constant 1 : index
    %c0_157 = arith.constant 0 : index
    %c0_158 = arith.constant 0 : index
    %275 = vector.load %arg18[%c1_156, %c0_157, %c0_158] : memref<2x32x64xf32, #tpu.memory_space<vmem>>, vector<1x32x64xf32>
    %276 = vector.shape_cast %275 : vector<1x32x64xf32> to vector<32x64xf32>
    %277 = vector.shape_cast %274 : vector<32x64xf32> to vector<1x32x64xf32>
    tpu.vector_store %arg18[%c1_156, %c0_157, %c0_158], %277 {strides = array<i32>} : memref<2x32x64xf32, #tpu.memory_space<vmem>>, vector<1x32x64xf32>,
    return
  }
  func.func @transform_0(%arg0: i32) -> (i32, i32, i32) {
    %c0_i32 = arith.constant 0 : i32
    %c0_i32_0 = arith.constant 0 : i32
    %c0_i32_1 = arith.constant 0 : i32
    return %arg0, %c0_i32, %c0_i32_0 : i32, i32, i32
  }
  func.func @transform_1(%arg0: i32) -> (i32, i32, i32) {
    %c0_i32 = arith.constant 0 : i32
    %c0_i32_0 = arith.constant 0 : i32
    %c0_i32_1 = arith.constant 0 : i32
    %c0_i32_2 = arith.constant 0 : i32
    return %c0_i32, %c0_i32_0, %c0_i32_1 : i32, i32, i32
  }
  func.func @transform_2(%arg0: i32) -> (i32, i32, i32) {
    %c0_i32 = arith.constant 0 : i32
    %c0_i32_0 = arith.constant 0 : i32
    %c0_i32_1 = arith.constant 0 : i32
    %c0_i32_2 = arith.constant 0 : i32
    return %c0_i32, %c0_i32_0, %c0_i32_1 : i32, i32, i32
  }
  func.func @transform_3(%arg0: i32) -> (i32, i32, i32) {
    %c0_i32 = arith.constant 0 : i32
    %c0_i32_0 = arith.constant 0 : i32
    %c0_i32_1 = arith.constant 0 : i32
    %c0_i32_2 = arith.constant 0 : i32
    return %c0_i32, %c0_i32_0, %c0_i32_1 : i32, i32, i32
  }
  func.func @transform_4(%arg0: i32) -> (i32, i32, i32) {
    %c0_i32 = arith.constant 0 : i32
    %c0_i32_0 = arith.constant 0 : i32
    %c0_i32_1 = arith.constant 0 : i32
    %c0_i32_2 = arith.constant 0 : i32
    return %c0_i32, %c0_i32_0, %c0_i32_1 : i32, i32, i32
  }
  func.func @transform_5(%arg0: i32) -> (i32, i32, i32) {
    %c0_i32 = arith.constant 0 : i32
    %c0_i32_0 = arith.constant 0 : i32
    %c0_i32_1 = arith.constant 0 : i32
    %c0_i32_2 = arith.constant 0 : i32
    return %c0_i32, %c0_i32_0, %c0_i32_1 : i32, i32, i32
  }
  func.func @transform_6(%arg0: i32) -> (i32, i32, i32) {
    %c0_i32 = arith.constant 0 : i32
    %c0_i32_0 = arith.constant 0 : i32
    %c0_i32_1 = arith.constant 0 : i32
    %c0_i32_2 = arith.constant 0 : i32
    return %c0_i32, %c0_i32_0, %c0_i32_1 : i32, i32, i32
  }
  func.func @transform_7(%arg0: i32) -> (i32, i32, i32) {
    %c0_i32 = arith.constant 0 : i32
    %c0_i32_0 = arith.constant 0 : i32
    %c0_i32_1 = arith.constant 0 : i32
    %c0_i32_2 = arith.constant 0 : i32
    return %c0_i32, %c0_i32_0, %c0_i32_1 : i32, i32, i32
  }
  func.func @transform_8(%arg0: i32) -> (i32, i32) {
    %c0_i32 = arith.constant 0 : i32
    %c0_i32_0 = arith.constant 0 : i32
    %c0_i32_1 = arith.constant 0 : i32
    return %c0_i32, %c0_i32_0 : i32, i32
  }
  func.func @transform_9(%arg0: i32) -> (i32, i32) {
    %c0_i32 = arith.constant 0 : i32
    %c0_i32_0 = arith.constant 0 : i32
    %c0_i32_1 = arith.constant 0 : i32
    return %c0_i32, %c0_i32_0 : i32, i32
  }
  func.func @transform_10(%arg0: i32) -> (i32, i32) {
    %c0_i32 = arith.constant 0 : i32
    %c0_i32_0 = arith.constant 0 : i32
    %c0_i32_1 = arith.constant 0 : i32
    return %c0_i32, %c0_i32_0 : i32, i32
  }
  func.func @transform_11(%arg0: i32) -> (i32, i32) {
    %c0_i32 = arith.constant 0 : i32
    %c0_i32_0 = arith.constant 0 : i32
    %c0_i32_1 = arith.constant 0 : i32
    return %c0_i32, %c0_i32_0 : i32, i32
  }
  func.func @transform_12(%arg0: i32) -> (i32, i32) {
    %c0_i32 = arith.constant 0 : i32
    %c0_i32_0 = arith.constant 0 : i32
    %c0_i32_1 = arith.constant 0 : i32
    return %c0_i32, %c0_i32_0 : i32, i32
  }
  func.func @transform_13(%arg0: i32) -> (i32, i32) {
    %c0_i32 = arith.constant 0 : i32
    %c0_i32_0 = arith.constant 0 : i32
    %c0_i32_1 = arith.constant 0 : i32
    return %c0_i32, %c0_i32_0 : i32, i32
  }
  func.func @transform_14(%arg0: i32) -> (i32, i32) {
    %c0_i32 = arith.constant 0 : i32
    %c0_i32_0 = arith.constant 0 : i32
    %c0_i32_1 = arith.constant 0 : i32
    return %c0_i32, %c0_i32_0 : i32, i32
  }
  func.func @transform_15(%arg0: i32) -> (i32, i32) {
    %c0_i32 = arith.constant 0 : i32
    %c0_i32_0 = arith.constant 0 : i32
    %c0_i32_1 = arith.constant 0 : i32
    return %c0_i32, %c0_i32_0 : i32, i32
  }
  func.func @transform_16(%arg0: i32) -> (i32, i32) {
    %c0_i32 = arith.constant 0 : i32
    %c0_i32_0 = arith.constant 0 : i32
    %c0_i32_1 = arith.constant 0 : i32
    return %c0_i32, %c0_i32_0 : i32, i32
  }
  func.func @transform_17(%arg0: i32) -> (i32, i32, i32) {
    %c0_i32 = arith.constant 0 : i32
    %c0_i32_0 = arith.constant 0 : i32
    %c0_i32_1 = arith.constant 0 : i32
    return %arg0, %c0_i32, %c0_i32_0 : i32, i32, i32
  }
}

</mosaic_0001>

<llo_original>
// kernel: transformer_block_forward.1
$region0: #{transformer_block_forward.1}
  #allocation0 [shape = 'u32[]', space=smem, size = 0x4, offset = 0x4, fixed_abs, tag = 'smem constant byte address 0x4 - core index']
  #allocation1 [shape = 'u32[144,128]{1,0:T(1,128)}', space=vmem, size = 0x12000, scoped, tag = 'internal scratch']
  %s0 = inlined_call_operand.vmem [shape: f32[2,32,64], index: 0, kind: input, shape index: {}]
  %s1 = inlined_call_operand.vmem [shape: bf16[4,32,8], index: 1, kind: input, shape index: {}]
  %s2 = inlined_call_operand.vmem [shape: bf16[4,32,8], index: 2, kind: input, shape index: {}]
  %s3 = inlined_call_operand.vmem [shape: bf16[4,32,8], index: 3, kind: input, shape index: {}]
  %s4 = inlined_call_operand.vmem [shape: f32[4,1,8], index: 4, kind: input, shape index: {}]
  %s5 = inlined_call_operand.vmem [shape: f32[4,1,8], index: 5, kind: input, shape index: {}]
  %s6 = inlined_call_operand.vmem [shape: f32[4,1,8], index: 6, kind: input, shape index: {}]
  %s7 = inlined_call_operand.vmem [shape: bf16[4,8,32], index: 7, kind: input, shape index: {}]
  %s8 = inlined_call_operand.vmem [shape: f32[1,32], index: 8, kind: input, shape index: {}]
  %s9 = inlined_call_operand.vmem [shape: f32[1,32], index: 9, kind: input, shape index: {}]
  %s10 = inlined_call_operand.vmem [shape: f32[1,32], index: 10, kind: input, shape index: {}]
  %s11 = inlined_call_operand.vmem [shape: bf16[32,2048], index: 11, kind: input, shape index: {}]
  %s12 = inlined_call_operand.vmem [shape: f32[1,2048], index: 12, kind: input, shape index: {}]
  %s13 = inlined_call_operand.vmem [shape: bf16[2048,32], index: 13, kind: input, shape index: {}]
  %s14 = inlined_call_operand.vmem [shape: f32[1,32], index: 14, kind: input, shape index: {}]
  %s15 = inlined_call_operand.vmem [shape: f32[1,32], index: 15, kind: input, shape index: {}]
  %s16 = inlined_call_operand.vmem [shape: f32[1,32], index: 16, kind: input, shape index: {}]
  %s17 = inlined_call_operand.vmem [shape: f32[2,32,64], index: 17, kind: output, shape index: {}]
  %s18 = sld [smem:[#allocation0]]
  $region78: #{transformer_block_forward.1} parent=0
    _
  %s20 = ssub.s32 1, %s18
  %s21 = scalar_select 0, %s20, %s18
  // Predicated region
  $region2: #{transformer_block_forward.1} parent=0 // pred_check
    _
  $region3: #{transformer_block_forward.1} parent=0 // pred_check_branch
    %23 = sbr.rel (0) target = $region5
  $region4: #{transformer_block_forward.1} parent=0 // pred_region
    _
  $region5: #{transformer_block_forward.1} parent=0 // pred_fallthru
    _
  // Predicated region
  $region6: #{transformer_block_forward.1} parent=0 // pred_check
    _
  $region7: #{transformer_block_forward.1} parent=0 // pred_check_branch
    %25 = sbr.rel (0) target = $region9
  $region8: #{transformer_block_forward.1} parent=0 // pred_region
    _
  $region9: #{transformer_block_forward.1} parent=0 // pred_fallthru
    _
  // Predicated region
  $region10: #{transformer_block_forward.1} parent=0 // pred_check
    _
  $region11: #{transformer_block_forward.1} parent=0 // pred_check_branch
    %27 = sbr.rel (0) target = $region13
  $region12: #{transformer_block_forward.1} parent=0 // pred_region
    _
  $region13: #{transformer_block_forward.1} parent=0 // pred_fallthru
    _
  // Predicated region
  $region14: #{transformer_block_forward.1} parent=0 // pred_check
    _
  $region15: #{transformer_block_forward.1} parent=0 // pred_check_branch
    %29 = sbr.rel (0) target = $region17
  $region16: #{transformer_block_forward.1} parent=0 // pred_region
    _
  $region17: #{transformer_block_forward.1} parent=0 // pred_fallthru
    _
  // Predicated region
  $region18: #{transformer_block_forward.1} parent=0 // pred_check
    _
  $region19: #{transformer_block_forward.1} parent=0 // pred_check_branch
    %31 = sbr.rel (0) target = $region21
  $region20: #{transformer_block_forward.1} parent=0 // pred_region
    _
  $region21: #{transformer_block_forward.1} parent=0 // pred_fallthru
    _
  // Predicated region
  $region22: #{transformer_block_forward.1} parent=0 // pred_check
    _
  $region23: #{transformer_block_forward.1} parent=0 // pred_check_branch
    %33 = sbr.rel (0) target = $region25
  $region24: #{transformer_block_forward.1} parent=0 // pred_region
    _
  $region25: #{transformer_block_forward.1} parent=0 // pred_fallthru
    _
  // Predicated region
  $region26: #{transformer_block_forward.1} parent=0 // pred_check
    _
  $region27: #{transformer_block_forward.1} parent=0 // pred_check_branch
    %35 = sbr.rel (0) target = $region29
  $region28: #{transformer_block_forward.1} parent=0 // pred_region
    _
  $region29: #{transformer_block_forward.1} parent=0 // pred_fallthru
    _
  // Predicated region
  $region30: #{transformer_block_forward.1} parent=0 // pred_check
    _
  $region31: #{transformer_block_forward.1} parent=0 // pred_check_branch
    %37 = sbr.rel (0) target = $region33
  $region32: #{transformer_block_forward.1} parent=0 // pred_region
    _
  $region33: #{transformer_block_forward.1} parent=0 // pred_fallthru
    _
  // Predicated region
  $region34: #{transformer_block_forward.1} parent=0 // pred_check
    _
  $region35: #{transformer_block_forward.1} parent=0 // pred_check_branch
    %39 = sbr.rel (0) target = $region37
  $region36: #{transformer_block_forward.1} parent=0 // pred_region
    _
  $region37: #{transformer_block_forward.1} parent=0 // pred_fallthru
    _
  // Predicated region
  $region38: #{transformer_block_forward.1} parent=0 // pred_check
    _
  $region39: #{transformer_block_forward.1} parent=0 // pred_check_branch
    %41 = sbr.rel (0) target = $region41
  $region40: #{transformer_block_forward.1} parent=0 // pred_region
    _
  $region41: #{transformer_block_forward.1} parent=0 // pred_fallthru
    _
  // Predicated region
  $region42: #{transformer_block_forward.1} parent=0 // pred_check
    _
  $region43: #{transformer_block_forward.1} parent=0 // pred_check_branch
    %43 = sbr.rel (0) target = $region45
  $region44: #{transformer_block_forward.1} parent=0 // pred_region
    _
  $region45: #{transformer_block_forward.1} parent=0 // pred_fallthru
    _
  // Predicated region
  $region46: #{transformer_block_forward.1} parent=0 // pred_check
    _
  $region47: #{transformer_block_forward.1} parent=0 // pred_check_branch
    %45 = sbr.rel (0) target = $region49
  $region48: #{transformer_block_forward.1} parent=0 // pred_region
    _
  $region49: #{transformer_block_forward.1} parent=0 // pred_fallthru
    _
  // Predicated region
  $region50: #{transformer_block_forward.1} parent=0 // pred_check
    _
  $region51: #{transformer_block_forward.1} parent=0 // pred_check_branch
    %47 = sbr.rel (0) target = $region53
  $region52: #{transformer_block_forward.1} parent=0 // pred_region
    _
  $region53: #{transformer_block_forward.1} parent=0 // pred_fallthru
    _
  // Predicated region
  $region54: #{transformer_block_forward.1} parent=0 // pred_check
    _
  $region55: #{transformer_block_forward.1} parent=0 // pred_check_branch
    %49 = sbr.rel (0) target = $region57
  $region56: #{transformer_block_forward.1} parent=0 // pred_region
    _
  $region57: #{transformer_block_forward.1} parent=0 // pred_fallthru
    _
  // Predicated region
  $region58: #{transformer_block_forward.1} parent=0 // pred_check
    _
  $region59: #{transformer_block_forward.1} parent=0 // pred_check_branch
    %51 = sbr.rel (0) target = $region61
  $region60: #{transformer_block_forward.1} parent=0 // pred_region
    _
  $region61: #{transformer_block_forward.1} parent=0 // pred_fallthru
    _
  // Predicated region
  $region62: #{transformer_block_forward.1} parent=0 // pred_check
    _
  $region63: #{transformer_block_forward.1} parent=0 // pred_check_branch
    %53 = sbr.rel (0) target = $region65
  $region64: #{transformer_block_forward.1} parent=0 // pred_region
    _
  $region65: #{transformer_block_forward.1} parent=0 // pred_fallthru
    _
  // Predicated region
  $region66: #{transformer_block_forward.1} parent=0 // pred_check
    _
  $region67: #{transformer_block_forward.1} parent=0 // pred_check_branch
    %55 = sbr.rel (0) target = $region69
  $region68: #{transformer_block_forward.1} parent=0 // pred_region
    _
  $region69: #{transformer_block_forward.1} parent=0 // pred_fallthru
    _
  %v57 = vld [vmem:[%s0] sm:$0xff]
  %v58 = vld [vmem:[%s0 + $0x8] sm:$0xff]
  %v59 = vld [vmem:[%s0 + $0x10] sm:$0xff]
  %v60 = vld [vmem:[%s0 + $0x18] sm:$0xff]
  %61 = vxpose.xlu0.b32.start [1/16] %v57, 128
  %62 = vxpose.xlu0.b32.cont [2/16] %v58, 128
  %63 = vxpose.xlu0.b32.cont [3/16] %v59, 128
  %64 = vxpose.xlu0.b32.cont [4/16] %v60, 128
  %65 = vxpose.xlu0.b32.cont [5/16] 0.0, 128
  %66 = vxpose.xlu0.b32.cont [6/16] 0.0, 128
  %67 = vxpose.xlu0.b32.cont [7/16] 0.0, 128
  %68 = vxpose.xlu0.b32.cont [8/16] 0.0, 128
  %69 = vxpose.xlu0.b32.cont [9/16] 0.0, 128
  %70 = vxpose.xlu0.b32.cont [10/16] 0.0, 128
  %71 = vxpose.xlu0.b32.cont [11/16] 0.0, 128
  %72 = vxpose.xlu0.b32.cont [12/16] 0.0, 128
  %73 = vxpose.xlu0.b32.cont [13/16] 0.0, 128
  %74 = vxpose.xlu0.b32.cont [14/16] 0.0, 128
  %75 = vxpose.xlu0.b32.cont [15/16] 0.0, 128
  %76 = vxpose.xlu0.b32.end [16/16] 0.0, 128
  %v77 = vpop.trf.xlu0
  %v78 = vpop.trf.xlu0
  %v79 = vpop.trf.xlu0
  %v80 = vpop.trf.xlu0
  %v81 = vpop.trf.xlu0
  %v82 = vpop.trf.xlu0
  %v83 = vpop.trf.xlu0
  %v84 = vpop.trf.xlu0
  %v85 = vpop.trf.xlu0
  %v86 = vpop.trf.xlu0
  %v87 = vpop.trf.xlu0
  %v88 = vpop.trf.xlu0
  %v89 = vpop.trf.xlu0
  %v90 = vpop.trf.xlu0
  %v91 = vpop.trf.xlu0
  %v92 = vpop.trf.xlu0
  %s93 = scalar_lea.vmem %s0, 32
  %v94 = vld [vmem:[%s93] sm:$0xff]
  %v95 = vld [vmem:[%s93 + $0x8] sm:$0xff]
  %v96 = vld [vmem:[%s93 + $0x10] sm:$0xff]
  %v97 = vld [vmem:[%s93 + $0x18] sm:$0xff]
  %98 = vxpose.xlu0.b32.start [1/16] %v94, 128
  %99 = vxpose.xlu0.b32.cont [2/16] %v95, 128
  %100 = vxpose.xlu0.b32.cont [3/16] %v96, 128
  %101 = vxpose.xlu0.b32.cont [4/16] %v97, 128
  %102 = vxpose.xlu0.b32.cont [5/16] 0.0, 128
  %103 = vxpose.xlu0.b32.cont [6/16] 0.0, 128
  %104 = vxpose.xlu0.b32.cont [7/16] 0.0, 128
  %105 = vxpose.xlu0.b32.cont [8/16] 0.0, 128
  %106 = vxpose.xlu0.b32.cont [9/16] 0.0, 128
  %107 = vxpose.xlu0.b32.cont [10/16] 0.0, 128
  %108 = vxpose.xlu0.b32.cont [11/16] 0.0, 128
  %109 = vxpose.xlu0.b32.cont [12/16] 0.0, 128
  %110 = vxpose.xlu0.b32.cont [13/16] 0.0, 128
  %111 = vxpose.xlu0.b32.cont [14/16] 0.0, 128
  %112 = vxpose.xlu0.b32.cont [15/16] 0.0, 128
  %113 = vxpose.xlu0.b32.end [16/16] 0.0, 128
  %v114 = vpop.trf.xlu0
  %v115 = vpop.trf.xlu0
  %v116 = vpop.trf.xlu0
  %v117 = vpop.trf.xlu0
  %v118 = vpop.trf.xlu0
  %v119 = vpop.trf.xlu0
  %v120 = vpop.trf.xlu0
  %v121 = vpop.trf.xlu0
  %v122 = vpop.trf.xlu0
  %v123 = vpop.trf.xlu0
  %v124 = vpop.trf.xlu0
  %v125 = vpop.trf.xlu0
  %v126 = vpop.trf.xlu0
  %v127 = vpop.trf.xlu0
  %v128 = vpop.trf.xlu0
  %v129 = vpop.trf.xlu0
  %v130 = vpack.c.bf16 %v78, %v77
  %v131 = vpack.c.bf16 %v80, %v79
  %v132 = vpack.c.bf16 %v82, %v81
  %v133 = vpack.c.bf16 %v84, %v83
  %v134 = vpack.c.bf16 %v115, %v114
  %v135 = vpack.c.bf16 %v117, %v116
  %v136 = vpack.c.bf16 %v119, %v118
  %v137 = vpack.c.bf16 %v121, %v120
  %v138 = vld [vmem:[%s1] sm:$0xf]
  %v139 = vld [vmem:[%s1 + $0x4] sm:$0xf]
  %v140 = vld [vmem:[%s1 + $0x8] sm:$0xf]
  %v141 = vld [vmem:[%s1 + $0xc] sm:$0xf]
  %v142 = vld [vmem:[%s4] sm:$0x1]
  %v144 = vlaneseq
  %v145 = vshrl.u32 %v144, 7
  %v146 = vsub.s32 0, %v145
  %v147 = vrot.slane %v142, %v146
  %v153 = vunpack.c.l.b16 %v138
  %v154 = vunpack.c.l.b16 %v139
  %v155 = vunpack.c.l.b16 %v140
  %v156 = vunpack.c.l.b16 %v141
  %v157 = vpack.c.b16 %v154, %v153
  %v158 = vpack.c.b16 %v156, %v155
  %vm161 = vcmask 261120
  %v163 = vsel %vm161, %v130, 0
  %v166 = vsel %vm161, %v131, 0
  %v169 = vsel %vm161, %v132, 0
  %v172 = vsel %vm161, %v133, 0
  %v175 = vsel %vm161, %v134, 0
  %v178 = vsel %vm161, %v135, 0
  %v181 = vsel %vm161, %v136, 0
  %v184 = vsel %vm161, %v137, 0
  %186 = vmatprep.subr.bf16.mxu0 0
  %187 = vmatpush1.bf16.msra.mxu0 %v157
  %188 = vmatprep.subr.bf16.mxu0 0
  %189 = vmatpush1.bf16.msra.mxu0 %v158
  %190 = vmatprep.subr.bf16.mxu0 0
  %191 = vmatpush1.bf16.msra.mxu0 0
  %192 = vmatprep.subr.bf16.mxu0 0
  %193 = vmatpush1.bf16.msra.mxu0 0
  %194 = vmatprep.subr.bf16.mxu0 0
  %195 = vmatpush1.bf16.msra.mxu0 0
  %196 = vmatprep.subr.bf16.mxu0 0
  %197 = vmatpush1.bf16.msra.mxu0 0
  %198 = vmatprep.subr.bf16.mxu0 0
  %199 = vmatpush1.bf16.msra.mxu0 0
  %200 = vmatprep.subr.bf16.mxu0 0
  %201 = vmatpush1.bf16.msra.mxu0 0
  %202 = vmatprep.subr.bf16.mxu0 0
  %203 = vmatpush1.bf16.msra.mxu0 0
  %204 = vmatprep.subr.bf16.mxu0 0
  %205 = vmatpush1.bf16.msra.mxu0 0
  %206 = vmatprep.subr.bf16.mxu0 0
  %207 = vmatpush1.bf16.msra.mxu0 0
  %208 = vmatprep.subr.bf16.mxu0 0
  %209 = vmatpush1.bf16.msra.mxu0 0
  %210 = vmatprep.subr.bf16.mxu0 0
  %211 = vmatpush1.bf16.msra.mxu0 0
  %212 = vmatprep.subr.bf16.mxu0 0
  %213 = vmatpush1.bf16.msra.mxu0 0
  %214 = vmatprep.subr.bf16.mxu0 0
  %215 = vmatpush1.bf16.msra.mxu0 0
  %216 = vmatprep.subr.bf16.mxu0 0
  %217 = vmatpush1.bf16.msra.mxu0 0
  %218 = vmatprep.mubr.bf16.mxu0 0
  %219 = vmatmul.mubr.bf16.gmra.mrb[0].mxu0 %v163
  %v220 = vpop.f32.mrb[0].mxu0
  %v221 = vadd.f32 %v147, %v220
  %v222 = vpop.f32.mrb[0].mxu0
  %v223 = vpop.f32.mrb[0].mxu0
  %v224 = vadd.f32 %v147, %v223
  %v225 = vpop.f32.mrb[0].mxu0
  %226 = vmatprep.mubr.bf16.mxu0 0
  %227 = vmatmul.mubr.bf16.gmra.mrb[0].mxu0 %v166
  %v228 = vpop.f32.mrb[0].mxu0
  %v229 = vadd.f32 %v147, %v228
  %v230 = vpop.f32.mrb[0].mxu0
  %v231 = vpop.f32.mrb[0].mxu0
  %v232 = vadd.f32 %v147, %v231
  %v233 = vpop.f32.mrb[0].mxu0
  %234 = vmatprep.mubr.bf16.mxu0 0
  %235 = vmatmul.mubr.bf16.gmra.mrb[0].mxu0 %v169
  %v236 = vpop.f32.mrb[0].mxu0
  %v237 = vadd.f32 %v147, %v236
  %v238 = vpop.f32.mrb[0].mxu0
  %v239 = vpop.f32.mrb[0].mxu0
  %v240 = vadd.f32 %v147, %v239
  %v241 = vpop.f32.mrb[0].mxu0
  %242 = vmatprep.mubr.bf16.mxu0 0
  %243 = vmatmul.mubr.bf16.gmra.mrb[0].mxu0 %v172
  %v244 = vpop.f32.mrb[0].mxu0
  %v245 = vadd.f32 %v147, %v244
  %v246 = vpop.f32.mrb[0].mxu0
  %v247 = vpop.f32.mrb[0].mxu0
  %v248 = vadd.f32 %v147, %v247
  %v249 = vpop.f32.mrb[0].mxu0
  %250 = vmatprep.mubr.bf16.mxu0 0
  %251 = vmatmul.mubr.bf16.gmra.mrb[0].mxu0 %v175
  %v252 = vpop.f32.mrb[0].mxu0
  %v253 = vadd.f32 %v147, %v252
  %v254 = vpop.f32.mrb[0].mxu0
  %v255 = vpop.f32.mrb[0].mxu0
  %v256 = vadd.f32 %v147, %v255
  %v257 = vpop.f32.mrb[0].mxu0
  %258 = vmatprep.mubr.bf16.mxu0 0
  %259 = vmatmul.mubr.bf16.gmra.mrb[0].mxu0 %v178
  %v260 = vpop.f32.mrb[0].mxu0
  %v261 = vadd.f32 %v147, %v260
  %v262 = vpop.f32.mrb[0].mxu0
  %v263 = vpop.f32.mrb[0].mxu0
  %v264 = vadd.f32 %v147, %v263
  %v265 = vpop.f32.mrb[0].mxu0
  %266 = vmatprep.mubr.bf16.mxu0 0
  %267 = vmatmul.mubr.bf16.gmra.mrb[0].mxu0 %v181
  %v268 = vpop.f32.mrb[0].mxu0
  %v269 = vadd.f32 %v147, %v268
  %v270 = vpop.f32.mrb[0].mxu0
  %v271 = vpop.f32.mrb[0].mxu0
  %v272 = vadd.f32 %v147, %v271
  %v273 = vpop.f32.mrb[0].mxu0
  %274 = vmatprep.mubr.bf16.mxu0 0
  %275 = vmatmul.mubr.bf16.gmra.mrb[0].mxu0 %v184
  %v276 = vpop.f32.mrb[0].mxu0
  %v277 = vadd.f32 %v147, %v276
  %v278 = vpop.f32.mrb[0].mxu0
  %v279 = vpop.f32.mrb[0].mxu0
  %v280 = vadd.f32 %v147, %v279
  %v281 = vpop.f32.mrb[0].mxu0
  %282 = vdwg.mxu0
  %v283 = vld [vmem:[%s2] sm:$0xf]
  %v284 = vld [vmem:[%s2 + $0x4] sm:$0xf]
  %v285 = vld [vmem:[%s2 + $0x8] sm:$0xf]
  %v286 = vld [vmem:[%s2 + $0xc] sm:$0xf]
  %v287 = vld [vmem:[%s5] sm:$0x1]
  %v289 = vlaneseq
  %v290 = vshrl.u32 %v289, 7
  %v291 = vsub.s32 0, %v290
  %v292 = vrot.slane %v287, %v291
  %v298 = vunpack.c.l.b16 %v283
  %v299 = vunpack.c.l.b16 %v284
  %v300 = vunpack.c.l.b16 %v285
  %v301 = vunpack.c.l.b16 %v286
  %v302 = vpack.c.b16 %v299, %v298
  %v303 = vpack.c.b16 %v301, %v300
  %306 = vmatprep.subr.bf16.mxu0 0
  %307 = vmatpush1.bf16.msra.mxu0 %v302
  %308 = vmatprep.subr.bf16.mxu0 0
  %309 = vmatpush1.bf16.msra.mxu0 %v303
  %310 = vmatprep.subr.bf16.mxu0 0
  %311 = vmatpush1.bf16.msra.mxu0 0
  %312 = vmatprep.subr.bf16.mxu0 0
  %313 = vmatpush1.bf16.msra.mxu0 0
  %314 = vmatprep.subr.bf16.mxu0 0
  %315 = vmatpush1.bf16.msra.mxu0 0
  %316 = vmatprep.subr.bf16.mxu0 0
  %317 = vmatpush1.bf16.msra.mxu0 0
  %318 = vmatprep.subr.bf16.mxu0 0
  %319 = vmatpush1.bf16.msra.mxu0 0
  %320 = vmatprep.subr.bf16.mxu0 0
  %321 = vmatpush1.bf16.msra.mxu0 0
  %322 = vmatprep.subr.bf16.mxu0 0
  %323 = vmatpush1.bf16.msra.mxu0 0
  %324 = vmatprep.subr.bf16.mxu0 0
  %325 = vmatpush1.bf16.msra.mxu0 0
  %326 = vmatprep.subr.bf16.mxu0 0
  %327 = vmatpush1.bf16.msra.mxu0 0
  %328 = vmatprep.subr.bf16.mxu0 0
  %329 = vmatpush1.bf16.msra.mxu0 0
  %330 = vmatprep.subr.bf16.mxu0 0
  %331 = vmatpush1.bf16.msra.mxu0 0
  %332 = vmatprep.subr.bf16.mxu0 0
  %333 = vmatpush1.bf16.msra.mxu0 0
  %334 = vmatprep.subr.bf16.mxu0 0
  %335 = vmatpush1.bf16.msra.mxu0 0
  %336 = vmatprep.subr.bf16.mxu0 0
  %337 = vmatpush1.bf16.msra.mxu0 0
  %338 = vmatprep.mubr.bf16.mxu0 0
  %339 = vmatmul.mubr.bf16.gmra.mrb[0].mxu0 %v163
  %v340 = vpop.f32.mrb[0].mxu0
  %v341 = vadd.f32 %v292, %v340
  %v342 = vpop.f32.mrb[0].mxu0
  %v343 = vpop.f32.mrb[0].mxu0
  %v344 = vadd.f32 %v292, %v343
  %v345 = vpop.f32.mrb[0].mxu0
  %346 = vmatprep.mubr.bf16.mxu0 0
  %347 = vmatmul.mubr.bf16.gmra.mrb[0].mxu0 %v166
  %v348 = vpop.f32.mrb[0].mxu0
  %v349 = vadd.f32 %v292, %v348
  %v350 = vpop.f32.mrb[0].mxu0
  %v351 = vpop.f32.mrb[0].mxu0
  %v352 = vadd.f32 %v292, %v351
  %v353 = vpop.f32.mrb[0].mxu0
  %354 = vmatprep.mubr.bf16.mxu0 0
  %355 = vmatmul.mubr.bf16.gmra.mrb[0].mxu0 %v169
  %v356 = vpop.f32.mrb[0].mxu0
  %v357 = vadd.f32 %v292, %v356
  %v358 = vpop.f32.mrb[0].mxu0
  %v359 = vpop.f32.mrb[0].mxu0
  %v360 = vadd.f32 %v292, %v359
  %v361 = vpop.f32.mrb[0].mxu0
  %362 = vmatprep.mubr.bf16.mxu0 0
  %363 = vmatmul.mubr.bf16.gmra.mrb[0].mxu0 %v172
  %v364 = vpop.f32.mrb[0].mxu0
  %v365 = vadd.f32 %v292, %v364
  %v366 = vpop.f32.mrb[0].mxu0
  %v367 = vpop.f32.mrb[0].mxu0
  %v368 = vadd.f32 %v292, %v367
  %v369 = vpop.f32.mrb[0].mxu0
  %370 = vmatprep.mubr.bf16.mxu0 0
  %371 = vmatmul.mubr.bf16.gmra.mrb[0].mxu0 %v175
  %v372 = vpop.f32.mrb[0].mxu0
  %v373 = vadd.f32 %v292, %v372
  %v374 = vpop.f32.mrb[0].mxu0
  %v375 = vpop.f32.mrb[0].mxu0
  %v376 = vadd.f32 %v292, %v375
  %v377 = vpop.f32.mrb[0].mxu0
  %378 = vmatprep.mubr.bf16.mxu0 0
  %379 = vmatmul.mubr.bf16.gmra.mrb[0].mxu0 %v178
  %v380 = vpop.f32.mrb[0].mxu0
  %v381 = vadd.f32 %v292, %v380
  %v382 = vpop.f32.mrb[0].mxu0
  %v383 = vpop.f32.mrb[0].mxu0
  %v384 = vadd.f32 %v292, %v383
  %v385 = vpop.f32.mrb[0].mxu0
  %386 = vmatprep.mubr.bf16.mxu0 0
  %387 = vmatmul.mubr.bf16.gmra.mrb[0].mxu0 %v181
  %v388 = vpop.f32.mrb[0].mxu0
  %v389 = vadd.f32 %v292, %v388
  %v390 = vpop.f32.mrb[0].mxu0
  %v391 = vpop.f32.mrb[0].mxu0
  %v392 = vadd.f32 %v292, %v391
  %v393 = vpop.f32.mrb[0].mxu0
  %394 = vmatprep.mubr.bf16.mxu0 0
  %395 = vmatmul.mubr.bf16.gmra.mrb[0].mxu0 %v184
  %v396 = vpop.f32.mrb[0].mxu0
  %v397 = vadd.f32 %v292, %v396
  %v398 = vpop.f32.mrb[0].mxu0
  %v399 = vpop.f32.mrb[0].mxu0
  %v400 = vadd.f32 %v292, %v399
  %v401 = vpop.f32.mrb[0].mxu0
  %402 = vdwg.mxu0
  %v403 = vld [vmem:[%s3] sm:$0xf]
  %v404 = vld [vmem:[%s3 + $0x4] sm:$0xf]
  %v405 = vld [vmem:[%s3 + $0x8] sm:$0xf]
  %v406 = vld [vmem:[%s3 + $0xc] sm:$0xf]
  %v407 = vld [vmem:[%s6] sm:$0x1]
  %v409 = vlaneseq
  %v410 = vshrl.u32 %v409, 7
  %v411 = vsub.s32 0, %v410
  %v412 = vrot.slane %v407, %v411
  %v418 = vunpack.c.l.b16 %v403
  %v419 = vunpack.c.l.b16 %v404
  %v420 = vunpack.c.l.b16 %v405
  %v421 = vunpack.c.l.b16 %v406
  %v422 = vpack.c.b16 %v419, %v418
  %v423 = vpack.c.b16 %v421, %v420
  %426 = vmatprep.subr.bf16.mxu0 0
  %427 = vmatpush1.bf16.msra.mxu0 %v422
  %428 = vmatprep.subr.bf16.mxu0 0
  %429 = vmatpush1.bf16.msra.mxu0 %v423
  %430 = vmatprep.subr.bf16.mxu0 0
  %431 = vmatpush1.bf16.msra.mxu0 0
  %432 = vmatprep.subr.bf16.mxu0 0
  %433 = vmatpush1.bf16.msra.mxu0 0
  %434 = vmatprep.subr.bf16.mxu0 0
  %435 = vmatpush1.bf16.msra.mxu0 0
  %436 = vmatprep.subr.bf16.mxu0 0
  %437 = vmatpush1.bf16.msra.mxu0 0
  %438 = vmatprep.subr.bf16.mxu0 0
  %439 = vmatpush1.bf16.msra.mxu0 0
  %440 = vmatprep.subr.bf16.mxu0 0
  %441 = vmatpush1.bf16.msra.mxu0 0
  %442 = vmatprep.subr.bf16.mxu0 0
  %443 = vmatpush1.bf16.msra.mxu0 0
  %444 = vmatprep.subr.bf16.mxu0 0
  %445 = vmatpush1.bf16.msra.mxu0 0
  %446 = vmatprep.subr.bf16.mxu0 0
  %447 = vmatpush1.bf16.msra.mxu0 0
  %448 = vmatprep.subr.bf16.mxu0 0
  %449 = vmatpush1.bf16.msra.mxu0 0
  %450 = vmatprep.subr.bf16.mxu0 0
  %451 = vmatpush1.bf16.msra.mxu0 0
  %452 = vmatprep.subr.bf16.mxu0 0
  %453 = vmatpush1.bf16.msra.mxu0 0
  %454 = vmatprep.subr.bf16.mxu0 0
  %455 = vmatpush1.bf16.msra.mxu0 0
  %456 = vmatprep.subr.bf16.mxu0 0
  %457 = vmatpush1.bf16.msra.mxu0 0
  %458 = vmatprep.mubr.bf16.mxu0 0
  %459 = vmatmul.mubr.bf16.gmra.mrb[0].mxu0 %v163
  %v460 = vpop.f32.mrb[0].mxu0
  %v461 = vadd.f32 %v412, %v460
  %v462 = vpop.f32.mrb[0].mxu0
  %v463 = vpop.f32.mrb[0].mxu0
  %v464 = vadd.f32 %v412, %v463
  %v465 = vpop.f32.mrb[0].mxu0
  %466 = vmatprep.mubr.bf16.mxu0 0
  %467 = vmatmul.mubr.bf16.gmra.mrb[0].mxu0 %v166
  %v468 = vpop.f32.mrb[0].mxu0
  %v469 = vadd.f32 %v412, %v468
  %v470 = vpop.f32.mrb[0].mxu0
  %v471 = vpop.f32.mrb[0].mxu0
  %v472 = vadd.f32 %v412, %v471
  %v473 = vpop.f32.mrb[0].mxu0
  %474 = vmatprep.mubr.bf16.mxu0 0
  %475 = vmatmul.mubr.bf16.gmra.mrb[0].mxu0 %v169
  %v476 = vpop.f32.mrb[0].mxu0
  %v477 = vadd.f32 %v412, %v476
  %v478 = vpop.f32.mrb[0].mxu0
  %v479 = vpop.f32.mrb[0].mxu0
  %v480 = vadd.f32 %v412, %v479
  %v481 = vpop.f32.mrb[0].mxu0
  %482 = vmatprep.mubr.bf16.mxu0 0
  %483 = vmatmul.mubr.bf16.gmra.mrb[0].mxu0 %v172
  %v484 = vpop.f32.mrb[0].mxu0
  %v485 = vadd.f32 %v412, %v484
  %v486 = vpop.f32.mrb[0].mxu0
  %v487 = vpop.f32.mrb[0].mxu0
  %v488 = vadd.f32 %v412, %v487
  %v489 = vpop.f32.mrb[0].mxu0
  %490 = vmatprep.mubr.bf16.mxu0 0
  %491 = vmatmul.mubr.bf16.gmra.mrb[0].mxu0 %v175
  %v492 = vpop.f32.mrb[0].mxu0
  %v493 = vadd.f32 %v412, %v492
  %v494 = vpop.f32.mrb[0].mxu0
  %v495 = vpop.f32.mrb[0].mxu0
  %v496 = vadd.f32 %v412, %v495
  %v497 = vpop.f32.mrb[0].mxu0
  %498 = vmatprep.mubr.bf16.mxu0 0
  %499 = vmatmul.mubr.bf16.gmra.mrb[0].mxu0 %v178
  %v500 = vpop.f32.mrb[0].mxu0
  %v501 = vadd.f32 %v412, %v500
  %v502 = vpop.f32.mrb[0].mxu0
  %v503 = vpop.f32.mrb[0].mxu0
  %v504 = vadd.f32 %v412, %v503
  %v505 = vpop.f32.mrb[0].mxu0
  %506 = vmatprep.mubr.bf16.mxu0 0
  %507 = vmatmul.mubr.bf16.gmra.mrb[0].mxu0 %v181
  %v508 = vpop.f32.mrb[0].mxu0
  %v509 = vadd.f32 %v412, %v508
  %v510 = vpop.f32.mrb[0].mxu0
  %v511 = vpop.f32.mrb[0].mxu0
  %v512 = vadd.f32 %v412, %v511
  %v513 = vpop.f32.mrb[0].mxu0
  %514 = vmatprep.mubr.bf16.mxu0 0
  %515 = vmatmul.mubr.bf16.gmra.mrb[0].mxu0 %v184
  %v516 = vpop.f32.mrb[0].mxu0
  %v517 = vadd.f32 %v412, %v516
  %v518 = vpop.f32.mrb[0].mxu0
  %v519 = vpop.f32.mrb[0].mxu0
  %v520 = vadd.f32 %v412, %v519
  %v521 = vpop.f32.mrb[0].mxu0
  %522 = vdwg.mxu0
  %v523 = vpack.c.bf16 %v224, %v221
  %v524 = vpack.c.bf16 %v232, %v229
  %v525 = vpack.c.bf16 %v240, %v237
  %v526 = vpack.c.bf16 %v248, %v245
  %v527 = vpack.c.bf16 %v256, %v253
  %v528 = vpack.c.bf16 %v264, %v261
  %v529 = vpack.c.bf16 %v272, %v269
  %v530 = vpack.c.bf16 %v280, %v277
  %v531 = vpack.c.bf16 %v344, %v341
  %v532 = vpack.c.bf16 %v352, %v349
  %v533 = vpack.c.bf16 %v360, %v357
  %v534 = vpack.c.bf16 %v368, %v365
  %v535 = vpack.c.bf16 %v376, %v373
  %v536 = vpack.c.bf16 %v384, %v381
  %v537 = vpack.c.bf16 %v392, %v389
  %v538 = vpack.c.bf16 %v400, %v397
  %vm539 = vcmask 64512
  %v541 = vsel %vm539, %v523, 0
  %v544 = vsel %vm539, %v524, 0
  %v547 = vsel %vm539, %v525, 0
  %v550 = vsel %vm539, %v526, 0
  %v553 = vsel %vm539, %v531, 0
  %v556 = vsel %vm539, %v532, 0
  %v559 = vsel %vm539, %v533, 0
  %v562 = vsel %vm539, %v534, 0
  %564 = vmatprep.subr.bf16.mxu0 0
  %565 = vmatpush1.bf16.xpose.msra.mxu0 %v553
  %566 = vmatprep.subr.bf16.mxu0 0
  %567 = vmatpush1.bf16.xpose.msra.mxu0 %v556
  %568 = vmatprep.subr.bf16.mxu0 0
  %569 = vmatpush1.bf16.xpose.msra.mxu0 %v559
  %570 = vmatprep.subr.bf16.mxu0 0
  %571 = vmatpush1.bf16.xpose.msra.mxu0 %v562
  %572 = vmatprep.subr.bf16.mxu0 0
  %573 = vmatpush1.bf16.xpose.msra.mxu0 0
  %574 = vmatprep.subr.bf16.mxu0 0
  %575 = vmatpush1.bf16.xpose.msra.mxu0 0
  %576 = vmatprep.subr.bf16.mxu0 0
  %577 = vmatpush1.bf16.xpose.msra.mxu0 0
  %578 = vmatprep.subr.bf16.mxu0 0
  %579 = vmatpush1.bf16.xpose.msra.mxu0 0
  %580 = vmatprep.subr.bf16.mxu0 0
  %581 = vmatpush1.bf16.xpose.msra.mxu0 0
  %582 = vmatprep.subr.bf16.mxu0 0
  %583 = vmatpush1.bf16.xpose.msra.mxu0 0
  %584 = vmatprep.subr.bf16.mxu0 0
  %585 = vmatpush1.bf16.xpose.msra.mxu0 0
  %586 = vmatprep.subr.bf16.mxu0 0
  %587 = vmatpush1.bf16.xpose.msra.mxu0 0
  %588 = vmatprep.subr.bf16.mxu0 0
  %589 = vmatpush1.bf16.xpose.msra.mxu0 0
  %590 = vmatprep.subr.bf16.mxu0 0
  %591 = vmatpush1.bf16.xpose.msra.mxu0 0
  %592 = vmatprep.subr.bf16.mxu0 0
  %593 = vmatpush1.bf16.xpose.msra.mxu0 0
  %594 = vmatprep.subr.bf16.mxu0 0
  %595 = vmatpush1.bf16.xpose.msra.mxu0 0
  %596 = vmatprep.mubr.bf16.mxu0 0
  %597 = vmatmul.mubr.bf16.gmra.mrb[0].mxu0 %v541
  %v598 = vpop.f32.mrb[0].mxu0
  %v599 = vadd.f32 0.0, %v598
  %v600 = vpop.f32.mrb[0].mxu0
  %v601 = vpop.f32.mrb[0].mxu0
  %v602 = vadd.f32 0.0, %v601
  %v603 = vpop.f32.mrb[0].mxu0
  %604 = vmatprep.mubr.bf16.mxu0 0
  %605 = vmatmul.mubr.bf16.gmra.mrb[0].mxu0 %v544
  %v606 = vpop.f32.mrb[0].mxu0
  %v607 = vadd.f32 0.0, %v606
  %v608 = vpop.f32.mrb[0].mxu0
  %v609 = vpop.f32.mrb[0].mxu0
  %v610 = vadd.f32 0.0, %v609
  %v611 = vpop.f32.mrb[0].mxu0
  %612 = vmatprep.mubr.bf16.mxu0 0
  %613 = vmatmul.mubr.bf16.gmra.mrb[0].mxu0 %v547
  %v614 = vpop.f32.mrb[0].mxu0
  %v615 = vadd.f32 0.0, %v614
  %v616 = vpop.f32.mrb[0].mxu0
  %v617 = vpop.f32.mrb[0].mxu0
  %v618 = vadd.f32 0.0, %v617
  %v619 = vpop.f32.mrb[0].mxu0
  %620 = vmatprep.mubr.bf16.mxu0 0
  %621 = vmatmul.mubr.bf16.gmra.mrb[0].mxu0 %v550
  %v622 = vpop.f32.mrb[0].mxu0
  %v623 = vadd.f32 0.0, %v622
  %v624 = vpop.f32.mrb[0].mxu0
  %v625 = vpop.f32.mrb[0].mxu0
  %v626 = vadd.f32 0.0, %v625
  %v627 = vpop.f32.mrb[0].mxu0
  %628 = vdwg.mxu0
  %v630 = vsel %vm539, %v527, 0
  %v633 = vsel %vm539, %v528, 0
  %v636 = vsel %vm539, %v529, 0
  %v639 = vsel %vm539, %v530, 0
  %v642 = vsel %vm539, %v535, 0
  %v645 = vsel %vm539, %v536, 0
  %v648 = vsel %vm539, %v537, 0
  %v651 = vsel %vm539, %v538, 0
  %653 = vmatprep.subr.bf16.mxu0 0
  %654 = vmatpush1.bf16.xpose.msra.mxu0 %v642
  %655 = vmatprep.subr.bf16.mxu0 0
  %656 = vmatpush1.bf16.xpose.msra.mxu0 %v645
  %657 = vmatprep.subr.bf16.mxu0 0
  %658 = vmatpush1.bf16.xpose.msra.mxu0 %v648
  %659 = vmatprep.subr.bf16.mxu0 0
  %660 = vmatpush1.bf16.xpose.msra.mxu0 %v651
  %661 = vmatprep.subr.bf16.mxu0 0
  %662 = vmatpush1.bf16.xpose.msra.mxu0 0
  %663 = vmatprep.subr.bf16.mxu0 0
  %664 = vmatpush1.bf16.xpose.msra.mxu0 0
  %665 = vmatprep.subr.bf16.mxu0 0
  %666 = vmatpush1.bf16.xpose.msra.mxu0 0
  %667 = vmatprep.subr.bf16.mxu0 0
  %668 = vmatpush1.bf16.xpose.msra.mxu0 0
  %669 = vmatprep.subr.bf16.mxu0 0
  %670 = vmatpush1.bf16.xpose.msra.mxu0 0
  %671 = vmatprep.subr.bf16.mxu0 0
  %672 = vmatpush1.bf16.xpose.msra.mxu0 0
  %673 = vmatprep.subr.bf16.mxu0 0
  %674 = vmatpush1.bf16.xpose.msra.mxu0 0
  %675 = vmatprep.subr.bf16.mxu0 0
  %676 = vmatpush1.bf16.xpose.msra.mxu0 0
  %677 = vmatprep.subr.bf16.mxu0 0
  %678 = vmatpush1.bf16.xpose.msra.mxu0 0
  %679 = vmatprep.subr.bf16.mxu0 0
  %680 = vmatpush1.bf16.xpose.msra.mxu0 0
  %681 = vmatprep.subr.bf16.mxu0 0
  %682 = vmatpush1.bf16.xpose.msra.mxu0 0
  %683 = vmatprep.subr.bf16.mxu0 0
  %684 = vmatpush1.bf16.xpose.msra.mxu0 0
  %685 = vmatprep.mubr.bf16.mxu0 0
  %686 = vmatmul.mubr.bf16.gmra.mrb[0].mxu0 %v630
  %v687 = vpop.f32.mrb[0].mxu0
  %v688 = vadd.f32 0.0, %v687
  %v689 = vpop.f32.mrb[0].mxu0
  %v690 = vpop.f32.mrb[0].mxu0
  %v691 = vadd.f32 0.0, %v690
  %v692 = vpop.f32.mrb[0].mxu0
  %693 = vmatprep.mubr.bf16.mxu0 0
  %694 = vmatmul.mubr.bf16.gmra.mrb[0].mxu0 %v633
  %v695 = vpop.f32.mrb[0].mxu0
  %v696 = vadd.f32 0.0, %v695
  %v697 = vpop.f32.mrb[0].mxu0
  %v698 = vpop.f32.mrb[0].mxu0
  %v699 = vadd.f32 0.0, %v698
  %v700 = vpop.f32.mrb[0].mxu0
  %701 = vmatprep.mubr.bf16.mxu0 0
  %702 = vmatmul.mubr.bf16.gmra.mrb[0].mxu0 %v636
  %v703 = vpop.f32.mrb[0].mxu0
  %v704 = vadd.f32 0.0, %v703
  %v705 = vpop.f32.mrb[0].mxu0
  %v706 = vpop.f32.mrb[0].mxu0
  %v707 = vadd.f32 0.0, %v706
  %v708 = vpop.f32.mrb[0].mxu0
  %709 = vmatprep.mubr.bf16.mxu0 0
  %710 = vmatmul.mubr.bf16.gmra.mrb[0].mxu0 %v639
  %v711 = vpop.f32.mrb[0].mxu0
  %v712 = vadd.f32 0.0, %v711
  %v713 = vpop.f32.mrb[0].mxu0
  %v714 = vpop.f32.mrb[0].mxu0
  %v715 = vadd.f32 0.0, %v714
  %v716 = vpop.f32.mrb[0].mxu0
  %717 = vdwg.mxu0
  %v718 = vmul.f32 %v599, 0.35355338
  %v719 = vmul.f32 %v602, 0.35355338
  %v720 = vmul.f32 %v607, 0.35355338
  %v721 = vmul.f32 %v610, 0.35355338
  %v722 = vmul.f32 %v615, 0.35355338
  %v723 = vmul.f32 %v618, 0.35355338
  %v724 = vmul.f32 %v623, 0.35355338
  %v725 = vmul.f32 %v626, 0.35355338
  %v726 = vmul.f32 %v688, 0.35355338
  %v727 = vmul.f32 %v691, 0.35355338
  %v728 = vmul.f32 %v696, 0.35355338
  %v729 = vmul.f32 %v699, 0.35355338
  %v730 = vmul.f32 %v704, 0.35355338
  %v731 = vmul.f32 %v707, 0.35355338
  %v732 = vmul.f32 %v712, 0.35355338
  %v733 = vmul.f32 %v715, 0.35355338
  %vm734 = vcmask 523264
  %v735 = vsel %vm734, %v718, -inf
  %736 = vmax.xlane.f32.xlu0 %v735
  %v737 = vpop.xlane.xlu0 %736
  %v738 = vsel %vm734, %v719, -inf
  %739 = vmax.xlane.f32.xlu0 %v738
  %v740 = vpop.xlane.xlu0 %739
  %v741 = vsel %vm734, %v720, -inf
  %742 = vmax.xlane.f32.xlu0 %v741
  %v743 = vpop.xlane.xlu0 %742
  %v744 = vsel %vm734, %v721, -inf
  %745 = vmax.xlane.f32.xlu0 %v744
  %v746 = vpop.xlane.xlu0 %745
  %v747 = vsel %vm734, %v722, -inf
  %748 = vmax.xlane.f32.xlu0 %v747
  %v749 = vpop.xlane.xlu0 %748
  %v750 = vsel %vm734, %v723, -inf
  %751 = vmax.xlane.f32.xlu0 %v750
  %v752 = vpop.xlane.xlu0 %751
  %v753 = vsel %vm734, %v724, -inf
  %754 = vmax.xlane.f32.xlu0 %v753
  %v755 = vpop.xlane.xlu0 %754
  %v756 = vsel %vm734, %v725, -inf
  %757 = vmax.xlane.f32.xlu0 %v756
  %v758 = vpop.xlane.xlu0 %757
  %v759 = vsel %vm734, %v726, -inf
  %760 = vmax.xlane.f32.xlu0 %v759
  %v761 = vpop.xlane.xlu0 %760
  %v762 = vsel %vm734, %v727, -inf
  %763 = vmax.xlane.f32.xlu0 %v762
  %v764 = vpop.xlane.xlu0 %763
  %v765 = vsel %vm734, %v728, -inf
  %766 = vmax.xlane.f32.xlu0 %v765
  %v767 = vpop.xlane.xlu0 %766
  %v768 = vsel %vm734, %v729, -inf
  %769 = vmax.xlane.f32.xlu0 %v768
  %v770 = vpop.xlane.xlu0 %769
  %v771 = vsel %vm734, %v730, -inf
  %772 = vmax.xlane.f32.xlu0 %v771
  %v773 = vpop.xlane.xlu0 %772
  %v774 = vsel %vm734, %v731, -inf
  %775 = vmax.xlane.f32.xlu0 %v774
  %v776 = vpop.xlane.xlu0 %775
  %v777 = vsel %vm734, %v732, -inf
  %778 = vmax.xlane.f32.xlu0 %v777
  %v779 = vpop.xlane.xlu0 %778
  %v780 = vsel %vm734, %v733, -inf
  %781 = vmax.xlane.f32.xlu0 %v780
  %v782 = vpop.xlane.xlu0 %781
  %v783 = vsub.f32 %v718, %v737
  %v784 = vsub.f32 %v719, %v740
  %v785 = vsub.f32 %v720, %v743
  %v786 = vsub.f32 %v721, %v746
  %v787 = vsub.f32 %v722, %v749
  %v788 = vsub.f32 %v723, %v752
  %v789 = vsub.f32 %v724, %v755
  %v790 = vsub.f32 %v725, %v758
  %v791 = vsub.f32 %v726, %v761
  %v792 = vsub.f32 %v727, %v764
  %v793 = vsub.f32 %v728, %v767
  %v794 = vsub.f32 %v729, %v770
  %v795 = vsub.f32 %v730, %v773
  %v796 = vsub.f32 %v731, %v776
  %v797 = vsub.f32 %v732, %v779
  %v798 = vsub.f32 %v733, %v782
  %v799 = vmul.f32 %v783, 1.442695
  %v800 = vpow.pop %v799
  %v801 = vmul.f32 %v784, 1.442695
  %v802 = vpow.pop %v801
  %v803 = vmul.f32 %v785, 1.442695
  %v804 = vpow.pop %v803
  %v805 = vmul.f32 %v786, 1.442695
  %v806 = vpow.pop %v805
  %v807 = vmul.f32 %v787, 1.442695
  %v808 = vpow.pop %v807
  %v809 = vmul.f32 %v788, 1.442695
  %v810 = vpow.pop %v809
  %v811 = vmul.f32 %v789, 1.442695
  %v812 = vpow.pop %v811
  %v813 = vmul.f32 %v790, 1.442695
  %v814 = vpow.pop %v813
  %v815 = vmul.f32 %v791, 1.442695
  %v816 = vpow.pop %v815
  %v817 = vmul.f32 %v792, 1.442695
  %v818 = vpow.pop %v817
  %v819 = vmul.f32 %v793, 1.442695
  %v820 = vpow.pop %v819
  %v821 = vmul.f32 %v794, 1.442695
  %v822 = vpow.pop %v821
  %v823 = vmul.f32 %v795, 1.442695
  %v824 = vpow.pop %v823
  %v825 = vmul.f32 %v796, 1.442695
  %v826 = vpow.pop %v825
  %v827 = vmul.f32 %v797, 1.442695
  %v828 = vpow.pop %v827
  %v829 = vmul.f32 %v798, 1.442695
  %v830 = vpow.pop %v829
  %v831 = vsel %vm734, %v800, 0.0
  %832 = vadd.xlane.f32.xlu0 %v831
  %v833 = vpop.xlane.xlu0 %832
  %v834 = vsel %vm734, %v802, 0.0
  %835 = vadd.xlane.f32.xlu0 %v834
  %v836 = vpop.xlane.xlu0 %835
  %v837 = vsel %vm734, %v804, 0.0
  %838 = vadd.xlane.f32.xlu0 %v837
  %v839 = vpop.xlane.xlu0 %838
  %v840 = vsel %vm734, %v806, 0.0
  %841 = vadd.xlane.f32.xlu0 %v840
  %v842 = vpop.xlane.xlu0 %841
  %v843 = vsel %vm734, %v808, 0.0
  %844 = vadd.xlane.f32.xlu0 %v843
  %v845 = vpop.xlane.xlu0 %844
  %v846 = vsel %vm734, %v810, 0.0
  %847 = vadd.xlane.f32.xlu0 %v846
  %v848 = vpop.xlane.xlu0 %847
  %v849 = vsel %vm734, %v812, 0.0
  %850 = vadd.xlane.f32.xlu0 %v849
  %v851 = vpop.xlane.xlu0 %850
  %v852 = vsel %vm734, %v814, 0.0
  %853 = vadd.xlane.f32.xlu0 %v852
  %v854 = vpop.xlane.xlu0 %853
  %v855 = vsel %vm734, %v816, 0.0
  %856 = vadd.xlane.f32.xlu0 %v855
  %v857 = vpop.xlane.xlu0 %856
  %v858 = vsel %vm734, %v818, 0.0
  %859 = vadd.xlane.f32.xlu0 %v858
  %v860 = vpop.xlane.xlu0 %859
  %v861 = vsel %vm734, %v820, 0.0
  %862 = vadd.xlane.f32.xlu0 %v861
  %v863 = vpop.xlane.xlu0 %862
  %v864 = vsel %vm734, %v822, 0.0
  %865 = vadd.xlane.f32.xlu0 %v864
  %v866 = vpop.xlane.xlu0 %865
  %v867 = vsel %vm734, %v824, 0.0
  %868 = vadd.xlane.f32.xlu0 %v867
  %v869 = vpop.xlane.xlu0 %868
  %v870 = vsel %vm734, %v826, 0.0
  %871 = vadd.xlane.f32.xlu0 %v870
  %v872 = vpop.xlane.xlu0 %871
  %v873 = vsel %vm734, %v828, 0.0
  %874 = vadd.xlane.f32.xlu0 %v873
  %v875 = vpop.xlane.xlu0 %874
  %v876 = vsel %vm734, %v830, 0.0
  %877 = vadd.xlane.f32.xlu0 %v876
  %v878 = vpop.xlane.xlu0 %877
  %v879 = vrcp.pop %v833
  %v880 = vrcp.pop %v836
  %v881 = vrcp.pop %v839
  %v882 = vrcp.pop %v842
  %v883 = vrcp.pop %v845
  %v884 = vrcp.pop %v848
  %v885 = vrcp.pop %v851
  %v886 = vrcp.pop %v854
  %v887 = vrcp.pop %v857
  %v888 = vrcp.pop %v860
  %v889 = vrcp.pop %v863
  %v890 = vrcp.pop %v866
  %v891 = vrcp.pop %v869
  %v892 = vrcp.pop %v872
  %v893 = vrcp.pop %v875
  %v894 = vrcp.pop %v878
  %v895 = vmul.f32 %v800, %v879
  %v896 = vmul.f32 %v802, %v880
  %v897 = vmul.f32 %v804, %v881
  %v898 = vmul.f32 %v806, %v882
  %v899 = vmul.f32 %v808, %v883
  %v900 = vmul.f32 %v810, %v884
  %v901 = vmul.f32 %v812, %v885
  %v902 = vmul.f32 %v814, %v886
  %v903 = vmul.f32 %v816, %v887
  %v904 = vmul.f32 %v818, %v888
  %v905 = vmul.f32 %v820, %v889
  %v906 = vmul.f32 %v822, %v890
  %v907 = vmul.f32 %v824, %v891
  %v908 = vmul.f32 %v826, %v892
  %v909 = vmul.f32 %v828, %v893
  %v910 = vmul.f32 %v830, %v894
  %v911 = vpack.c.bf16 %v896, %v895
  %v912 = vpack.c.bf16 %v898, %v897
  %v913 = vpack.c.bf16 %v900, %v899
  %v914 = vpack.c.bf16 %v902, %v901
  %v915 = vpack.c.bf16 %v904, %v903
  %v916 = vpack.c.bf16 %v906, %v905
  %v917 = vpack.c.bf16 %v908, %v907
  %v918 = vpack.c.bf16 %v910, %v909
  %v919 = vpack.c.bf16 %v464, %v461
  %v920 = vpack.c.bf16 %v472, %v469
  %v921 = vpack.c.bf16 %v480, %v477
  %v922 = vpack.c.bf16 %v488, %v485
  %v923 = vpack.c.bf16 %v496, %v493
  %v924 = vpack.c.bf16 %v504, %v501
  %v925 = vpack.c.bf16 %v512, %v509
  %v926 = vpack.c.bf16 %v520, %v517
  %v928 = vsel %vm734, %v911, 0
  %v931 = vsel %vm734, %v912, 0
  %v934 = vsel %vm734, %v913, 0
  %v937 = vsel %vm734, %v914, 0
  %939 = vmatprep.subr.bf16.mxu0 0
  %940 = vmatpush1.bf16.msra.mxu0 %v919
  %941 = vmatprep.subr.bf16.mxu0 0
  %942 = vmatpush1.bf16.msra.mxu0 %v920
  %943 = vmatprep.subr.bf16.mxu0 0
  %944 = vmatpush1.bf16.msra.mxu0 %v921
  %945 = vmatprep.subr.bf16.mxu0 0
  %946 = vmatpush1.bf16.msra.mxu0 %v922
  %947 = vmatprep.subr.bf16.mxu0 0
  %948 = vmatpush1.bf16.msra.mxu0 0
  %949 = vmatprep.subr.bf16.mxu0 0
  %950 = vmatpush1.bf16.msra.mxu0 0
  %951 = vmatprep.subr.bf16.mxu0 0
  %952 = vmatpush1.bf16.msra.mxu0 0
  %953 = vmatprep.subr.bf16.mxu0 0
  %954 = vmatpush1.bf16.msra.mxu0 0
  %955 = vmatprep.subr.bf16.mxu0 0
  %956 = vmatpush1.bf16.msra.mxu0 0
  %957 = vmatprep.subr.bf16.mxu0 0
  %958 = vmatpush1.bf16.msra.mxu0 0
  %959 = vmatprep.subr.bf16.mxu0 0
  %960 = vmatpush1.bf16.msra.mxu0 0
  %961 = vmatprep.subr.bf16.mxu0 0
  %962 = vmatpush1.bf16.msra.mxu0 0
  %963 = vmatprep.subr.bf16.mxu0 0
  %964 = vmatpush1.bf16.msra.mxu0 0
  %965 = vmatprep.subr.bf16.mxu0 0
  %966 = vmatpush1.bf16.msra.mxu0 0
  %967 = vmatprep.subr.bf16.mxu0 0
  %968 = vmatpush1.bf16.msra.mxu0 0
  %969 = vmatprep.subr.bf16.mxu0 0
  %970 = vmatpush1.bf16.msra.mxu0 0
  %971 = vmatprep.mubr.bf16.mxu0 0
  %972 = vmatmul.mubr.bf16.gmra.mrb[0].mxu0 %v928
  %v973 = vpop.f32.mrb[0].mxu0
  %v974 = vadd.f32 0.0, %v973
  %v975 = vpop.f32.mrb[0].mxu0
  %v976 = vpop.f32.mrb[0].mxu0
  %v977 = vadd.f32 0.0, %v976
  %v978 = vpop.f32.mrb[0].mxu0
  %979 = vmatprep.mubr.bf16.mxu0 0
  %980 = vmatmul.mubr.bf16.gmra.mrb[0].mxu0 %v931
  %v981 = vpop.f32.mrb[0].mxu0
  %v982 = vadd.f32 0.0, %v981
  %v983 = vpop.f32.mrb[0].mxu0
  %v984 = vpop.f32.mrb[0].mxu0
  %v985 = vadd.f32 0.0, %v984
  %v986 = vpop.f32.mrb[0].mxu0
  %987 = vmatprep.mubr.bf16.mxu0 0
  %988 = vmatmul.mubr.bf16.gmra.mrb[0].mxu0 %v934
  %v989 = vpop.f32.mrb[0].mxu0
  %v990 = vadd.f32 0.0, %v989
  %v991 = vpop.f32.mrb[0].mxu0
  %v992 = vpop.f32.mrb[0].mxu0
  %v993 = vadd.f32 0.0, %v992
  %v994 = vpop.f32.mrb[0].mxu0
  %995 = vmatprep.mubr.bf16.mxu0 0
  %996 = vmatmul.mubr.bf16.gmra.mrb[0].mxu0 %v937
  %v997 = vpop.f32.mrb[0].mxu0
  %v998 = vadd.f32 0.0, %v997
  %v999 = vpop.f32.mrb[0].mxu0
  %v1000 = vpop.f32.mrb[0].mxu0
  %v1001 = vadd.f32 0.0, %v1000
  %v1002 = vpop.f32.mrb[0].mxu0
  %1003 = vdwg.mxu0
  %v1005 = vsel %vm734, %v915, 0
  %v1008 = vsel %vm734, %v916, 0
  %v1011 = vsel %vm734, %v917, 0
  %v1014 = vsel %vm734, %v918, 0
  %1016 = vmatprep.subr.bf16.mxu0 0
  %1017 = vmatpush1.bf16.msra.mxu0 %v923
  %1018 = vmatprep.subr.bf16.mxu0 0
  %1019 = vmatpush1.bf16.msra.mxu0 %v924
  %1020 = vmatprep.subr.bf16.mxu0 0
  %1021 = vmatpush1.bf16.msra.mxu0 %v925
  %1022 = vmatprep.subr.bf16.mxu0 0
  %1023 = vmatpush1.bf16.msra.mxu0 %v926
  %1024 = vmatprep.subr.bf16.mxu0 0
  %1025 = vmatpush1.bf16.msra.mxu0 0
  %1026 = vmatprep.subr.bf16.mxu0 0
  %1027 = vmatpush1.bf16.msra.mxu0 0
  %1028 = vmatprep.subr.bf16.mxu0 0
  %1029 = vmatpush1.bf16.msra.mxu0 0
  %1030 = vmatprep.subr.bf16.mxu0 0
  %1031 = vmatpush1.bf16.msra.mxu0 0
  %1032 = vmatprep.subr.bf16.mxu0 0
  %1033 = vmatpush1.bf16.msra.mxu0 0
  %1034 = vmatprep.subr.bf16.mxu0 0
  %1035 = vmatpush1.bf16.msra.mxu0 0
  %1036 = vmatprep.subr.bf16.mxu0 0
  %1037 = vmatpush1.bf16.msra.mxu0 0
  %1038 = vmatprep.subr.bf16.mxu0 0
  %1039 = vmatpush1.bf16.msra.mxu0 0
  %1040 = vmatprep.subr.bf16.mxu0 0
  %1041 = vmatpush1.bf16.msra.mxu0 0
  %1042 = vmatprep.subr.bf16.mxu0 0
  %1043 = vmatpush1.bf16.msra.mxu0 0
  %1044 = vmatprep.subr.bf16.mxu0 0
  %1045 = vmatpush1.bf16.msra.mxu0 0
  %1046 = vmatprep.subr.bf16.mxu0 0
  %1047 = vmatpush1.bf16.msra.mxu0 0
  %1048 = vmatprep.mubr.bf16.mxu0 0
  %1049 = vmatmul.mubr.bf16.gmra.mrb[0].mxu0 %v1005
  %v1050 = vpop.f32.mrb[0].mxu0
  %v1051 = vadd.f32 0.0, %v1050
  %v1052 = vpop.f32.mrb[0].mxu0
  %v1053 = vpop.f32.mrb[0].mxu0
  %v1054 = vadd.f32 0.0, %v1053
  %v1055 = vpop.f32.mrb[0].mxu0
  %1056 = vmatprep.mubr.bf16.mxu0 0
  %1057 = vmatmul.mubr.bf16.gmra.mrb[0].mxu0 %v1008
  %v1058 = vpop.f32.mrb[0].mxu0
  %v1059 = vadd.f32 0.0, %v1058
  %v1060 = vpop.f32.mrb[0].mxu0
  %v1061 = vpop.f32.mrb[0].mxu0
  %v1062 = vadd.f32 0.0, %v1061
  %v1063 = vpop.f32.mrb[0].mxu0
  %1064 = vmatprep.mubr.bf16.mxu0 0
  %1065 = vmatmul.mubr.bf16.gmra.mrb[0].mxu0 %v1011
  %v1066 = vpop.f32.mrb[0].mxu0
  %v1067 = vadd.f32 0.0, %v1066
  %v1068 = vpop.f32.mrb[0].mxu0
  %v1069 = vpop.f32.mrb[0].mxu0
  %v1070 = vadd.f32 0.0, %v1069
  %v1071 = vpop.f32.mrb[0].mxu0
  %1072 = vmatprep.mubr.bf16.mxu0 0
  %1073 = vmatmul.mubr.bf16.gmra.mrb[0].mxu0 %v1014
  %v1074 = vpop.f32.mrb[0].mxu0
  %v1075 = vadd.f32 0.0, %v1074
  %v1076 = vpop.f32.mrb[0].mxu0
  %v1077 = vpop.f32.mrb[0].mxu0
  %v1078 = vadd.f32 0.0, %v1077
  %v1079 = vpop.f32.mrb[0].mxu0
  %1080 = vdwg.mxu0
  %v1081 = vpack.c.bf16 %v977, %v974
  %v1082 = vpack.c.bf16 %v985, %v982
  %v1083 = vpack.c.bf16 %v993, %v990
  %v1084 = vpack.c.bf16 %v1001, %v998
  %v1085 = vpack.c.bf16 %v1054, %v1051
  %v1086 = vpack.c.bf16 %v1062, %v1059
  %v1087 = vpack.c.bf16 %v1070, %v1067
  %v1088 = vpack.c.bf16 %v1078, %v1075
  %v1089 = vld [vmem:[%s7] sm:$0xf]
  %s1090 = scalar_lea.vmem %s1, 16
  %v1091 = vld [vmem:[%s1090] sm:$0xf]
  %v1092 = vld [vmem:[%s1090 + $0x4] sm:$0xf]
  %v1093 = vld [vmem:[%s1090 + $0x8] sm:$0xf]
  %v1094 = vld [vmem:[%s1090 + $0xc] sm:$0xf]
  %s1095 = scalar_lea.vmem %s4, 1
  %v1096 = vld [vmem:[%s1095] sm:$0x1]
  %v1098 = vlaneseq
  %v1099 = vshrl.u32 %v1098, 7
  %v1100 = vsub.s32 0, %v1099
  %v1101 = vrot.slane %v1096, %v1100
  %v1107 = vunpack.c.l.b16 %v1091
  %v1108 = vunpack.c.l.b16 %v1092
  %v1109 = vunpack.c.l.b16 %v1093
  %v1110 = vunpack.c.l.b16 %v1094
  %v1111 = vpack.c.b16 %v1108, %v1107
  %v1112 = vpack.c.b16 %v1110, %v1109
  %1115 = vmatprep.subr.bf16.mxu0 0
  %1116 = vmatpush1.bf16.msra.mxu0 %v1111
  %1117 = vmatprep.subr.bf16.mxu0 0
  %1118 = vmatpush1.bf16.msra.mxu0 %v1112
  %1119 = vmatprep.subr.bf16.mxu0 0
  %1120 = vmatpush1.bf16.msra.mxu0 0
  %1121 = vmatprep.subr.bf16.mxu0 0
  %1122 = vmatpush1.bf16.msra.mxu0 0
  %1123 = vmatprep.subr.bf16.mxu0 0
  %1124 = vmatpush1.bf16.msra.mxu0 0
  %1125 = vmatprep.subr.bf16.mxu0 0
  %1126 = vmatpush1.bf16.msra.mxu0 0
  %1127 = vmatprep.subr.bf16.mxu0 0
  %1128 = vmatpush1.bf16.msra.mxu0 0
  %1129 = vmatprep.subr.bf16.mxu0 0
  %1130 = vmatpush1.bf16.msra.mxu0 0
  %1131 = vmatprep.subr.bf16.mxu0 0
  %1132 = vmatpush1.bf16.msra.mxu0 0
  %1133 = vmatprep.subr.bf16.mxu0 0
  %1134 = vmatpush1.bf16.msra.mxu0 0
  %1135 = vmatprep.subr.bf16.mxu0 0
  %1136 = vmatpush1.bf16.msra.mxu0 0
  %1137 = vmatprep.subr.bf16.mxu0 0
  %1138 = vmatpush1.bf16.msra.mxu0 0
  %1139 = vmatprep.subr.bf16.mxu0 0
  %1140 = vmatpush1.bf16.msra.mxu0 0
  %1141 = vmatprep.subr.bf16.mxu0 0
  %1142 = vmatpush1.bf16.msra.mxu0 0
  %1143 = vmatprep.subr.bf16.mxu0 0
  %1144 = vmatpush1.bf16.msra.mxu0 0
  %1145 = vmatprep.subr.bf16.mxu0 0
  %1146 = vmatpush1.bf16.msra.mxu0 0
  %1147 = vmatprep.mubr.bf16.mxu0 0
  %1148 = vmatmul.mubr.bf16.gmra.mrb[0].mxu0 %v163
  %v1149 = vpop.f32.mrb[0].mxu0
  %v1150 = vadd.f32 %v1101, %v1149
  %v1151 = vpop.f32.mrb[0].mxu0
  %v1152 = vpop.f32.mrb[0].mxu0
  %v1153 = vadd.f32 %v1101, %v1152
  %v1154 = vpop.f32.mrb[0].mxu0
  %1155 = vmatprep.mubr.bf16.mxu0 0
  %1156 = vmatmul.mubr.bf16.gmra.mrb[0].mxu0 %v166
  %v1157 = vpop.f32.mrb[0].mxu0
  %v1158 = vadd.f32 %v1101, %v1157
  %v1159 = vpop.f32.mrb[0].mxu0
  %v1160 = vpop.f32.mrb[0].mxu0
  %v1161 = vadd.f32 %v1101, %v1160
  %v1162 = vpop.f32.mrb[0].mxu0
  %1163 = vmatprep.mubr.bf16.mxu0 0
  %1164 = vmatmul.mubr.bf16.gmra.mrb[0].mxu0 %v169
  %v1165 = vpop.f32.mrb[0].mxu0
  %v1166 = vadd.f32 %v1101, %v1165
  %v1167 = vpop.f32.mrb[0].mxu0
  %v1168 = vpop.f32.mrb[0].mxu0
  %v1169 = vadd.f32 %v1101, %v1168
  %v1170 = vpop.f32.mrb[0].mxu0
  %1171 = vmatprep.mubr.bf16.mxu0 0
  %1172 = vmatmul.mubr.bf16.gmra.mrb[0].mxu0 %v172
  %v1173 = vpop.f32.mrb[0].mxu0
  %v1174 = vadd.f32 %v1101, %v1173
  %v1175 = vpop.f32.mrb[0].mxu0
  %v1176 = vpop.f32.mrb[0].mxu0
  %v1177 = vadd.f32 %v1101, %v1176
  %v1178 = vpop.f32.mrb[0].mxu0
  %1179 = vmatprep.mubr.bf16.mxu0 0
  %1180 = vmatmul.mubr.bf16.gmra.mrb[0].mxu0 %v175
  %v1181 = vpop.f32.mrb[0].mxu0
  %v1182 = vadd.f32 %v1101, %v1181
  %v1183 = vpop.f32.mrb[0].mxu0
  %v1184 = vpop.f32.mrb[0].mxu0
  %v1185 = vadd.f32 %v1101, %v1184
  %v1186 = vpop.f32.mrb[0].mxu0
  %1187 = vmatprep.mubr.bf16.mxu0 0
  %1188 = vmatmul.mubr.bf16.gmra.mrb[0].mxu0 %v178
  %v1189 = vpop.f32.mrb[0].mxu0
  %v1190 = vadd.f32 %v1101, %v1189
  %v1191 = vpop.f32.mrb[0].mxu0
  %v1192 = vpop.f32.mrb[0].mxu0
  %v1193 = vadd.f32 %v1101, %v1192
  %v1194 = vpop.f32.mrb[0].mxu0
  %1195 = vmatprep.mubr.bf16.mxu0 0
  %1196 = vmatmul.mubr.bf16.gmra.mrb[0].mxu0 %v181
  %v1197 = vpop.f32.mrb[0].mxu0
  %v1198 = vadd.f32 %v1101, %v1197
  %v1199 = vpop.f32.mrb[0].mxu0
  %v1200 = vpop.f32.mrb[0].mxu0
  %v1201 = vadd.f32 %v1101, %v1200
  %v1202 = vpop.f32.mrb[0].mxu0
  %1203 = vmatprep.mubr.bf16.mxu0 0
  %1204 = vmatmul.mubr.bf16.gmra.mrb[0].mxu0 %v184
  %v1205 = vpop.f32.mrb[0].mxu0
  %v1206 = vadd.f32 %v1101, %v1205
  %v1207 = vpop.f32.mrb[0].mxu0
  %v1208 = vpop.f32.mrb[0].mxu0
  %v1209 = vadd.f32 %v1101, %v1208
  %v1210 = vpop.f32.mrb[0].mxu0
  %1211 = vdwg.mxu0
  %s1212 = scalar_lea.vmem %s2, 16
  %v1213 = vld [vmem:[%s1212] sm:$0xf]
  %v1214 = vld [vmem:[%s1212 + $0x4] sm:$0xf]
  %v1215 = vld [vmem:[%s1212 + $0x8] sm:$0xf]
  %v1216 = vld [vmem:[%s1212 + $0xc] sm:$0xf]
  %s1217 = scalar_lea.vmem %s5, 1
  %v1218 = vld [vmem:[%s1217] sm:$0x1]
  %v1220 = vlaneseq
  %v1221 = vshrl.u32 %v1220, 7
  %v1222 = vsub.s32 0, %v1221
  %v1223 = vrot.slane %v1218, %v1222
  %v1229 = vunpack.c.l.b16 %v1213
  %v1230 = vunpack.c.l.b16 %v1214
  %v1231 = vunpack.c.l.b16 %v1215
  %v1232 = vunpack.c.l.b16 %v1216
  %v1233 = vpack.c.b16 %v1230, %v1229
  %v1234 = vpack.c.b16 %v1232, %v1231
  %1237 = vmatprep.subr.bf16.mxu0 0
  %1238 = vmatpush1.bf16.msra.mxu0 %v1233
  %1239 = vmatprep.subr.bf16.mxu0 0
  %1240 = vmatpush1.bf16.msra.mxu0 %v1234
  %1241 = vmatprep.subr.bf16.mxu0 0
  %1242 = vmatpush1.bf16.msra.mxu0 0
  %1243 = vmatprep.subr.bf16.mxu0 0
  %1244 = vmatpush1.bf16.msra.mxu0 0
  %1245 = vmatprep.subr.bf16.mxu0 0
  %1246 = vmatpush1.bf16.msra.mxu0 0
  %1247 = vmatprep.subr.bf16.mxu0 0
  %1248 = vmatpush1.bf16.msra.mxu0 0
  %1249 = vmatprep.subr.bf16.mxu0 0
  %1250 = vmatpush1.bf16.msra.mxu0 0
  %1251 = vmatprep.subr.bf16.mxu0 0
  %1252 = vmatpush1.bf16.msra.mxu0 0
  %1253 = vmatprep.subr.bf16.mxu0 0
  %1254 = vmatpush1.bf16.msra.mxu0 0
  %1255 = vmatprep.subr.bf16.mxu0 0
  %1256 = vmatpush1.bf16.msra.mxu0 0
  %1257 = vmatprep.subr.bf16.mxu0 0
  %1258 = vmatpush1.bf16.msra.mxu0 0
  %1259 = vmatprep.subr.bf16.mxu0 0
  %1260 = vmatpush1.bf16.msra.mxu0 0
  %1261 = vmatprep.subr.bf16.mxu0 0
  %1262 = vmatpush1.bf16.msra.mxu0 0
  %1263 = vmatprep.subr.bf16.mxu0 0
  %1264 = vmatpush1.bf16.msra.mxu0 0
  %1265 = vmatprep.subr.bf16.mxu0 0
  %1266 = vmatpush1.bf16.msra.mxu0 0
  %1267 = vmatprep.subr.bf16.mxu0 0
  %1268 = vmatpush1.bf16.msra.mxu0 0
  %1269 = vmatprep.mubr.bf16.mxu0 0
  %1270 = vmatmul.mubr.bf16.gmra.mrb[0].mxu0 %v163
  %v1271 = vpop.f32.mrb[0].mxu0
  %v1272 = vadd.f32 %v1223, %v1271
  %v1273 = vpop.f32.mrb[0].mxu0
  %v1274 = vpop.f32.mrb[0].mxu0
  %v1275 = vadd.f32 %v1223, %v1274
  %v1276 = vpop.f32.mrb[0].mxu0
  %1277 = vmatprep.mubr.bf16.mxu0 0
  %1278 = vmatmul.mubr.bf16.gmra.mrb[0].mxu0 %v166
  %v1279 = vpop.f32.mrb[0].mxu0
  %v1280 = vadd.f32 %v1223, %v1279
  %v1281 = vpop.f32.mrb[0].mxu0
  %v1282 = vpop.f32.mrb[0].mxu0
  %v1283 = vadd.f32 %v1223, %v1282
  %v1284 = vpop.f32.mrb[0].mxu0
  %1285 = vmatprep.mubr.bf16.mxu0 0
  %1286 = vmatmul.mubr.bf16.gmra.mrb[0].mxu0 %v169
  %v1287 = vpop.f32.mrb[0].mxu0
  %v1288 = vadd.f32 %v1223, %v1287
  %v1289 = vpop.f32.mrb[0].mxu0
  %v1290 = vpop.f32.mrb[0].mxu0
  %v1291 = vadd.f32 %v1223, %v1290
  %v1292 = vpop.f32.mrb[0].mxu0
  %1293 = vmatprep.mubr.bf16.mxu0 0
  %1294 = vmatmul.mubr.bf16.gmra.mrb[0].mxu0 %v172
  %v1295 = vpop.f32.mrb[0].mxu0
  %v1296 = vadd.f32 %v1223, %v1295
  %v1297 = vpop.f32.mrb[0].mxu0
  %v1298 = vpop.f32.mrb[0].mxu0
  %v1299 = vadd.f32 %v1223, %v1298
  %v1300 = vpop.f32.mrb[0].mxu0
  %1301 = vmatprep.mubr.bf16.mxu0 0
  %1302 = vmatmul.mubr.bf16.gmra.mrb[0].mxu0 %v175
  %v1303 = vpop.f32.mrb[0].mxu0
  %v1304 = vadd.f32 %v1223, %v1303
  %v1305 = vpop.f32.mrb[0].mxu0
  %v1306 = vpop.f32.mrb[0].mxu0
  %v1307 = vadd.f32 %v1223, %v1306
  %v1308 = vpop.f32.mrb[0].mxu0
  %1309 = vmatprep.mubr.bf16.mxu0 0
  %1310 = vmatmul.mubr.bf16.gmra.mrb[0].mxu0 %v178
  %v1311 = vpop.f32.mrb[0].mxu0
  %v1312 = vadd.f32 %v1223, %v1311
  %v1313 = vpop.f32.mrb[0].mxu0
  %v1314 = vpop.f32.mrb[0].mxu0
  %v1315 = vadd.f32 %v1223, %v1314
  %v1316 = vpop.f32.mrb[0].mxu0
  %1317 = vmatprep.mubr.bf16.mxu0 0
  %1318 = vmatmul.mubr.bf16.gmra.mrb[0].mxu0 %v181
  %v1319 = vpop.f32.mrb[0].mxu0
  %v1320 = vadd.f32 %v1223, %v1319
  %v1321 = vpop.f32.mrb[0].mxu0
  %v1322 = vpop.f32.mrb[0].mxu0
  %v1323 = vadd.f32 %v1223, %v1322
  %v1324 = vpop.f32.mrb[0].mxu0
  %1325 = vmatprep.mubr.bf16.mxu0 0
  %1326 = vmatmul.mubr.bf16.gmra.mrb[0].mxu0 %v184
  %v1327 = vpop.f32.mrb[0].mxu0
  %v1328 = vadd.f32 %v1223, %v1327
  %v1329 = vpop.f32.mrb[0].mxu0
  %v1330 = vpop.f32.mrb[0].mxu0
  %v1331 = vadd.f32 %v1223, %v1330
  %v1332 = vpop.f32.mrb[0].mxu0
  %1333 = vdwg.mxu0
  %s1334 = scalar_lea.vmem %s3, 16
  %v1335 = vld [vmem:[%s1334] sm:$0xf]
  %v1336 = vld [vmem:[%s1334 + $0x4] sm:$0xf]
  %v1337 = vld [vmem:[%s1334 + $0x8] sm:$0xf]
  %v1338 = vld [vmem:[%s1334 + $0xc] sm:$0xf]
  %s1339 = scalar_lea.vmem %s6, 1
  %v1340 = vld [vmem:[%s1339] sm:$0x1]
  %v1342 = vlaneseq
  %v1343 = vshrl.u32 %v1342, 7
  %v1344 = vsub.s32 0, %v1343
  %v1345 = vrot.slane %v1340, %v1344
  %v1351 = vunpack.c.l.b16 %v1335
  %v1352 = vunpack.c.l.b16 %v1336
  %v1353 = vunpack.c.l.b16 %v1337
  %v1354 = vunpack.c.l.b16 %v1338
  %v1355 = vpack.c.b16 %v1352, %v1351
  %v1356 = vpack.c.b16 %v1354, %v1353
  %1359 = vmatprep.subr.bf16.mxu0 0
  %1360 = vmatpush1.bf16.msra.mxu0 %v1355
  %1361 = vmatprep.subr.bf16.mxu0 0
  %1362 = vmatpush1.bf16.msra.mxu0 %v1356
  %1363 = vmatprep.subr.bf16.mxu0 0
  %1364 = vmatpush1.bf16.msra.mxu0 0
  %1365 = vmatprep.subr.bf16.mxu0 0
  %1366 = vmatpush1.bf16.msra.mxu0 0
  %1367 = vmatprep.subr.bf16.mxu0 0
  %1368 = vmatpush1.bf16.msra.mxu0 0
  %1369 = vmatprep.subr.bf16.mxu0 0
  %1370 = vmatpush1.bf16.msra.mxu0 0
  %1371 = vmatprep.subr.bf16.mxu0 0
  %1372 = vmatpush1.bf16.msra.mxu0 0
  %1373 = vmatprep.subr.bf16.mxu0 0
  %1374 = vmatpush1.bf16.msra.mxu0 0
  %1375 = vmatprep.subr.bf16.mxu0 0
  %1376 = vmatpush1.bf16.msra.mxu0 0
  %1377 = vmatprep.subr.bf16.mxu0 0
  %1378 = vmatpush1.bf16.msra.mxu0 0
  %1379 = vmatprep.subr.bf16.mxu0 0
  %1380 = vmatpush1.bf16.msra.mxu0 0
  %1381 = vmatprep.subr.bf16.mxu0 0
  %1382 = vmatpush1.bf16.msra.mxu0 0
  %1383 = vmatprep.subr.bf16.mxu0 0
  %1384 = vmatpush1.bf16.msra.mxu0 0
  %1385 = vmatprep.subr.bf16.mxu0 0
  %1386 = vmatpush1.bf16.msra.mxu0 0
  %1387 = vmatprep.subr.bf16.mxu0 0
  %1388 = vmatpush1.bf16.msra.mxu0 0
  %1389 = vmatprep.subr.bf16.mxu0 0
  %1390 = vmatpush1.bf16.msra.mxu0 0
  %1391 = vmatprep.mubr.bf16.mxu0 0
  %1392 = vmatmul.mubr.bf16.gmra.mrb[0].mxu0 %v163
  %v1393 = vpop.f32.mrb[0].mxu0
  %v1394 = vadd.f32 %v1345, %v1393
  %v1395 = vpop.f32.mrb[0].mxu0
  %v1396 = vpop.f32.mrb[0].mxu0
  %v1397 = vadd.f32 %v1345, %v1396
  %v1398 = vpop.f32.mrb[0].mxu0
  %1399 = vmatprep.mubr.bf16.mxu0 0
  %1400 = vmatmul.mubr.bf16.gmra.mrb[0].mxu0 %v166
  %v1401 = vpop.f32.mrb[0].mxu0
  %v1402 = vadd.f32 %v1345, %v1401
  %v1403 = vpop.f32.mrb[0].mxu0
  %v1404 = vpop.f32.mrb[0].mxu0
  %v1405 = vadd.f32 %v1345, %v1404
  %v1406 = vpop.f32.mrb[0].mxu0
  %1407 = vmatprep.mubr.bf16.mxu0 0
  %1408 = vmatmul.mubr.bf16.gmra.mrb[0].mxu0 %v169
  %v1409 = vpop.f32.mrb[0].mxu0
  %v1410 = vadd.f32 %v1345, %v1409
  %v1411 = vpop.f32.mrb[0].mxu0
  %v1412 = vpop.f32.mrb[0].mxu0
  %v1413 = vadd.f32 %v1345, %v1412
  %v1414 = vpop.f32.mrb[0].mxu0
  %1415 = vmatprep.mubr.bf16.mxu0 0
  %1416 = vmatmul.mubr.bf16.gmra.mrb[0].mxu0 %v172
  %v1417 = vpop.f32.mrb[0].mxu0
  %v1418 = vadd.f32 %v1345, %v1417
  %v1419 = vpop.f32.mrb[0].mxu0
  %v1420 = vpop.f32.mrb[0].mxu0
  %v1421 = vadd.f32 %v1345, %v1420
  %v1422 = vpop.f32.mrb[0].mxu0
  %1423 = vmatprep.mubr.bf16.mxu0 0
  %1424 = vmatmul.mubr.bf16.gmra.mrb[0].mxu0 %v175
  %v1425 = vpop.f32.mrb[0].mxu0
  %v1426 = vadd.f32 %v1345, %v1425
  %v1427 = vpop.f32.mrb[0].mxu0
  %v1428 = vpop.f32.mrb[0].mxu0
  %v1429 = vadd.f32 %v1345, %v1428
  %v1430 = vpop.f32.mrb[0].mxu0
  %1431 = vmatprep.mubr.bf16.mxu0 0
  %1432 = vmatmul.mubr.bf16.gmra.mrb[0].mxu0 %v178
  %v1433 = vpop.f32.mrb[0].mxu0
  %v1434 = vadd.f32 %v1345, %v1433
  %v1435 = vpop.f32.mrb[0].mxu0
  %v1436 = vpop.f32.mrb[0].mxu0
  %v1437 = vadd.f32 %v1345, %v1436
  %v1438 = vpop.f32.mrb[0].mxu0
  %1439 = vmatprep.mubr.bf16.mxu0 0
  %1440 = vmatmul.mubr.bf16.gmra.mrb[0].mxu0 %v181
  %v1441 = vpop.f32.mrb[0].mxu0
  %v1442 = vadd.f32 %v1345, %v1441
  %v1443 = vpop.f32.mrb[0].mxu0
  %v1444 = vpop.f32.mrb[0].mxu0
  %v1445 = vadd.f32 %v1345, %v1444
  %v1446 = vpop.f32.mrb[0].mxu0
  %1447 = vmatprep.mubr.bf16.mxu0 0
  %1448 = vmatmul.mubr.bf16.gmra.mrb[0].mxu0 %v184
  %v1449 = vpop.f32.mrb[0].mxu0
  %v1450 = vadd.f32 %v1345, %v1449
  %v1451 = vpop.f32.mrb[0].mxu0
  %v1452 = vpop.f32.mrb[0].mxu0
  %v1453 = vadd.f32 %v1345, %v1452
  %v1454 = vpop.f32.mrb[0].mxu0
  %1455 = vdwg.mxu0
  %v1456 = vpack.c.bf16 %v1153, %v1150
  %v1457 = vpack.c.bf16 %v1161, %v1158
  %v1458 = vpack.c.bf16 %v1169, %v1166
  %v1459 = vpack.c.bf16 %v1177, %v1174
  %v1460 = vpack.c.bf16 %v1185, %v1182
  %v1461 = vpack.c.bf16 %v1193, %v1190
  %v1462 = vpack.c.bf16 %v1201, %v1198
  %v1463 = vpack.c.bf16 %v1209, %v1206
  %v1464 = vpack.c.bf16 %v1275, %v1272
  %v1465 = vpack.c.bf16 %v1283, %v1280
  %v1466 = vpack.c.bf16 %v1291, %v1288
  %v1467 = vpack.c.bf16 %v1299, %v1296
  %v1468 = vpack.c.bf16 %v1307, %v1304
  %v1469 = vpack.c.bf16 %v1315, %v1312
  %v1470 = vpack.c.bf16 %v1323, %v1320
  %v1471 = vpack.c.bf16 %v1331, %v1328
  %v1473 = vsel %vm539, %v1456, 0
  %v1476 = vsel %vm539, %v1457, 0
  %v1479 = vsel %vm539, %v1458, 0
  %v1482 = vsel %vm539, %v1459, 0
  %v1485 = vsel %vm539, %v1464, 0
  %v1488 = vsel %vm539, %v1465, 0
  %v1491 = vsel %vm539, %v1466, 0
  %v1494 = vsel %vm539, %v1467, 0
  %1496 = vmatprep.subr.bf16.mxu0 0
  %1497 = vmatpush1.bf16.xpose.msra.mxu0 %v1485
  %1498 = vmatprep.subr.bf16.mxu0 0
  %1499 = vmatpush1.bf16.xpose.msra.mxu0 %v1488
  %1500 = vmatprep.subr.bf16.mxu0 0
  %1501 = vmatpush1.bf16.xpose.msra.mxu0 %v1491
  %1502 = vmatprep.subr.bf16.mxu0 0
  %1503 = vmatpush1.bf16.xpose.msra.mxu0 %v1494
  %1504 = vmatprep.subr.bf16.mxu0 0
  %1505 = vmatpush1.bf16.xpose.msra.mxu0 0
  %1506 = vmatprep.subr.bf16.mxu0 0
  %1507 = vmatpush1.bf16.xpose.msra.mxu0 0
  %1508 = vmatprep.subr.bf16.mxu0 0
  %1509 = vmatpush1.bf16.xpose.msra.mxu0 0
  %1510 = vmatprep.subr.bf16.mxu0 0
  %1511 = vmatpush1.bf16.xpose.msra.mxu0 0
  %1512 = vmatprep.subr.bf16.mxu0 0
  %1513 = vmatpush1.bf16.xpose.msra.mxu0 0
  %1514 = vmatprep.subr.bf16.mxu0 0
  %1515 = vmatpush1.bf16.xpose.msra.mxu0 0
  %1516 = vmatprep.subr.bf16.mxu0 0
  %1517 = vmatpush1.bf16.xpose.msra.mxu0 0
  %1518 = vmatprep.subr.bf16.mxu0 0
  %1519 = vmatpush1.bf16.xpose.msra.mxu0 0
  %1520 = vmatprep.subr.bf16.mxu0 0
  %1521 = vmatpush1.bf16.xpose.msra.mxu0 0
  %1522 = vmatprep.subr.bf16.mxu0 0
  %1523 = vmatpush1.bf16.xpose.msra.mxu0 0
  %1524 = vmatprep.subr.bf16.mxu0 0
  %1525 = vmatpush1.bf16.xpose.msra.mxu0 0
  %1526 = vmatprep.subr.bf16.mxu0 0
  %1527 = vmatpush1.bf16.xpose.msra.mxu0 0
  %1528 = vmatprep.mubr.bf16.mxu0 0
  %1529 = vmatmul.mubr.bf16.gmra.mrb[0].mxu0 %v1473
  %v1530 = vpop.f32.mrb[0].mxu0
  %v1531 = vadd.f32 0.0, %v1530
  %v1532 = vpop.f32.mrb[0].mxu0
  %v1533 = vpop.f32.mrb[0].mxu0
  %v1534 = vadd.f32 0.0, %v1533
  %v1535 = vpop.f32.mrb[0].mxu0
  %1536 = vmatprep.mubr.bf16.mxu0 0
  %1537 = vmatmul.mubr.bf16.gmra.mrb[0].mxu0 %v1476
  %v1538 = vpop.f32.mrb[0].mxu0
  %v1539 = vadd.f32 0.0, %v1538
  %v1540 = vpop.f32.mrb[0].mxu0
  %v1541 = vpop.f32.mrb[0].mxu0
  %v1542 = vadd.f32 0.0, %v1541
  %v1543 = vpop.f32.mrb[0].mxu0
  %1544 = vmatprep.mubr.bf16.mxu0 0
  %1545 = vmatmul.mubr.bf16.gmra.mrb[0].mxu0 %v1479
  %v1546 = vpop.f32.mrb[0].mxu0
  %v1547 = vadd.f32 0.0, %v1546
  %v1548 = vpop.f32.mrb[0].mxu0
  %v1549 = vpop.f32.mrb[0].mxu0
  %v1550 = vadd.f32 0.0, %v1549
  %v1551 = vpop.f32.mrb[0].mxu0
  %1552 = vmatprep.mubr.bf16.mxu0 0
  %1553 = vmatmul.mubr.bf16.gmra.mrb[0].mxu0 %v1482
  %v1554 = vpop.f32.mrb[0].mxu0
  %v1555 = vadd.f32 0.0, %v1554
  %v1556 = vpop.f32.mrb[0].mxu0
  %v1557 = vpop.f32.mrb[0].mxu0
  %v1558 = vadd.f32 0.0, %v1557
  %v1559 = vpop.f32.mrb[0].mxu0
  %1560 = vdwg.mxu0
  %v1562 = vsel %vm539, %v1460, 0
  %v1565 = vsel %vm539, %v1461, 0
  %v1568 = vsel %vm539, %v1462, 0
  %v1571 = vsel %vm539, %v1463, 0
  %v1574 = vsel %vm539, %v1468, 0
  %v1577 = vsel %vm539, %v1469, 0
  %v1580 = vsel %vm539, %v1470, 0
  %v1583 = vsel %vm539, %v1471, 0
  %1585 = vmatprep.subr.bf16.mxu0 0
  %1586 = vmatpush1.bf16.xpose.msra.mxu0 %v1574
  %1587 = vmatprep.subr.bf16.mxu0 0
  %1588 = vmatpush1.bf16.xpose.msra.mxu0 %v1577
  %1589 = vmatprep.subr.bf16.mxu0 0
  %1590 = vmatpush1.bf16.xpose.msra.mxu0 %v1580
  %1591 = vmatprep.subr.bf16.mxu0 0
  %1592 = vmatpush1.bf16.xpose.msra.mxu0 %v1583
  %1593 = vmatprep.subr.bf16.mxu0 0
  %1594 = vmatpush1.bf16.xpose.msra.mxu0 0
  %1595 = vmatprep.subr.bf16.mxu0 0
  %1596 = vmatpush1.bf16.xpose.msra.mxu0 0
  %1597 = vmatprep.subr.bf16.mxu0 0
  %1598 = vmatpush1.bf16.xpose.msra.mxu0 0
  %1599 = vmatprep.subr.bf16.mxu0 0
  %1600 = vmatpush1.bf16.xpose.msra.mxu0 0
  %1601 = vmatprep.subr.bf16.mxu0 0
  %1602 = vmatpush1.bf16.xpose.msra.mxu0 0
  %1603 = vmatprep.subr.bf16.mxu0 0
  %1604 = vmatpush1.bf16.xpose.msra.mxu0 0
  %1605 = vmatprep.subr.bf16.mxu0 0
  %1606 = vmatpush1.bf16.xpose.msra.mxu0 0
  %1607 = vmatprep.subr.bf16.mxu0 0
  %1608 = vmatpush1.bf16.xpose.msra.mxu0 0
  %1609 = vmatprep.subr.bf16.mxu0 0
  %1610 = vmatpush1.bf16.xpose.msra.mxu0 0
  %1611 = vmatprep.subr.bf16.mxu0 0
  %1612 = vmatpush1.bf16.xpose.msra.mxu0 0
  %1613 = vmatprep.subr.bf16.mxu0 0
  %1614 = vmatpush1.bf16.xpose.msra.mxu0 0
  %1615 = vmatprep.subr.bf16.mxu0 0
  %1616 = vmatpush1.bf16.xpose.msra.mxu0 0
  %1617 = vmatprep.mubr.bf16.mxu0 0
  %1618 = vmatmul.mubr.bf16.gmra.mrb[0].mxu0 %v1562
  %v1619 = vpop.f32.mrb[0].mxu0
  %v1620 = vadd.f32 0.0, %v1619
  %v1621 = vpop.f32.mrb[0].mxu0
  %v1622 = vpop.f32.mrb[0].mxu0
  %v1623 = vadd.f32 0.0, %v1622
  %v1624 = vpop.f32.mrb[0].mxu0
  %1625 = vmatprep.mubr.bf16.mxu0 0
  %1626 = vmatmul.mubr.bf16.gmra.mrb[0].mxu0 %v1565
  %v1627 = vpop.f32.mrb[0].mxu0
  %v1628 = vadd.f32 0.0, %v1627
  %v1629 = vpop.f32.mrb[0].mxu0
  %v1630 = vpop.f32.mrb[0].mxu0
  %v1631 = vadd.f32 0.0, %v1630
  %v1632 = vpop.f32.mrb[0].mxu0
  %1633 = vmatprep.mubr.bf16.mxu0 0
  %1634 = vmatmul.mubr.bf16.gmra.mrb[0].mxu0 %v1568
  %v1635 = vpop.f32.mrb[0].mxu0
  %v1636 = vadd.f32 0.0, %v1635
  %v1637 = vpop.f32.mrb[0].mxu0
  %v1638 = vpop.f32.mrb[0].mxu0
  %v1639 = vadd.f32 0.0, %v1638
  %v1640 = vpop.f32.mrb[0].mxu0
  %1641 = vmatprep.mubr.bf16.mxu0 0
  %1642 = vmatmul.mubr.bf16.gmra.mrb[0].mxu0 %v1571
  %v1643 = vpop.f32.mrb[0].mxu0
  %v1644 = vadd.f32 0.0, %v1643
  %v1645 = vpop.f32.mrb[0].mxu0
  %v1646 = vpop.f32.mrb[0].mxu0
  %v1647 = vadd.f32 0.0, %v1646
  %v1648 = vpop.f32.mrb[0].mxu0
  %1649 = vdwg.mxu0
  %v1650 = vmul.f32 %v1531, 0.35355338
  %v1651 = vmul.f32 %v1534, 0.35355338
  %v1652 = vmul.f32 %v1539, 0.35355338
  %v1653 = vmul.f32 %v1542, 0.35355338
  %v1654 = vmul.f32 %v1547, 0.35355338
  %v1655 = vmul.f32 %v1550, 0.35355338
  %v1656 = vmul.f32 %v1555, 0.35355338
  %v1657 = vmul.f32 %v1558, 0.35355338
  %v1658 = vmul.f32 %v1620, 0.35355338
  %v1659 = vmul.f32 %v1623, 0.35355338
  %v1660 = vmul.f32 %v1628, 0.35355338
  %v1661 = vmul.f32 %v1631, 0.35355338
  %v1662 = vmul.f32 %v1636, 0.35355338
  %v1663 = vmul.f32 %v1639, 0.35355338
  %v1664 = vmul.f32 %v1644, 0.35355338
  %v1665 = vmul.f32 %v1647, 0.35355338
  %v1666 = vsel %vm734, %v1650, -inf
  %1667 = vmax.xlane.f32.xlu0 %v1666
  %v1668 = vpop.xlane.xlu0 %1667
  %v1669 = vsel %vm734, %v1651, -inf
  %1670 = vmax.xlane.f32.xlu0 %v1669
  %v1671 = vpop.xlane.xlu0 %1670
  %v1672 = vsel %vm734, %v1652, -inf
  %1673 = vmax.xlane.f32.xlu0 %v1672
  %v1674 = vpop.xlane.xlu0 %1673
  %v1675 = vsel %vm734, %v1653, -inf
  %1676 = vmax.xlane.f32.xlu0 %v1675
  %v1677 = vpop.xlane.xlu0 %1676
  %v1678 = vsel %vm734, %v1654, -inf
  %1679 = vmax.xlane.f32.xlu0 %v1678
  %v1680 = vpop.xlane.xlu0 %1679
  %v1681 = vsel %vm734, %v1655, -inf
  %1682 = vmax.xlane.f32.xlu0 %v1681
  %v1683 = vpop.xlane.xlu0 %1682
  %v1684 = vsel %vm734, %v1656, -inf
  %1685 = vmax.xlane.f32.xlu0 %v1684
  %v1686 = vpop.xlane.xlu0 %1685
  %v1687 = vsel %vm734, %v1657, -inf
  %1688 = vmax.xlane.f32.xlu0 %v1687
  %v1689 = vpop.xlane.xlu0 %1688
  %v1690 = vsel %vm734, %v1658, -inf
  %1691 = vmax.xlane.f32.xlu0 %v1690
  %v1692 = vpop.xlane.xlu0 %1691
  %v1693 = vsel %vm734, %v1659, -inf
  %1694 = vmax.xlane.f32.xlu0 %v1693
  %v1695 = vpop.xlane.xlu0 %1694
  %v1696 = vsel %vm734, %v1660, -inf
  %1697 = vmax.xlane.f32.xlu0 %v1696
  %v1698 = vpop.xlane.xlu0 %1697
  %v1699 = vsel %vm734, %v1661, -inf
  %1700 = vmax.xlane.f32.xlu0 %v1699
  %v1701 = vpop.xlane.xlu0 %1700
  %v1702 = vsel %vm734, %v1662, -inf
  %1703 = vmax.xlane.f32.xlu0 %v1702
  %v1704 = vpop.xlane.xlu0 %1703
  %v1705 = vsel %vm734, %v1663, -inf
  %1706 = vmax.xlane.f32.xlu0 %v1705
  %v1707 = vpop.xlane.xlu0 %1706
  %v1708 = vsel %vm734, %v1664, -inf
  %1709 = vmax.xlane.f32.xlu0 %v1708
  %v1710 = vpop.xlane.xlu0 %1709
  %v1711 = vsel %vm734, %v1665, -inf
  %1712 = vmax.xlane.f32.xlu0 %v1711
  %v1713 = vpop.xlane.xlu0 %1712
  %v1714 = vsub.f32 %v1650, %v1668
  %v1715 = vsub.f32 %v1651, %v1671
  %v1716 = vsub.f32 %v1652, %v1674
  %v1717 = vsub.f32 %v1653, %v1677
  %v1718 = vsub.f32 %v1654, %v1680
  %v1719 = vsub.f32 %v1655, %v1683
  %v1720 = vsub.f32 %v1656, %v1686
  %v1721 = vsub.f32 %v1657, %v1689
  %v1722 = vsub.f32 %v1658, %v1692
  %v1723 = vsub.f32 %v1659, %v1695
  %v1724 = vsub.f32 %v1660, %v1698
  %v1725 = vsub.f32 %v1661, %v1701
  %v1726 = vsub.f32 %v1662, %v1704
  %v1727 = vsub.f32 %v1663, %v1707
  %v1728 = vsub.f32 %v1664, %v1710
  %v1729 = vsub.f32 %v1665, %v1713
  %v1730 = vmul.f32 %v1714, 1.442695
  %v1731 = vpow.pop %v1730
  %v1732 = vmul.f32 %v1715, 1.442695
  %v1733 = vpow.pop %v1732
  %v1734 = vmul.f32 %v1716, 1.442695
  %v1735 = vpow.pop %v1734
  %v1736 = vmul.f32 %v1717, 1.442695
  %v1737 = vpow.pop %v1736
  %v1738 = vmul.f32 %v1718, 1.442695
  %v1739 = vpow.pop %v1738
  %v1740 = vmul.f32 %v1719, 1.442695
  %v1741 = vpow.pop %v1740
  %v1742 = vmul.f32 %v1720, 1.442695
  %v1743 = vpow.pop %v1742
  %v1744 = vmul.f32 %v1721, 1.442695
  %v1745 = vpow.pop %v1744
  %v1746 = vmul.f32 %v1722, 1.442695
  %v1747 = vpow.pop %v1746
  %v1748 = vmul.f32 %v1723, 1.442695
  %v1749 = vpow.pop %v1748
  %v1750 = vmul.f32 %v1724, 1.442695
  %v1751 = vpow.pop %v1750
  %v1752 = vmul.f32 %v1725, 1.442695
  %v1753 = vpow.pop %v1752
  %v1754 = vmul.f32 %v1726, 1.442695
  %v1755 = vpow.pop %v1754
  %v1756 = vmul.f32 %v1727, 1.442695
  %v1757 = vpow.pop %v1756
  %v1758 = vmul.f32 %v1728, 1.442695
  %v1759 = vpow.pop %v1758
  %v1760 = vmul.f32 %v1729, 1.442695
  %v1761 = vpow.pop %v1760
  %v1762 = vsel %vm734, %v1731, 0.0
  %1763 = vadd.xlane.f32.xlu0 %v1762
  %v1764 = vpop.xlane.xlu0 %1763
  %v1765 = vsel %vm734, %v1733, 0.0
  %1766 = vadd.xlane.f32.xlu0 %v1765
  %v1767 = vpop.xlane.xlu0 %1766
  %v1768 = vsel %vm734, %v1735, 0.0
  %1769 = vadd.xlane.f32.xlu0 %v1768
  %v1770 = vpop.xlane.xlu0 %1769
  %v1771 = vsel %vm734, %v1737, 0.0
  %1772 = vadd.xlane.f32.xlu0 %v1771
  %v1773 = vpop.xlane.xlu0 %1772
  %v1774 = vsel %vm734, %v1739, 0.0
  %1775 = vadd.xlane.f32.xlu0 %v1774
  %v1776 = vpop.xlane.xlu0 %1775
  %v1777 = vsel %vm734, %v1741, 0.0
  %1778 = vadd.xlane.f32.xlu0 %v1777
  %v1779 = vpop.xlane.xlu0 %1778
  %v1780 = vsel %vm734, %v1743, 0.0
  %1781 = vadd.xlane.f32.xlu0 %v1780
  %v1782 = vpop.xlane.xlu0 %1781
  %v1783 = vsel %vm734, %v1745, 0.0
  %1784 = vadd.xlane.f32.xlu0 %v1783
  %v1785 = vpop.xlane.xlu0 %1784
  %v1786 = vsel %vm734, %v1747, 0.0
  %1787 = vadd.xlane.f32.xlu0 %v1786
  %v1788 = vpop.xlane.xlu0 %1787
  %v1789 = vsel %vm734, %v1749, 0.0
  %1790 = vadd.xlane.f32.xlu0 %v1789
  %v1791 = vpop.xlane.xlu0 %1790
  %v1792 = vsel %vm734, %v1751, 0.0
  %1793 = vadd.xlane.f32.xlu0 %v1792
  %v1794 = vpop.xlane.xlu0 %1793
  %v1795 = vsel %vm734, %v1753, 0.0
  %1796 = vadd.xlane.f32.xlu0 %v1795
  %v1797 = vpop.xlane.xlu0 %1796
  %v1798 = vsel %vm734, %v1755, 0.0
  %1799 = vadd.xlane.f32.xlu0 %v1798
  %v1800 = vpop.xlane.xlu0 %1799
  %v1801 = vsel %vm734, %v1757, 0.0
  %1802 = vadd.xlane.f32.xlu0 %v1801
  %v1803 = vpop.xlane.xlu0 %1802
  %v1804 = vsel %vm734, %v1759, 0.0
  %1805 = vadd.xlane.f32.xlu0 %v1804
  %v1806 = vpop.xlane.xlu0 %1805
  %v1807 = vsel %vm734, %v1761, 0.0
  %1808 = vadd.xlane.f32.xlu0 %v1807
  %v1809 = vpop.xlane.xlu0 %1808
  %v1810 = vrcp.pop %v1764
  %v1811 = vrcp.pop %v1767
  %v1812 = vrcp.pop %v1770
  %v1813 = vrcp.pop %v1773
  %v1814 = vrcp.pop %v1776
  %v1815 = vrcp.pop %v1779
  %v1816 = vrcp.pop %v1782
  %v1817 = vrcp.pop %v1785
  %v1818 = vrcp.pop %v1788
  %v1819 = vrcp.pop %v1791
  %v1820 = vrcp.pop %v1794
  %v1821 = vrcp.pop %v1797
  %v1822 = vrcp.pop %v1800
  %v1823 = vrcp.pop %v1803
  %v1824 = vrcp.pop %v1806
  %v1825 = vrcp.pop %v1809
  %v1826 = vmul.f32 %v1731, %v1810
  %v1827 = vmul.f32 %v1733, %v1811
  %v1828 = vmul.f32 %v1735, %v1812
  %v1829 = vmul.f32 %v1737, %v1813
  %v1830 = vmul.f32 %v1739, %v1814
  %v1831 = vmul.f32 %v1741, %v1815
  %v1832 = vmul.f32 %v1743, %v1816
  %v1833 = vmul.f32 %v1745, %v1817
  %v1834 = vmul.f32 %v1747, %v1818
  %v1835 = vmul.f32 %v1749, %v1819
  %v1836 = vmul.f32 %v1751, %v1820
  %v1837 = vmul.f32 %v1753, %v1821
  %v1838 = vmul.f32 %v1755, %v1822
  %v1839 = vmul.f32 %v1757, %v1823
  %v1840 = vmul.f32 %v1759, %v1824
  %v1841 = vmul.f32 %v1761, %v1825
  %v1842 = vpack.c.bf16 %v1827, %v1826
  %v1843 = vpack.c.bf16 %v1829, %v1828
  %v1844 = vpack.c.bf16 %v1831, %v1830
  %v1845 = vpack.c.bf16 %v1833, %v1832
  %v1846 = vpack.c.bf16 %v1835, %v1834
  %v1847 = vpack.c.bf16 %v1837, %v1836
  %v1848 = vpack.c.bf16 %v1839, %v1838
  %v1849 = vpack.c.bf16 %v1841, %v1840
  %v1850 = vpack.c.bf16 %v1397, %v1394
  %v1851 = vpack.c.bf16 %v1405, %v1402
  %v1852 = vpack.c.bf16 %v1413, %v1410
  %v1853 = vpack.c.bf16 %v1421, %v1418
  %v1854 = vpack.c.bf16 %v1429, %v1426
  %v1855 = vpack.c.bf16 %v1437, %v1434
  %v1856 = vpack.c.bf16 %v1445, %v1442
  %v1857 = vpack.c.bf16 %v1453, %v1450
  %v1859 = vsel %vm734, %v1842, 0
  %v1862 = vsel %vm734, %v1843, 0
  %v1865 = vsel %vm734, %v1844, 0
  %v1868 = vsel %vm734, %v1845, 0
  %1870 = vmatprep.subr.bf16.mxu0 0
  %1871 = vmatpush1.bf16.msra.mxu0 %v1850
  %1872 = vmatprep.subr.bf16.mxu0 0
  %1873 = vmatpush1.bf16.msra.mxu0 %v1851
  %1874 = vmatprep.subr.bf16.mxu0 0
  %1875 = vmatpush1.bf16.msra.mxu0 %v1852
  %1876 = vmatprep.subr.bf16.mxu0 0
  %1877 = vmatpush1.bf16.msra.mxu0 %v1853
  %1878 = vmatprep.subr.bf16.mxu0 0
  %1879 = vmatpush1.bf16.msra.mxu0 0
  %1880 = vmatprep.subr.bf16.mxu0 0
  %1881 = vmatpush1.bf16.msra.mxu0 0
  %1882 = vmatprep.subr.bf16.mxu0 0
  %1883 = vmatpush1.bf16.msra.mxu0 0
  %1884 = vmatprep.subr.bf16.mxu0 0
  %1885 = vmatpush1.bf16.msra.mxu0 0
  %1886 = vmatprep.subr.bf16.mxu0 0
  %1887 = vmatpush1.bf16.msra.mxu0 0
  %1888 = vmatprep.subr.bf16.mxu0 0
  %1889 = vmatpush1.bf16.msra.mxu0 0
  %1890 = vmatprep.subr.bf16.mxu0 0
  %1891 = vmatpush1.bf16.msra.mxu0 0
  %1892 = vmatprep.subr.bf16.mxu0 0
  %1893 = vmatpush1.bf16.msra.mxu0 0
  %1894 = vmatprep.subr.bf16.mxu0 0
  %1895 = vmatpush1.bf16.msra.mxu0 0
  %1896 = vmatprep.subr.bf16.mxu0 0
  %1897 = vmatpush1.bf16.msra.mxu0 0
  %1898 = vmatprep.subr.bf16.mxu0 0
  %1899 = vmatpush1.bf16.msra.mxu0 0
  %1900 = vmatprep.subr.bf16.mxu0 0
  %1901 = vmatpush1.bf16.msra.mxu0 0
  %1902 = vmatprep.mubr.bf16.mxu0 0
  %1903 = vmatmul.mubr.bf16.gmra.mrb[0].mxu0 %v1859
  %v1904 = vpop.f32.mrb[0].mxu0
  %v1905 = vadd.f32 0.0, %v1904
  %v1906 = vpop.f32.mrb[0].mxu0
  %v1907 = vpop.f32.mrb[0].mxu0
  %v1908 = vadd.f32 0.0, %v1907
  %v1909 = vpop.f32.mrb[0].mxu0
  %1910 = vmatprep.mubr.bf16.mxu0 0
  %1911 = vmatmul.mubr.bf16.gmra.mrb[0].mxu0 %v1862
  %v1912 = vpop.f32.mrb[0].mxu0
  %v1913 = vadd.f32 0.0, %v1912
  %v1914 = vpop.f32.mrb[0].mxu0
  %v1915 = vpop.f32.mrb[0].mxu0
  %v1916 = vadd.f32 0.0, %v1915
  %v1917 = vpop.f32.mrb[0].mxu0
  %1918 = vmatprep.mubr.bf16.mxu0 0
  %1919 = vmatmul.mubr.bf16.gmra.mrb[0].mxu0 %v1865
  %v1920 = vpop.f32.mrb[0].mxu0
  %v1921 = vadd.f32 0.0, %v1920
  %v1922 = vpop.f32.mrb[0].mxu0
  %v1923 = vpop.f32.mrb[0].mxu0
  %v1924 = vadd.f32 0.0, %v1923
  %v1925 = vpop.f32.mrb[0].mxu0
  %1926 = vmatprep.mubr.bf16.mxu0 0
  %1927 = vmatmul.mubr.bf16.gmra.mrb[0].mxu0 %v1868
  %v1928 = vpop.f32.mrb[0].mxu0
  %v1929 = vadd.f32 0.0, %v1928
  %v1930 = vpop.f32.mrb[0].mxu0
  %v1931 = vpop.f32.mrb[0].mxu0
  %v1932 = vadd.f32 0.0, %v1931
  %v1933 = vpop.f32.mrb[0].mxu0
  %1934 = vdwg.mxu0
  %v1936 = vsel %vm734, %v1846, 0
  %v1939 = vsel %vm734, %v1847, 0
  %v1942 = vsel %vm734, %v1848, 0
  %v1945 = vsel %vm734, %v1849, 0
  %1947 = vmatprep.subr.bf16.mxu0 0
  %1948 = vmatpush1.bf16.msra.mxu0 %v1854
  %1949 = vmatprep.subr.bf16.mxu0 0
  %1950 = vmatpush1.bf16.msra.mxu0 %v1855
  %1951 = vmatprep.subr.bf16.mxu0 0
  %1952 = vmatpush1.bf16.msra.mxu0 %v1856
  %1953 = vmatprep.subr.bf16.mxu0 0
  %1954 = vmatpush1.bf16.msra.mxu0 %v1857
  %1955 = vmatprep.subr.bf16.mxu0 0
  %1956 = vmatpush1.bf16.msra.mxu0 0
  %1957 = vmatprep.subr.bf16.mxu0 0
  %1958 = vmatpush1.bf16.msra.mxu0 0
  %1959 = vmatprep.subr.bf16.mxu0 0
  %1960 = vmatpush1.bf16.msra.mxu0 0
  %1961 = vmatprep.subr.bf16.mxu0 0
  %1962 = vmatpush1.bf16.msra.mxu0 0
  %1963 = vmatprep.subr.bf16.mxu0 0
  %1964 = vmatpush1.bf16.msra.mxu0 0
  %1965 = vmatprep.subr.bf16.mxu0 0
  %1966 = vmatpush1.bf16.msra.mxu0 0
  %1967 = vmatprep.subr.bf16.mxu0 0
  %1968 = vmatpush1.bf16.msra.mxu0 0
  %1969 = vmatprep.subr.bf16.mxu0 0
  %1970 = vmatpush1.bf16.msra.mxu0 0
  %1971 = vmatprep.subr.bf16.mxu0 0
  %1972 = vmatpush1.bf16.msra.mxu0 0
  %1973 = vmatprep.subr.bf16.mxu0 0
  %1974 = vmatpush1.bf16.msra.mxu0 0
  %1975 = vmatprep.subr.bf16.mxu0 0
  %1976 = vmatpush1.bf16.msra.mxu0 0
  %1977 = vmatprep.subr.bf16.mxu0 0
  %1978 = vmatpush1.bf16.msra.mxu0 0
  %1979 = vmatprep.mubr.bf16.mxu0 0
  %1980 = vmatmul.mubr.bf16.gmra.mrb[0].mxu0 %v1936
  %v1981 = vpop.f32.mrb[0].mxu0
  %v1982 = vadd.f32 0.0, %v1981
  %v1983 = vpop.f32.mrb[0].mxu0
  %v1984 = vpop.f32.mrb[0].mxu0
  %v1985 = vadd.f32 0.0, %v1984
  %v1986 = vpop.f32.mrb[0].mxu0
  %1987 = vmatprep.mubr.bf16.mxu0 0
  %1988 = vmatmul.mubr.bf16.gmra.mrb[0].mxu0 %v1939
  %v1989 = vpop.f32.mrb[0].mxu0
  %v1990 = vadd.f32 0.0, %v1989
  %v1991 = vpop.f32.mrb[0].mxu0
  %v1992 = vpop.f32.mrb[0].mxu0
  %v1993 = vadd.f32 0.0, %v1992
  %v1994 = vpop.f32.mrb[0].mxu0
  %1995 = vmatprep.mubr.bf16.mxu0 0
  %1996 = vmatmul.mubr.bf16.gmra.mrb[0].mxu0 %v1942
  %v1997 = vpop.f32.mrb[0].mxu0
  %v1998 = vadd.f32 0.0, %v1997
  %v1999 = vpop.f32.mrb[0].mxu0
  %v2000 = vpop.f32.mrb[0].mxu0
  %v2001 = vadd.f32 0.0, %v2000
  %v2002 = vpop.f32.mrb[0].mxu0
  %2003 = vmatprep.mubr.bf16.mxu0 0
  %2004 = vmatmul.mubr.bf16.gmra.mrb[0].mxu0 %v1945
  %v2005 = vpop.f32.mrb[0].mxu0
  %v2006 = vadd.f32 0.0, %v2005
  %v2007 = vpop.f32.mrb[0].mxu0
  %v2008 = vpop.f32.mrb[0].mxu0
  %v2009 = vadd.f32 0.0, %v2008
  %v2010 = vpop.f32.mrb[0].mxu0
  %2011 = vdwg.mxu0
  %v2012 = vpack.c.bf16 %v1908, %v1905
  %v2013 = vpack.c.bf16 %v1916, %v1913
  %v2014 = vpack.c.bf16 %v1924, %v1921
  %v2015 = vpack.c.bf16 %v1932, %v1929
  %v2016 = vpack.c.bf16 %v1985, %v1982
  %v2017 = vpack.c.bf16 %v1993, %v1990
  %v2018 = vpack.c.bf16 %v2001, %v1998
  %v2019 = vpack.c.bf16 %v2009, %v2006
  %s2020 = scalar_lea.vmem %s7, 4
  %v2021 = vld [vmem:[%s2020] sm:$0xf]
  %v2023 = vsel %vm539, %v2012, 0
  %v2026 = vsel %vm539, %v2013, 0
  %v2029 = vsel %vm539, %v2014, 0
  %v2032 = vsel %vm539, %v2015, 0
  %v2035 = vsel %vm539, %v2016, 0
  %v2038 = vsel %vm539, %v2017, 0
  %v2041 = vsel %vm539, %v2018, 0
  %v2044 = vsel %vm539, %v2019, 0
  %vm2046 = vcmask 1043456
  %v2048 = vsel %vm2046, %v2021, 0
  %2050 = vmatprep.subr.bf16.mxu0 0
  %2051 = vmatpush1.bf16.msra.mxu0 %v2048
  %2052 = vmatprep.subr.bf16.mxu0 0
  %2053 = vmatpush1.bf16.msra.mxu0 0
  %2054 = vmatprep.subr.bf16.mxu0 0
  %2055 = vmatpush1.bf16.msra.mxu0 0
  %2056 = vmatprep.subr.bf16.mxu0 0
  %2057 = vmatpush1.bf16.msra.mxu0 0
  %2058 = vmatprep.subr.bf16.mxu0 0
  %2059 = vmatpush1.bf16.msra.mxu0 0
  %2060 = vmatprep.subr.bf16.mxu0 0
  %2061 = vmatpush1.bf16.msra.mxu0 0
  %2062 = vmatprep.subr.bf16.mxu0 0
  %2063 = vmatpush1.bf16.msra.mxu0 0
  %2064 = vmatprep.subr.bf16.mxu0 0
  %2065 = vmatpush1.bf16.msra.mxu0 0
  %2066 = vmatprep.subr.bf16.mxu0 0
  %2067 = vmatpush1.bf16.msra.mxu0 0
  %2068 = vmatprep.subr.bf16.mxu0 0
  %2069 = vmatpush1.bf16.msra.mxu0 0
  %2070 = vmatprep.subr.bf16.mxu0 0
  %2071 = vmatpush1.bf16.msra.mxu0 0
  %2072 = vmatprep.subr.bf16.mxu0 0
  %2073 = vmatpush1.bf16.msra.mxu0 0
  %2074 = vmatprep.subr.bf16.mxu0 0
  %2075 = vmatpush1.bf16.msra.mxu0 0
  %2076 = vmatprep.subr.bf16.mxu0 0
  %2077 = vmatpush1.bf16.msra.mxu0 0
  %2078 = vmatprep.subr.bf16.mxu0 0
  %2079 = vmatpush1.bf16.msra.mxu0 0
  %2080 = vmatprep.subr.bf16.mxu0 0
  %2081 = vmatpush1.bf16.msra.mxu0 0
  %2082 = vmatprep.mubr.bf16.mxu0 0
  %2083 = vmatmul.mubr.bf16.gmra.mrb[0].mxu0 %v2023
  %v2084 = vpop.f32.mrb[0].mxu0
  %v2085 = vadd.f32 0.0, %v2084
  %v2086 = vpop.f32.mrb[0].mxu0
  %v2087 = vpop.f32.mrb[0].mxu0
  %v2088 = vadd.f32 0.0, %v2087
  %v2089 = vpop.f32.mrb[0].mxu0
  %2090 = vmatprep.mubr.bf16.mxu0 0
  %2091 = vmatmul.mubr.bf16.gmra.mrb[0].mxu0 %v2026
  %v2092 = vpop.f32.mrb[0].mxu0
  %v2093 = vadd.f32 0.0, %v2092
  %v2094 = vpop.f32.mrb[0].mxu0
  %v2095 = vpop.f32.mrb[0].mxu0
  %v2096 = vadd.f32 0.0, %v2095
  %v2097 = vpop.f32.mrb[0].mxu0
  %2098 = vmatprep.mubr.bf16.mxu0 0
  %2099 = vmatmul.mubr.bf16.gmra.mrb[0].mxu0 %v2029
  %v2100 = vpop.f32.mrb[0].mxu0
  %v2101 = vadd.f32 0.0, %v2100
  %v2102 = vpop.f32.mrb[0].mxu0
  %v2103 = vpop.f32.mrb[0].mxu0
  %v2104 = vadd.f32 0.0, %v2103
  %v2105 = vpop.f32.mrb[0].mxu0
  %2106 = vmatprep.mubr.bf16.mxu0 0
  %2107 = vmatmul.mubr.bf16.gmra.mrb[0].mxu0 %v2032
  %v2108 = vpop.f32.mrb[0].mxu0
  %v2109 = vadd.f32 0.0, %v2108
  %v2110 = vpop.f32.mrb[0].mxu0
  %v2111 = vpop.f32.mrb[0].mxu0
  %v2112 = vadd.f32 0.0, %v2111
  %v2113 = vpop.f32.mrb[0].mxu0
  %2114 = vmatprep.mubr.bf16.mxu0 0
  %2115 = vmatmul.mubr.bf16.gmra.mrb[0].mxu0 %v2035
  %v2116 = vpop.f32.mrb[0].mxu0
  %v2117 = vadd.f32 0.0, %v2116
  %v2118 = vpop.f32.mrb[0].mxu0
  %v2119 = vpop.f32.mrb[0].mxu0
  %v2120 = vadd.f32 0.0, %v2119
  %v2121 = vpop.f32.mrb[0].mxu0
  %2122 = vmatprep.mubr.bf16.mxu0 0
  %2123 = vmatmul.mubr.bf16.gmra.mrb[0].mxu0 %v2038
  %v2124 = vpop.f32.mrb[0].mxu0
  %v2125 = vadd.f32 0.0, %v2124
  %v2126 = vpop.f32.mrb[0].mxu0
  %v2127 = vpop.f32.mrb[0].mxu0
  %v2128 = vadd.f32 0.0, %v2127
  %v2129 = vpop.f32.mrb[0].mxu0
  %2130 = vmatprep.mubr.bf16.mxu0 0
  %2131 = vmatmul.mubr.bf16.gmra.mrb[0].mxu0 %v2041
  %v2132 = vpop.f32.mrb[0].mxu0
  %v2133 = vadd.f32 0.0, %v2132
  %v2134 = vpop.f32.mrb[0].mxu0
  %v2135 = vpop.f32.mrb[0].mxu0
  %v2136 = vadd.f32 0.0, %v2135
  %v2137 = vpop.f32.mrb[0].mxu0
  %2138 = vmatprep.mubr.bf16.mxu0 0
  %2139 = vmatmul.mubr.bf16.gmra.mrb[0].mxu0 %v2044
  %v2140 = vpop.f32.mrb[0].mxu0
  %v2141 = vadd.f32 0.0, %v2140
  %v2142 = vpop.f32.mrb[0].mxu0
  %v2143 = vpop.f32.mrb[0].mxu0
  %v2144 = vadd.f32 0.0, %v2143
  %v2145 = vpop.f32.mrb[0].mxu0
  %2146 = vdwg.mxu0
  %v2148 = vsel %vm539, %v1081, 0
  %v2151 = vsel %vm539, %v1082, 0
  %v2154 = vsel %vm539, %v1083, 0
  %v2157 = vsel %vm539, %v1084, 0
  %v2160 = vsel %vm539, %v1085, 0
  %v2163 = vsel %vm539, %v1086, 0
  %v2166 = vsel %vm539, %v1087, 0
  %v2169 = vsel %vm539, %v1088, 0
  %v2172 = vsel %vm2046, %v1089, 0
  %2174 = vmatprep.subr.bf16.mxu0 0
  %2175 = vmatpush1.bf16.msra.mxu0 %v2172
  %2176 = vmatprep.subr.bf16.mxu0 0
  %2177 = vmatpush1.bf16.msra.mxu0 0
  %2178 = vmatprep.subr.bf16.mxu0 0
  %2179 = vmatpush1.bf16.msra.mxu0 0
  %2180 = vmatprep.subr.bf16.mxu0 0
  %2181 = vmatpush1.bf16.msra.mxu0 0
  %2182 = vmatprep.subr.bf16.mxu0 0
  %2183 = vmatpush1.bf16.msra.mxu0 0
  %2184 = vmatprep.subr.bf16.mxu0 0
  %2185 = vmatpush1.bf16.msra.mxu0 0
  %2186 = vmatprep.subr.bf16.mxu0 0
  %2187 = vmatpush1.bf16.msra.mxu0 0
  %2188 = vmatprep.subr.bf16.mxu0 0
  %2189 = vmatpush1.bf16.msra.mxu0 0
  %2190 = vmatprep.subr.bf16.mxu0 0
  %2191 = vmatpush1.bf16.msra.mxu0 0
  %2192 = vmatprep.subr.bf16.mxu0 0
  %2193 = vmatpush1.bf16.msra.mxu0 0
  %2194 = vmatprep.subr.bf16.mxu0 0
  %2195 = vmatpush1.bf16.msra.mxu0 0
  %2196 = vmatprep.subr.bf16.mxu0 0
  %2197 = vmatpush1.bf16.msra.mxu0 0
  %2198 = vmatprep.subr.bf16.mxu0 0
  %2199 = vmatpush1.bf16.msra.mxu0 0
  %2200 = vmatprep.subr.bf16.mxu0 0
  %2201 = vmatpush1.bf16.msra.mxu0 0
  %2202 = vmatprep.subr.bf16.mxu0 0
  %2203 = vmatpush1.bf16.msra.mxu0 0
  %2204 = vmatprep.subr.bf16.mxu0 0
  %2205 = vmatpush1.bf16.msra.mxu0 0
  %2206 = vmatprep.mubr.bf16.mxu0 0
  %2207 = vmatmul.mubr.bf16.gmra.mrb[0].mxu0 %v2148
  %v2208 = vpop.f32.mrb[0].mxu0
  %v2209 = vadd.f32 %v2085, %v2208
  %v2210 = vpop.f32.mrb[0].mxu0
  %v2211 = vpop.f32.mrb[0].mxu0
  %v2212 = vadd.f32 %v2088, %v2211
  %v2213 = vpop.f32.mrb[0].mxu0
  %2214 = vmatprep.mubr.bf16.mxu0 0
  %2215 = vmatmul.mubr.bf16.gmra.mrb[0].mxu0 %v2151
  %v2216 = vpop.f32.mrb[0].mxu0
  %v2217 = vadd.f32 %v2093, %v2216
  %v2218 = vpop.f32.mrb[0].mxu0
  %v2219 = vpop.f32.mrb[0].mxu0
  %v2220 = vadd.f32 %v2096, %v2219
  %v2221 = vpop.f32.mrb[0].mxu0
  %2222 = vmatprep.mubr.bf16.mxu0 0
  %2223 = vmatmul.mubr.bf16.gmra.mrb[0].mxu0 %v2154
  %v2224 = vpop.f32.mrb[0].mxu0
  %v2225 = vadd.f32 %v2101, %v2224
  %v2226 = vpop.f32.mrb[0].mxu0
  %v2227 = vpop.f32.mrb[0].mxu0
  %v2228 = vadd.f32 %v2104, %v2227
  %v2229 = vpop.f32.mrb[0].mxu0
  %2230 = vmatprep.mubr.bf16.mxu0 0
  %2231 = vmatmul.mubr.bf16.gmra.mrb[0].mxu0 %v2157
  %v2232 = vpop.f32.mrb[0].mxu0
  %v2233 = vadd.f32 %v2109, %v2232
  %v2234 = vpop.f32.mrb[0].mxu0
  %v2235 = vpop.f32.mrb[0].mxu0
  %v2236 = vadd.f32 %v2112, %v2235
  %v2237 = vpop.f32.mrb[0].mxu0
  %2238 = vmatprep.mubr.bf16.mxu0 0
  %2239 = vmatmul.mubr.bf16.gmra.mrb[0].mxu0 %v2160
  %v2240 = vpop.f32.mrb[0].mxu0
  %v2241 = vadd.f32 %v2117, %v2240
  %v2242 = vpop.f32.mrb[0].mxu0
  %v2243 = vpop.f32.mrb[0].mxu0
  %v2244 = vadd.f32 %v2120, %v2243
  %v2245 = vpop.f32.mrb[0].mxu0
  %2246 = vmatprep.mubr.bf16.mxu0 0
  %2247 = vmatmul.mubr.bf16.gmra.mrb[0].mxu0 %v2163
  %v2248 = vpop.f32.mrb[0].mxu0
  %v2249 = vadd.f32 %v2125, %v2248
  %v2250 = vpop.f32.mrb[0].mxu0
  %v2251 = vpop.f32.mrb[0].mxu0
  %v2252 = vadd.f32 %v2128, %v2251
  %v2253 = vpop.f32.mrb[0].mxu0
  %2254 = vmatprep.mubr.bf16.mxu0 0
  %2255 = vmatmul.mubr.bf16.gmra.mrb[0].mxu0 %v2166
  %v2256 = vpop.f32.mrb[0].mxu0
  %v2257 = vadd.f32 %v2133, %v2256
  %v2258 = vpop.f32.mrb[0].mxu0
  %v2259 = vpop.f32.mrb[0].mxu0
  %v2260 = vadd.f32 %v2136, %v2259
  %v2261 = vpop.f32.mrb[0].mxu0
  %2262 = vmatprep.mubr.bf16.mxu0 0
  %2263 = vmatmul.mubr.bf16.gmra.mrb[0].mxu0 %v2169
  %v2264 = vpop.f32.mrb[0].mxu0
  %v2265 = vadd.f32 %v2141, %v2264
  %v2266 = vpop.f32.mrb[0].mxu0
  %v2267 = vpop.f32.mrb[0].mxu0
  %v2268 = vadd.f32 %v2144, %v2267
  %v2269 = vpop.f32.mrb[0].mxu0
  %2270 = vdwg.mxu0
  %s2271 = scalar_lea.vmem %s1, 32
  %v2272 = vld [vmem:[%s2271] sm:$0xf]
  %v2273 = vld [vmem:[%s2271 + $0x4] sm:$0xf]
  %v2274 = vld [vmem:[%s2271 + $0x8] sm:$0xf]
  %v2275 = vld [vmem:[%s2271 + $0xc] sm:$0xf]
  %s2276 = scalar_lea.vmem %s4, 2
  %v2277 = vld [vmem:[%s2276] sm:$0x1]
  %v2279 = vlaneseq
  %v2280 = vshrl.u32 %v2279, 7
  %v2281 = vsub.s32 0, %v2280
  %v2282 = vrot.slane %v2277, %v2281
  %v2288 = vunpack.c.l.b16 %v2272
  %v2289 = vunpack.c.l.b16 %v2273
  %v2290 = vunpack.c.l.b16 %v2274
  %v2291 = vunpack.c.l.b16 %v2275
  %v2292 = vpack.c.b16 %v2289, %v2288
  %v2293 = vpack.c.b16 %v2291, %v2290
  %2296 = vmatprep.subr.bf16.mxu0 0
  %2297 = vmatpush1.bf16.msra.mxu0 %v2292
  %2298 = vmatprep.subr.bf16.mxu0 0
  %2299 = vmatpush1.bf16.msra.mxu0 %v2293
  %2300 = vmatprep.subr.bf16.mxu0 0
  %2301 = vmatpush1.bf16.msra.mxu0 0
  %2302 = vmatprep.subr.bf16.mxu0 0
  %2303 = vmatpush1.bf16.msra.mxu0 0
  %2304 = vmatprep.subr.bf16.mxu0 0
  %2305 = vmatpush1.bf16.msra.mxu0 0
  %2306 = vmatprep.subr.bf16.mxu0 0
  %2307 = vmatpush1.bf16.msra.mxu0 0
  %2308 = vmatprep.subr.bf16.mxu0 0
  %2309 = vmatpush1.bf16.msra.mxu0 0
  %2310 = vmatprep.subr.bf16.mxu0 0
  %2311 = vmatpush1.bf16.msra.mxu0 0
  %2312 = vmatprep.subr.bf16.mxu0 0
  %2313 = vmatpush1.bf16.msra.mxu0 0
  %2314 = vmatprep.subr.bf16.mxu0 0
  %2315 = vmatpush1.bf16.msra.mxu0 0
  %2316 = vmatprep.subr.bf16.mxu0 0
  %2317 = vmatpush1.bf16.msra.mxu0 0
  %2318 = vmatprep.subr.bf16.mxu0 0
  %2319 = vmatpush1.bf16.msra.mxu0 0
  %2320 = vmatprep.subr.bf16.mxu0 0
  %2321 = vmatpush1.bf16.msra.mxu0 0
  %2322 = vmatprep.subr.bf16.mxu0 0
  %2323 = vmatpush1.bf16.msra.mxu0 0
  %2324 = vmatprep.subr.bf16.mxu0 0
  %2325 = vmatpush1.bf16.msra.mxu0 0
  %2326 = vmatprep.subr.bf16.mxu0 0
  %2327 = vmatpush1.bf16.msra.mxu0 0
  %2328 = vmatprep.mubr.bf16.mxu0 0
  %2329 = vmatmul.mubr.bf16.gmra.mrb[0].mxu0 %v163
  %v2330 = vpop.f32.mrb[0].mxu0
  %v2331 = vadd.f32 %v2282, %v2330
  %v2332 = vpop.f32.mrb[0].mxu0
  %v2333 = vpop.f32.mrb[0].mxu0
  %v2334 = vadd.f32 %v2282, %v2333
  %v2335 = vpop.f32.mrb[0].mxu0
  %2336 = vmatprep.mubr.bf16.mxu0 0
  %2337 = vmatmul.mubr.bf16.gmra.mrb[0].mxu0 %v166
  %v2338 = vpop.f32.mrb[0].mxu0
  %v2339 = vadd.f32 %v2282, %v2338
  %v2340 = vpop.f32.mrb[0].mxu0
  %v2341 = vpop.f32.mrb[0].mxu0
  %v2342 = vadd.f32 %v2282, %v2341
  %v2343 = vpop.f32.mrb[0].mxu0
  %2344 = vmatprep.mubr.bf16.mxu0 0
  %2345 = vmatmul.mubr.bf16.gmra.mrb[0].mxu0 %v169
  %v2346 = vpop.f32.mrb[0].mxu0
  %v2347 = vadd.f32 %v2282, %v2346
  %v2348 = vpop.f32.mrb[0].mxu0
  %v2349 = vpop.f32.mrb[0].mxu0
  %v2350 = vadd.f32 %v2282, %v2349
  %v2351 = vpop.f32.mrb[0].mxu0
  %2352 = vmatprep.mubr.bf16.mxu0 0
  %2353 = vmatmul.mubr.bf16.gmra.mrb[0].mxu0 %v172
  %v2354 = vpop.f32.mrb[0].mxu0
  %v2355 = vadd.f32 %v2282, %v2354
  %v2356 = vpop.f32.mrb[0].mxu0
  %v2357 = vpop.f32.mrb[0].mxu0
  %v2358 = vadd.f32 %v2282, %v2357
  %v2359 = vpop.f32.mrb[0].mxu0
  %2360 = vmatprep.mubr.bf16.mxu0 0
  %2361 = vmatmul.mubr.bf16.gmra.mrb[0].mxu0 %v175
  %v2362 = vpop.f32.mrb[0].mxu0
  %v2363 = vadd.f32 %v2282, %v2362
  %v2364 = vpop.f32.mrb[0].mxu0
  %v2365 = vpop.f32.mrb[0].mxu0
  %v2366 = vadd.f32 %v2282, %v2365
  %v2367 = vpop.f32.mrb[0].mxu0
  %2368 = vmatprep.mubr.bf16.mxu0 0
  %2369 = vmatmul.mubr.bf16.gmra.mrb[0].mxu0 %v178
  %v2370 = vpop.f32.mrb[0].mxu0
  %v2371 = vadd.f32 %v2282, %v2370
  %v2372 = vpop.f32.mrb[0].mxu0
  %v2373 = vpop.f32.mrb[0].mxu0
  %v2374 = vadd.f32 %v2282, %v2373
  %v2375 = vpop.f32.mrb[0].mxu0
  %2376 = vmatprep.mubr.bf16.mxu0 0
  %2377 = vmatmul.mubr.bf16.gmra.mrb[0].mxu0 %v181
  %v2378 = vpop.f32.mrb[0].mxu0
  %v2379 = vadd.f32 %v2282, %v2378
  %v2380 = vpop.f32.mrb[0].mxu0
  %v2381 = vpop.f32.mrb[0].mxu0
  %v2382 = vadd.f32 %v2282, %v2381
  %v2383 = vpop.f32.mrb[0].mxu0
  %2384 = vmatprep.mubr.bf16.mxu0 0
  %2385 = vmatmul.mubr.bf16.gmra.mrb[0].mxu0 %v184
  %v2386 = vpop.f32.mrb[0].mxu0
  %v2387 = vadd.f32 %v2282, %v2386
  %v2388 = vpop.f32.mrb[0].mxu0
  %v2389 = vpop.f32.mrb[0].mxu0
  %v2390 = vadd.f32 %v2282, %v2389
  %v2391 = vpop.f32.mrb[0].mxu0
  %2392 = vdwg.mxu0
  %s2393 = scalar_lea.vmem %s2, 32
  %v2394 = vld [vmem:[%s2393] sm:$0xf]
  %v2395 = vld [vmem:[%s2393 + $0x4] sm:$0xf]
  %v2396 = vld [vmem:[%s2393 + $0x8] sm:$0xf]
  %v2397 = vld [vmem:[%s2393 + $0xc] sm:$0xf]
  %s2398 = scalar_lea.vmem %s5, 2
  %v2399 = vld [vmem:[%s2398] sm:$0x1]
  %v2401 = vlaneseq
  %v2402 = vshrl.u32 %v2401, 7
  %v2403 = vsub.s32 0, %v2402
  %v2404 = vrot.slane %v2399, %v2403
  %v2410 = vunpack.c.l.b16 %v2394
  %v2411 = vunpack.c.l.b16 %v2395
  %v2412 = vunpack.c.l.b16 %v2396
  %v2413 = vunpack.c.l.b16 %v2397
  %v2414 = vpack.c.b16 %v2411, %v2410
  %v2415 = vpack.c.b16 %v2413, %v2412
  %2418 = vmatprep.subr.bf16.mxu0 0
  %2419 = vmatpush1.bf16.msra.mxu0 %v2414
  %2420 = vmatprep.subr.bf16.mxu0 0
  %2421 = vmatpush1.bf16.msra.mxu0 %v2415
  %2422 = vmatprep.subr.bf16.mxu0 0
  %2423 = vmatpush1.bf16.msra.mxu0 0
  %2424 = vmatprep.subr.bf16.mxu0 0
  %2425 = vmatpush1.bf16.msra.mxu0 0
  %2426 = vmatprep.subr.bf16.mxu0 0
  %2427 = vmatpush1.bf16.msra.mxu0 0
  %2428 = vmatprep.subr.bf16.mxu0 0
  %2429 = vmatpush1.bf16.msra.mxu0 0
  %2430 = vmatprep.subr.bf16.mxu0 0
  %2431 = vmatpush1.bf16.msra.mxu0 0
  %2432 = vmatprep.subr.bf16.mxu0 0
  %2433 = vmatpush1.bf16.msra.mxu0 0
  %2434 = vmatprep.subr.bf16.mxu0 0
  %2435 = vmatpush1.bf16.msra.mxu0 0
  %2436 = vmatprep.subr.bf16.mxu0 0
  %2437 = vmatpush1.bf16.msra.mxu0 0
  %2438 = vmatprep.subr.bf16.mxu0 0
  %2439 = vmatpush1.bf16.msra.mxu0 0
  %2440 = vmatprep.subr.bf16.mxu0 0
  %2441 = vmatpush1.bf16.msra.mxu0 0
  %2442 = vmatprep.subr.bf16.mxu0 0
  %2443 = vmatpush1.bf16.msra.mxu0 0
  %2444 = vmatprep.subr.bf16.mxu0 0
  %2445 = vmatpush1.bf16.msra.mxu0 0
  %2446 = vmatprep.subr.bf16.mxu0 0
  %2447 = vmatpush1.bf16.msra.mxu0 0
  %2448 = vmatprep.subr.bf16.mxu0 0
  %2449 = vmatpush1.bf16.msra.mxu0 0
  %2450 = vmatprep.mubr.bf16.mxu0 0
  %2451 = vmatmul.mubr.bf16.gmra.mrb[0].mxu0 %v163
  %v2452 = vpop.f32.mrb[0].mxu0
  %v2453 = vadd.f32 %v2404, %v2452
  %v2454 = vpop.f32.mrb[0].mxu0
  %v2455 = vpop.f32.mrb[0].mxu0
  %v2456 = vadd.f32 %v2404, %v2455
  %v2457 = vpop.f32.mrb[0].mxu0
  %2458 = vmatprep.mubr.bf16.mxu0 0
  %2459 = vmatmul.mubr.bf16.gmra.mrb[0].mxu0 %v166
  %v2460 = vpop.f32.mrb[0].mxu0
  %v2461 = vadd.f32 %v2404, %v2460
  %v2462 = vpop.f32.mrb[0].mxu0
  %v2463 = vpop.f32.mrb[0].mxu0
  %v2464 = vadd.f32 %v2404, %v2463
  %v2465 = vpop.f32.mrb[0].mxu0
  %2466 = vmatprep.mubr.bf16.mxu0 0
  %2467 = vmatmul.mubr.bf16.gmra.mrb[0].mxu0 %v169
  %v2468 = vpop.f32.mrb[0].mxu0
  %v2469 = vadd.f32 %v2404, %v2468
  %v2470 = vpop.f32.mrb[0].mxu0
  %v2471 = vpop.f32.mrb[0].mxu0
  %v2472 = vadd.f32 %v2404, %v2471
  %v2473 = vpop.f32.mrb[0].mxu0
  %2474 = vmatprep.mubr.bf16.mxu0 0
  %2475 = vmatmul.mubr.bf16.gmra.mrb[0].mxu0 %v172
  %v2476 = vpop.f32.mrb[0].mxu0
  %v2477 = vadd.f32 %v2404, %v2476
  %v2478 = vpop.f32.mrb[0].mxu0
  %v2479 = vpop.f32.mrb[0].mxu0
  %v2480 = vadd.f32 %v2404, %v2479
  %v2481 = vpop.f32.mrb[0].mxu0
  %2482 = vmatprep.mubr.bf16.mxu0 0
  %2483 = vmatmul.mubr.bf16.gmra.mrb[0].mxu0 %v175
  %v2484 = vpop.f32.mrb[0].mxu0
  %v2485 = vadd.f32 %v2404, %v2484
  %v2486 = vpop.f32.mrb[0].mxu0
  %v2487 = vpop.f32.mrb[0].mxu0
  %v2488 = vadd.f32 %v2404, %v2487
  %v2489 = vpop.f32.mrb[0].mxu0
  %2490 = vmatprep.mubr.bf16.mxu0 0
  %2491 = vmatmul.mubr.bf16.gmra.mrb[0].mxu0 %v178
  %v2492 = vpop.f32.mrb[0].mxu0
  %v2493 = vadd.f32 %v2404, %v2492
  %v2494 = vpop.f32.mrb[0].mxu0
  %v2495 = vpop.f32.mrb[0].mxu0
  %v2496 = vadd.f32 %v2404, %v2495
  %v2497 = vpop.f32.mrb[0].mxu0
  %2498 = vmatprep.mubr.bf16.mxu0 0
  %2499 = vmatmul.mubr.bf16.gmra.mrb[0].mxu0 %v181
  %v2500 = vpop.f32.mrb[0].mxu0
  %v2501 = vadd.f32 %v2404, %v2500
  %v2502 = vpop.f32.mrb[0].mxu0
  %v2503 = vpop.f32.mrb[0].mxu0
  %v2504 = vadd.f32 %v2404, %v2503
  %v2505 = vpop.f32.mrb[0].mxu0
  %2506 = vmatprep.mubr.bf16.mxu0 0
  %2507 = vmatmul.mubr.bf16.gmra.mrb[0].mxu0 %v184
  %v2508 = vpop.f32.mrb[0].mxu0
  %v2509 = vadd.f32 %v2404, %v2508
  %v2510 = vpop.f32.mrb[0].mxu0
  %v2511 = vpop.f32.mrb[0].mxu0
  %v2512 = vadd.f32 %v2404, %v2511
  %v2513 = vpop.f32.mrb[0].mxu0
  %2514 = vdwg.mxu0
  %s2515 = scalar_lea.vmem %s3, 32
  %v2516 = vld [vmem:[%s2515] sm:$0xf]
  %v2517 = vld [vmem:[%s2515 + $0x4] sm:$0xf]
  %v2518 = vld [vmem:[%s2515 + $0x8] sm:$0xf]
  %v2519 = vld [vmem:[%s2515 + $0xc] sm:$0xf]
  %s2520 = scalar_lea.vmem %s6, 2
  %v2521 = vld [vmem:[%s2520] sm:$0x1]
  %v2523 = vlaneseq
  %v2524 = vshrl.u32 %v2523, 7
  %v2525 = vsub.s32 0, %v2524
  %v2526 = vrot.slane %v2521, %v2525
  %v2532 = vunpack.c.l.b16 %v2516
  %v2533 = vunpack.c.l.b16 %v2517
  %v2534 = vunpack.c.l.b16 %v2518
  %v2535 = vunpack.c.l.b16 %v2519
  %v2536 = vpack.c.b16 %v2533, %v2532
  %v2537 = vpack.c.b16 %v2535, %v2534
  %2540 = vmatprep.subr.bf16.mxu0 0
  %2541 = vmatpush1.bf16.msra.mxu0 %v2536
  %2542 = vmatprep.subr.bf16.mxu0 0
  %2543 = vmatpush1.bf16.msra.mxu0 %v2537
  %2544 = vmatprep.subr.bf16.mxu0 0
  %2545 = vmatpush1.bf16.msra.mxu0 0
  %2546 = vmatprep.subr.bf16.mxu0 0
  %2547 = vmatpush1.bf16.msra.mxu0 0
  %2548 = vmatprep.subr.bf16.mxu0 0
  %2549 = vmatpush1.bf16.msra.mxu0 0
  %2550 = vmatprep.subr.bf16.mxu0 0
  %2551 = vmatpush1.bf16.msra.mxu0 0
  %2552 = vmatprep.subr.bf16.mxu0 0
  %2553 = vmatpush1.bf16.msra.mxu0 0
  %2554 = vmatprep.subr.bf16.mxu0 0
  %2555 = vmatpush1.bf16.msra.mxu0 0
  %2556 = vmatprep.subr.bf16.mxu0 0
  %2557 = vmatpush1.bf16.msra.mxu0 0
  %2558 = vmatprep.subr.bf16.mxu0 0
  %2559 = vmatpush1.bf16.msra.mxu0 0
  %2560 = vmatprep.subr.bf16.mxu0 0
  %2561 = vmatpush1.bf16.msra.mxu0 0
  %2562 = vmatprep.subr.bf16.mxu0 0
  %2563 = vmatpush1.bf16.msra.mxu0 0
  %2564 = vmatprep.subr.bf16.mxu0 0
  %2565 = vmatpush1.bf16.msra.mxu0 0
  %2566 = vmatprep.subr.bf16.mxu0 0
  %2567 = vmatpush1.bf16.msra.mxu0 0
  %2568 = vmatprep.subr.bf16.mxu0 0
  %2569 = vmatpush1.bf16.msra.mxu0 0
  %2570 = vmatprep.subr.bf16.mxu0 0
  %2571 = vmatpush1.bf16.msra.mxu0 0
  %2572 = vmatprep.mubr.bf16.mxu0 0
  %2573 = vmatmul.mubr.bf16.gmra.mrb[0].mxu0 %v163
  %v2574 = vpop.f32.mrb[0].mxu0
  %v2575 = vadd.f32 %v2526, %v2574
  %v2576 = vpop.f32.mrb[0].mxu0
  %v2577 = vpop.f32.mrb[0].mxu0
  %v2578 = vadd.f32 %v2526, %v2577
  %v2579 = vpop.f32.mrb[0].mxu0
  %2580 = vmatprep.mubr.bf16.mxu0 0
  %2581 = vmatmul.mubr.bf16.gmra.mrb[0].mxu0 %v166
  %v2582 = vpop.f32.mrb[0].mxu0
  %v2583 = vadd.f32 %v2526, %v2582
  %v2584 = vpop.f32.mrb[0].mxu0
  %v2585 = vpop.f32.mrb[0].mxu0
  %v2586 = vadd.f32 %v2526, %v2585
  %v2587 = vpop.f32.mrb[0].mxu0
  %2588 = vmatprep.mubr.bf16.mxu0 0
  %2589 = vmatmul.mubr.bf16.gmra.mrb[0].mxu0 %v169
  %v2590 = vpop.f32.mrb[0].mxu0
  %v2591 = vadd.f32 %v2526, %v2590
  %v2592 = vpop.f32.mrb[0].mxu0
  %v2593 = vpop.f32.mrb[0].mxu0
  %v2594 = vadd.f32 %v2526, %v2593
  %v2595 = vpop.f32.mrb[0].mxu0
  %2596 = vmatprep.mubr.bf16.mxu0 0
  %2597 = vmatmul.mubr.bf16.gmra.mrb[0].mxu0 %v172
  %v2598 = vpop.f32.mrb[0].mxu0
  %v2599 = vadd.f32 %v2526, %v2598
  %v2600 = vpop.f32.mrb[0].mxu0
  %v2601 = vpop.f32.mrb[0].mxu0
  %v2602 = vadd.f32 %v2526, %v2601
  %v2603 = vpop.f32.mrb[0].mxu0
  %2604 = vmatprep.mubr.bf16.mxu0 0
  %2605 = vmatmul.mubr.bf16.gmra.mrb[0].mxu0 %v175
  %v2606 = vpop.f32.mrb[0].mxu0
  %v2607 = vadd.f32 %v2526, %v2606
  %v2608 = vpop.f32.mrb[0].mxu0
  %v2609 = vpop.f32.mrb[0].mxu0
  %v2610 = vadd.f32 %v2526, %v2609
  %v2611 = vpop.f32.mrb[0].mxu0
  %2612 = vmatprep.mubr.bf16.mxu0 0
  %2613 = vmatmul.mubr.bf16.gmra.mrb[0].mxu0 %v178
  %v2614 = vpop.f32.mrb[0].mxu0
  %v2615 = vadd.f32 %v2526, %v2614
  %v2616 = vpop.f32.mrb[0].mxu0
  %v2617 = vpop.f32.mrb[0].mxu0
  %v2618 = vadd.f32 %v2526, %v2617
  %v2619 = vpop.f32.mrb[0].mxu0
  %2620 = vmatprep.mubr.bf16.mxu0 0
  %2621 = vmatmul.mubr.bf16.gmra.mrb[0].mxu0 %v181
  %v2622 = vpop.f32.mrb[0].mxu0
  %v2623 = vadd.f32 %v2526, %v2622
  %v2624 = vpop.f32.mrb[0].mxu0
  %v2625 = vpop.f32.mrb[0].mxu0
  %v2626 = vadd.f32 %v2526, %v2625
  %v2627 = vpop.f32.mrb[0].mxu0
  %2628 = vmatprep.mubr.bf16.mxu0 0
  %2629 = vmatmul.mubr.bf16.gmra.mrb[0].mxu0 %v184
  %v2630 = vpop.f32.mrb[0].mxu0
  %v2631 = vadd.f32 %v2526, %v2630
  %v2632 = vpop.f32.mrb[0].mxu0
  %v2633 = vpop.f32.mrb[0].mxu0
  %v2634 = vadd.f32 %v2526, %v2633
  %v2635 = vpop.f32.mrb[0].mxu0
  %2636 = vdwg.mxu0
  %v2637 = vpack.c.bf16 %v2334, %v2331
  %v2638 = vpack.c.bf16 %v2342, %v2339
  %v2639 = vpack.c.bf16 %v2350, %v2347
  %v2640 = vpack.c.bf16 %v2358, %v2355
  %v2641 = vpack.c.bf16 %v2366, %v2363
  %v2642 = vpack.c.bf16 %v2374, %v2371
  %v2643 = vpack.c.bf16 %v2382, %v2379
  %v2644 = vpack.c.bf16 %v2390, %v2387
  %v2645 = vpack.c.bf16 %v2456, %v2453
  %v2646 = vpack.c.bf16 %v2464, %v2461
  %v2647 = vpack.c.bf16 %v2472, %v2469
  %v2648 = vpack.c.bf16 %v2480, %v2477
  %v2649 = vpack.c.bf16 %v2488, %v2485
  %v2650 = vpack.c.bf16 %v2496, %v2493
  %v2651 = vpack.c.bf16 %v2504, %v2501
  %v2652 = vpack.c.bf16 %v2512, %v2509
  %v2654 = vsel %vm539, %v2637, 0
  %v2657 = vsel %vm539, %v2638, 0
  %v2660 = vsel %vm539, %v2639, 0
  %v2663 = vsel %vm539, %v2640, 0
  %v2666 = vsel %vm539, %v2645, 0
  %v2669 = vsel %vm539, %v2646, 0
  %v2672 = vsel %vm539, %v2647, 0
  %v2675 = vsel %vm539, %v2648, 0
  %2677 = vmatprep.subr.bf16.mxu0 0
  %2678 = vmatpush1.bf16.xpose.msra.mxu0 %v2666
  %2679 = vmatprep.subr.bf16.mxu0 0
  %2680 = vmatpush1.bf16.xpose.msra.mxu0 %v2669
  %2681 = vmatprep.subr.bf16.mxu0 0
  %2682 = vmatpush1.bf16.xpose.msra.mxu0 %v2672
  %2683 = vmatprep.subr.bf16.mxu0 0
  %2684 = vmatpush1.bf16.xpose.msra.mxu0 %v2675
  %2685 = vmatprep.subr.bf16.mxu0 0
  %2686 = vmatpush1.bf16.xpose.msra.mxu0 0
  %2687 = vmatprep.subr.bf16.mxu0 0
  %2688 = vmatpush1.bf16.xpose.msra.mxu0 0
  %2689 = vmatprep.subr.bf16.mxu0 0
  %2690 = vmatpush1.bf16.xpose.msra.mxu0 0
  %2691 = vmatprep.subr.bf16.mxu0 0
  %2692 = vmatpush1.bf16.xpose.msra.mxu0 0
  %2693 = vmatprep.subr.bf16.mxu0 0
  %2694 = vmatpush1.bf16.xpose.msra.mxu0 0
  %2695 = vmatprep.subr.bf16.mxu0 0
  %2696 = vmatpush1.bf16.xpose.msra.mxu0 0
  %2697 = vmatprep.subr.bf16.mxu0 0
  %2698 = vmatpush1.bf16.xpose.msra.mxu0 0
  %2699 = vmatprep.subr.bf16.mxu0 0
  %2700 = vmatpush1.bf16.xpose.msra.mxu0 0
  %2701 = vmatprep.subr.bf16.mxu0 0
  %2702 = vmatpush1.bf16.xpose.msra.mxu0 0
  %2703 = vmatprep.subr.bf16.mxu0 0
  %2704 = vmatpush1.bf16.xpose.msra.mxu0 0
  %2705 = vmatprep.subr.bf16.mxu0 0
  %2706 = vmatpush1.bf16.xpose.msra.mxu0 0
  %2707 = vmatprep.subr.bf16.mxu0 0
  %2708 = vmatpush1.bf16.xpose.msra.mxu0 0
  %2709 = vmatprep.mubr.bf16.mxu0 0
  %2710 = vmatmul.mubr.bf16.gmra.mrb[0].mxu0 %v2654
  %v2711 = vpop.f32.mrb[0].mxu0
  %v2712 = vadd.f32 0.0, %v2711
  %v2713 = vpop.f32.mrb[0].mxu0
  %v2714 = vpop.f32.mrb[0].mxu0
  %v2715 = vadd.f32 0.0, %v2714
  %v2716 = vpop.f32.mrb[0].mxu0
  %2717 = vmatprep.mubr.bf16.mxu0 0
  %2718 = vmatmul.mubr.bf16.gmra.mrb[0].mxu0 %v2657
  %v2719 = vpop.f32.mrb[0].mxu0
  %v2720 = vadd.f32 0.0, %v2719
  %v2721 = vpop.f32.mrb[0].mxu0
  %v2722 = vpop.f32.mrb[0].mxu0
  %v2723 = vadd.f32 0.0, %v2722
  %v2724 = vpop.f32.mrb[0].mxu0
  %2725 = vmatprep.mubr.bf16.mxu0 0
  %2726 = vmatmul.mubr.bf16.gmra.mrb[0].mxu0 %v2660
  %v2727 = vpop.f32.mrb[0].mxu0
  %v2728 = vadd.f32 0.0, %v2727
  %v2729 = vpop.f32.mrb[0].mxu0
  %v2730 = vpop.f32.mrb[0].mxu0
  %v2731 = vadd.f32 0.0, %v2730
  %v2732 = vpop.f32.mrb[0].mxu0
  %2733 = vmatprep.mubr.bf16.mxu0 0
  %2734 = vmatmul.mubr.bf16.gmra.mrb[0].mxu0 %v2663
  %v2735 = vpop.f32.mrb[0].mxu0
  %v2736 = vadd.f32 0.0, %v2735
  %v2737 = vpop.f32.mrb[0].mxu0
  %v2738 = vpop.f32.mrb[0].mxu0
  %v2739 = vadd.f32 0.0, %v2738
  %v2740 = vpop.f32.mrb[0].mxu0
  %2741 = vdwg.mxu0
  %v2743 = vsel %vm539, %v2641, 0
  %v2746 = vsel %vm539, %v2642, 0
  %v2749 = vsel %vm539, %v2643, 0
  %v2752 = vsel %vm539, %v2644, 0
  %v2755 = vsel %vm539, %v2649, 0
  %v2758 = vsel %vm539, %v2650, 0
  %v2761 = vsel %vm539, %v2651, 0
  %v2764 = vsel %vm539, %v2652, 0
  %2766 = vmatprep.subr.bf16.mxu0 0
  %2767 = vmatpush1.bf16.xpose.msra.mxu0 %v2755
  %2768 = vmatprep.subr.bf16.mxu0 0
  %2769 = vmatpush1.bf16.xpose.msra.mxu0 %v2758
  %2770 = vmatprep.subr.bf16.mxu0 0
  %2771 = vmatpush1.bf16.xpose.msra.mxu0 %v2761
  %2772 = vmatprep.subr.bf16.mxu0 0
  %2773 = vmatpush1.bf16.xpose.msra.mxu0 %v2764
  %2774 = vmatprep.subr.bf16.mxu0 0
  %2775 = vmatpush1.bf16.xpose.msra.mxu0 0
  %2776 = vmatprep.subr.bf16.mxu0 0
  %2777 = vmatpush1.bf16.xpose.msra.mxu0 0
  %2778 = vmatprep.subr.bf16.mxu0 0
  %2779 = vmatpush1.bf16.xpose.msra.mxu0 0
  %2780 = vmatprep.subr.bf16.mxu0 0
  %2781 = vmatpush1.bf16.xpose.msra.mxu0 0
  %2782 = vmatprep.subr.bf16.mxu0 0
  %2783 = vmatpush1.bf16.xpose.msra.mxu0 0
  %2784 = vmatprep.subr.bf16.mxu0 0
  %2785 = vmatpush1.bf16.xpose.msra.mxu0 0
  %2786 = vmatprep.subr.bf16.mxu0 0
  %2787 = vmatpush1.bf16.xpose.msra.mxu0 0
  %2788 = vmatprep.subr.bf16.mxu0 0
  %2789 = vmatpush1.bf16.xpose.msra.mxu0 0
  %2790 = vmatprep.subr.bf16.mxu0 0
  %2791 = vmatpush1.bf16.xpose.msra.mxu0 0
  %2792 = vmatprep.subr.bf16.mxu0 0
  %2793 = vmatpush1.bf16.xpose.msra.mxu0 0
  %2794 = vmatprep.subr.bf16.mxu0 0
  %2795 = vmatpush1.bf16.xpose.msra.mxu0 0
  %2796 = vmatprep.subr.bf16.mxu0 0
  %2797 = vmatpush1.bf16.xpose.msra.mxu0 0
  %2798 = vmatprep.mubr.bf16.mxu0 0
  %2799 = vmatmul.mubr.bf16.gmra.mrb[0].mxu0 %v2743
  %v2800 = vpop.f32.mrb[0].mxu0
  %v2801 = vadd.f32 0.0, %v2800
  %v2802 = vpop.f32.mrb[0].mxu0
  %v2803 = vpop.f32.mrb[0].mxu0
  %v2804 = vadd.f32 0.0, %v2803
  %v2805 = vpop.f32.mrb[0].mxu0
  %2806 = vmatprep.mubr.bf16.mxu0 0
  %2807 = vmatmul.mubr.bf16.gmra.mrb[0].mxu0 %v2746
  %v2808 = vpop.f32.mrb[0].mxu0
  %v2809 = vadd.f32 0.0, %v2808
  %v2810 = vpop.f32.mrb[0].mxu0
  %v2811 = vpop.f32.mrb[0].mxu0
  %v2812 = vadd.f32 0.0, %v2811
  %v2813 = vpop.f32.mrb[0].mxu0
  %2814 = vmatprep.mubr.bf16.mxu0 0
  %2815 = vmatmul.mubr.bf16.gmra.mrb[0].mxu0 %v2749
  %v2816 = vpop.f32.mrb[0].mxu0
  %v2817 = vadd.f32 0.0, %v2816
  %v2818 = vpop.f32.mrb[0].mxu0
  %v2819 = vpop.f32.mrb[0].mxu0
  %v2820 = vadd.f32 0.0, %v2819
  %v2821 = vpop.f32.mrb[0].mxu0
  %2822 = vmatprep.mubr.bf16.mxu0 0
  %2823 = vmatmul.mubr.bf16.gmra.mrb[0].mxu0 %v2752
  %v2824 = vpop.f32.mrb[0].mxu0
  %v2825 = vadd.f32 0.0, %v2824
  %v2826 = vpop.f32.mrb[0].mxu0
  %v2827 = vpop.f32.mrb[0].mxu0
  %v2828 = vadd.f32 0.0, %v2827
  %v2829 = vpop.f32.mrb[0].mxu0
  %2830 = vdwg.mxu0
  %v2831 = vmul.f32 %v2712, 0.35355338
  %v2832 = vmul.f32 %v2715, 0.35355338
  %v2833 = vmul.f32 %v2720, 0.35355338
  %v2834 = vmul.f32 %v2723, 0.35355338
  %v2835 = vmul.f32 %v2728, 0.35355338
  %v2836 = vmul.f32 %v2731, 0.35355338
  %v2837 = vmul.f32 %v2736, 0.35355338
  %v2838 = vmul.f32 %v2739, 0.35355338
  %v2839 = vmul.f32 %v2801, 0.35355338
  %v2840 = vmul.f32 %v2804, 0.35355338
  %v2841 = vmul.f32 %v2809, 0.35355338
  %v2842 = vmul.f32 %v2812, 0.35355338
  %v2843 = vmul.f32 %v2817, 0.35355338
  %v2844 = vmul.f32 %v2820, 0.35355338
  %v2845 = vmul.f32 %v2825, 0.35355338
  %v2846 = vmul.f32 %v2828, 0.35355338
  %v2847 = vsel %vm734, %v2831, -inf
  %2848 = vmax.xlane.f32.xlu0 %v2847
  %v2849 = vpop.xlane.xlu0 %2848
  %v2850 = vsel %vm734, %v2832, -inf
  %2851 = vmax.xlane.f32.xlu0 %v2850
  %v2852 = vpop.xlane.xlu0 %2851
  %v2853 = vsel %vm734, %v2833, -inf
  %2854 = vmax.xlane.f32.xlu0 %v2853
  %v2855 = vpop.xlane.xlu0 %2854
  %v2856 = vsel %vm734, %v2834, -inf
  %2857 = vmax.xlane.f32.xlu0 %v2856
  %v2858 = vpop.xlane.xlu0 %2857
  %v2859 = vsel %vm734, %v2835, -inf
  %2860 = vmax.xlane.f32.xlu0 %v2859
  %v2861 = vpop.xlane.xlu0 %2860
  %v2862 = vsel %vm734, %v2836, -inf
  %2863 = vmax.xlane.f32.xlu0 %v2862
  %v2864 = vpop.xlane.xlu0 %2863
  %v2865 = vsel %vm734, %v2837, -inf
  %2866 = vmax.xlane.f32.xlu0 %v2865
  %v2867 = vpop.xlane.xlu0 %2866
  %v2868 = vsel %vm734, %v2838, -inf
  %2869 = vmax.xlane.f32.xlu0 %v2868
  %v2870 = vpop.xlane.xlu0 %2869
  %v2871 = vsel %vm734, %v2839, -inf
  %2872 = vmax.xlane.f32.xlu0 %v2871
  %v2873 = vpop.xlane.xlu0 %2872
  %v2874 = vsel %vm734, %v2840, -inf
  %2875 = vmax.xlane.f32.xlu0 %v2874
  %v2876 = vpop.xlane.xlu0 %2875
  %v2877 = vsel %vm734, %v2841, -inf
  %2878 = vmax.xlane.f32.xlu0 %v2877
  %v2879 = vpop.xlane.xlu0 %2878
  %v2880 = vsel %vm734, %v2842, -inf
  %2881 = vmax.xlane.f32.xlu0 %v2880
  %v2882 = vpop.xlane.xlu0 %2881
  %v2883 = vsel %vm734, %v2843, -inf
  %2884 = vmax.xlane.f32.xlu0 %v2883
  %v2885 = vpop.xlane.xlu0 %2884
  %v2886 = vsel %vm734, %v2844, -inf
  %2887 = vmax.xlane.f32.xlu0 %v2886
  %v2888 = vpop.xlane.xlu0 %2887
  %v2889 = vsel %vm734, %v2845, -inf
  %2890 = vmax.xlane.f32.xlu0 %v2889
  %v2891 = vpop.xlane.xlu0 %2890
  %v2892 = vsel %vm734, %v2846, -inf
  %2893 = vmax.xlane.f32.xlu0 %v2892
  %v2894 = vpop.xlane.xlu0 %2893
  %v2895 = vsub.f32 %v2831, %v2849
  %v2896 = vsub.f32 %v2832, %v2852
  %v2897 = vsub.f32 %v2833, %v2855
  %v2898 = vsub.f32 %v2834, %v2858
  %v2899 = vsub.f32 %v2835, %v2861
  %v2900 = vsub.f32 %v2836, %v2864
  %v2901 = vsub.f32 %v2837, %v2867
  %v2902 = vsub.f32 %v2838, %v2870
  %v2903 = vsub.f32 %v2839, %v2873
  %v2904 = vsub.f32 %v2840, %v2876
  %v2905 = vsub.f32 %v2841, %v2879
  %v2906 = vsub.f32 %v2842, %v2882
  %v2907 = vsub.f32 %v2843, %v2885
  %v2908 = vsub.f32 %v2844, %v2888
  %v2909 = vsub.f32 %v2845, %v2891
  %v2910 = vsub.f32 %v2846, %v2894
  %v2911 = vmul.f32 %v2895, 1.442695
  %v2912 = vpow.pop %v2911
  %v2913 = vmul.f32 %v2896, 1.442695
  %v2914 = vpow.pop %v2913
  %v2915 = vmul.f32 %v2897, 1.442695
  %v2916 = vpow.pop %v2915
  %v2917 = vmul.f32 %v2898, 1.442695
  %v2918 = vpow.pop %v2917
  %v2919 = vmul.f32 %v2899, 1.442695
  %v2920 = vpow.pop %v2919
  %v2921 = vmul.f32 %v2900, 1.442695
  %v2922 = vpow.pop %v2921
  %v2923 = vmul.f32 %v2901, 1.442695
  %v2924 = vpow.pop %v2923
  %v2925 = vmul.f32 %v2902, 1.442695
  %v2926 = vpow.pop %v2925
  %v2927 = vmul.f32 %v2903, 1.442695
  %v2928 = vpow.pop %v2927
  %v2929 = vmul.f32 %v2904, 1.442695
  %v2930 = vpow.pop %v2929
  %v2931 = vmul.f32 %v2905, 1.442695
  %v2932 = vpow.pop %v2931
  %v2933 = vmul.f32 %v2906, 1.442695
  %v2934 = vpow.pop %v2933
  %v2935 = vmul.f32 %v2907, 1.442695
  %v2936 = vpow.pop %v2935
  %v2937 = vmul.f32 %v2908, 1.442695
  %v2938 = vpow.pop %v2937
  %v2939 = vmul.f32 %v2909, 1.442695
  %v2940 = vpow.pop %v2939
  %v2941 = vmul.f32 %v2910, 1.442695
  %v2942 = vpow.pop %v2941
  %v2943 = vsel %vm734, %v2912, 0.0
  %2944 = vadd.xlane.f32.xlu0 %v2943
  %v2945 = vpop.xlane.xlu0 %2944
  %v2946 = vsel %vm734, %v2914, 0.0
  %2947 = vadd.xlane.f32.xlu0 %v2946
  %v2948 = vpop.xlane.xlu0 %2947
  %v2949 = vsel %vm734, %v2916, 0.0
  %2950 = vadd.xlane.f32.xlu0 %v2949
  %v2951 = vpop.xlane.xlu0 %2950
  %v2952 = vsel %vm734, %v2918, 0.0
  %2953 = vadd.xlane.f32.xlu0 %v2952
  %v2954 = vpop.xlane.xlu0 %2953
  %v2955 = vsel %vm734, %v2920, 0.0
  %2956 = vadd.xlane.f32.xlu0 %v2955
  %v2957 = vpop.xlane.xlu0 %2956
  %v2958 = vsel %vm734, %v2922, 0.0
  %2959 = vadd.xlane.f32.xlu0 %v2958
  %v2960 = vpop.xlane.xlu0 %2959
  %v2961 = vsel %vm734, %v2924, 0.0
  %2962 = vadd.xlane.f32.xlu0 %v2961
  %v2963 = vpop.xlane.xlu0 %2962
  %v2964 = vsel %vm734, %v2926, 0.0
  %2965 = vadd.xlane.f32.xlu0 %v2964
  %v2966 = vpop.xlane.xlu0 %2965
  %v2967 = vsel %vm734, %v2928, 0.0
  %2968 = vadd.xlane.f32.xlu0 %v2967
  %v2969 = vpop.xlane.xlu0 %2968
  %v2970 = vsel %vm734, %v2930, 0.0
  %2971 = vadd.xlane.f32.xlu0 %v2970
  %v2972 = vpop.xlane.xlu0 %2971
  %v2973 = vsel %vm734, %v2932, 0.0
  %2974 = vadd.xlane.f32.xlu0 %v2973
  %v2975 = vpop.xlane.xlu0 %2974
  %v2976 = vsel %vm734, %v2934, 0.0
  %2977 = vadd.xlane.f32.xlu0 %v2976
  %v2978 = vpop.xlane.xlu0 %2977
  %v2979 = vsel %vm734, %v2936, 0.0
  %2980 = vadd.xlane.f32.xlu0 %v2979
  %v2981 = vpop.xlane.xlu0 %2980
  %v2982 = vsel %vm734, %v2938, 0.0
  %2983 = vadd.xlane.f32.xlu0 %v2982
  %v2984 = vpop.xlane.xlu0 %2983
  %v2985 = vsel %vm734, %v2940, 0.0
  %2986 = vadd.xlane.f32.xlu0 %v2985
  %v2987 = vpop.xlane.xlu0 %2986
  %v2988 = vsel %vm734, %v2942, 0.0
  %2989 = vadd.xlane.f32.xlu0 %v2988
  %v2990 = vpop.xlane.xlu0 %2989
  %v2991 = vrcp.pop %v2945
  %v2992 = vrcp.pop %v2948
  %v2993 = vrcp.pop %v2951
  %v2994 = vrcp.pop %v2954
  %v2995 = vrcp.pop %v2957
  %v2996 = vrcp.pop %v2960
  %v2997 = vrcp.pop %v2963
  %v2998 = vrcp.pop %v2966
  %v2999 = vrcp.pop %v2969
  %v3000 = vrcp.pop %v2972
  %v3001 = vrcp.pop %v2975
  %v3002 = vrcp.pop %v2978
  %v3003 = vrcp.pop %v2981
  %v3004 = vrcp.pop %v2984
  %v3005 = vrcp.pop %v2987
  %v3006 = vrcp.pop %v2990
  %v3007 = vmul.f32 %v2912, %v2991
  %v3008 = vmul.f32 %v2914, %v2992
  %v3009 = vmul.f32 %v2916, %v2993
  %v3010 = vmul.f32 %v2918, %v2994
  %v3011 = vmul.f32 %v2920, %v2995
  %v3012 = vmul.f32 %v2922, %v2996
  %v3013 = vmul.f32 %v2924, %v2997
  %v3014 = vmul.f32 %v2926, %v2998
  %v3015 = vmul.f32 %v2928, %v2999
  %v3016 = vmul.f32 %v2930, %v3000
  %v3017 = vmul.f32 %v2932, %v3001
  %v3018 = vmul.f32 %v2934, %v3002
  %v3019 = vmul.f32 %v2936, %v3003
  %v3020 = vmul.f32 %v2938, %v3004
  %v3021 = vmul.f32 %v2940, %v3005
  %v3022 = vmul.f32 %v2942, %v3006
  %v3023 = vpack.c.bf16 %v3008, %v3007
  %v3024 = vpack.c.bf16 %v3010, %v3009
  %v3025 = vpack.c.bf16 %v3012, %v3011
  %v3026 = vpack.c.bf16 %v3014, %v3013
  %v3027 = vpack.c.bf16 %v3016, %v3015
  %v3028 = vpack.c.bf16 %v3018, %v3017
  %v3029 = vpack.c.bf16 %v3020, %v3019
  %v3030 = vpack.c.bf16 %v3022, %v3021
  %v3031 = vpack.c.bf16 %v2578, %v2575
  %v3032 = vpack.c.bf16 %v2586, %v2583
  %v3033 = vpack.c.bf16 %v2594, %v2591
  %v3034 = vpack.c.bf16 %v2602, %v2599
  %v3035 = vpack.c.bf16 %v2610, %v2607
  %v3036 = vpack.c.bf16 %v2618, %v2615
  %v3037 = vpack.c.bf16 %v2626, %v2623
  %v3038 = vpack.c.bf16 %v2634, %v2631
  %v3040 = vsel %vm734, %v3023, 0
  %v3043 = vsel %vm734, %v3024, 0
  %v3046 = vsel %vm734, %v3025, 0
  %v3049 = vsel %vm734, %v3026, 0
  %3051 = vmatprep.subr.bf16.mxu0 0
  %3052 = vmatpush1.bf16.msra.mxu0 %v3031
  %3053 = vmatprep.subr.bf16.mxu0 0
  %3054 = vmatpush1.bf16.msra.mxu0 %v3032
  %3055 = vmatprep.subr.bf16.mxu0 0
  %3056 = vmatpush1.bf16.msra.mxu0 %v3033
  %3057 = vmatprep.subr.bf16.mxu0 0
  %3058 = vmatpush1.bf16.msra.mxu0 %v3034
  %3059 = vmatprep.subr.bf16.mxu0 0
  %3060 = vmatpush1.bf16.msra.mxu0 0
  %3061 = vmatprep.subr.bf16.mxu0 0
  %3062 = vmatpush1.bf16.msra.mxu0 0
  %3063 = vmatprep.subr.bf16.mxu0 0
  %3064 = vmatpush1.bf16.msra.mxu0 0
  %3065 = vmatprep.subr.bf16.mxu0 0
  %3066 = vmatpush1.bf16.msra.mxu0 0
  %3067 = vmatprep.subr.bf16.mxu0 0
  %3068 = vmatpush1.bf16.msra.mxu0 0
  %3069 = vmatprep.subr.bf16.mxu0 0
  %3070 = vmatpush1.bf16.msra.mxu0 0
  %3071 = vmatprep.subr.bf16.mxu0 0
  %3072 = vmatpush1.bf16.msra.mxu0 0
  %3073 = vmatprep.subr.bf16.mxu0 0
  %3074 = vmatpush1.bf16.msra.mxu0 0
  %3075 = vmatprep.subr.bf16.mxu0 0
  %3076 = vmatpush1.bf16.msra.mxu0 0
  %3077 = vmatprep.subr.bf16.mxu0 0
  %3078 = vmatpush1.bf16.msra.mxu0 0
  %3079 = vmatprep.subr.bf16.mxu0 0
  %3080 = vmatpush1.bf16.msra.mxu0 0
  %3081 = vmatprep.subr.bf16.mxu0 0
  %3082 = vmatpush1.bf16.msra.mxu0 0
  %3083 = vmatprep.mubr.bf16.mxu0 0
  %3084 = vmatmul.mubr.bf16.gmra.mrb[0].mxu0 %v3040
  %v3085 = vpop.f32.mrb[0].mxu0
  %v3086 = vadd.f32 0.0, %v3085
  %v3087 = vpop.f32.mrb[0].mxu0
  %v3088 = vpop.f32.mrb[0].mxu0
  %v3089 = vadd.f32 0.0, %v3088
  %v3090 = vpop.f32.mrb[0].mxu0
  %3091 = vmatprep.mubr.bf16.mxu0 0
  %3092 = vmatmul.mubr.bf16.gmra.mrb[0].mxu0 %v3043
  %v3093 = vpop.f32.mrb[0].mxu0
  %v3094 = vadd.f32 0.0, %v3093
  %v3095 = vpop.f32.mrb[0].mxu0
  %v3096 = vpop.f32.mrb[0].mxu0
  %v3097 = vadd.f32 0.0, %v3096
  %v3098 = vpop.f32.mrb[0].mxu0
  %3099 = vmatprep.mubr.bf16.mxu0 0
  %3100 = vmatmul.mubr.bf16.gmra.mrb[0].mxu0 %v3046
  %v3101 = vpop.f32.mrb[0].mxu0
  %v3102 = vadd.f32 0.0, %v3101
  %v3103 = vpop.f32.mrb[0].mxu0
  %v3104 = vpop.f32.mrb[0].mxu0
  %v3105 = vadd.f32 0.0, %v3104
  %v3106 = vpop.f32.mrb[0].mxu0
  %3107 = vmatprep.mubr.bf16.mxu0 0
  %3108 = vmatmul.mubr.bf16.gmra.mrb[0].mxu0 %v3049
  %v3109 = vpop.f32.mrb[0].mxu0
  %v3110 = vadd.f32 0.0, %v3109
  %v3111 = vpop.f32.mrb[0].mxu0
  %v3112 = vpop.f32.mrb[0].mxu0
  %v3113 = vadd.f32 0.0, %v3112
  %v3114 = vpop.f32.mrb[0].mxu0
  %3115 = vdwg.mxu0
  %v3117 = vsel %vm734, %v3027, 0
  %v3120 = vsel %vm734, %v3028, 0
  %v3123 = vsel %vm734, %v3029, 0
  %v3126 = vsel %vm734, %v3030, 0
  %3128 = vmatprep.subr.bf16.mxu0 0
  %3129 = vmatpush1.bf16.msra.mxu0 %v3035
  %3130 = vmatprep.subr.bf16.mxu0 0
  %3131 = vmatpush1.bf16.msra.mxu0 %v3036
  %3132 = vmatprep.subr.bf16.mxu0 0
  %3133 = vmatpush1.bf16.msra.mxu0 %v3037
  %3134 = vmatprep.subr.bf16.mxu0 0
  %3135 = vmatpush1.bf16.msra.mxu0 %v3038
  %3136 = vmatprep.subr.bf16.mxu0 0
  %3137 = vmatpush1.bf16.msra.mxu0 0
  %3138 = vmatprep.subr.bf16.mxu0 0
  %3139 = vmatpush1.bf16.msra.mxu0 0
  %3140 = vmatprep.subr.bf16.mxu0 0
  %3141 = vmatpush1.bf16.msra.mxu0 0
  %3142 = vmatprep.subr.bf16.mxu0 0
  %3143 = vmatpush1.bf16.msra.mxu0 0
  %3144 = vmatprep.subr.bf16.mxu0 0
  %3145 = vmatpush1.bf16.msra.mxu0 0
  %3146 = vmatprep.subr.bf16.mxu0 0
  %3147 = vmatpush1.bf16.msra.mxu0 0
  %3148 = vmatprep.subr.bf16.mxu0 0
  %3149 = vmatpush1.bf16.msra.mxu0 0
  %3150 = vmatprep.subr.bf16.mxu0 0
  %3151 = vmatpush1.bf16.msra.mxu0 0
  %3152 = vmatprep.subr.bf16.mxu0 0
  %3153 = vmatpush1.bf16.msra.mxu0 0
  %3154 = vmatprep.subr.bf16.mxu0 0
  %3155 = vmatpush1.bf16.msra.mxu0 0
  %3156 = vmatprep.subr.bf16.mxu0 0
  %3157 = vmatpush1.bf16.msra.mxu0 0
  %3158 = vmatprep.subr.bf16.mxu0 0
  %3159 = vmatpush1.bf16.msra.mxu0 0
  %3160 = vmatprep.mubr.bf16.mxu0 0
  %3161 = vmatmul.mubr.bf16.gmra.mrb[0].mxu0 %v3117
  %v3162 = vpop.f32.mrb[0].mxu0
  %v3163 = vadd.f32 0.0, %v3162
  %v3164 = vpop.f32.mrb[0].mxu0
  %v3165 = vpop.f32.mrb[0].mxu0
  %v3166 = vadd.f32 0.0, %v3165
  %v3167 = vpop.f32.mrb[0].mxu0
  %3168 = vmatprep.mubr.bf16.mxu0 0
  %3169 = vmatmul.mubr.bf16.gmra.mrb[0].mxu0 %v3120
  %v3170 = vpop.f32.mrb[0].mxu0
  %v3171 = vadd.f32 0.0, %v3170
  %v3172 = vpop.f32.mrb[0].mxu0
  %v3173 = vpop.f32.mrb[0].mxu0
  %v3174 = vadd.f32 0.0, %v3173
  %v3175 = vpop.f32.mrb[0].mxu0
  %3176 = vmatprep.mubr.bf16.mxu0 0
  %3177 = vmatmul.mubr.bf16.gmra.mrb[0].mxu0 %v3123
  %v3178 = vpop.f32.mrb[0].mxu0
  %v3179 = vadd.f32 0.0, %v3178
  %v3180 = vpop.f32.mrb[0].mxu0
  %v3181 = vpop.f32.mrb[0].mxu0
  %v3182 = vadd.f32 0.0, %v3181
  %v3183 = vpop.f32.mrb[0].mxu0
  %3184 = vmatprep.mubr.bf16.mxu0 0
  %3185 = vmatmul.mubr.bf16.gmra.mrb[0].mxu0 %v3126
  %v3186 = vpop.f32.mrb[0].mxu0
  %v3187 = vadd.f32 0.0, %v3186
  %v3188 = vpop.f32.mrb[0].mxu0
  %v3189 = vpop.f32.mrb[0].mxu0
  %v3190 = vadd.f32 0.0, %v3189
  %v3191 = vpop.f32.mrb[0].mxu0
  %3192 = vdwg.mxu0
  %v3193 = vpack.c.bf16 %v3089, %v3086
  %v3194 = vpack.c.bf16 %v3097, %v3094
  %v3195 = vpack.c.bf16 %v3105, %v3102
  %v3196 = vpack.c.bf16 %v3113, %v3110
  %v3197 = vpack.c.bf16 %v3166, %v3163
  %v3198 = vpack.c.bf16 %v3174, %v3171
  %v3199 = vpack.c.bf16 %v3182, %v3179
  %v3200 = vpack.c.bf16 %v3190, %v3187
  %s3201 = scalar_lea.vmem %s7, 8
  %v3202 = vld [vmem:[%s3201] sm:$0xf]
  %v3204 = vsel %vm539, %v3193, 0
  %v3207 = vsel %vm539, %v3194, 0
  %v3210 = vsel %vm539, %v3195, 0
  %v3213 = vsel %vm539, %v3196, 0
  %v3216 = vsel %vm539, %v3197, 0
  %v3219 = vsel %vm539, %v3198, 0
  %v3222 = vsel %vm539, %v3199, 0
  %v3225 = vsel %vm539, %v3200, 0
  %v3228 = vsel %vm2046, %v3202, 0
  %3230 = vmatprep.subr.bf16.mxu0 0
  %3231 = vmatpush1.bf16.msra.mxu0 %v3228
  %3232 = vmatprep.subr.bf16.mxu0 0
  %3233 = vmatpush1.bf16.msra.mxu0 0
  %3234 = vmatprep.subr.bf16.mxu0 0
  %3235 = vmatpush1.bf16.msra.mxu0 0
  %3236 = vmatprep.subr.bf16.mxu0 0
  %3237 = vmatpush1.bf16.msra.mxu0 0
  %3238 = vmatprep.subr.bf16.mxu0 0
  %3239 = vmatpush1.bf16.msra.mxu0 0
  %3240 = vmatprep.subr.bf16.mxu0 0
  %3241 = vmatpush1.bf16.msra.mxu0 0
  %3242 = vmatprep.subr.bf16.mxu0 0
  %3243 = vmatpush1.bf16.msra.mxu0 0
  %3244 = vmatprep.subr.bf16.mxu0 0
  %3245 = vmatpush1.bf16.msra.mxu0 0
  %3246 = vmatprep.subr.bf16.mxu0 0
  %3247 = vmatpush1.bf16.msra.mxu0 0
  %3248 = vmatprep.subr.bf16.mxu0 0
  %3249 = vmatpush1.bf16.msra.mxu0 0
  %3250 = vmatprep.subr.bf16.mxu0 0
  %3251 = vmatpush1.bf16.msra.mxu0 0
  %3252 = vmatprep.subr.bf16.mxu0 0
  %3253 = vmatpush1.bf16.msra.mxu0 0
  %3254 = vmatprep.subr.bf16.mxu0 0
  %3255 = vmatpush1.bf16.msra.mxu0 0
  %3256 = vmatprep.subr.bf16.mxu0 0
  %3257 = vmatpush1.bf16.msra.mxu0 0
  %3258 = vmatprep.subr.bf16.mxu0 0
  %3259 = vmatpush1.bf16.msra.mxu0 0
  %3260 = vmatprep.subr.bf16.mxu0 0
  %3261 = vmatpush1.bf16.msra.mxu0 0
  %3262 = vmatprep.mubr.bf16.mxu0 0
  %3263 = vmatmul.mubr.bf16.gmra.mrb[0].mxu0 %v3204
  %v3264 = vpop.f32.mrb[0].mxu0
  %v3265 = vadd.f32 0.0, %v3264
  %v3266 = vpop.f32.mrb[0].mxu0
  %v3267 = vpop.f32.mrb[0].mxu0
  %v3268 = vadd.f32 0.0, %v3267
  %v3269 = vpop.f32.mrb[0].mxu0
  %3270 = vmatprep.mubr.bf16.mxu0 0
  %3271 = vmatmul.mubr.bf16.gmra.mrb[0].mxu0 %v3207
  %v3272 = vpop.f32.mrb[0].mxu0
  %v3273 = vadd.f32 0.0, %v3272
  %v3274 = vpop.f32.mrb[0].mxu0
  %v3275 = vpop.f32.mrb[0].mxu0
  %v3276 = vadd.f32 0.0, %v3275
  %v3277 = vpop.f32.mrb[0].mxu0
  %3278 = vmatprep.mubr.bf16.mxu0 0
  %3279 = vmatmul.mubr.bf16.gmra.mrb[0].mxu0 %v3210
  %v3280 = vpop.f32.mrb[0].mxu0
  %v3281 = vadd.f32 0.0, %v3280
  %v3282 = vpop.f32.mrb[0].mxu0
  %v3283 = vpop.f32.mrb[0].mxu0
  %v3284 = vadd.f32 0.0, %v3283
  %v3285 = vpop.f32.mrb[0].mxu0
  %3286 = vmatprep.mubr.bf16.mxu0 0
  %3287 = vmatmul.mubr.bf16.gmra.mrb[0].mxu0 %v3213
  %v3288 = vpop.f32.mrb[0].mxu0
  %v3289 = vadd.f32 0.0, %v3288
  %v3290 = vpop.f32.mrb[0].mxu0
  %v3291 = vpop.f32.mrb[0].mxu0
  %v3292 = vadd.f32 0.0, %v3291
  %v3293 = vpop.f32.mrb[0].mxu0
  %3294 = vmatprep.mubr.bf16.mxu0 0
  %3295 = vmatmul.mubr.bf16.gmra.mrb[0].mxu0 %v3216
  %v3296 = vpop.f32.mrb[0].mxu0
  %v3297 = vadd.f32 0.0, %v3296
  %v3298 = vpop.f32.mrb[0].mxu0
  %v3299 = vpop.f32.mrb[0].mxu0
  %v3300 = vadd.f32 0.0, %v3299
  %v3301 = vpop.f32.mrb[0].mxu0
  %3302 = vmatprep.mubr.bf16.mxu0 0
  %3303 = vmatmul.mubr.bf16.gmra.mrb[0].mxu0 %v3219
  %v3304 = vpop.f32.mrb[0].mxu0
  %v3305 = vadd.f32 0.0, %v3304
  %v3306 = vpop.f32.mrb[0].mxu0
  %v3307 = vpop.f32.mrb[0].mxu0
  %v3308 = vadd.f32 0.0, %v3307
  %v3309 = vpop.f32.mrb[0].mxu0
  %3310 = vmatprep.mubr.bf16.mxu0 0
  %3311 = vmatmul.mubr.bf16.gmra.mrb[0].mxu0 %v3222
  %v3312 = vpop.f32.mrb[0].mxu0
  %v3313 = vadd.f32 0.0, %v3312
  %v3314 = vpop.f32.mrb[0].mxu0
  %v3315 = vpop.f32.mrb[0].mxu0
  %v3316 = vadd.f32 0.0, %v3315
  %v3317 = vpop.f32.mrb[0].mxu0
  %3318 = vmatprep.mubr.bf16.mxu0 0
  %3319 = vmatmul.mubr.bf16.gmra.mrb[0].mxu0 %v3225
  %v3320 = vpop.f32.mrb[0].mxu0
  %v3321 = vadd.f32 0.0, %v3320
  %v3322 = vpop.f32.mrb[0].mxu0
  %v3323 = vpop.f32.mrb[0].mxu0
  %v3324 = vadd.f32 0.0, %v3323
  %v3325 = vpop.f32.mrb[0].mxu0
  %3326 = vdwg.mxu0
  %v3327 = vadd.f32 %v2209, %v3265
  %v3328 = vadd.f32 %v2212, %v3268
  %v3329 = vadd.f32 %v2217, %v3273
  %v3330 = vadd.f32 %v2220, %v3276
  %v3331 = vadd.f32 %v2225, %v3281
  %v3332 = vadd.f32 %v2228, %v3284
  %v3333 = vadd.f32 %v2233, %v3289
  %v3334 = vadd.f32 %v2236, %v3292
  %v3335 = vadd.f32 %v2241, %v3297
  %v3336 = vadd.f32 %v2244, %v3300
  %v3337 = vadd.f32 %v2249, %v3305
  %v3338 = vadd.f32 %v2252, %v3308
  %v3339 = vadd.f32 %v2257, %v3313
  %v3340 = vadd.f32 %v2260, %v3316
  %v3341 = vadd.f32 %v2265, %v3321
  %v3342 = vadd.f32 %v2268, %v3324
  %s3343 = scalar_lea.vmem %s1, 48
  %v3344 = vld [vmem:[%s3343] sm:$0xf]
  %v3345 = vld [vmem:[%s3343 + $0x4] sm:$0xf]
  %v3346 = vld [vmem:[%s3343 + $0x8] sm:$0xf]
  %v3347 = vld [vmem:[%s3343 + $0xc] sm:$0xf]
  %s3348 = scalar_lea.vmem %s4, 3
  %v3349 = vld [vmem:[%s3348] sm:$0x1]
  %v3351 = vlaneseq
  %v3352 = vshrl.u32 %v3351, 7
  %v3353 = vsub.s32 0, %v3352
  %v3354 = vrot.slane %v3349, %v3353
  %v3360 = vunpack.c.l.b16 %v3344
  %v3361 = vunpack.c.l.b16 %v3345
  %v3362 = vunpack.c.l.b16 %v3346
  %v3363 = vunpack.c.l.b16 %v3347
  %v3364 = vpack.c.b16 %v3361, %v3360
  %v3365 = vpack.c.b16 %v3363, %v3362
  %3368 = vmatprep.subr.bf16.mxu0 0
  %3369 = vmatpush1.bf16.msra.mxu0 %v3364
  %3370 = vmatprep.subr.bf16.mxu0 0
  %3371 = vmatpush1.bf16.msra.mxu0 %v3365
  %3372 = vmatprep.subr.bf16.mxu0 0
  %3373 = vmatpush1.bf16.msra.mxu0 0
  %3374 = vmatprep.subr.bf16.mxu0 0
  %3375 = vmatpush1.bf16.msra.mxu0 0
  %3376 = vmatprep.subr.bf16.mxu0 0
  %3377 = vmatpush1.bf16.msra.mxu0 0
  %3378 = vmatprep.subr.bf16.mxu0 0
  %3379 = vmatpush1.bf16.msra.mxu0 0
  %3380 = vmatprep.subr.bf16.mxu0 0
  %3381 = vmatpush1.bf16.msra.mxu0 0
  %3382 = vmatprep.subr.bf16.mxu0 0
  %3383 = vmatpush1.bf16.msra.mxu0 0
  %3384 = vmatprep.subr.bf16.mxu0 0
  %3385 = vmatpush1.bf16.msra.mxu0 0
  %3386 = vmatprep.subr.bf16.mxu0 0
  %3387 = vmatpush1.bf16.msra.mxu0 0
  %3388 = vmatprep.subr.bf16.mxu0 0
  %3389 = vmatpush1.bf16.msra.mxu0 0
  %3390 = vmatprep.subr.bf16.mxu0 0
  %3391 = vmatpush1.bf16.msra.mxu0 0
  %3392 = vmatprep.subr.bf16.mxu0 0
  %3393 = vmatpush1.bf16.msra.mxu0 0
  %3394 = vmatprep.subr.bf16.mxu0 0
  %3395 = vmatpush1.bf16.msra.mxu0 0
  %3396 = vmatprep.subr.bf16.mxu0 0
  %3397 = vmatpush1.bf16.msra.mxu0 0
  %3398 = vmatprep.subr.bf16.mxu0 0
  %3399 = vmatpush1.bf16.msra.mxu0 0
  %3400 = vmatprep.mubr.bf16.mxu0 0
  %3401 = vmatmul.mubr.bf16.gmra.mrb[0].mxu0 %v163
  %v3402 = vpop.f32.mrb[0].mxu0
  %v3403 = vadd.f32 %v3354, %v3402
  %v3404 = vpop.f32.mrb[0].mxu0
  %v3405 = vpop.f32.mrb[0].mxu0
  %v3406 = vadd.f32 %v3354, %v3405
  %v3407 = vpop.f32.mrb[0].mxu0
  %3408 = vmatprep.mubr.bf16.mxu0 0
  %3409 = vmatmul.mubr.bf16.gmra.mrb[0].mxu0 %v166
  %v3410 = vpop.f32.mrb[0].mxu0
  %v3411 = vadd.f32 %v3354, %v3410
  %v3412 = vpop.f32.mrb[0].mxu0
  %v3413 = vpop.f32.mrb[0].mxu0
  %v3414 = vadd.f32 %v3354, %v3413
  %v3415 = vpop.f32.mrb[0].mxu0
  %3416 = vmatprep.mubr.bf16.mxu0 0
  %3417 = vmatmul.mubr.bf16.gmra.mrb[0].mxu0 %v169
  %v3418 = vpop.f32.mrb[0].mxu0
  %v3419 = vadd.f32 %v3354, %v3418
  %v3420 = vpop.f32.mrb[0].mxu0
  %v3421 = vpop.f32.mrb[0].mxu0
  %v3422 = vadd.f32 %v3354, %v3421
  %v3423 = vpop.f32.mrb[0].mxu0
  %3424 = vmatprep.mubr.bf16.mxu0 0
  %3425 = vmatmul.mubr.bf16.gmra.mrb[0].mxu0 %v172
  %v3426 = vpop.f32.mrb[0].mxu0
  %v3427 = vadd.f32 %v3354, %v3426
  %v3428 = vpop.f32.mrb[0].mxu0
  %v3429 = vpop.f32.mrb[0].mxu0
  %v3430 = vadd.f32 %v3354, %v3429
  %v3431 = vpop.f32.mrb[0].mxu0
  %3432 = vmatprep.mubr.bf16.mxu0 0
  %3433 = vmatmul.mubr.bf16.gmra.mrb[0].mxu0 %v175
  %v3434 = vpop.f32.mrb[0].mxu0
  %v3435 = vadd.f32 %v3354, %v3434
  %v3436 = vpop.f32.mrb[0].mxu0
  %v3437 = vpop.f32.mrb[0].mxu0
  %v3438 = vadd.f32 %v3354, %v3437
  %v3439 = vpop.f32.mrb[0].mxu0
  %3440 = vmatprep.mubr.bf16.mxu0 0
  %3441 = vmatmul.mubr.bf16.gmra.mrb[0].mxu0 %v178
  %v3442 = vpop.f32.mrb[0].mxu0
  %v3443 = vadd.f32 %v3354, %v3442
  %v3444 = vpop.f32.mrb[0].mxu0
  %v3445 = vpop.f32.mrb[0].mxu0
  %v3446 = vadd.f32 %v3354, %v3445
  %v3447 = vpop.f32.mrb[0].mxu0
  %3448 = vmatprep.mubr.bf16.mxu0 0
  %3449 = vmatmul.mubr.bf16.gmra.mrb[0].mxu0 %v181
  %v3450 = vpop.f32.mrb[0].mxu0
  %v3451 = vadd.f32 %v3354, %v3450
  %v3452 = vpop.f32.mrb[0].mxu0
  %v3453 = vpop.f32.mrb[0].mxu0
  %v3454 = vadd.f32 %v3354, %v3453
  %v3455 = vpop.f32.mrb[0].mxu0
  %3456 = vmatprep.mubr.bf16.mxu0 0
  %3457 = vmatmul.mubr.bf16.gmra.mrb[0].mxu0 %v184
  %v3458 = vpop.f32.mrb[0].mxu0
  %v3459 = vadd.f32 %v3354, %v3458
  %v3460 = vpop.f32.mrb[0].mxu0
  %v3461 = vpop.f32.mrb[0].mxu0
  %v3462 = vadd.f32 %v3354, %v3461
  %v3463 = vpop.f32.mrb[0].mxu0
  %3464 = vdwg.mxu0
  %s3465 = scalar_lea.vmem %s2, 48
  %v3466 = vld [vmem:[%s3465] sm:$0xf]
  %v3467 = vld [vmem:[%s3465 + $0x4] sm:$0xf]
  %v3468 = vld [vmem:[%s3465 + $0x8] sm:$0xf]
  %v3469 = vld [vmem:[%s3465 + $0xc] sm:$0xf]
  %s3470 = scalar_lea.vmem %s5, 3
  %v3471 = vld [vmem:[%s3470] sm:$0x1]
  %v3473 = vlaneseq
  %v3474 = vshrl.u32 %v3473, 7
  %v3475 = vsub.s32 0, %v3474
  %v3476 = vrot.slane %v3471, %v3475
  %v3482 = vunpack.c.l.b16 %v3466
  %v3483 = vunpack.c.l.b16 %v3467
  %v3484 = vunpack.c.l.b16 %v3468
  %v3485 = vunpack.c.l.b16 %v3469
  %v3486 = vpack.c.b16 %v3483, %v3482
  %v3487 = vpack.c.b16 %v3485, %v3484
  %3490 = vmatprep.subr.bf16.mxu0 0
  %3491 = vmatpush1.bf16.msra.mxu0 %v3486
  %3492 = vmatprep.subr.bf16.mxu0 0
  %3493 = vmatpush1.bf16.msra.mxu0 %v3487
  %3494 = vmatprep.subr.bf16.mxu0 0
  %3495 = vmatpush1.bf16.msra.mxu0 0
  %3496 = vmatprep.subr.bf16.mxu0 0
  %3497 = vmatpush1.bf16.msra.mxu0 0
  %3498 = vmatprep.subr.bf16.mxu0 0
  %3499 = vmatpush1.bf16.msra.mxu0 0
  %3500 = vmatprep.subr.bf16.mxu0 0
  %3501 = vmatpush1.bf16.msra.mxu0 0
  %3502 = vmatprep.subr.bf16.mxu0 0
  %3503 = vmatpush1.bf16.msra.mxu0 0
  %3504 = vmatprep.subr.bf16.mxu0 0
  %3505 = vmatpush1.bf16.msra.mxu0 0
  %3506 = vmatprep.subr.bf16.mxu0 0
  %3507 = vmatpush1.bf16.msra.mxu0 0
  %3508 = vmatprep.subr.bf16.mxu0 0
  %3509 = vmatpush1.bf16.msra.mxu0 0
  %3510 = vmatprep.subr.bf16.mxu0 0
  %3511 = vmatpush1.bf16.msra.mxu0 0
  %3512 = vmatprep.subr.bf16.mxu0 0
  %3513 = vmatpush1.bf16.msra.mxu0 0
  %3514 = vmatprep.subr.bf16.mxu0 0
  %3515 = vmatpush1.bf16.msra.mxu0 0
  %3516 = vmatprep.subr.bf16.mxu0 0
  %3517 = vmatpush1.bf16.msra.mxu0 0
  %3518 = vmatprep.subr.bf16.mxu0 0
  %3519 = vmatpush1.bf16.msra.mxu0 0
  %3520 = vmatprep.subr.bf16.mxu0 0
  %3521 = vmatpush1.bf16.msra.mxu0 0
  %3522 = vmatprep.mubr.bf16.mxu0 0
  %3523 = vmatmul.mubr.bf16.gmra.mrb[0].mxu0 %v163
  %v3524 = vpop.f32.mrb[0].mxu0
  %v3525 = vadd.f32 %v3476, %v3524
  %v3526 = vpop.f32.mrb[0].mxu0
  %v3527 = vpop.f32.mrb[0].mxu0
  %v3528 = vadd.f32 %v3476, %v3527
  %v3529 = vpop.f32.mrb[0].mxu0
  %3530 = vmatprep.mubr.bf16.mxu0 0
  %3531 = vmatmul.mubr.bf16.gmra.mrb[0].mxu0 %v166
  %v3532 = vpop.f32.mrb[0].mxu0
  %v3533 = vadd.f32 %v3476, %v3532
  %v3534 = vpop.f32.mrb[0].mxu0
  %v3535 = vpop.f32.mrb[0].mxu0
  %v3536 = vadd.f32 %v3476, %v3535
  %v3537 = vpop.f32.mrb[0].mxu0
  %3538 = vmatprep.mubr.bf16.mxu0 0
  %3539 = vmatmul.mubr.bf16.gmra.mrb[0].mxu0 %v169
  %v3540 = vpop.f32.mrb[0].mxu0
  %v3541 = vadd.f32 %v3476, %v3540
  %v3542 = vpop.f32.mrb[0].mxu0
  %v3543 = vpop.f32.mrb[0].mxu0
  %v3544 = vadd.f32 %v3476, %v3543
  %v3545 = vpop.f32.mrb[0].mxu0
  %3546 = vmatprep.mubr.bf16.mxu0 0
  %3547 = vmatmul.mubr.bf16.gmra.mrb[0].mxu0 %v172
  %v3548 = vpop.f32.mrb[0].mxu0
  %v3549 = vadd.f32 %v3476, %v3548
  %v3550 = vpop.f32.mrb[0].mxu0
  %v3551 = vpop.f32.mrb[0].mxu0
  %v3552 = vadd.f32 %v3476, %v3551
  %v3553 = vpop.f32.mrb[0].mxu0
  %3554 = vmatprep.mubr.bf16.mxu0 0
  %3555 = vmatmul.mubr.bf16.gmra.mrb[0].mxu0 %v175
  %v3556 = vpop.f32.mrb[0].mxu0
  %v3557 = vadd.f32 %v3476, %v3556
  %v3558 = vpop.f32.mrb[0].mxu0
  %v3559 = vpop.f32.mrb[0].mxu0
  %v3560 = vadd.f32 %v3476, %v3559
  %v3561 = vpop.f32.mrb[0].mxu0
  %3562 = vmatprep.mubr.bf16.mxu0 0
  %3563 = vmatmul.mubr.bf16.gmra.mrb[0].mxu0 %v178
  %v3564 = vpop.f32.mrb[0].mxu0
  %v3565 = vadd.f32 %v3476, %v3564
  %v3566 = vpop.f32.mrb[0].mxu0
  %v3567 = vpop.f32.mrb[0].mxu0
  %v3568 = vadd.f32 %v3476, %v3567
  %v3569 = vpop.f32.mrb[0].mxu0
  %3570 = vmatprep.mubr.bf16.mxu0 0
  %3571 = vmatmul.mubr.bf16.gmra.mrb[0].mxu0 %v181
  %v3572 = vpop.f32.mrb[0].mxu0
  %v3573 = vadd.f32 %v3476, %v3572
  %v3574 = vpop.f32.mrb[0].mxu0
  %v3575 = vpop.f32.mrb[0].mxu0
  %v3576 = vadd.f32 %v3476, %v3575
  %v3577 = vpop.f32.mrb[0].mxu0
  %3578 = vmatprep.mubr.bf16.mxu0 0
  %3579 = vmatmul.mubr.bf16.gmra.mrb[0].mxu0 %v184
  %v3580 = vpop.f32.mrb[0].mxu0
  %v3581 = vadd.f32 %v3476, %v3580
  %v3582 = vpop.f32.mrb[0].mxu0
  %v3583 = vpop.f32.mrb[0].mxu0
  %v3584 = vadd.f32 %v3476, %v3583
  %v3585 = vpop.f32.mrb[0].mxu0
  %3586 = vdwg.mxu0
  %s3587 = scalar_lea.vmem %s3, 48
  %v3588 = vld [vmem:[%s3587] sm:$0xf]
  %v3589 = vld [vmem:[%s3587 + $0x4] sm:$0xf]
  %v3590 = vld [vmem:[%s3587 + $0x8] sm:$0xf]
  %v3591 = vld [vmem:[%s3587 + $0xc] sm:$0xf]
  %s3592 = scalar_lea.vmem %s6, 3
  %v3593 = vld [vmem:[%s3592] sm:$0x1]
  %v3595 = vlaneseq
  %v3596 = vshrl.u32 %v3595, 7
  %v3597 = vsub.s32 0, %v3596
  %v3598 = vrot.slane %v3593, %v3597
  %v3604 = vunpack.c.l.b16 %v3588
  %v3605 = vunpack.c.l.b16 %v3589
  %v3606 = vunpack.c.l.b16 %v3590
  %v3607 = vunpack.c.l.b16 %v3591
  %v3608 = vpack.c.b16 %v3605, %v3604
  %v3609 = vpack.c.b16 %v3607, %v3606
  %3612 = vmatprep.subr.bf16.mxu0 0
  %3613 = vmatpush1.bf16.msra.mxu0 %v3608
  %3614 = vmatprep.subr.bf16.mxu0 0
  %3615 = vmatpush1.bf16.msra.mxu0 %v3609
  %3616 = vmatprep.subr.bf16.mxu0 0
  %3617 = vmatpush1.bf16.msra.mxu0 0
  %3618 = vmatprep.subr.bf16.mxu0 0
  %3619 = vmatpush1.bf16.msra.mxu0 0
  %3620 = vmatprep.subr.bf16.mxu0 0
  %3621 = vmatpush1.bf16.msra.mxu0 0
  %3622 = vmatprep.subr.bf16.mxu0 0
  %3623 = vmatpush1.bf16.msra.mxu0 0
  %3624 = vmatprep.subr.bf16.mxu0 0
  %3625 = vmatpush1.bf16.msra.mxu0 0
  %3626 = vmatprep.subr.bf16.mxu0 0
  %3627 = vmatpush1.bf16.msra.mxu0 0
  %3628 = vmatprep.subr.bf16.mxu0 0
  %3629 = vmatpush1.bf16.msra.mxu0 0
  %3630 = vmatprep.subr.bf16.mxu0 0
  %3631 = vmatpush1.bf16.msra.mxu0 0
  %3632 = vmatprep.subr.bf16.mxu0 0
  %3633 = vmatpush1.bf16.msra.mxu0 0
  %3634 = vmatprep.subr.bf16.mxu0 0
  %3635 = vmatpush1.bf16.msra.mxu0 0
  %3636 = vmatprep.subr.bf16.mxu0 0
  %3637 = vmatpush1.bf16.msra.mxu0 0
  %3638 = vmatprep.subr.bf16.mxu0 0
  %3639 = vmatpush1.bf16.msra.mxu0 0
  %3640 = vmatprep.subr.bf16.mxu0 0
  %3641 = vmatpush1.bf16.msra.mxu0 0
  %3642 = vmatprep.subr.bf16.mxu0 0
  %3643 = vmatpush1.bf16.msra.mxu0 0
  %3644 = vmatprep.mubr.bf16.mxu0 0
  %3645 = vmatmul.mubr.bf16.gmra.mrb[0].mxu0 %v163
  %v3646 = vpop.f32.mrb[0].mxu0
  %v3647 = vadd.f32 %v3598, %v3646
  %v3648 = vpop.f32.mrb[0].mxu0
  %v3649 = vpop.f32.mrb[0].mxu0
  %v3650 = vadd.f32 %v3598, %v3649
  %v3651 = vpop.f32.mrb[0].mxu0
  %3652 = vmatprep.mubr.bf16.mxu0 0
  %3653 = vmatmul.mubr.bf16.gmra.mrb[0].mxu0 %v166
  %v3654 = vpop.f32.mrb[0].mxu0
  %v3655 = vadd.f32 %v3598, %v3654
  %v3656 = vpop.f32.mrb[0].mxu0
  %v3657 = vpop.f32.mrb[0].mxu0
  %v3658 = vadd.f32 %v3598, %v3657
  %v3659 = vpop.f32.mrb[0].mxu0
  %3660 = vmatprep.mubr.bf16.mxu0 0
  %3661 = vmatmul.mubr.bf16.gmra.mrb[0].mxu0 %v169
  %v3662 = vpop.f32.mrb[0].mxu0
  %v3663 = vadd.f32 %v3598, %v3662
  %v3664 = vpop.f32.mrb[0].mxu0
  %v3665 = vpop.f32.mrb[0].mxu0
  %v3666 = vadd.f32 %v3598, %v3665
  %v3667 = vpop.f32.mrb[0].mxu0
  %3668 = vmatprep.mubr.bf16.mxu0 0
  %3669 = vmatmul.mubr.bf16.gmra.mrb[0].mxu0 %v172
  %v3670 = vpop.f32.mrb[0].mxu0
  %v3671 = vadd.f32 %v3598, %v3670
  %v3672 = vpop.f32.mrb[0].mxu0
  %v3673 = vpop.f32.mrb[0].mxu0
  %v3674 = vadd.f32 %v3598, %v3673
  %v3675 = vpop.f32.mrb[0].mxu0
  %3676 = vmatprep.mubr.bf16.mxu0 0
  %3677 = vmatmul.mubr.bf16.gmra.mrb[0].mxu0 %v175
  %v3678 = vpop.f32.mrb[0].mxu0
  %v3679 = vadd.f32 %v3598, %v3678
  %v3680 = vpop.f32.mrb[0].mxu0
  %v3681 = vpop.f32.mrb[0].mxu0
  %v3682 = vadd.f32 %v3598, %v3681
  %v3683 = vpop.f32.mrb[0].mxu0
  %3684 = vmatprep.mubr.bf16.mxu0 0
  %3685 = vmatmul.mubr.bf16.gmra.mrb[0].mxu0 %v178
  %v3686 = vpop.f32.mrb[0].mxu0
  %v3687 = vadd.f32 %v3598, %v3686
  %v3688 = vpop.f32.mrb[0].mxu0
  %v3689 = vpop.f32.mrb[0].mxu0
  %v3690 = vadd.f32 %v3598, %v3689
  %v3691 = vpop.f32.mrb[0].mxu0
  %3692 = vmatprep.mubr.bf16.mxu0 0
  %3693 = vmatmul.mubr.bf16.gmra.mrb[0].mxu0 %v181
  %v3694 = vpop.f32.mrb[0].mxu0
  %v3695 = vadd.f32 %v3598, %v3694
  %v3696 = vpop.f32.mrb[0].mxu0
  %v3697 = vpop.f32.mrb[0].mxu0
  %v3698 = vadd.f32 %v3598, %v3697
  %v3699 = vpop.f32.mrb[0].mxu0
  %3700 = vmatprep.mubr.bf16.mxu0 0
  %3701 = vmatmul.mubr.bf16.gmra.mrb[0].mxu0 %v184
  %v3702 = vpop.f32.mrb[0].mxu0
  %v3703 = vadd.f32 %v3598, %v3702
  %v3704 = vpop.f32.mrb[0].mxu0
  %v3705 = vpop.f32.mrb[0].mxu0
  %v3706 = vadd.f32 %v3598, %v3705
  %v3707 = vpop.f32.mrb[0].mxu0
  %3708 = vdwg.mxu0
  %v3709 = vpack.c.bf16 %v3406, %v3403
  %v3710 = vpack.c.bf16 %v3414, %v3411
  %v3711 = vpack.c.bf16 %v3422, %v3419
  %v3712 = vpack.c.bf16 %v3430, %v3427
  %v3713 = vpack.c.bf16 %v3438, %v3435
  %v3714 = vpack.c.bf16 %v3446, %v3443
  %v3715 = vpack.c.bf16 %v3454, %v3451
  %v3716 = vpack.c.bf16 %v3462, %v3459
  %v3717 = vpack.c.bf16 %v3528, %v3525
  %v3718 = vpack.c.bf16 %v3536, %v3533
  %v3719 = vpack.c.bf16 %v3544, %v3541
  %v3720 = vpack.c.bf16 %v3552, %v3549
  %v3721 = vpack.c.bf16 %v3560, %v3557
  %v3722 = vpack.c.bf16 %v3568, %v3565
  %v3723 = vpack.c.bf16 %v3576, %v3573
  %v3724 = vpack.c.bf16 %v3584, %v3581
  %v3726 = vsel %vm539, %v3709, 0
  %v3729 = vsel %vm539, %v3710, 0
  %v3732 = vsel %vm539, %v3711, 0
  %v3735 = vsel %vm539, %v3712, 0
  %v3738 = vsel %vm539, %v3717, 0
  %v3741 = vsel %vm539, %v3718, 0
  %v3744 = vsel %vm539, %v3719, 0
  %v3747 = vsel %vm539, %v3720, 0
  %3749 = vmatprep.subr.bf16.mxu0 0
  %3750 = vmatpush1.bf16.xpose.msra.mxu0 %v3738
  %3751 = vmatprep.subr.bf16.mxu0 0
  %3752 = vmatpush1.bf16.xpose.msra.mxu0 %v3741
  %3753 = vmatprep.subr.bf16.mxu0 0
  %3754 = vmatpush1.bf16.xpose.msra.mxu0 %v3744
  %3755 = vmatprep.subr.bf16.mxu0 0
  %3756 = vmatpush1.bf16.xpose.msra.mxu0 %v3747
  %3757 = vmatprep.subr.bf16.mxu0 0
  %3758 = vmatpush1.bf16.xpose.msra.mxu0 0
  %3759 = vmatprep.subr.bf16.mxu0 0
  %3760 = vmatpush1.bf16.xpose.msra.mxu0 0
  %3761 = vmatprep.subr.bf16.mxu0 0
  %3762 = vmatpush1.bf16.xpose.msra.mxu0 0
  %3763 = vmatprep.subr.bf16.mxu0 0
  %3764 = vmatpush1.bf16.xpose.msra.mxu0 0
  %3765 = vmatprep.subr.bf16.mxu0 0
  %3766 = vmatpush1.bf16.xpose.msra.mxu0 0
  %3767 = vmatprep.subr.bf16.mxu0 0
  %3768 = vmatpush1.bf16.xpose.msra.mxu0 0
  %3769 = vmatprep.subr.bf16.mxu0 0
  %3770 = vmatpush1.bf16.xpose.msra.mxu0 0
  %3771 = vmatprep.subr.bf16.mxu0 0
  %3772 = vmatpush1.bf16.xpose.msra.mxu0 0
  %3773 = vmatprep.subr.bf16.mxu0 0
  %3774 = vmatpush1.bf16.xpose.msra.mxu0 0
  %3775 = vmatprep.subr.bf16.mxu0 0
  %3776 = vmatpush1.bf16.xpose.msra.mxu0 0
  %3777 = vmatprep.subr.bf16.mxu0 0
  %3778 = vmatpush1.bf16.xpose.msra.mxu0 0
  %3779 = vmatprep.subr.bf16.mxu0 0
  %3780 = vmatpush1.bf16.xpose.msra.mxu0 0
  %3781 = vmatprep.mubr.bf16.mxu0 0
  %3782 = vmatmul.mubr.bf16.gmra.mrb[0].mxu0 %v3726
  %v3783 = vpop.f32.mrb[0].mxu0
  %v3784 = vadd.f32 0.0, %v3783
  %v3785 = vpop.f32.mrb[0].mxu0
  %v3786 = vpop.f32.mrb[0].mxu0
  %v3787 = vadd.f32 0.0, %v3786
  %v3788 = vpop.f32.mrb[0].mxu0
  %3789 = vmatprep.mubr.bf16.mxu0 0
  %3790 = vmatmul.mubr.bf16.gmra.mrb[0].mxu0 %v3729
  %v3791 = vpop.f32.mrb[0].mxu0
  %v3792 = vadd.f32 0.0, %v3791
  %v3793 = vpop.f32.mrb[0].mxu0
  %v3794 = vpop.f32.mrb[0].mxu0
  %v3795 = vadd.f32 0.0, %v3794
  %v3796 = vpop.f32.mrb[0].mxu0
  %3797 = vmatprep.mubr.bf16.mxu0 0
  %3798 = vmatmul.mubr.bf16.gmra.mrb[0].mxu0 %v3732
  %v3799 = vpop.f32.mrb[0].mxu0
  %v3800 = vadd.f32 0.0, %v3799
  %v3801 = vpop.f32.mrb[0].mxu0
  %v3802 = vpop.f32.mrb[0].mxu0
  %v3803 = vadd.f32 0.0, %v3802
  %v3804 = vpop.f32.mrb[0].mxu0
  %3805 = vmatprep.mubr.bf16.mxu0 0
  %3806 = vmatmul.mubr.bf16.gmra.mrb[0].mxu0 %v3735
  %v3807 = vpop.f32.mrb[0].mxu0
  %v3808 = vadd.f32 0.0, %v3807
  %v3809 = vpop.f32.mrb[0].mxu0
  %v3810 = vpop.f32.mrb[0].mxu0
  %v3811 = vadd.f32 0.0, %v3810
  %v3812 = vpop.f32.mrb[0].mxu0
  %3813 = vdwg.mxu0
  %v3815 = vsel %vm539, %v3713, 0
  %v3818 = vsel %vm539, %v3714, 0
  %v3821 = vsel %vm539, %v3715, 0
  %v3824 = vsel %vm539, %v3716, 0
  %v3827 = vsel %vm539, %v3721, 0
  %v3830 = vsel %vm539, %v3722, 0
  %v3833 = vsel %vm539, %v3723, 0
  %v3836 = vsel %vm539, %v3724, 0
  %3838 = vmatprep.subr.bf16.mxu0 0
  %3839 = vmatpush1.bf16.xpose.msra.mxu0 %v3827
  %3840 = vmatprep.subr.bf16.mxu0 0
  %3841 = vmatpush1.bf16.xpose.msra.mxu0 %v3830
  %3842 = vmatprep.subr.bf16.mxu0 0
  %3843 = vmatpush1.bf16.xpose.msra.mxu0 %v3833
  %3844 = vmatprep.subr.bf16.mxu0 0
  %3845 = vmatpush1.bf16.xpose.msra.mxu0 %v3836
  %3846 = vmatprep.subr.bf16.mxu0 0
  %3847 = vmatpush1.bf16.xpose.msra.mxu0 0
  %3848 = vmatprep.subr.bf16.mxu0 0
  %3849 = vmatpush1.bf16.xpose.msra.mxu0 0
  %3850 = vmatprep.subr.bf16.mxu0 0
  %3851 = vmatpush1.bf16.xpose.msra.mxu0 0
  %3852 = vmatprep.subr.bf16.mxu0 0
  %3853 = vmatpush1.bf16.xpose.msra.mxu0 0
  %3854 = vmatprep.subr.bf16.mxu0 0
  %3855 = vmatpush1.bf16.xpose.msra.mxu0 0
  %3856 = vmatprep.subr.bf16.mxu0 0
  %3857 = vmatpush1.bf16.xpose.msra.mxu0 0
  %3858 = vmatprep.subr.bf16.mxu0 0
  %3859 = vmatpush1.bf16.xpose.msra.mxu0 0
  %3860 = vmatprep.subr.bf16.mxu0 0
  %3861 = vmatpush1.bf16.xpose.msra.mxu0 0
  %3862 = vmatprep.subr.bf16.mxu0 0
  %3863 = vmatpush1.bf16.xpose.msra.mxu0 0
  %3864 = vmatprep.subr.bf16.mxu0 0
  %3865 = vmatpush1.bf16.xpose.msra.mxu0 0
  %3866 = vmatprep.subr.bf16.mxu0 0
  %3867 = vmatpush1.bf16.xpose.msra.mxu0 0
  %3868 = vmatprep.subr.bf16.mxu0 0
  %3869 = vmatpush1.bf16.xpose.msra.mxu0 0
  %3870 = vmatprep.mubr.bf16.mxu0 0
  %3871 = vmatmul.mubr.bf16.gmra.mrb[0].mxu0 %v3815
  %v3872 = vpop.f32.mrb[0].mxu0
  %v3873 = vadd.f32 0.0, %v3872
  %v3874 = vpop.f32.mrb[0].mxu0
  %v3875 = vpop.f32.mrb[0].mxu0
  %v3876 = vadd.f32 0.0, %v3875
  %v3877 = vpop.f32.mrb[0].mxu0
  %3878 = vmatprep.mubr.bf16.mxu0 0
  %3879 = vmatmul.mubr.bf16.gmra.mrb[0].mxu0 %v3818
  %v3880 = vpop.f32.mrb[0].mxu0
  %v3881 = vadd.f32 0.0, %v3880
  %v3882 = vpop.f32.mrb[0].mxu0
  %v3883 = vpop.f32.mrb[0].mxu0
  %v3884 = vadd.f32 0.0, %v3883
  %v3885 = vpop.f32.mrb[0].mxu0
  %3886 = vmatprep.mubr.bf16.mxu0 0
  %3887 = vmatmul.mubr.bf16.gmra.mrb[0].mxu0 %v3821
  %v3888 = vpop.f32.mrb[0].mxu0
  %v3889 = vadd.f32 0.0, %v3888
  %v3890 = vpop.f32.mrb[0].mxu0
  %v3891 = vpop.f32.mrb[0].mxu0
  %v3892 = vadd.f32 0.0, %v3891
  %v3893 = vpop.f32.mrb[0].mxu0
  %3894 = vmatprep.mubr.bf16.mxu0 0
  %3895 = vmatmul.mubr.bf16.gmra.mrb[0].mxu0 %v3824
  %v3896 = vpop.f32.mrb[0].mxu0
  %v3897 = vadd.f32 0.0, %v3896
  %v3898 = vpop.f32.mrb[0].mxu0
  %v3899 = vpop.f32.mrb[0].mxu0
  %v3900 = vadd.f32 0.0, %v3899
  %v3901 = vpop.f32.mrb[0].mxu0
  %3902 = vdwg.mxu0
  %v3903 = vmul.f32 %v3784, 0.35355338
  %v3904 = vmul.f32 %v3787, 0.35355338
  %v3905 = vmul.f32 %v3792, 0.35355338
  %v3906 = vmul.f32 %v3795, 0.35355338
  %v3907 = vmul.f32 %v3800, 0.35355338
  %v3908 = vmul.f32 %v3803, 0.35355338
  %v3909 = vmul.f32 %v3808, 0.35355338
  %v3910 = vmul.f32 %v3811, 0.35355338
  %v3911 = vmul.f32 %v3873, 0.35355338
  %v3912 = vmul.f32 %v3876, 0.35355338
  %v3913 = vmul.f32 %v3881, 0.35355338
  %v3914 = vmul.f32 %v3884, 0.35355338
  %v3915 = vmul.f32 %v3889, 0.35355338
  %v3916 = vmul.f32 %v3892, 0.35355338
  %v3917 = vmul.f32 %v3897, 0.35355338
  %v3918 = vmul.f32 %v3900, 0.35355338
  %v3919 = vsel %vm734, %v3903, -inf
  %3920 = vmax.xlane.f32.xlu0 %v3919
  %v3921 = vpop.xlane.xlu0 %3920
  %v3922 = vsel %vm734, %v3904, -inf
  %3923 = vmax.xlane.f32.xlu0 %v3922
  %v3924 = vpop.xlane.xlu0 %3923
  %v3925 = vsel %vm734, %v3905, -inf
  %3926 = vmax.xlane.f32.xlu0 %v3925
  %v3927 = vpop.xlane.xlu0 %3926
  %v3928 = vsel %vm734, %v3906, -inf
  %3929 = vmax.xlane.f32.xlu0 %v3928
  %v3930 = vpop.xlane.xlu0 %3929
  %v3931 = vsel %vm734, %v3907, -inf
  %3932 = vmax.xlane.f32.xlu0 %v3931
  %v3933 = vpop.xlane.xlu0 %3932
  %v3934 = vsel %vm734, %v3908, -inf
  %3935 = vmax.xlane.f32.xlu0 %v3934
  %v3936 = vpop.xlane.xlu0 %3935
  %v3937 = vsel %vm734, %v3909, -inf
  %3938 = vmax.xlane.f32.xlu0 %v3937
  %v3939 = vpop.xlane.xlu0 %3938
  %v3940 = vsel %vm734, %v3910, -inf
  %3941 = vmax.xlane.f32.xlu0 %v3940
  %v3942 = vpop.xlane.xlu0 %3941
  %v3943 = vsel %vm734, %v3911, -inf
  %3944 = vmax.xlane.f32.xlu0 %v3943
  %v3945 = vpop.xlane.xlu0 %3944
  %v3946 = vsel %vm734, %v3912, -inf
  %3947 = vmax.xlane.f32.xlu0 %v3946
  %v3948 = vpop.xlane.xlu0 %3947
  %v3949 = vsel %vm734, %v3913, -inf
  %3950 = vmax.xlane.f32.xlu0 %v3949
  %v3951 = vpop.xlane.xlu0 %3950
  %v3952 = vsel %vm734, %v3914, -inf
  %3953 = vmax.xlane.f32.xlu0 %v3952
  %v3954 = vpop.xlane.xlu0 %3953
  %v3955 = vsel %vm734, %v3915, -inf
  %3956 = vmax.xlane.f32.xlu0 %v3955
  %v3957 = vpop.xlane.xlu0 %3956
  %v3958 = vsel %vm734, %v3916, -inf
  %3959 = vmax.xlane.f32.xlu0 %v3958
  %v3960 = vpop.xlane.xlu0 %3959
  %v3961 = vsel %vm734, %v3917, -inf
  %3962 = vmax.xlane.f32.xlu0 %v3961
  %v3963 = vpop.xlane.xlu0 %3962
  %v3964 = vsel %vm734, %v3918, -inf
  %3965 = vmax.xlane.f32.xlu0 %v3964
  %v3966 = vpop.xlane.xlu0 %3965
  %v3967 = vsub.f32 %v3903, %v3921
  %v3968 = vsub.f32 %v3904, %v3924
  %v3969 = vsub.f32 %v3905, %v3927
  %v3970 = vsub.f32 %v3906, %v3930
  %v3971 = vsub.f32 %v3907, %v3933
  %v3972 = vsub.f32 %v3908, %v3936
  %v3973 = vsub.f32 %v3909, %v3939
  %v3974 = vsub.f32 %v3910, %v3942
  %v3975 = vsub.f32 %v3911, %v3945
  %v3976 = vsub.f32 %v3912, %v3948
  %v3977 = vsub.f32 %v3913, %v3951
  %v3978 = vsub.f32 %v3914, %v3954
  %v3979 = vsub.f32 %v3915, %v3957
  %v3980 = vsub.f32 %v3916, %v3960
  %v3981 = vsub.f32 %v3917, %v3963
  %v3982 = vsub.f32 %v3918, %v3966
  %v3983 = vmul.f32 %v3967, 1.442695
  %v3984 = vpow.pop %v3983
  %v3985 = vmul.f32 %v3968, 1.442695
  %v3986 = vpow.pop %v3985
  %v3987 = vmul.f32 %v3969, 1.442695
  %v3988 = vpow.pop %v3987
  %v3989 = vmul.f32 %v3970, 1.442695
  %v3990 = vpow.pop %v3989
  %v3991 = vmul.f32 %v3971, 1.442695
  %v3992 = vpow.pop %v3991
  %v3993 = vmul.f32 %v3972, 1.442695
  %v3994 = vpow.pop %v3993
  %v3995 = vmul.f32 %v3973, 1.442695
  %v3996 = vpow.pop %v3995
  %v3997 = vmul.f32 %v3974, 1.442695
  %v3998 = vpow.pop %v3997
  %v3999 = vmul.f32 %v3975, 1.442695
  %v4000 = vpow.pop %v3999
  %v4001 = vmul.f32 %v3976, 1.442695
  %v4002 = vpow.pop %v4001
  %v4003 = vmul.f32 %v3977, 1.442695
  %v4004 = vpow.pop %v4003
  %v4005 = vmul.f32 %v3978, 1.442695
  %v4006 = vpow.pop %v4005
  %v4007 = vmul.f32 %v3979, 1.442695
  %v4008 = vpow.pop %v4007
  %v4009 = vmul.f32 %v3980, 1.442695
  %v4010 = vpow.pop %v4009
  %v4011 = vmul.f32 %v3981, 1.442695
  %v4012 = vpow.pop %v4011
  %v4013 = vmul.f32 %v3982, 1.442695
  %v4014 = vpow.pop %v4013
  %v4015 = vsel %vm734, %v3984, 0.0
  %4016 = vadd.xlane.f32.xlu0 %v4015
  %v4017 = vpop.xlane.xlu0 %4016
  %v4018 = vsel %vm734, %v3986, 0.0
  %4019 = vadd.xlane.f32.xlu0 %v4018
  %v4020 = vpop.xlane.xlu0 %4019
  %v4021 = vsel %vm734, %v3988, 0.0
  %4022 = vadd.xlane.f32.xlu0 %v4021
  %v4023 = vpop.xlane.xlu0 %4022
  %v4024 = vsel %vm734, %v3990, 0.0
  %4025 = vadd.xlane.f32.xlu0 %v4024
  %v4026 = vpop.xlane.xlu0 %4025
  %v4027 = vsel %vm734, %v3992, 0.0
  %4028 = vadd.xlane.f32.xlu0 %v4027
  %v4029 = vpop.xlane.xlu0 %4028
  %v4030 = vsel %vm734, %v3994, 0.0
  %4031 = vadd.xlane.f32.xlu0 %v4030
  %v4032 = vpop.xlane.xlu0 %4031
  %v4033 = vsel %vm734, %v3996, 0.0
  %4034 = vadd.xlane.f32.xlu0 %v4033
  %v4035 = vpop.xlane.xlu0 %4034
  %v4036 = vsel %vm734, %v3998, 0.0
  %4037 = vadd.xlane.f32.xlu0 %v4036
  %v4038 = vpop.xlane.xlu0 %4037
  %v4039 = vsel %vm734, %v4000, 0.0
  %4040 = vadd.xlane.f32.xlu0 %v4039
  %v4041 = vpop.xlane.xlu0 %4040
  %v4042 = vsel %vm734, %v4002, 0.0
  %4043 = vadd.xlane.f32.xlu0 %v4042
  %v4044 = vpop.xlane.xlu0 %4043
  %v4045 = vsel %vm734, %v4004, 0.0
  %4046 = vadd.xlane.f32.xlu0 %v4045
  %v4047 = vpop.xlane.xlu0 %4046
  %v4048 = vsel %vm734, %v4006, 0.0
  %4049 = vadd.xlane.f32.xlu0 %v4048
  %v4050 = vpop.xlane.xlu0 %4049
  %v4051 = vsel %vm734, %v4008, 0.0
  %4052 = vadd.xlane.f32.xlu0 %v4051
  %v4053 = vpop.xlane.xlu0 %4052
  %v4054 = vsel %vm734, %v4010, 0.0
  %4055 = vadd.xlane.f32.xlu0 %v4054
  %v4056 = vpop.xlane.xlu0 %4055
  %v4057 = vsel %vm734, %v4012, 0.0
  %4058 = vadd.xlane.f32.xlu0 %v4057
  %v4059 = vpop.xlane.xlu0 %4058
  %v4060 = vsel %vm734, %v4014, 0.0
  %4061 = vadd.xlane.f32.xlu0 %v4060
  %v4062 = vpop.xlane.xlu0 %4061
  %v4063 = vrcp.pop %v4017
  %v4064 = vrcp.pop %v4020
  %v4065 = vrcp.pop %v4023
  %v4066 = vrcp.pop %v4026
  %v4067 = vrcp.pop %v4029
  %v4068 = vrcp.pop %v4032
  %v4069 = vrcp.pop %v4035
  %v4070 = vrcp.pop %v4038
  %v4071 = vrcp.pop %v4041
  %v4072 = vrcp.pop %v4044
  %v4073 = vrcp.pop %v4047
  %v4074 = vrcp.pop %v4050
  %v4075 = vrcp.pop %v4053
  %v4076 = vrcp.pop %v4056
  %v4077 = vrcp.pop %v4059
  %v4078 = vrcp.pop %v4062
  %v4079 = vmul.f32 %v3984, %v4063
  %v4080 = vmul.f32 %v3986, %v4064
  %v4081 = vmul.f32 %v3988, %v4065
  %v4082 = vmul.f32 %v3990, %v4066
  %v4083 = vmul.f32 %v3992, %v4067
  %v4084 = vmul.f32 %v3994, %v4068
  %v4085 = vmul.f32 %v3996, %v4069
  %v4086 = vmul.f32 %v3998, %v4070
  %v4087 = vmul.f32 %v4000, %v4071
  %v4088 = vmul.f32 %v4002, %v4072
  %v4089 = vmul.f32 %v4004, %v4073
  %v4090 = vmul.f32 %v4006, %v4074
  %v4091 = vmul.f32 %v4008, %v4075
  %v4092 = vmul.f32 %v4010, %v4076
  %v4093 = vmul.f32 %v4012, %v4077
  %v4094 = vmul.f32 %v4014, %v4078
  %v4095 = vpack.c.bf16 %v4080, %v4079
  %v4096 = vpack.c.bf16 %v4082, %v4081
  %v4097 = vpack.c.bf16 %v4084, %v4083
  %v4098 = vpack.c.bf16 %v4086, %v4085
  %v4099 = vpack.c.bf16 %v4088, %v4087
  %v4100 = vpack.c.bf16 %v4090, %v4089
  %v4101 = vpack.c.bf16 %v4092, %v4091
  %v4102 = vpack.c.bf16 %v4094, %v4093
  %v4103 = vpack.c.bf16 %v3650, %v3647
  %v4104 = vpack.c.bf16 %v3658, %v3655
  %v4105 = vpack.c.bf16 %v3666, %v3663
  %v4106 = vpack.c.bf16 %v3674, %v3671
  %v4107 = vpack.c.bf16 %v3682, %v3679
  %v4108 = vpack.c.bf16 %v3690, %v3687
  %v4109 = vpack.c.bf16 %v3698, %v3695
  %v4110 = vpack.c.bf16 %v3706, %v3703
  %v4112 = vsel %vm734, %v4095, 0
  %v4115 = vsel %vm734, %v4096, 0
  %v4118 = vsel %vm734, %v4097, 0
  %v4121 = vsel %vm734, %v4098, 0
  %4123 = vmatprep.subr.bf16.mxu0 0
  %4124 = vmatpush1.bf16.msra.mxu0 %v4103
  %4125 = vmatprep.subr.bf16.mxu0 0
  %4126 = vmatpush1.bf16.msra.mxu0 %v4104
  %4127 = vmatprep.subr.bf16.mxu0 0
  %4128 = vmatpush1.bf16.msra.mxu0 %v4105
  %4129 = vmatprep.subr.bf16.mxu0 0
  %4130 = vmatpush1.bf16.msra.mxu0 %v4106
  %4131 = vmatprep.subr.bf16.mxu0 0
  %4132 = vmatpush1.bf16.msra.mxu0 0
  %4133 = vmatprep.subr.bf16.mxu0 0
  %4134 = vmatpush1.bf16.msra.mxu0 0
  %4135 = vmatprep.subr.bf16.mxu0 0
  %4136 = vmatpush1.bf16.msra.mxu0 0
  %4137 = vmatprep.subr.bf16.mxu0 0
  %4138 = vmatpush1.bf16.msra.mxu0 0
  %4139 = vmatprep.subr.bf16.mxu0 0
  %4140 = vmatpush1.bf16.msra.mxu0 0
  %4141 = vmatprep.subr.bf16.mxu0 0
  %4142 = vmatpush1.bf16.msra.mxu0 0
  %4143 = vmatprep.subr.bf16.mxu0 0
  %4144 = vmatpush1.bf16.msra.mxu0 0
  %4145 = vmatprep.subr.bf16.mxu0 0
  %4146 = vmatpush1.bf16.msra.mxu0 0
  %4147 = vmatprep.subr.bf16.mxu0 0
  %4148 = vmatpush1.bf16.msra.mxu0 0
  %4149 = vmatprep.subr.bf16.mxu0 0
  %4150 = vmatpush1.bf16.msra.mxu0 0
  %4151 = vmatprep.subr.bf16.mxu0 0
  %4152 = vmatpush1.bf16.msra.mxu0 0
  %4153 = vmatprep.subr.bf16.mxu0 0
  %4154 = vmatpush1.bf16.msra.mxu0 0
  %4155 = vmatprep.mubr.bf16.mxu0 0
  %4156 = vmatmul.mubr.bf16.gmra.mrb[0].mxu0 %v4112
  %v4157 = vpop.f32.mrb[0].mxu0
  %v4158 = vadd.f32 0.0, %v4157
  %v4159 = vpop.f32.mrb[0].mxu0
  %v4160 = vpop.f32.mrb[0].mxu0
  %v4161 = vadd.f32 0.0, %v4160
  %v4162 = vpop.f32.mrb[0].mxu0
  %4163 = vmatprep.mubr.bf16.mxu0 0
  %4164 = vmatmul.mubr.bf16.gmra.mrb[0].mxu0 %v4115
  %v4165 = vpop.f32.mrb[0].mxu0
  %v4166 = vadd.f32 0.0, %v4165
  %v4167 = vpop.f32.mrb[0].mxu0
  %v4168 = vpop.f32.mrb[0].mxu0
  %v4169 = vadd.f32 0.0, %v4168
  %v4170 = vpop.f32.mrb[0].mxu0
  %4171 = vmatprep.mubr.bf16.mxu0 0
  %4172 = vmatmul.mubr.bf16.gmra.mrb[0].mxu0 %v4118
  %v4173 = vpop.f32.mrb[0].mxu0
  %v4174 = vadd.f32 0.0, %v4173
  %v4175 = vpop.f32.mrb[0].mxu0
  %v4176 = vpop.f32.mrb[0].mxu0
  %v4177 = vadd.f32 0.0, %v4176
  %v4178 = vpop.f32.mrb[0].mxu0
  %4179 = vmatprep.mubr.bf16.mxu0 0
  %4180 = vmatmul.mubr.bf16.gmra.mrb[0].mxu0 %v4121
  %v4181 = vpop.f32.mrb[0].mxu0
  %v4182 = vadd.f32 0.0, %v4181
  %v4183 = vpop.f32.mrb[0].mxu0
  %v4184 = vpop.f32.mrb[0].mxu0
  %v4185 = vadd.f32 0.0, %v4184
  %v4186 = vpop.f32.mrb[0].mxu0
  %4187 = vdwg.mxu0
  %v4189 = vsel %vm734, %v4099, 0
  %v4192 = vsel %vm734, %v4100, 0
  %v4195 = vsel %vm734, %v4101, 0
  %v4198 = vsel %vm734, %v4102, 0
  %4200 = vmatprep.subr.bf16.mxu0 0
  %4201 = vmatpush1.bf16.msra.mxu0 %v4107
  %4202 = vmatprep.subr.bf16.mxu0 0
  %4203 = vmatpush1.bf16.msra.mxu0 %v4108
  %4204 = vmatprep.subr.bf16.mxu0 0
  %4205 = vmatpush1.bf16.msra.mxu0 %v4109
  %4206 = vmatprep.subr.bf16.mxu0 0
  %4207 = vmatpush1.bf16.msra.mxu0 %v4110
  %4208 = vmatprep.subr.bf16.mxu0 0
  %4209 = vmatpush1.bf16.msra.mxu0 0
  %4210 = vmatprep.subr.bf16.mxu0 0
  %4211 = vmatpush1.bf16.msra.mxu0 0
  %4212 = vmatprep.subr.bf16.mxu0 0
  %4213 = vmatpush1.bf16.msra.mxu0 0
  %4214 = vmatprep.subr.bf16.mxu0 0
  %4215 = vmatpush1.bf16.msra.mxu0 0
  %4216 = vmatprep.subr.bf16.mxu0 0
  %4217 = vmatpush1.bf16.msra.mxu0 0
  %4218 = vmatprep.subr.bf16.mxu0 0
  %4219 = vmatpush1.bf16.msra.mxu0 0
  %4220 = vmatprep.subr.bf16.mxu0 0
  %4221 = vmatpush1.bf16.msra.mxu0 0
  %4222 = vmatprep.subr.bf16.mxu0 0
  %4223 = vmatpush1.bf16.msra.mxu0 0
  %4224 = vmatprep.subr.bf16.mxu0 0
  %4225 = vmatpush1.bf16.msra.mxu0 0
  %4226 = vmatprep.subr.bf16.mxu0 0
  %4227 = vmatpush1.bf16.msra.mxu0 0
  %4228 = vmatprep.subr.bf16.mxu0 0
  %4229 = vmatpush1.bf16.msra.mxu0 0
  %4230 = vmatprep.subr.bf16.mxu0 0
  %4231 = vmatpush1.bf16.msra.mxu0 0
  %4232 = vmatprep.mubr.bf16.mxu0 0
  %4233 = vmatmul.mubr.bf16.gmra.mrb[0].mxu0 %v4189
  %v4234 = vpop.f32.mrb[0].mxu0
  %v4235 = vadd.f32 0.0, %v4234
  %v4236 = vpop.f32.mrb[0].mxu0
  %v4237 = vpop.f32.mrb[0].mxu0
  %v4238 = vadd.f32 0.0, %v4237
  %v4239 = vpop.f32.mrb[0].mxu0
  %4240 = vmatprep.mubr.bf16.mxu0 0
  %4241 = vmatmul.mubr.bf16.gmra.mrb[0].mxu0 %v4192
  %v4242 = vpop.f32.mrb[0].mxu0
  %v4243 = vadd.f32 0.0, %v4242
  %v4244 = vpop.f32.mrb[0].mxu0
  %v4245 = vpop.f32.mrb[0].mxu0
  %v4246 = vadd.f32 0.0, %v4245
  %v4247 = vpop.f32.mrb[0].mxu0
  %4248 = vmatprep.mubr.bf16.mxu0 0
  %4249 = vmatmul.mubr.bf16.gmra.mrb[0].mxu0 %v4195
  %v4250 = vpop.f32.mrb[0].mxu0
  %v4251 = vadd.f32 0.0, %v4250
  %v4252 = vpop.f32.mrb[0].mxu0
  %v4253 = vpop.f32.mrb[0].mxu0
  %v4254 = vadd.f32 0.0, %v4253
  %v4255 = vpop.f32.mrb[0].mxu0
  %4256 = vmatprep.mubr.bf16.mxu0 0
  %4257 = vmatmul.mubr.bf16.gmra.mrb[0].mxu0 %v4198
  %v4258 = vpop.f32.mrb[0].mxu0
  %v4259 = vadd.f32 0.0, %v4258
  %v4260 = vpop.f32.mrb[0].mxu0
  %v4261 = vpop.f32.mrb[0].mxu0
  %v4262 = vadd.f32 0.0, %v4261
  %v4263 = vpop.f32.mrb[0].mxu0
  %4264 = vdwg.mxu0
  %v4265 = vpack.c.bf16 %v4161, %v4158
  %v4266 = vpack.c.bf16 %v4169, %v4166
  %v4267 = vpack.c.bf16 %v4177, %v4174
  %v4268 = vpack.c.bf16 %v4185, %v4182
  %v4269 = vpack.c.bf16 %v4238, %v4235
  %v4270 = vpack.c.bf16 %v4246, %v4243
  %v4271 = vpack.c.bf16 %v4254, %v4251
  %v4272 = vpack.c.bf16 %v4262, %v4259
  %s4273 = scalar_lea.vmem %s7, 12
  %v4274 = vld [vmem:[%s4273] sm:$0xf]
  %v4276 = vsel %vm539, %v4265, 0
  %v4279 = vsel %vm539, %v4266, 0
  %v4282 = vsel %vm539, %v4267, 0
  %v4285 = vsel %vm539, %v4268, 0
  %v4288 = vsel %vm539, %v4269, 0
  %v4291 = vsel %vm539, %v4270, 0
  %v4294 = vsel %vm539, %v4271, 0
  %v4297 = vsel %vm539, %v4272, 0
  %v4300 = vsel %vm2046, %v4274, 0
  %4302 = vmatprep.subr.bf16.mxu0 0
  %4303 = vmatpush1.bf16.msra.mxu0 %v4300
  %4304 = vmatprep.subr.bf16.mxu0 0
  %4305 = vmatpush1.bf16.msra.mxu0 0
  %4306 = vmatprep.subr.bf16.mxu0 0
  %4307 = vmatpush1.bf16.msra.mxu0 0
  %4308 = vmatprep.subr.bf16.mxu0 0
  %4309 = vmatpush1.bf16.msra.mxu0 0
  %4310 = vmatprep.subr.bf16.mxu0 0
  %4311 = vmatpush1.bf16.msra.mxu0 0
  %4312 = vmatprep.subr.bf16.mxu0 0
  %4313 = vmatpush1.bf16.msra.mxu0 0
  %4314 = vmatprep.subr.bf16.mxu0 0
  %4315 = vmatpush1.bf16.msra.mxu0 0
  %4316 = vmatprep.subr.bf16.mxu0 0
  %4317 = vmatpush1.bf16.msra.mxu0 0
  %4318 = vmatprep.subr.bf16.mxu0 0
  %4319 = vmatpush1.bf16.msra.mxu0 0
  %4320 = vmatprep.subr.bf16.mxu0 0
  %4321 = vmatpush1.bf16.msra.mxu0 0
  %4322 = vmatprep.subr.bf16.mxu0 0
  %4323 = vmatpush1.bf16.msra.mxu0 0
  %4324 = vmatprep.subr.bf16.mxu0 0
  %4325 = vmatpush1.bf16.msra.mxu0 0
  %4326 = vmatprep.subr.bf16.mxu0 0
  %4327 = vmatpush1.bf16.msra.mxu0 0
  %4328 = vmatprep.subr.bf16.mxu0 0
  %4329 = vmatpush1.bf16.msra.mxu0 0
  %4330 = vmatprep.subr.bf16.mxu0 0
  %4331 = vmatpush1.bf16.msra.mxu0 0
  %4332 = vmatprep.subr.bf16.mxu0 0
  %4333 = vmatpush1.bf16.msra.mxu0 0
  %4334 = vmatprep.mubr.bf16.mxu0 0
  %4335 = vmatmul.mubr.bf16.gmra.mrb[0].mxu0 %v4276
  %v4336 = vpop.f32.mrb[0].mxu0
  %v4337 = vadd.f32 0.0, %v4336
  %v4338 = vpop.f32.mrb[0].mxu0
  %v4339 = vpop.f32.mrb[0].mxu0
  %v4340 = vadd.f32 0.0, %v4339
  %v4341 = vpop.f32.mrb[0].mxu0
  %4342 = vmatprep.mubr.bf16.mxu0 0
  %4343 = vmatmul.mubr.bf16.gmra.mrb[0].mxu0 %v4279
  %v4344 = vpop.f32.mrb[0].mxu0
  %v4345 = vadd.f32 0.0, %v4344
  %v4346 = vpop.f32.mrb[0].mxu0
  %v4347 = vpop.f32.mrb[0].mxu0
  %v4348 = vadd.f32 0.0, %v4347
  %v4349 = vpop.f32.mrb[0].mxu0
  %4350 = vmatprep.mubr.bf16.mxu0 0
  %4351 = vmatmul.mubr.bf16.gmra.mrb[0].mxu0 %v4282
  %v4352 = vpop.f32.mrb[0].mxu0
  %v4353 = vadd.f32 0.0, %v4352
  %v4354 = vpop.f32.mrb[0].mxu0
  %v4355 = vpop.f32.mrb[0].mxu0
  %v4356 = vadd.f32 0.0, %v4355
  %v4357 = vpop.f32.mrb[0].mxu0
  %4358 = vmatprep.mubr.bf16.mxu0 0
  %4359 = vmatmul.mubr.bf16.gmra.mrb[0].mxu0 %v4285
  %v4360 = vpop.f32.mrb[0].mxu0
  %v4361 = vadd.f32 0.0, %v4360
  %v4362 = vpop.f32.mrb[0].mxu0
  %v4363 = vpop.f32.mrb[0].mxu0
  %v4364 = vadd.f32 0.0, %v4363
  %v4365 = vpop.f32.mrb[0].mxu0
  %4366 = vmatprep.mubr.bf16.mxu0 0
  %4367 = vmatmul.mubr.bf16.gmra.mrb[0].mxu0 %v4288
  %v4368 = vpop.f32.mrb[0].mxu0
  %v4369 = vadd.f32 0.0, %v4368
  %v4370 = vpop.f32.mrb[0].mxu0
  %v4371 = vpop.f32.mrb[0].mxu0
  %v4372 = vadd.f32 0.0, %v4371
  %v4373 = vpop.f32.mrb[0].mxu0
  %4374 = vmatprep.mubr.bf16.mxu0 0
  %4375 = vmatmul.mubr.bf16.gmra.mrb[0].mxu0 %v4291
  %v4376 = vpop.f32.mrb[0].mxu0
  %v4377 = vadd.f32 0.0, %v4376
  %v4378 = vpop.f32.mrb[0].mxu0
  %v4379 = vpop.f32.mrb[0].mxu0
  %v4380 = vadd.f32 0.0, %v4379
  %v4381 = vpop.f32.mrb[0].mxu0
  %4382 = vmatprep.mubr.bf16.mxu0 0
  %4383 = vmatmul.mubr.bf16.gmra.mrb[0].mxu0 %v4294
  %v4384 = vpop.f32.mrb[0].mxu0
  %v4385 = vadd.f32 0.0, %v4384
  %v4386 = vpop.f32.mrb[0].mxu0
  %v4387 = vpop.f32.mrb[0].mxu0
  %v4388 = vadd.f32 0.0, %v4387
  %v4389 = vpop.f32.mrb[0].mxu0
  %4390 = vmatprep.mubr.bf16.mxu0 0
  %4391 = vmatmul.mubr.bf16.gmra.mrb[0].mxu0 %v4297
  %v4392 = vpop.f32.mrb[0].mxu0
  %v4393 = vadd.f32 0.0, %v4392
  %v4394 = vpop.f32.mrb[0].mxu0
  %v4395 = vpop.f32.mrb[0].mxu0
  %v4396 = vadd.f32 0.0, %v4395
  %v4397 = vpop.f32.mrb[0].mxu0
  %4398 = vdwg.mxu0
  %v4399 = vadd.f32 %v3327, %v4337
  %v4400 = vadd.f32 %v3328, %v4340
  %v4401 = vadd.f32 %v3329, %v4345
  %v4402 = vadd.f32 %v3330, %v4348
  %v4403 = vadd.f32 %v3331, %v4353
  %v4404 = vadd.f32 %v3332, %v4356
  %v4405 = vadd.f32 %v3333, %v4361
  %v4406 = vadd.f32 %v3334, %v4364
  %v4407 = vadd.f32 %v3335, %v4369
  %v4408 = vadd.f32 %v3336, %v4372
  %v4409 = vadd.f32 %v3337, %v4377
  %v4410 = vadd.f32 %v3338, %v4380
  %v4411 = vadd.f32 %v3339, %v4385
  %v4412 = vadd.f32 %v3340, %v4388
  %v4413 = vadd.f32 %v3341, %v4393
  %v4414 = vadd.f32 %v3342, %v4396
  %v4415 = vld [vmem:[%s8] sm:$0x1]
  %v4417 = vlaneseq
  %v4418 = vshrl.u32 %v4417, 7
  %v4419 = vsub.s32 0, %v4418
  %v4420 = vrot.slane %v4415, %v4419
  %v4422 = vadd.f32 %v4399, %v4420
  %v4423 = vadd.f32 %v4400, %v4420
  %v4424 = vadd.f32 %v4401, %v4420
  %v4425 = vadd.f32 %v4402, %v4420
  %v4426 = vadd.f32 %v4403, %v4420
  %v4427 = vadd.f32 %v4404, %v4420
  %v4428 = vadd.f32 %v4405, %v4420
  %v4429 = vadd.f32 %v4406, %v4420
  %v4430 = vadd.f32 %v4407, %v4420
  %v4431 = vadd.f32 %v4408, %v4420
  %v4432 = vadd.f32 %v4409, %v4420
  %v4433 = vadd.f32 %v4410, %v4420
  %v4434 = vadd.f32 %v4411, %v4420
  %v4435 = vadd.f32 %v4412, %v4420
  %v4436 = vadd.f32 %v4413, %v4420
  %v4437 = vadd.f32 %v4414, %v4420
  %v4438 = vadd.f32 %v77, %v4422
  %v4439 = vadd.f32 %v78, %v4423
  %v4440 = vadd.f32 %v79, %v4424
  %v4441 = vadd.f32 %v80, %v4425
  %v4442 = vadd.f32 %v81, %v4426
  %v4443 = vadd.f32 %v82, %v4427
  %v4444 = vadd.f32 %v83, %v4428
  %v4445 = vadd.f32 %v84, %v4429
  %v4446 = vadd.f32 %v114, %v4430
  %v4447 = vadd.f32 %v115, %v4431
  %v4448 = vadd.f32 %v116, %v4432
  %v4449 = vadd.f32 %v117, %v4433
  %v4450 = vadd.f32 %v118, %v4434
  %v4451 = vadd.f32 %v119, %v4435
  %v4452 = vadd.f32 %v120, %v4436
  %v4453 = vadd.f32 %v121, %v4437
  %v4454 = vld [vmem:[%s9] sm:$0x1]
  %v4455 = vld [vmem:[%s10] sm:$0x1]
  %v4456 = vsel %vm161, %v4438, 0.0
  %4457 = vadd.xlane.f32.xlu0 %v4456
  %v4458 = vpop.xlane.xlu0 %4457
  %v4459 = vsel %vm161, %v4439, 0.0
  %4460 = vadd.xlane.f32.xlu0 %v4459
  %v4461 = vpop.xlane.xlu0 %4460
  %v4462 = vsel %vm161, %v4440, 0.0
  %4463 = vadd.xlane.f32.xlu0 %v4462
  %v4464 = vpop.xlane.xlu0 %4463
  %v4465 = vsel %vm161, %v4441, 0.0
  %4466 = vadd.xlane.f32.xlu0 %v4465
  %v4467 = vpop.xlane.xlu0 %4466
  %v4468 = vsel %vm161, %v4442, 0.0
  %4469 = vadd.xlane.f32.xlu0 %v4468
  %v4470 = vpop.xlane.xlu0 %4469
  %v4471 = vsel %vm161, %v4443, 0.0
  %4472 = vadd.xlane.f32.xlu0 %v4471
  %v4473 = vpop.xlane.xlu0 %4472
  %v4474 = vsel %vm161, %v4444, 0.0
  %4475 = vadd.xlane.f32.xlu0 %v4474
  %v4476 = vpop.xlane.xlu0 %4475
  %v4477 = vsel %vm161, %v4445, 0.0
  %4478 = vadd.xlane.f32.xlu0 %v4477
  %v4479 = vpop.xlane.xlu0 %4478
  %v4480 = vsel %vm161, %v4446, 0.0
  %4481 = vadd.xlane.f32.xlu0 %v4480
  %v4482 = vpop.xlane.xlu0 %4481
  %v4483 = vsel %vm161, %v4447, 0.0
  %4484 = vadd.xlane.f32.xlu0 %v4483
  %v4485 = vpop.xlane.xlu0 %4484
  %v4486 = vsel %vm161, %v4448, 0.0
  %4487 = vadd.xlane.f32.xlu0 %v4486
  %v4488 = vpop.xlane.xlu0 %4487
  %v4489 = vsel %vm161, %v4449, 0.0
  %4490 = vadd.xlane.f32.xlu0 %v4489
  %v4491 = vpop.xlane.xlu0 %4490
  %v4492 = vsel %vm161, %v4450, 0.0
  %4493 = vadd.xlane.f32.xlu0 %v4492
  %v4494 = vpop.xlane.xlu0 %4493
  %v4495 = vsel %vm161, %v4451, 0.0
  %4496 = vadd.xlane.f32.xlu0 %v4495
  %v4497 = vpop.xlane.xlu0 %4496
  %v4498 = vsel %vm161, %v4452, 0.0
  %4499 = vadd.xlane.f32.xlu0 %v4498
  %v4500 = vpop.xlane.xlu0 %4499
  %v4501 = vsel %vm161, %v4453, 0.0
  %4502 = vadd.xlane.f32.xlu0 %v4501
  %v4503 = vpop.xlane.xlu0 %4502
  %v4504 = vrcp.pop 32.0
  %v4505 = vmul.f32 %v4458, %v4504
  %v4506 = vmul.f32 %v4461, %v4504
  %v4507 = vmul.f32 %v4464, %v4504
  %v4508 = vmul.f32 %v4467, %v4504
  %v4509 = vmul.f32 %v4470, %v4504
  %v4510 = vmul.f32 %v4473, %v4504
  %v4511 = vmul.f32 %v4476, %v4504
  %v4512 = vmul.f32 %v4479, %v4504
  %v4513 = vmul.f32 %v4482, %v4504
  %v4514 = vmul.f32 %v4485, %v4504
  %v4515 = vmul.f32 %v4488, %v4504
  %v4516 = vmul.f32 %v4491, %v4504
  %v4517 = vmul.f32 %v4494, %v4504
  %v4518 = vmul.f32 %v4497, %v4504
  %v4519 = vmul.f32 %v4500, %v4504
  %v4520 = vmul.f32 %v4503, %v4504
  %v4521 = vsub.f32 %v4438, %v4505
  %v4522 = vsub.f32 %v4439, %v4506
  %v4523 = vsub.f32 %v4440, %v4507
  %v4524 = vsub.f32 %v4441, %v4508
  %v4525 = vsub.f32 %v4442, %v4509
  %v4526 = vsub.f32 %v4443, %v4510
  %v4527 = vsub.f32 %v4444, %v4511
  %v4528 = vsub.f32 %v4445, %v4512
  %v4529 = vsub.f32 %v4446, %v4513
  %v4530 = vsub.f32 %v4447, %v4514
  %v4531 = vsub.f32 %v4448, %v4515
  %v4532 = vsub.f32 %v4449, %v4516
  %v4533 = vsub.f32 %v4450, %v4517
  %v4534 = vsub.f32 %v4451, %v4518
  %v4535 = vsub.f32 %v4452, %v4519
  %v4536 = vsub.f32 %v4453, %v4520
  %v4537 = vmul.f32 %v4521, %v4521
  %v4538 = vmul.f32 %v4522, %v4522
  %v4539 = vmul.f32 %v4523, %v4523
  %v4540 = vmul.f32 %v4524, %v4524
  %v4541 = vmul.f32 %v4525, %v4525
  %v4542 = vmul.f32 %v4526, %v4526
  %v4543 = vmul.f32 %v4527, %v4527
  %v4544 = vmul.f32 %v4528, %v4528
  %v4545 = vmul.f32 %v4529, %v4529
  %v4546 = vmul.f32 %v4530, %v4530
  %v4547 = vmul.f32 %v4531, %v4531
  %v4548 = vmul.f32 %v4532, %v4532
  %v4549 = vmul.f32 %v4533, %v4533
  %v4550 = vmul.f32 %v4534, %v4534
  %v4551 = vmul.f32 %v4535, %v4535
  %v4552 = vmul.f32 %v4536, %v4536
  %v4553 = vsel %vm161, %v4537, 0.0
  %4554 = vadd.xlane.f32.xlu0 %v4553
  %v4555 = vpop.xlane.xlu0 %4554
  %v4556 = vsel %vm161, %v4538, 0.0
  %4557 = vadd.xlane.f32.xlu0 %v4556
  %v4558 = vpop.xlane.xlu0 %4557
  %v4559 = vsel %vm161, %v4539, 0.0
  %4560 = vadd.xlane.f32.xlu0 %v4559
  %v4561 = vpop.xlane.xlu0 %4560
  %v4562 = vsel %vm161, %v4540, 0.0
  %4563 = vadd.xlane.f32.xlu0 %v4562
  %v4564 = vpop.xlane.xlu0 %4563
  %v4565 = vsel %vm161, %v4541, 0.0
  %4566 = vadd.xlane.f32.xlu0 %v4565
  %v4567 = vpop.xlane.xlu0 %4566
  %v4568 = vsel %vm161, %v4542, 0.0
  %4569 = vadd.xlane.f32.xlu0 %v4568
  %v4570 = vpop.xlane.xlu0 %4569
  %v4571 = vsel %vm161, %v4543, 0.0
  %4572 = vadd.xlane.f32.xlu0 %v4571
  %v4573 = vpop.xlane.xlu0 %4572
  %v4574 = vsel %vm161, %v4544, 0.0
  %4575 = vadd.xlane.f32.xlu0 %v4574
  %v4576 = vpop.xlane.xlu0 %4575
  %v4577 = vsel %vm161, %v4545, 0.0
  %4578 = vadd.xlane.f32.xlu0 %v4577
  %v4579 = vpop.xlane.xlu0 %4578
  %v4580 = vsel %vm161, %v4546, 0.0
  %4581 = vadd.xlane.f32.xlu0 %v4580
  %v4582 = vpop.xlane.xlu0 %4581
  %v4583 = vsel %vm161, %v4547, 0.0
  %4584 = vadd.xlane.f32.xlu0 %v4583
  %v4585 = vpop.xlane.xlu0 %4584
  %v4586 = vsel %vm161, %v4548, 0.0
  %4587 = vadd.xlane.f32.xlu0 %v4586
  %v4588 = vpop.xlane.xlu0 %4587
  %v4589 = vsel %vm161, %v4549, 0.0
  %4590 = vadd.xlane.f32.xlu0 %v4589
  %v4591 = vpop.xlane.xlu0 %4590
  %v4592 = vsel %vm161, %v4550, 0.0
  %4593 = vadd.xlane.f32.xlu0 %v4592
  %v4594 = vpop.xlane.xlu0 %4593
  %v4595 = vsel %vm161, %v4551, 0.0
  %4596 = vadd.xlane.f32.xlu0 %v4595
  %v4597 = vpop.xlane.xlu0 %4596
  %v4598 = vsel %vm161, %v4552, 0.0
  %4599 = vadd.xlane.f32.xlu0 %v4598
  %v4600 = vpop.xlane.xlu0 %4599
  %v4601 = vmul.f32 %v4555, %v4504
  %v4602 = vmul.f32 %v4558, %v4504
  %v4603 = vmul.f32 %v4561, %v4504
  %v4604 = vmul.f32 %v4564, %v4504
  %v4605 = vmul.f32 %v4567, %v4504
  %v4606 = vmul.f32 %v4570, %v4504
  %v4607 = vmul.f32 %v4573, %v4504
  %v4608 = vmul.f32 %v4576, %v4504
  %v4609 = vmul.f32 %v4579, %v4504
  %v4610 = vmul.f32 %v4582, %v4504
  %v4611 = vmul.f32 %v4585, %v4504
  %v4612 = vmul.f32 %v4588, %v4504
  %v4613 = vmul.f32 %v4591, %v4504
  %v4614 = vmul.f32 %v4594, %v4504
  %v4615 = vmul.f32 %v4597, %v4504
  %v4616 = vmul.f32 %v4600, %v4504
  %v4617 = vadd.f32 %v4601, 1e-05
  %v4618 = vadd.f32 %v4602, 1e-05
  %v4619 = vadd.f32 %v4603, 1e-05
  %v4620 = vadd.f32 %v4604, 1e-05
  %v4621 = vadd.f32 %v4605, 1e-05
  %v4622 = vadd.f32 %v4606, 1e-05
  %v4623 = vadd.f32 %v4607, 1e-05
  %v4624 = vadd.f32 %v4608, 1e-05
  %v4625 = vadd.f32 %v4609, 1e-05
  %v4626 = vadd.f32 %v4610, 1e-05
  %v4627 = vadd.f32 %v4611, 1e-05
  %v4628 = vadd.f32 %v4612, 1e-05
  %v4629 = vadd.f32 %v4613, 1e-05
  %v4630 = vadd.f32 %v4614, 1e-05
  %v4631 = vadd.f32 %v4615, 1e-05
  %v4632 = vadd.f32 %v4616, 1e-05
  %v4633 = vrsqrt.pop %v4617
  %v4634 = vrsqrt.pop %v4618
  %v4635 = vrsqrt.pop %v4619
  %v4636 = vrsqrt.pop %v4620
  %v4637 = vrsqrt.pop %v4621
  %v4638 = vrsqrt.pop %v4622
  %v4639 = vrsqrt.pop %v4623
  %v4640 = vrsqrt.pop %v4624
  %v4641 = vrsqrt.pop %v4625
  %v4642 = vrsqrt.pop %v4626
  %v4643 = vrsqrt.pop %v4627
  %v4644 = vrsqrt.pop %v4628
  %v4645 = vrsqrt.pop %v4629
  %v4646 = vrsqrt.pop %v4630
  %v4647 = vrsqrt.pop %v4631
  %v4648 = vrsqrt.pop %v4632
  %v4649 = vmul.f32 %v4521, %v4633
  %v4650 = vmul.f32 %v4522, %v4634
  %v4651 = vmul.f32 %v4523, %v4635
  %v4652 = vmul.f32 %v4524, %v4636
  %v4653 = vmul.f32 %v4525, %v4637
  %v4654 = vmul.f32 %v4526, %v4638
  %v4655 = vmul.f32 %v4527, %v4639
  %v4656 = vmul.f32 %v4528, %v4640
  %v4657 = vmul.f32 %v4529, %v4641
  %v4658 = vmul.f32 %v4530, %v4642
  %v4659 = vmul.f32 %v4531, %v4643
  %v4660 = vmul.f32 %v4532, %v4644
  %v4661 = vmul.f32 %v4533, %v4645
  %v4662 = vmul.f32 %v4534, %v4646
  %v4663 = vmul.f32 %v4535, %v4647
  %v4664 = vmul.f32 %v4536, %v4648
  %v4666 = vlaneseq
  %v4667 = vshrl.u32 %v4666, 7
  %v4668 = vsub.s32 0, %v4667
  %v4669 = vrot.slane %v4454, %v4668
  %v4671 = vmul.f32 %v4649, %v4669
  %v4672 = vmul.f32 %v4650, %v4669
  %v4673 = vmul.f32 %v4651, %v4669
  %v4674 = vmul.f32 %v4652, %v4669
  %v4675 = vmul.f32 %v4653, %v4669
  %v4676 = vmul.f32 %v4654, %v4669
  %v4677 = vmul.f32 %v4655, %v4669
  %v4678 = vmul.f32 %v4656, %v4669
  %v4679 = vmul.f32 %v4657, %v4669
  %v4680 = vmul.f32 %v4658, %v4669
  %v4681 = vmul.f32 %v4659, %v4669
  %v4682 = vmul.f32 %v4660, %v4669
  %v4683 = vmul.f32 %v4661, %v4669
  %v4684 = vmul.f32 %v4662, %v4669
  %v4685 = vmul.f32 %v4663, %v4669
  %v4686 = vmul.f32 %v4664, %v4669
  %v4688 = vlaneseq
  %v4689 = vshrl.u32 %v4688, 7
  %v4690 = vsub.s32 0, %v4689
  %v4691 = vrot.slane %v4455, %v4690
  %v4693 = vadd.f32 %v4671, %v4691
  %v4694 = vadd.f32 %v4672, %v4691
  %v4695 = vadd.f32 %v4673, %v4691
  %v4696 = vadd.f32 %v4674, %v4691
  %v4697 = vadd.f32 %v4675, %v4691
  %v4698 = vadd.f32 %v4676, %v4691
  %v4699 = vadd.f32 %v4677, %v4691
  %v4700 = vadd.f32 %v4678, %v4691
  %v4701 = vadd.f32 %v4679, %v4691
  %v4702 = vadd.f32 %v4680, %v4691
  %v4703 = vadd.f32 %v4681, %v4691
  %v4704 = vadd.f32 %v4682, %v4691
  %v4705 = vadd.f32 %v4683, %v4691
  %v4706 = vadd.f32 %v4684, %v4691
  %v4707 = vadd.f32 %v4685, %v4691
  %v4708 = vadd.f32 %v4686, %v4691
  %v4709 = vpack.c.bf16 %v4694, %v4693
  %v4710 = vpack.c.bf16 %v4696, %v4695
  %v4711 = vpack.c.bf16 %v4698, %v4697
  %v4712 = vpack.c.bf16 %v4700, %v4699
  %v4713 = vpack.c.bf16 %v4702, %v4701
  %v4714 = vpack.c.bf16 %v4704, %v4703
  %v4715 = vpack.c.bf16 %v4706, %v4705
  %v4716 = vpack.c.bf16 %v4708, %v4707
  %v4717 = vld [vmem:[%s11] sm:$0xff]
  %v4718 = vld [vmem:[%s11 + $0x8] sm:$0xff]
  %v4719 = vld [vmem:[%s11 + $0x10] sm:$0xff]
  %v4720 = vld [vmem:[%s11 + $0x18] sm:$0xff]
  %v4721 = vld [vmem:[%s11 + $0x20] sm:$0xff]
  %v4722 = vld [vmem:[%s11 + $0x28] sm:$0xff]
  %v4723 = vld [vmem:[%s11 + $0x30] sm:$0xff]
  %v4724 = vld [vmem:[%s11 + $0x38] sm:$0xff]
  %v4725 = vld [vmem:[%s11 + $0x40] sm:$0xff]
  %v4726 = vld [vmem:[%s11 + $0x48] sm:$0xff]
  %v4727 = vld [vmem:[%s11 + $0x50] sm:$0xff]
  %v4728 = vld [vmem:[%s11 + $0x58] sm:$0xff]
  %v4729 = vld [vmem:[%s11 + $0x60] sm:$0xff]
  %v4730 = vld [vmem:[%s11 + $0x68] sm:$0xff]
  %v4731 = vld [vmem:[%s11 + $0x70] sm:$0xff]
  %v4732 = vld [vmem:[%s11 + $0x78] sm:$0xff]
  %v4733 = vld [vmem:[%s11 + $0x80] sm:$0xff]
  %v4734 = vld [vmem:[%s11 + $0x88] sm:$0xff]
  %v4735 = vld [vmem:[%s11 + $0x90] sm:$0xff]
  %v4736 = vld [vmem:[%s11 + $0x98] sm:$0xff]
  %v4737 = vld [vmem:[%s11 + $0xa0] sm:$0xff]
  %v4738 = vld [vmem:[%s11 + $0xa8] sm:$0xff]
  %v4739 = vld [vmem:[%s11 + $0xb0] sm:$0xff]
  %v4740 = vld [vmem:[%s11 + $0xb8] sm:$0xff]
  %v4741 = vld [vmem:[%s11 + $0xc0] sm:$0xff]
  %v4742 = vld [vmem:[%s11 + $0xc8] sm:$0xff]
  %v4743 = vld [vmem:[%s11 + $0xd0] sm:$0xff]
  %v4744 = vld [vmem:[%s11 + $0xd8] sm:$0xff]
  %v4745 = vld [vmem:[%s11 + $0xe0] sm:$0xff]
  %v4746 = vld [vmem:[%s11 + $0xe8] sm:$0xff]
  %v4747 = vld [vmem:[%s11 + $0xf0] sm:$0xff]
  %v4748 = vld [vmem:[%s11 + $0xf8] sm:$0xff]
  %v4749 = vld [vmem:[%s12] sm:$0xff]
  %v4750 = vld [vmem:[%s12 + $0x8] sm:$0xff]
  %v4753 = vlaneseq
  %v4754 = vshrl.u32 %v4753, 7
  %v4755 = vsub.s32 0, %v4754
  %v4756 = vrot.slane %v4749, %v4755
  %v4757 = vlaneseq
  %v4758 = vshrl.u32 %v4757, 7
  %v4759 = vsub.s32 1, %v4758
  %v4760 = vrot.slane %v4749, %v4759
  %v4761 = vlaneseq
  %v4762 = vshrl.u32 %v4761, 7
  %v4763 = vsub.s32 2, %v4762
  %v4764 = vrot.slane %v4749, %v4763
  %v4765 = vlaneseq
  %v4766 = vshrl.u32 %v4765, 7
  %v4767 = vsub.s32 3, %v4766
  %v4768 = vrot.slane %v4749, %v4767
  %v4769 = vlaneseq
  %v4770 = vshrl.u32 %v4769, 7
  %v4771 = vsub.s32 4, %v4770
  %v4772 = vrot.slane %v4749, %v4771
  %v4773 = vlaneseq
  %v4774 = vshrl.u32 %v4773, 7
  %v4775 = vsub.s32 5, %v4774
  %v4776 = vrot.slane %v4749, %v4775
  %v4777 = vlaneseq
  %v4778 = vshrl.u32 %v4777, 7
  %v4779 = vsub.s32 6, %v4778
  %v4780 = vrot.slane %v4749, %v4779
  %v4781 = vlaneseq
  %v4782 = vshrl.u32 %v4781, 7
  %v4783 = vsub.s32 7, %v4782
  %v4784 = vrot.slane %v4749, %v4783
  %v4785 = vlaneseq
  %v4786 = vshrl.u32 %v4785, 7
  %v4787 = vsub.s32 0, %v4786
  %v4788 = vrot.slane %v4750, %v4787
  %v4789 = vlaneseq
  %v4790 = vshrl.u32 %v4789, 7
  %v4791 = vsub.s32 1, %v4790
  %v4792 = vrot.slane %v4750, %v4791
  %v4793 = vlaneseq
  %v4794 = vshrl.u32 %v4793, 7
  %v4795 = vsub.s32 2, %v4794
  %v4796 = vrot.slane %v4750, %v4795
  %v4797 = vlaneseq
  %v4798 = vshrl.u32 %v4797, 7
  %v4799 = vsub.s32 3, %v4798
  %v4800 = vrot.slane %v4750, %v4799
  %v4801 = vlaneseq
  %v4802 = vshrl.u32 %v4801, 7
  %v4803 = vsub.s32 4, %v4802
  %v4804 = vrot.slane %v4750, %v4803
  %v4805 = vlaneseq
  %v4806 = vshrl.u32 %v4805, 7
  %v4807 = vsub.s32 5, %v4806
  %v4808 = vrot.slane %v4750, %v4807
  %v4809 = vlaneseq
  %v4810 = vshrl.u32 %v4809, 7
  %v4811 = vsub.s32 6, %v4810
  %v4812 = vrot.slane %v4750, %v4811
  %v4813 = vlaneseq
  %v4814 = vshrl.u32 %v4813, 7
  %v4815 = vsub.s32 7, %v4814
  %v4816 = vrot.slane %v4750, %v4815
  %v4865 = vunpack.c.l.b16 %v4717
  %v4866 = vunpack.c.h.b16 %v4717
  %v4867 = vunpack.c.l.b16 %v4718
  %v4868 = vunpack.c.h.b16 %v4718
  %v4869 = vunpack.c.l.b16 %v4719
  %v4870 = vunpack.c.h.b16 %v4719
  %v4871 = vunpack.c.l.b16 %v4720
  %v4872 = vunpack.c.h.b16 %v4720
  %v4873 = vunpack.c.l.b16 %v4721
  %v4874 = vunpack.c.h.b16 %v4721
  %v4875 = vunpack.c.l.b16 %v4722
  %v4876 = vunpack.c.h.b16 %v4722
  %v4877 = vunpack.c.l.b16 %v4723
  %v4878 = vunpack.c.h.b16 %v4723
  %v4879 = vunpack.c.l.b16 %v4724
  %v4880 = vunpack.c.h.b16 %v4724
  %v4881 = vunpack.c.l.b16 %v4725
  %v4882 = vunpack.c.h.b16 %v4725
  %v4883 = vunpack.c.l.b16 %v4726
  %v4884 = vunpack.c.h.b16 %v4726
  %v4885 = vunpack.c.l.b16 %v4727
  %v4886 = vunpack.c.h.b16 %v4727
  %v4887 = vunpack.c.l.b16 %v4728
  %v4888 = vunpack.c.h.b16 %v4728
  %v4889 = vunpack.c.l.b16 %v4729
  %v4890 = vunpack.c.h.b16 %v4729
  %v4891 = vunpack.c.l.b16 %v4730
  %v4892 = vunpack.c.h.b16 %v4730
  %v4893 = vunpack.c.l.b16 %v4731
  %v4894 = vunpack.c.h.b16 %v4731
  %v4895 = vunpack.c.l.b16 %v4732
  %v4896 = vunpack.c.h.b16 %v4732
  %v4897 = vunpack.c.l.b16 %v4733
  %v4898 = vunpack.c.h.b16 %v4733
  %v4899 = vunpack.c.l.b16 %v4734
  %v4900 = vunpack.c.h.b16 %v4734
  %v4901 = vunpack.c.l.b16 %v4735
  %v4902 = vunpack.c.h.b16 %v4735
  %v4903 = vunpack.c.l.b16 %v4736
  %v4904 = vunpack.c.h.b16 %v4736
  %v4905 = vunpack.c.l.b16 %v4737
  %v4906 = vunpack.c.h.b16 %v4737
  %v4907 = vunpack.c.l.b16 %v4738
  %v4908 = vunpack.c.h.b16 %v4738
  %v4909 = vunpack.c.l.b16 %v4739
  %v4910 = vunpack.c.h.b16 %v4739
  %v4911 = vunpack.c.l.b16 %v4740
  %v4912 = vunpack.c.h.b16 %v4740
  %v4913 = vunpack.c.l.b16 %v4741
  %v4914 = vunpack.c.h.b16 %v4741
  %v4915 = vunpack.c.l.b16 %v4742
  %v4916 = vunpack.c.h.b16 %v4742
  %v4917 = vunpack.c.l.b16 %v4743
  %v4918 = vunpack.c.h.b16 %v4743
  %v4919 = vunpack.c.l.b16 %v4744
  %v4920 = vunpack.c.h.b16 %v4744
  %v4921 = vunpack.c.l.b16 %v4745
  %v4922 = vunpack.c.h.b16 %v4745
  %v4923 = vunpack.c.l.b16 %v4746
  %v4924 = vunpack.c.h.b16 %v4746
  %v4925 = vunpack.c.l.b16 %v4747
  %v4926 = vunpack.c.h.b16 %v4747
  %v4927 = vunpack.c.l.b16 %v4748
  %v4928 = vunpack.c.h.b16 %v4748
  %v4929 = vpack.c.b16 %v4881, %v4865
  %v4930 = vpack.c.b16 %v4882, %v4866
  %v4931 = vpack.c.b16 %v4883, %v4867
  %v4932 = vpack.c.b16 %v4884, %v4868
  %v4933 = vpack.c.b16 %v4885, %v4869
  %v4934 = vpack.c.b16 %v4886, %v4870
  %v4935 = vpack.c.b16 %v4887, %v4871
  %v4936 = vpack.c.b16 %v4888, %v4872
  %v4937 = vpack.c.b16 %v4889, %v4873
  %v4938 = vpack.c.b16 %v4890, %v4874
  %v4939 = vpack.c.b16 %v4891, %v4875
  %v4940 = vpack.c.b16 %v4892, %v4876
  %v4941 = vpack.c.b16 %v4893, %v4877
  %v4942 = vpack.c.b16 %v4894, %v4878
  %v4943 = vpack.c.b16 %v4895, %v4879
  %v4944 = vpack.c.b16 %v4896, %v4880
  %v4945 = vpack.c.b16 %v4913, %v4897
  %v4946 = vpack.c.b16 %v4914, %v4898
  %v4947 = vpack.c.b16 %v4915, %v4899
  %v4948 = vpack.c.b16 %v4916, %v4900
  %v4949 = vpack.c.b16 %v4917, %v4901
  %v4950 = vpack.c.b16 %v4918, %v4902
  %v4951 = vpack.c.b16 %v4919, %v4903
  %v4952 = vpack.c.b16 %v4920, %v4904
  %v4953 = vpack.c.b16 %v4921, %v4905
  %v4954 = vpack.c.b16 %v4922, %v4906
  %v4955 = vpack.c.b16 %v4923, %v4907
  %v4956 = vpack.c.b16 %v4924, %v4908
  %v4957 = vpack.c.b16 %v4925, %v4909
  %v4958 = vpack.c.b16 %v4926, %v4910
  %v4959 = vpack.c.b16 %v4927, %v4911
  %v4960 = vpack.c.b16 %v4928, %v4912
  %v4994 = vsel %vm161, %v4709, 0
  %v4997 = vsel %vm161, %v4710, 0
  %v5000 = vsel %vm161, %v4711, 0
  %v5003 = vsel %vm161, %v4712, 0
  %v5006 = vsel %vm161, %v4713, 0
  %v5009 = vsel %vm161, %v4714, 0
  %v5012 = vsel %vm161, %v4715, 0
  %v5015 = vsel %vm161, %v4716, 0
  %5017 = vmatprep.subr.bf16.mxu0 %v4930
  %5018 = vmatpush1.bf16.msra.mxu0 %v4929
  %5019 = vmatprep.subr.bf16.mxu0 %v4946
  %5020 = vmatpush1.bf16.msra.mxu0 %v4945
  %5021 = vmatprep.subr.bf16.mxu0 0
  %5022 = vmatpush1.bf16.msra.mxu0 0
  %5023 = vmatprep.subr.bf16.mxu0 0
  %5024 = vmatpush1.bf16.msra.mxu0 0
  %5025 = vmatprep.subr.bf16.mxu0 0
  %5026 = vmatpush1.bf16.msra.mxu0 0
  %5027 = vmatprep.subr.bf16.mxu0 0
  %5028 = vmatpush1.bf16.msra.mxu0 0
  %5029 = vmatprep.subr.bf16.mxu0 0
  %5030 = vmatpush1.bf16.msra.mxu0 0
  %5031 = vmatprep.subr.bf16.mxu0 0
  %5032 = vmatpush1.bf16.msra.mxu0 0
  %5033 = vmatprep.subr.bf16.mxu0 0
  %5034 = vmatpush1.bf16.msra.mxu0 0
  %5035 = vmatprep.subr.bf16.mxu0 0
  %5036 = vmatpush1.bf16.msra.mxu0 0
  %5037 = vmatprep.subr.bf16.mxu0 0
  %5038 = vmatpush1.bf16.msra.mxu0 0
  %5039 = vmatprep.subr.bf16.mxu0 0
  %5040 = vmatpush1.bf16.msra.mxu0 0
  %5041 = vmatprep.subr.bf16.mxu0 0
  %5042 = vmatpush1.bf16.msra.mxu0 0
  %5043 = vmatprep.subr.bf16.mxu0 0
  %5044 = vmatpush1.bf16.msra.mxu0 0
  %5045 = vmatprep.subr.bf16.mxu0 0
  %5046 = vmatpush1.bf16.msra.mxu0 0
  %5047 = vmatprep.subr.bf16.mxu0 0
  %5048 = vmatpush1.bf16.msra.mxu0 0
  %5049 = vmatprep.mubr.bf16.mxu0 0
  %5050 = vmatmul.mubr.bf16.gmra.mrb[0].mxu0 %v4994
  %v5051 = vpop.f32.mrb[0].mxu0
  %v5052 = vadd.f32 %v4756, %v5051
  %v5053 = vpop.f32.mrb[0].mxu0
  %v5054 = vadd.f32 %v4760, %v5053
  %v5055 = vpop.f32.mrb[0].mxu0
  %v5056 = vadd.f32 %v4756, %v5055
  %v5057 = vpop.f32.mrb[0].mxu0
  %v5058 = vadd.f32 %v4760, %v5057
  %5059 = vmatprep.mubr.bf16.mxu0 0
  %5060 = vmatmul.mubr.bf16.gmra.mrb[0].mxu0 %v4997
  %v5061 = vpop.f32.mrb[0].mxu0
  %v5062 = vadd.f32 %v4756, %v5061
  %v5063 = vpop.f32.mrb[0].mxu0
  %v5064 = vadd.f32 %v4760, %v5063
  %v5065 = vpop.f32.mrb[0].mxu0
  %v5066 = vadd.f32 %v4756, %v5065
  %v5067 = vpop.f32.mrb[0].mxu0
  %v5068 = vadd.f32 %v4760, %v5067
  %5069 = vmatprep.mubr.bf16.mxu0 0
  %5070 = vmatmul.mubr.bf16.gmra.mrb[0].mxu0 %v5000
  %v5071 = vpop.f32.mrb[0].mxu0
  %v5072 = vadd.f32 %v4756, %v5071
  %v5073 = vpop.f32.mrb[0].mxu0
  %v5074 = vadd.f32 %v4760, %v5073
  %v5075 = vpop.f32.mrb[0].mxu0
  %v5076 = vadd.f32 %v4756, %v5075
  %v5077 = vpop.f32.mrb[0].mxu0
  %v5078 = vadd.f32 %v4760, %v5077
  %5079 = vmatprep.mubr.bf16.mxu0 0
  %5080 = vmatmul.mubr.bf16.gmra.mrb[0].mxu0 %v5003
  %v5081 = vpop.f32.mrb[0].mxu0
  %v5082 = vadd.f32 %v4756, %v5081
  %v5083 = vpop.f32.mrb[0].mxu0
  %v5084 = vadd.f32 %v4760, %v5083
  %v5085 = vpop.f32.mrb[0].mxu0
  %v5086 = vadd.f32 %v4756, %v5085
  %v5087 = vpop.f32.mrb[0].mxu0
  %v5088 = vadd.f32 %v4760, %v5087
  %5089 = vmatprep.mubr.bf16.mxu0 0
  %5090 = vmatmul.mubr.bf16.gmra.mrb[0].mxu0 %v5006
  %v5091 = vpop.f32.mrb[0].mxu0
  %v5092 = vadd.f32 %v4756, %v5091
  %v5093 = vpop.f32.mrb[0].mxu0
  %v5094 = vadd.f32 %v4760, %v5093
  %v5095 = vpop.f32.mrb[0].mxu0
  %v5096 = vadd.f32 %v4756, %v5095
  %v5097 = vpop.f32.mrb[0].mxu0
  %v5098 = vadd.f32 %v4760, %v5097
  %5099 = vmatprep.mubr.bf16.mxu0 0
  %5100 = vmatmul.mubr.bf16.gmra.mrb[0].mxu0 %v5009
  %v5101 = vpop.f32.mrb[0].mxu0
  %v5102 = vadd.f32 %v4756, %v5101
  %v5103 = vpop.f32.mrb[0].mxu0
  %v5104 = vadd.f32 %v4760, %v5103
  %v5105 = vpop.f32.mrb[0].mxu0
  %v5106 = vadd.f32 %v4756, %v5105
  %v5107 = vpop.f32.mrb[0].mxu0
  %v5108 = vadd.f32 %v4760, %v5107
  %5109 = vmatprep.mubr.bf16.mxu0 0
  %5110 = vmatmul.mubr.bf16.gmra.mrb[0].mxu0 %v5012
  %v5111 = vpop.f32.mrb[0].mxu0
  %v5112 = vadd.f32 %v4756, %v5111
  %v5113 = vpop.f32.mrb[0].mxu0
  %v5114 = vadd.f32 %v4760, %v5113
  %v5115 = vpop.f32.mrb[0].mxu0
  %v5116 = vadd.f32 %v4756, %v5115
  %v5117 = vpop.f32.mrb[0].mxu0
  %v5118 = vadd.f32 %v4760, %v5117
  %5119 = vmatprep.mubr.bf16.mxu0 0
  %5120 = vmatmul.mubr.bf16.gmra.mrb[0].mxu0 %v5015
  %v5121 = vpop.f32.mrb[0].mxu0
  %v5122 = vadd.f32 %v4756, %v5121
  %v5123 = vpop.f32.mrb[0].mxu0
  %v5124 = vadd.f32 %v4760, %v5123
  %v5125 = vpop.f32.mrb[0].mxu0
  %v5126 = vadd.f32 %v4756, %v5125
  %v5127 = vpop.f32.mrb[0].mxu0
  %v5128 = vadd.f32 %v4760, %v5127
  %5129 = vdwg.mxu0
  %5130 = vmatprep.subr.bf16.mxu0 %v4932
  %5131 = vmatpush1.bf16.msra.mxu0 %v4931
  %5132 = vmatprep.subr.bf16.mxu0 %v4948
  %5133 = vmatpush1.bf16.msra.mxu0 %v4947
  %5134 = vmatprep.subr.bf16.mxu0 0
  %5135 = vmatpush1.bf16.msra.mxu0 0
  %5136 = vmatprep.subr.bf16.mxu0 0
  %5137 = vmatpush1.bf16.msra.mxu0 0
  %5138 = vmatprep.subr.bf16.mxu0 0
  %5139 = vmatpush1.bf16.msra.mxu0 0
  %5140 = vmatprep.subr.bf16.mxu0 0
  %5141 = vmatpush1.bf16.msra.mxu0 0
  %5142 = vmatprep.subr.bf16.mxu0 0
  %5143 = vmatpush1.bf16.msra.mxu0 0
  %5144 = vmatprep.subr.bf16.mxu0 0
  %5145 = vmatpush1.bf16.msra.mxu0 0
  %5146 = vmatprep.subr.bf16.mxu0 0
  %5147 = vmatpush1.bf16.msra.mxu0 0
  %5148 = vmatprep.subr.bf16.mxu0 0
  %5149 = vmatpush1.bf16.msra.mxu0 0
  %5150 = vmatprep.subr.bf16.mxu0 0
  %5151 = vmatpush1.bf16.msra.mxu0 0
  %5152 = vmatprep.subr.bf16.mxu0 0
  %5153 = vmatpush1.bf16.msra.mxu0 0
  %5154 = vmatprep.subr.bf16.mxu0 0
  %5155 = vmatpush1.bf16.msra.mxu0 0
  %5156 = vmatprep.subr.bf16.mxu0 0
  %5157 = vmatpush1.bf16.msra.mxu0 0
  %5158 = vmatprep.subr.bf16.mxu0 0
  %5159 = vmatpush1.bf16.msra.mxu0 0
  %5160 = vmatprep.subr.bf16.mxu0 0
  %5161 = vmatpush1.bf16.msra.mxu0 0
  %5162 = vmatprep.mubr.bf16.mxu0 0
  %5163 = vmatmul.mubr.bf16.gmra.mrb[0].mxu0 %v4994
  %v5164 = vpop.f32.mrb[0].mxu0
  %v5165 = vadd.f32 %v4764, %v5164
  %v5166 = vpop.f32.mrb[0].mxu0
  %v5167 = vadd.f32 %v4768, %v5166
  %v5168 = vpop.f32.mrb[0].mxu0
  %v5169 = vadd.f32 %v4764, %v5168
  %v5170 = vpop.f32.mrb[0].mxu0
  %v5171 = vadd.f32 %v4768, %v5170
  %5172 = vmatprep.mubr.bf16.mxu0 0
  %5173 = vmatmul.mubr.bf16.gmra.mrb[0].mxu0 %v4997
  %v5174 = vpop.f32.mrb[0].mxu0
  %v5175 = vadd.f32 %v4764, %v5174
  %v5176 = vpop.f32.mrb[0].mxu0
  %v5177 = vadd.f32 %v4768, %v5176
  %v5178 = vpop.f32.mrb[0].mxu0
  %v5179 = vadd.f32 %v4764, %v5178
  %v5180 = vpop.f32.mrb[0].mxu0
  %v5181 = vadd.f32 %v4768, %v5180
  %5182 = vmatprep.mubr.bf16.mxu0 0
  %5183 = vmatmul.mubr.bf16.gmra.mrb[0].mxu0 %v5000
  %v5184 = vpop.f32.mrb[0].mxu0
  %v5185 = vadd.f32 %v4764, %v5184
  %v5186 = vpop.f32.mrb[0].mxu0
  %v5187 = vadd.f32 %v4768, %v5186
  %v5188 = vpop.f32.mrb[0].mxu0
  %v5189 = vadd.f32 %v4764, %v5188
  %v5190 = vpop.f32.mrb[0].mxu0
  %v5191 = vadd.f32 %v4768, %v5190
  %5192 = vmatprep.mubr.bf16.mxu0 0
  %5193 = vmatmul.mubr.bf16.gmra.mrb[0].mxu0 %v5003
  %v5194 = vpop.f32.mrb[0].mxu0
  %v5195 = vadd.f32 %v4764, %v5194
  %v5196 = vpop.f32.mrb[0].mxu0
  %v5197 = vadd.f32 %v4768, %v5196
  %v5198 = vpop.f32.mrb[0].mxu0
  %v5199 = vadd.f32 %v4764, %v5198
  %v5200 = vpop.f32.mrb[0].mxu0
  %v5201 = vadd.f32 %v4768, %v5200
  %5202 = vmatprep.mubr.bf16.mxu0 0
  %5203 = vmatmul.mubr.bf16.gmra.mrb[0].mxu0 %v5006
  %v5204 = vpop.f32.mrb[0].mxu0
  %v5205 = vadd.f32 %v4764, %v5204
  %v5206 = vpop.f32.mrb[0].mxu0
  %v5207 = vadd.f32 %v4768, %v5206
  %v5208 = vpop.f32.mrb[0].mxu0
  %v5209 = vadd.f32 %v4764, %v5208
  %v5210 = vpop.f32.mrb[0].mxu0
  %v5211 = vadd.f32 %v4768, %v5210
  %5212 = vmatprep.mubr.bf16.mxu0 0
  %5213 = vmatmul.mubr.bf16.gmra.mrb[0].mxu0 %v5009
  %v5214 = vpop.f32.mrb[0].mxu0
  %v5215 = vadd.f32 %v4764, %v5214
  %v5216 = vpop.f32.mrb[0].mxu0
  %v5217 = vadd.f32 %v4768, %v5216
  %v5218 = vpop.f32.mrb[0].mxu0
  %v5219 = vadd.f32 %v4764, %v5218
  %v5220 = vpop.f32.mrb[0].mxu0
  %v5221 = vadd.f32 %v4768, %v5220
  %5222 = vmatprep.mubr.bf16.mxu0 0
  %5223 = vmatmul.mubr.bf16.gmra.mrb[0].mxu0 %v5012
  %v5224 = vpop.f32.mrb[0].mxu0
  %v5225 = vadd.f32 %v4764, %v5224
  %v5226 = vpop.f32.mrb[0].mxu0
  %v5227 = vadd.f32 %v4768, %v5226
  %v5228 = vpop.f32.mrb[0].mxu0
  %v5229 = vadd.f32 %v4764, %v5228
  %v5230 = vpop.f32.mrb[0].mxu0
  %v5231 = vadd.f32 %v4768, %v5230
  %5232 = vmatprep.mubr.bf16.mxu0 0
  %5233 = vmatmul.mubr.bf16.gmra.mrb[0].mxu0 %v5015
  %v5234 = vpop.f32.mrb[0].mxu0
  %v5235 = vadd.f32 %v4764, %v5234
  %v5236 = vpop.f32.mrb[0].mxu0
  %v5237 = vadd.f32 %v4768, %v5236
  %v5238 = vpop.f32.mrb[0].mxu0
  %v5239 = vadd.f32 %v4764, %v5238
  %v5240 = vpop.f32.mrb[0].mxu0
  %v5241 = vadd.f32 %v4768, %v5240
  %5242 = vdwg.mxu0
  %5243 = vmatprep.subr.bf16.mxu0 %v4934
  %5244 = vmatpush1.bf16.msra.mxu0 %v4933
  %5245 = vmatprep.subr.bf16.mxu0 %v4950
  %5246 = vmatpush1.bf16.msra.mxu0 %v4949
  %5247 = vmatprep.subr.bf16.mxu0 0
  %5248 = vmatpush1.bf16.msra.mxu0 0
  %5249 = vmatprep.subr.bf16.mxu0 0
  %5250 = vmatpush1.bf16.msra.mxu0 0
  %5251 = vmatprep.subr.bf16.mxu0 0
  %5252 = vmatpush1.bf16.msra.mxu0 0
  %5253 = vmatprep.subr.bf16.mxu0 0
  %5254 = vmatpush1.bf16.msra.mxu0 0
  %5255 = vmatprep.subr.bf16.mxu0 0
  %5256 = vmatpush1.bf16.msra.mxu0 0
  %5257 = vmatprep.subr.bf16.mxu0 0
  %5258 = vmatpush1.bf16.msra.mxu0 0
  %5259 = vmatprep.subr.bf16.mxu0 0
  %5260 = vmatpush1.bf16.msra.mxu0 0
  %5261 = vmatprep.subr.bf16.mxu0 0
  %5262 = vmatpush1.bf16.msra.mxu0 0
  %5263 = vmatprep.subr.bf16.mxu0 0
  %5264 = vmatpush1.bf16.msra.mxu0 0
  %5265 = vmatprep.subr.bf16.mxu0 0
  %5266 = vmatpush1.bf16.msra.mxu0 0
  %5267 = vmatprep.subr.bf16.mxu0 0
  %5268 = vmatpush1.bf16.msra.mxu0 0
  %5269 = vmatprep.subr.bf16.mxu0 0
  %5270 = vmatpush1.bf16.msra.mxu0 0
  %5271 = vmatprep.subr.bf16.mxu0 0
  %5272 = vmatpush1.bf16.msra.mxu0 0
  %5273 = vmatprep.subr.bf16.mxu0 0
  %5274 = vmatpush1.bf16.msra.mxu0 0
  %5275 = vmatprep.mubr.bf16.mxu0 0
  %5276 = vmatmul.mubr.bf16.gmra.mrb[0].mxu0 %v4994
  %v5277 = vpop.f32.mrb[0].mxu0
  %v5278 = vadd.f32 %v4772, %v5277
  %v5279 = vpop.f32.mrb[0].mxu0
  %v5280 = vadd.f32 %v4776, %v5279
  %v5281 = vpop.f32.mrb[0].mxu0
  %v5282 = vadd.f32 %v4772, %v5281
  %v5283 = vpop.f32.mrb[0].mxu0
  %v5284 = vadd.f32 %v4776, %v5283
  %5285 = vmatprep.mubr.bf16.mxu0 0
  %5286 = vmatmul.mubr.bf16.gmra.mrb[0].mxu0 %v4997
  %v5287 = vpop.f32.mrb[0].mxu0
  %v5288 = vadd.f32 %v4772, %v5287
  %v5289 = vpop.f32.mrb[0].mxu0
  %v5290 = vadd.f32 %v4776, %v5289
  %v5291 = vpop.f32.mrb[0].mxu0
  %v5292 = vadd.f32 %v4772, %v5291
  %v5293 = vpop.f32.mrb[0].mxu0
  %v5294 = vadd.f32 %v4776, %v5293
  %5295 = vmatprep.mubr.bf16.mxu0 0
  %5296 = vmatmul.mubr.bf16.gmra.mrb[0].mxu0 %v5000
  %v5297 = vpop.f32.mrb[0].mxu0
  %v5298 = vadd.f32 %v4772, %v5297
  %v5299 = vpop.f32.mrb[0].mxu0
  %v5300 = vadd.f32 %v4776, %v5299
  %v5301 = vpop.f32.mrb[0].mxu0
  %v5302 = vadd.f32 %v4772, %v5301
  %v5303 = vpop.f32.mrb[0].mxu0
  %v5304 = vadd.f32 %v4776, %v5303
  %5305 = vmatprep.mubr.bf16.mxu0 0
  %5306 = vmatmul.mubr.bf16.gmra.mrb[0].mxu0 %v5003
  %v5307 = vpop.f32.mrb[0].mxu0
  %v5308 = vadd.f32 %v4772, %v5307
  %v5309 = vpop.f32.mrb[0].mxu0
  %v5310 = vadd.f32 %v4776, %v5309
  %v5311 = vpop.f32.mrb[0].mxu0
  %v5312 = vadd.f32 %v4772, %v5311
  %v5313 = vpop.f32.mrb[0].mxu0
  %v5314 = vadd.f32 %v4776, %v5313
  %5315 = vmatprep.mubr.bf16.mxu0 0
  %5316 = vmatmul.mubr.bf16.gmra.mrb[0].mxu0 %v5006
  %v5317 = vpop.f32.mrb[0].mxu0
  %v5318 = vadd.f32 %v4772, %v5317
  %v5319 = vpop.f32.mrb[0].mxu0
  %v5320 = vadd.f32 %v4776, %v5319
  %v5321 = vpop.f32.mrb[0].mxu0
  %v5322 = vadd.f32 %v4772, %v5321
  %v5323 = vpop.f32.mrb[0].mxu0
  %v5324 = vadd.f32 %v4776, %v5323
  %5325 = vmatprep.mubr.bf16.mxu0 0
  %5326 = vmatmul.mubr.bf16.gmra.mrb[0].mxu0 %v5009
  %v5327 = vpop.f32.mrb[0].mxu0
  %v5328 = vadd.f32 %v4772, %v5327
  %v5329 = vpop.f32.mrb[0].mxu0
  %v5330 = vadd.f32 %v4776, %v5329
  %v5331 = vpop.f32.mrb[0].mxu0
  %v5332 = vadd.f32 %v4772, %v5331
  %v5333 = vpop.f32.mrb[0].mxu0
  %v5334 = vadd.f32 %v4776, %v5333
  %5335 = vmatprep.mubr.bf16.mxu0 0
  %5336 = vmatmul.mubr.bf16.gmra.mrb[0].mxu0 %v5012
  %v5337 = vpop.f32.mrb[0].mxu0
  %v5338 = vadd.f32 %v4772, %v5337
  %v5339 = vpop.f32.mrb[0].mxu0
  %v5340 = vadd.f32 %v4776, %v5339
  %v5341 = vpop.f32.mrb[0].mxu0
  %v5342 = vadd.f32 %v4772, %v5341
  %v5343 = vpop.f32.mrb[0].mxu0
  %v5344 = vadd.f32 %v4776, %v5343
  %5345 = vmatprep.mubr.bf16.mxu0 0
  %5346 = vmatmul.mubr.bf16.gmra.mrb[0].mxu0 %v5015
  %v5347 = vpop.f32.mrb[0].mxu0
  %v5348 = vadd.f32 %v4772, %v5347
  %v5349 = vpop.f32.mrb[0].mxu0
  %v5350 = vadd.f32 %v4776, %v5349
  %v5351 = vpop.f32.mrb[0].mxu0
  %v5352 = vadd.f32 %v4772, %v5351
  %v5353 = vpop.f32.mrb[0].mxu0
  %v5354 = vadd.f32 %v4776, %v5353
  %5355 = vdwg.mxu0
  %5356 = vmatprep.subr.bf16.mxu0 %v4936
  %5357 = vmatpush1.bf16.msra.mxu0 %v4935
  %5358 = vmatprep.subr.bf16.mxu0 %v4952
  %5359 = vmatpush1.bf16.msra.mxu0 %v4951
  %5360 = vmatprep.subr.bf16.mxu0 0
  %5361 = vmatpush1.bf16.msra.mxu0 0
  %5362 = vmatprep.subr.bf16.mxu0 0
  %5363 = vmatpush1.bf16.msra.mxu0 0
  %5364 = vmatprep.subr.bf16.mxu0 0
  %5365 = vmatpush1.bf16.msra.mxu0 0
  %5366 = vmatprep.subr.bf16.mxu0 0
  %5367 = vmatpush1.bf16.msra.mxu0 0
  %5368 = vmatprep.subr.bf16.mxu0 0
  %5369 = vmatpush1.bf16.msra.mxu0 0
  %5370 = vmatprep.subr.bf16.mxu0 0
  %5371 = vmatpush1.bf16.msra.mxu0 0
  %5372 = vmatprep.subr.bf16.mxu0 0
  %5373 = vmatpush1.bf16.msra.mxu0 0
  %5374 = vmatprep.subr.bf16.mxu0 0
  %5375 = vmatpush1.bf16.msra.mxu0 0
  %5376 = vmatprep.subr.bf16.mxu0 0
  %5377 = vmatpush1.bf16.msra.mxu0 0
  %5378 = vmatprep.subr.bf16.mxu0 0
  %5379 = vmatpush1.bf16.msra.mxu0 0
  %5380 = vmatprep.subr.bf16.mxu0 0
  %5381 = vmatpush1.bf16.msra.mxu0 0
  %5382 = vmatprep.subr.bf16.mxu0 0
  %5383 = vmatpush1.bf16.msra.mxu0 0
  %5384 = vmatprep.subr.bf16.mxu0 0
  %5385 = vmatpush1.bf16.msra.mxu0 0
  %5386 = vmatprep.subr.bf16.mxu0 0
  %5387 = vmatpush1.bf16.msra.mxu0 0
  %5388 = vmatprep.mubr.bf16.mxu0 0
  %5389 = vmatmul.mubr.bf16.gmra.mrb[0].mxu0 %v4994
  %v5390 = vpop.f32.mrb[0].mxu0
  %v5391 = vadd.f32 %v4780, %v5390
  %v5392 = vpop.f32.mrb[0].mxu0
  %v5393 = vadd.f32 %v4784, %v5392
  %v5394 = vpop.f32.mrb[0].mxu0
  %v5395 = vadd.f32 %v4780, %v5394
  %v5396 = vpop.f32.mrb[0].mxu0
  %v5397 = vadd.f32 %v4784, %v5396
  %5398 = vmatprep.mubr.bf16.mxu0 0
  %5399 = vmatmul.mubr.bf16.gmra.mrb[0].mxu0 %v4997
  %v5400 = vpop.f32.mrb[0].mxu0
  %v5401 = vadd.f32 %v4780, %v5400
  %v5402 = vpop.f32.mrb[0].mxu0
  %v5403 = vadd.f32 %v4784, %v5402
  %v5404 = vpop.f32.mrb[0].mxu0
  %v5405 = vadd.f32 %v4780, %v5404
  %v5406 = vpop.f32.mrb[0].mxu0
  %v5407 = vadd.f32 %v4784, %v5406
  %5408 = vmatprep.mubr.bf16.mxu0 0
  %5409 = vmatmul.mubr.bf16.gmra.mrb[0].mxu0 %v5000
  %v5410 = vpop.f32.mrb[0].mxu0
  %v5411 = vadd.f32 %v4780, %v5410
  %v5412 = vpop.f32.mrb[0].mxu0
  %v5413 = vadd.f32 %v4784, %v5412
  %v5414 = vpop.f32.mrb[0].mxu0
  %v5415 = vadd.f32 %v4780, %v5414
  %v5416 = vpop.f32.mrb[0].mxu0
  %v5417 = vadd.f32 %v4784, %v5416
  %5418 = vmatprep.mubr.bf16.mxu0 0
  %5419 = vmatmul.mubr.bf16.gmra.mrb[0].mxu0 %v5003
  %v5420 = vpop.f32.mrb[0].mxu0
  %v5421 = vadd.f32 %v4780, %v5420
  %v5422 = vpop.f32.mrb[0].mxu0
  %v5423 = vadd.f32 %v4784, %v5422
  %v5424 = vpop.f32.mrb[0].mxu0
  %v5425 = vadd.f32 %v4780, %v5424
  %v5426 = vpop.f32.mrb[0].mxu0
  %v5427 = vadd.f32 %v4784, %v5426
  %5428 = vmatprep.mubr.bf16.mxu0 0
  %5429 = vmatmul.mubr.bf16.gmra.mrb[0].mxu0 %v5006
  %v5430 = vpop.f32.mrb[0].mxu0
  %v5431 = vadd.f32 %v4780, %v5430
  %v5432 = vpop.f32.mrb[0].mxu0
  %v5433 = vadd.f32 %v4784, %v5432
  %v5434 = vpop.f32.mrb[0].mxu0
  %v5435 = vadd.f32 %v4780, %v5434
  %v5436 = vpop.f32.mrb[0].mxu0
  %v5437 = vadd.f32 %v4784, %v5436
  %5438 = vmatprep.mubr.bf16.mxu0 0
  %5439 = vmatmul.mubr.bf16.gmra.mrb[0].mxu0 %v5009
  %v5440 = vpop.f32.mrb[0].mxu0
  %v5441 = vadd.f32 %v4780, %v5440
  %v5442 = vpop.f32.mrb[0].mxu0
  %v5443 = vadd.f32 %v4784, %v5442
  %v5444 = vpop.f32.mrb[0].mxu0
  %v5445 = vadd.f32 %v4780, %v5444
  %v5446 = vpop.f32.mrb[0].mxu0
  %v5447 = vadd.f32 %v4784, %v5446
  %5448 = vmatprep.mubr.bf16.mxu0 0
  %5449 = vmatmul.mubr.bf16.gmra.mrb[0].mxu0 %v5012
  %v5450 = vpop.f32.mrb[0].mxu0
  %v5451 = vadd.f32 %v4780, %v5450
  %v5452 = vpop.f32.mrb[0].mxu0
  %v5453 = vadd.f32 %v4784, %v5452
  %v5454 = vpop.f32.mrb[0].mxu0
  %v5455 = vadd.f32 %v4780, %v5454
  %v5456 = vpop.f32.mrb[0].mxu0
  %v5457 = vadd.f32 %v4784, %v5456
  %5458 = vmatprep.mubr.bf16.mxu0 0
  %5459 = vmatmul.mubr.bf16.gmra.mrb[0].mxu0 %v5015
  %v5460 = vpop.f32.mrb[0].mxu0
  %v5461 = vadd.f32 %v4780, %v5460
  %v5462 = vpop.f32.mrb[0].mxu0
  %v5463 = vadd.f32 %v4784, %v5462
  %v5464 = vpop.f32.mrb[0].mxu0
  %v5465 = vadd.f32 %v4780, %v5464
  %v5466 = vpop.f32.mrb[0].mxu0
  %v5467 = vadd.f32 %v4784, %v5466
  %5468 = vdwg.mxu0
  %5469 = vmatprep.subr.bf16.mxu0 %v4938
  %5470 = vmatpush1.bf16.msra.mxu0 %v4937
  %5471 = vmatprep.subr.bf16.mxu0 %v4954
  %5472 = vmatpush1.bf16.msra.mxu0 %v4953
  %5473 = vmatprep.subr.bf16.mxu0 0
  %5474 = vmatpush1.bf16.msra.mxu0 0
  %5475 = vmatprep.subr.bf16.mxu0 0
  %5476 = vmatpush1.bf16.msra.mxu0 0
  %5477 = vmatprep.subr.bf16.mxu0 0
  %5478 = vmatpush1.bf16.msra.mxu0 0
  %5479 = vmatprep.subr.bf16.mxu0 0
  %5480 = vmatpush1.bf16.msra.mxu0 0
  %5481 = vmatprep.subr.bf16.mxu0 0
  %5482 = vmatpush1.bf16.msra.mxu0 0
  %5483 = vmatprep.subr.bf16.mxu0 0
  %5484 = vmatpush1.bf16.msra.mxu0 0
  %5485 = vmatprep.subr.bf16.mxu0 0
  %5486 = vmatpush1.bf16.msra.mxu0 0
  %5487 = vmatprep.subr.bf16.mxu0 0
  %5488 = vmatpush1.bf16.msra.mxu0 0
  %5489 = vmatprep.subr.bf16.mxu0 0
  %5490 = vmatpush1.bf16.msra.mxu0 0
  %5491 = vmatprep.subr.bf16.mxu0 0
  %5492 = vmatpush1.bf16.msra.mxu0 0
  %5493 = vmatprep.subr.bf16.mxu0 0
  %5494 = vmatpush1.bf16.msra.mxu0 0
  %5495 = vmatprep.subr.bf16.mxu0 0
  %5496 = vmatpush1.bf16.msra.mxu0 0
  %5497 = vmatprep.subr.bf16.mxu0 0
  %5498 = vmatpush1.bf16.msra.mxu0 0
  %5499 = vmatprep.subr.bf16.mxu0 0
  %5500 = vmatpush1.bf16.msra.mxu0 0
  %5501 = vmatprep.mubr.bf16.mxu0 0
  %5502 = vmatmul.mubr.bf16.gmra.mrb[0].mxu0 %v4994
  %v5503 = vpop.f32.mrb[0].mxu0
  %v5504 = vadd.f32 %v4788, %v5503
  %v5505 = vpop.f32.mrb[0].mxu0
  %v5506 = vadd.f32 %v4792, %v5505
  %v5507 = vpop.f32.mrb[0].mxu0
  %v5508 = vadd.f32 %v4788, %v5507
  %v5509 = vpop.f32.mrb[0].mxu0
  %v5510 = vadd.f32 %v4792, %v5509
  %5511 = vmatprep.mubr.bf16.mxu0 0
  %5512 = vmatmul.mubr.bf16.gmra.mrb[0].mxu0 %v4997
  %v5513 = vpop.f32.mrb[0].mxu0
  %v5514 = vadd.f32 %v4788, %v5513
  %v5515 = vpop.f32.mrb[0].mxu0
  %v5516 = vadd.f32 %v4792, %v5515
  %v5517 = vpop.f32.mrb[0].mxu0
  %v5518 = vadd.f32 %v4788, %v5517
  %v5519 = vpop.f32.mrb[0].mxu0
  %v5520 = vadd.f32 %v4792, %v5519
  %5521 = vmatprep.mubr.bf16.mxu0 0
  %5522 = vmatmul.mubr.bf16.gmra.mrb[0].mxu0 %v5000
  %v5523 = vpop.f32.mrb[0].mxu0
  %v5524 = vadd.f32 %v4788, %v5523
  %v5525 = vpop.f32.mrb[0].mxu0
  %v5526 = vadd.f32 %v4792, %v5525
  %v5527 = vpop.f32.mrb[0].mxu0
  %v5528 = vadd.f32 %v4788, %v5527
  %v5529 = vpop.f32.mrb[0].mxu0
  %v5530 = vadd.f32 %v4792, %v5529
  %5531 = vmatprep.mubr.bf16.mxu0 0
  %5532 = vmatmul.mubr.bf16.gmra.mrb[0].mxu0 %v5003
  %v5533 = vpop.f32.mrb[0].mxu0
  %v5534 = vadd.f32 %v4788, %v5533
  %v5535 = vpop.f32.mrb[0].mxu0
  %v5536 = vadd.f32 %v4792, %v5535
  %v5537 = vpop.f32.mrb[0].mxu0
  %v5538 = vadd.f32 %v4788, %v5537
  %v5539 = vpop.f32.mrb[0].mxu0
  %v5540 = vadd.f32 %v4792, %v5539
  %5541 = vmatprep.mubr.bf16.mxu0 0
  %5542 = vmatmul.mubr.bf16.gmra.mrb[0].mxu0 %v5006
  %v5543 = vpop.f32.mrb[0].mxu0
  %v5544 = vadd.f32 %v4788, %v5543
  %v5545 = vpop.f32.mrb[0].mxu0
  %v5546 = vadd.f32 %v4792, %v5545
  %v5547 = vpop.f32.mrb[0].mxu0
  %v5548 = vadd.f32 %v4788, %v5547
  %v5549 = vpop.f32.mrb[0].mxu0
  %v5550 = vadd.f32 %v4792, %v5549
  %5551 = vmatprep.mubr.bf16.mxu0 0
  %5552 = vmatmul.mubr.bf16.gmra.mrb[0].mxu0 %v5009
  %v5553 = vpop.f32.mrb[0].mxu0
  %v5554 = vadd.f32 %v4788, %v5553
  %v5555 = vpop.f32.mrb[0].mxu0
  %v5556 = vadd.f32 %v4792, %v5555
  %v5557 = vpop.f32.mrb[0].mxu0
  %v5558 = vadd.f32 %v4788, %v5557
  %v5559 = vpop.f32.mrb[0].mxu0
  %v5560 = vadd.f32 %v4792, %v5559
  %5561 = vmatprep.mubr.bf16.mxu0 0
  %5562 = vmatmul.mubr.bf16.gmra.mrb[0].mxu0 %v5012
  %v5563 = vpop.f32.mrb[0].mxu0
  %v5564 = vadd.f32 %v4788, %v5563
  %v5565 = vpop.f32.mrb[0].mxu0
  %v5566 = vadd.f32 %v4792, %v5565
  %v5567 = vpop.f32.mrb[0].mxu0
  %v5568 = vadd.f32 %v4788, %v5567
  %v5569 = vpop.f32.mrb[0].mxu0
  %v5570 = vadd.f32 %v4792, %v5569
  %5571 = vmatprep.mubr.bf16.mxu0 0
  %5572 = vmatmul.mubr.bf16.gmra.mrb[0].mxu0 %v5015
  %v5573 = vpop.f32.mrb[0].mxu0
  %v5574 = vadd.f32 %v4788, %v5573
  %v5575 = vpop.f32.mrb[0].mxu0
  %v5576 = vadd.f32 %v4792, %v5575
  %v5577 = vpop.f32.mrb[0].mxu0
  %v5578 = vadd.f32 %v4788, %v5577
  %v5579 = vpop.f32.mrb[0].mxu0
  %v5580 = vadd.f32 %v4792, %v5579
  %5581 = vdwg.mxu0
  %5582 = vmatprep.subr.bf16.mxu0 %v4940
  %5583 = vmatpush1.bf16.msra.mxu0 %v4939
  %5584 = vmatprep.subr.bf16.mxu0 %v4956
  %5585 = vmatpush1.bf16.msra.mxu0 %v4955
  %5586 = vmatprep.subr.bf16.mxu0 0
  %5587 = vmatpush1.bf16.msra.mxu0 0
  %5588 = vmatprep.subr.bf16.mxu0 0
  %5589 = vmatpush1.bf16.msra.mxu0 0
  %5590 = vmatprep.subr.bf16.mxu0 0
  %5591 = vmatpush1.bf16.msra.mxu0 0
  %5592 = vmatprep.subr.bf16.mxu0 0
  %5593 = vmatpush1.bf16.msra.mxu0 0
  %5594 = vmatprep.subr.bf16.mxu0 0
  %5595 = vmatpush1.bf16.msra.mxu0 0
  %5596 = vmatprep.subr.bf16.mxu0 0
  %5597 = vmatpush1.bf16.msra.mxu0 0
  %5598 = vmatprep.subr.bf16.mxu0 0
  %5599 = vmatpush1.bf16.msra.mxu0 0
  %5600 = vmatprep.subr.bf16.mxu0 0
  %5601 = vmatpush1.bf16.msra.mxu0 0
  %5602 = vmatprep.subr.bf16.mxu0 0
  %5603 = vmatpush1.bf16.msra.mxu0 0
  %5604 = vmatprep.subr.bf16.mxu0 0
  %5605 = vmatpush1.bf16.msra.mxu0 0
  %5606 = vmatprep.subr.bf16.mxu0 0
  %5607 = vmatpush1.bf16.msra.mxu0 0
  %5608 = vmatprep.subr.bf16.mxu0 0
  %5609 = vmatpush1.bf16.msra.mxu0 0
  %5610 = vmatprep.subr.bf16.mxu0 0
  %5611 = vmatpush1.bf16.msra.mxu0 0
  %5612 = vmatprep.subr.bf16.mxu0 0
  %5613 = vmatpush1.bf16.msra.mxu0 0
  %5614 = vmatprep.mubr.bf16.mxu0 0
  %5615 = vmatmul.mubr.bf16.gmra.mrb[0].mxu0 %v4994
  %v5616 = vpop.f32.mrb[0].mxu0
  %v5617 = vadd.f32 %v4796, %v5616
  %v5618 = vpop.f32.mrb[0].mxu0
  %v5619 = vadd.f32 %v4800, %v5618
  %v5620 = vpop.f32.mrb[0].mxu0
  %v5621 = vadd.f32 %v4796, %v5620
  %v5622 = vpop.f32.mrb[0].mxu0
  %v5623 = vadd.f32 %v4800, %v5622
  %5624 = vmatprep.mubr.bf16.mxu0 0
  %5625 = vmatmul.mubr.bf16.gmra.mrb[0].mxu0 %v4997
  %v5626 = vpop.f32.mrb[0].mxu0
  %v5627 = vadd.f32 %v4796, %v5626
  %v5628 = vpop.f32.mrb[0].mxu0
  %v5629 = vadd.f32 %v4800, %v5628
  %v5630 = vpop.f32.mrb[0].mxu0
  %v5631 = vadd.f32 %v4796, %v5630
  %v5632 = vpop.f32.mrb[0].mxu0
  %v5633 = vadd.f32 %v4800, %v5632
  %5634 = vmatprep.mubr.bf16.mxu0 0
  %5635 = vmatmul.mubr.bf16.gmra.mrb[0].mxu0 %v5000
  %v5636 = vpop.f32.mrb[0].mxu0
  %v5637 = vadd.f32 %v4796, %v5636
  %v5638 = vpop.f32.mrb[0].mxu0
  %v5639 = vadd.f32 %v4800, %v5638
  %v5640 = vpop.f32.mrb[0].mxu0
  %v5641 = vadd.f32 %v4796, %v5640
  %v5642 = vpop.f32.mrb[0].mxu0
  %v5643 = vadd.f32 %v4800, %v5642
  %5644 = vmatprep.mubr.bf16.mxu0 0
  %5645 = vmatmul.mubr.bf16.gmra.mrb[0].mxu0 %v5003
  %v5646 = vpop.f32.mrb[0].mxu0
  %v5647 = vadd.f32 %v4796, %v5646
  %v5648 = vpop.f32.mrb[0].mxu0
  %v5649 = vadd.f32 %v4800, %v5648
  %v5650 = vpop.f32.mrb[0].mxu0
  %v5651 = vadd.f32 %v4796, %v5650
  %v5652 = vpop.f32.mrb[0].mxu0
  %v5653 = vadd.f32 %v4800, %v5652
  %5654 = vmatprep.mubr.bf16.mxu0 0
  %5655 = vmatmul.mubr.bf16.gmra.mrb[0].mxu0 %v5006
  %v5656 = vpop.f32.mrb[0].mxu0
  %v5657 = vadd.f32 %v4796, %v5656
  %v5658 = vpop.f32.mrb[0].mxu0
  %v5659 = vadd.f32 %v4800, %v5658
  %v5660 = vpop.f32.mrb[0].mxu0
  %v5661 = vadd.f32 %v4796, %v5660
  %v5662 = vpop.f32.mrb[0].mxu0
  %v5663 = vadd.f32 %v4800, %v5662
  %5664 = vmatprep.mubr.bf16.mxu0 0
  %5665 = vmatmul.mubr.bf16.gmra.mrb[0].mxu0 %v5009
  %v5666 = vpop.f32.mrb[0].mxu0
  %v5667 = vadd.f32 %v4796, %v5666
  %v5668 = vpop.f32.mrb[0].mxu0
  %v5669 = vadd.f32 %v4800, %v5668
  %v5670 = vpop.f32.mrb[0].mxu0
  %v5671 = vadd.f32 %v4796, %v5670
  %v5672 = vpop.f32.mrb[0].mxu0
  %v5673 = vadd.f32 %v4800, %v5672
  %5674 = vmatprep.mubr.bf16.mxu0 0
  %5675 = vmatmul.mubr.bf16.gmra.mrb[0].mxu0 %v5012
  %v5676 = vpop.f32.mrb[0].mxu0
  %v5677 = vadd.f32 %v4796, %v5676
  %v5678 = vpop.f32.mrb[0].mxu0
  %v5679 = vadd.f32 %v4800, %v5678
  %v5680 = vpop.f32.mrb[0].mxu0
  %v5681 = vadd.f32 %v4796, %v5680
  %v5682 = vpop.f32.mrb[0].mxu0
  %v5683 = vadd.f32 %v4800, %v5682
  %5684 = vmatprep.mubr.bf16.mxu0 0
  %5685 = vmatmul.mubr.bf16.gmra.mrb[0].mxu0 %v5015
  %v5686 = vpop.f32.mrb[0].mxu0
  %v5687 = vadd.f32 %v4796, %v5686
  %v5688 = vpop.f32.mrb[0].mxu0
  %v5689 = vadd.f32 %v4800, %v5688
  %v5690 = vpop.f32.mrb[0].mxu0
  %v5691 = vadd.f32 %v4796, %v5690
  %v5692 = vpop.f32.mrb[0].mxu0
  %v5693 = vadd.f32 %v4800, %v5692
  %5694 = vdwg.mxu0
  %5695 = vmatprep.subr.bf16.mxu0 %v4942
  %5696 = vmatpush1.bf16.msra.mxu0 %v4941
  %5697 = vmatprep.subr.bf16.mxu0 %v4958
  %5698 = vmatpush1.bf16.msra.mxu0 %v4957
  %5699 = vmatprep.subr.bf16.mxu0 0
  %5700 = vmatpush1.bf16.msra.mxu0 0
  %5701 = vmatprep.subr.bf16.mxu0 0
  %5702 = vmatpush1.bf16.msra.mxu0 0
  %5703 = vmatprep.subr.bf16.mxu0 0
  %5704 = vmatpush1.bf16.msra.mxu0 0
  %5705 = vmatprep.subr.bf16.mxu0 0
  %5706 = vmatpush1.bf16.msra.mxu0 0
  %5707 = vmatprep.subr.bf16.mxu0 0
  %5708 = vmatpush1.bf16.msra.mxu0 0
  %5709 = vmatprep.subr.bf16.mxu0 0
  %5710 = vmatpush1.bf16.msra.mxu0 0
  %5711 = vmatprep.subr.bf16.mxu0 0
  %5712 = vmatpush1.bf16.msra.mxu0 0
  %5713 = vmatprep.subr.bf16.mxu0 0
  %5714 = vmatpush1.bf16.msra.mxu0 0
  %5715 = vmatprep.subr.bf16.mxu0 0
  %5716 = vmatpush1.bf16.msra.mxu0 0
  %5717 = vmatprep.subr.bf16.mxu0 0
  %5718 = vmatpush1.bf16.msra.mxu0 0
  %5719 = vmatprep.subr.bf16.mxu0 0
  %5720 = vmatpush1.bf16.msra.mxu0 0
  %5721 = vmatprep.subr.bf16.mxu0 0
  %5722 = vmatpush1.bf16.msra.mxu0 0
  %5723 = vmatprep.subr.bf16.mxu0 0
  %5724 = vmatpush1.bf16.msra.mxu0 0
  %5725 = vmatprep.subr.bf16.mxu0 0
  %5726 = vmatpush1.bf16.msra.mxu0 0
  %5727 = vmatprep.mubr.bf16.mxu0 0
  %5728 = vmatmul.mubr.bf16.gmra.mrb[0].mxu0 %v4994
  %v5729 = vpop.f32.mrb[0].mxu0
  %v5730 = vadd.f32 %v4804, %v5729
  %v5731 = vpop.f32.mrb[0].mxu0
  %v5732 = vadd.f32 %v4808, %v5731
  %v5733 = vpop.f32.mrb[0].mxu0
  %v5734 = vadd.f32 %v4804, %v5733
  %v5735 = vpop.f32.mrb[0].mxu0
  %v5736 = vadd.f32 %v4808, %v5735
  %5737 = vmatprep.mubr.bf16.mxu0 0
  %5738 = vmatmul.mubr.bf16.gmra.mrb[0].mxu0 %v4997
  %v5739 = vpop.f32.mrb[0].mxu0
  %v5740 = vadd.f32 %v4804, %v5739
  %v5741 = vpop.f32.mrb[0].mxu0
  %v5742 = vadd.f32 %v4808, %v5741
  %v5743 = vpop.f32.mrb[0].mxu0
  %v5744 = vadd.f32 %v4804, %v5743
  %v5745 = vpop.f32.mrb[0].mxu0
  %v5746 = vadd.f32 %v4808, %v5745
  %5747 = vmatprep.mubr.bf16.mxu0 0
  %5748 = vmatmul.mubr.bf16.gmra.mrb[0].mxu0 %v5000
  %v5749 = vpop.f32.mrb[0].mxu0
  %v5750 = vadd.f32 %v4804, %v5749
  %v5751 = vpop.f32.mrb[0].mxu0
  %v5752 = vadd.f32 %v4808, %v5751
  %v5753 = vpop.f32.mrb[0].mxu0
  %v5754 = vadd.f32 %v4804, %v5753
  %v5755 = vpop.f32.mrb[0].mxu0
  %v5756 = vadd.f32 %v4808, %v5755
  %5757 = vmatprep.mubr.bf16.mxu0 0
  %5758 = vmatmul.mubr.bf16.gmra.mrb[0].mxu0 %v5003
  %v5759 = vpop.f32.mrb[0].mxu0
  %v5760 = vadd.f32 %v4804, %v5759
  %v5761 = vpop.f32.mrb[0].mxu0
  %v5762 = vadd.f32 %v4808, %v5761
  %v5763 = vpop.f32.mrb[0].mxu0
  %v5764 = vadd.f32 %v4804, %v5763
  %v5765 = vpop.f32.mrb[0].mxu0
  %v5766 = vadd.f32 %v4808, %v5765
  %5767 = vmatprep.mubr.bf16.mxu0 0
  %5768 = vmatmul.mubr.bf16.gmra.mrb[0].mxu0 %v5006
  %v5769 = vpop.f32.mrb[0].mxu0
  %v5770 = vadd.f32 %v4804, %v5769
  %v5771 = vpop.f32.mrb[0].mxu0
  %v5772 = vadd.f32 %v4808, %v5771
  %v5773 = vpop.f32.mrb[0].mxu0
  %v5774 = vadd.f32 %v4804, %v5773
  %v5775 = vpop.f32.mrb[0].mxu0
  %v5776 = vadd.f32 %v4808, %v5775
  %5777 = vmatprep.mubr.bf16.mxu0 0
  %5778 = vmatmul.mubr.bf16.gmra.mrb[0].mxu0 %v5009
  %v5779 = vpop.f32.mrb[0].mxu0
  %v5780 = vadd.f32 %v4804, %v5779
  %v5781 = vpop.f32.mrb[0].mxu0
  %v5782 = vadd.f32 %v4808, %v5781
  %v5783 = vpop.f32.mrb[0].mxu0
  %v5784 = vadd.f32 %v4804, %v5783
  %v5785 = vpop.f32.mrb[0].mxu0
  %v5786 = vadd.f32 %v4808, %v5785
  %5787 = vmatprep.mubr.bf16.mxu0 0
  %5788 = vmatmul.mubr.bf16.gmra.mrb[0].mxu0 %v5012
  %v5789 = vpop.f32.mrb[0].mxu0
  %v5790 = vadd.f32 %v4804, %v5789
  %v5791 = vpop.f32.mrb[0].mxu0
  %v5792 = vadd.f32 %v4808, %v5791
  %v5793 = vpop.f32.mrb[0].mxu0
  %v5794 = vadd.f32 %v4804, %v5793
  %v5795 = vpop.f32.mrb[0].mxu0
  %v5796 = vadd.f32 %v4808, %v5795
  %5797 = vmatprep.mubr.bf16.mxu0 0
  %5798 = vmatmul.mubr.bf16.gmra.mrb[0].mxu0 %v5015
  %v5799 = vpop.f32.mrb[0].mxu0
  %v5800 = vadd.f32 %v4804, %v5799
  %v5801 = vpop.f32.mrb[0].mxu0
  %v5802 = vadd.f32 %v4808, %v5801
  %v5803 = vpop.f32.mrb[0].mxu0
  %v5804 = vadd.f32 %v4804, %v5803
  %v5805 = vpop.f32.mrb[0].mxu0
  %v5806 = vadd.f32 %v4808, %v5805
  %5807 = vdwg.mxu0
  %5808 = vmatprep.subr.bf16.mxu0 %v4944
  %5809 = vmatpush1.bf16.msra.mxu0 %v4943
  %5810 = vmatprep.subr.bf16.mxu0 %v4960
  %5811 = vmatpush1.bf16.msra.mxu0 %v4959
  %5812 = vmatprep.subr.bf16.mxu0 0
  %5813 = vmatpush1.bf16.msra.mxu0 0
  %5814 = vmatprep.subr.bf16.mxu0 0
  %5815 = vmatpush1.bf16.msra.mxu0 0
  %5816 = vmatprep.subr.bf16.mxu0 0
  %5817 = vmatpush1.bf16.msra.mxu0 0
  %5818 = vmatprep.subr.bf16.mxu0 0
  %5819 = vmatpush1.bf16.msra.mxu0 0
  %5820 = vmatprep.subr.bf16.mxu0 0
  %5821 = vmatpush1.bf16.msra.mxu0 0
  %5822 = vmatprep.subr.bf16.mxu0 0
  %5823 = vmatpush1.bf16.msra.mxu0 0
  %5824 = vmatprep.subr.bf16.mxu0 0
  %5825 = vmatpush1.bf16.msra.mxu0 0
  %5826 = vmatprep.subr.bf16.mxu0 0
  %5827 = vmatpush1.bf16.msra.mxu0 0
  %5828 = vmatprep.subr.bf16.mxu0 0
  %5829 = vmatpush1.bf16.msra.mxu0 0
  %5830 = vmatprep.subr.bf16.mxu0 0
  %5831 = vmatpush1.bf16.msra.mxu0 0
  %5832 = vmatprep.subr.bf16.mxu0 0
  %5833 = vmatpush1.bf16.msra.mxu0 0
  %5834 = vmatprep.subr.bf16.mxu0 0
  %5835 = vmatpush1.bf16.msra.mxu0 0
  %5836 = vmatprep.subr.bf16.mxu0 0
  %5837 = vmatpush1.bf16.msra.mxu0 0
  %5838 = vmatprep.subr.bf16.mxu0 0
  %5839 = vmatpush1.bf16.msra.mxu0 0
  %5840 = vmatprep.mubr.bf16.mxu0 0
  %5841 = vmatmul.mubr.bf16.gmra.mrb[0].mxu0 %v4994
  %v5842 = vpop.f32.mrb[0].mxu0
  %v5843 = vadd.f32 %v4812, %v5842
  %v5844 = vpop.f32.mrb[0].mxu0
  %v5845 = vadd.f32 %v4816, %v5844
  %v5846 = vpop.f32.mrb[0].mxu0
  %v5847 = vadd.f32 %v4812, %v5846
  %v5848 = vpop.f32.mrb[0].mxu0
  %v5849 = vadd.f32 %v4816, %v5848
  %5850 = vmatprep.mubr.bf16.mxu0 0
  %5851 = vmatmul.mubr.bf16.gmra.mrb[0].mxu0 %v4997
  %v5852 = vpop.f32.mrb[0].mxu0
  %v5853 = vadd.f32 %v4812, %v5852
  %v5854 = vpop.f32.mrb[0].mxu0
  %v5855 = vadd.f32 %v4816, %v5854
  %v5856 = vpop.f32.mrb[0].mxu0
  %v5857 = vadd.f32 %v4812, %v5856
  %v5858 = vpop.f32.mrb[0].mxu0
  %v5859 = vadd.f32 %v4816, %v5858
  %5860 = vmatprep.mubr.bf16.mxu0 0
  %5861 = vmatmul.mubr.bf16.gmra.mrb[0].mxu0 %v5000
  %v5862 = vpop.f32.mrb[0].mxu0
  %v5863 = vadd.f32 %v4812, %v5862
  %v5864 = vpop.f32.mrb[0].mxu0
  %v5865 = vadd.f32 %v4816, %v5864
  %v5866 = vpop.f32.mrb[0].mxu0
  %v5867 = vadd.f32 %v4812, %v5866
  %v5868 = vpop.f32.mrb[0].mxu0
  %v5869 = vadd.f32 %v4816, %v5868
  %5870 = vmatprep.mubr.bf16.mxu0 0
  %5871 = vmatmul.mubr.bf16.gmra.mrb[0].mxu0 %v5003
  %v5872 = vpop.f32.mrb[0].mxu0
  %v5873 = vadd.f32 %v4812, %v5872
  %v5874 = vpop.f32.mrb[0].mxu0
  %v5875 = vadd.f32 %v4816, %v5874
  %v5876 = vpop.f32.mrb[0].mxu0
  %v5877 = vadd.f32 %v4812, %v5876
  %v5878 = vpop.f32.mrb[0].mxu0
  %v5879 = vadd.f32 %v4816, %v5878
  %5880 = vmatprep.mubr.bf16.mxu0 0
  %5881 = vmatmul.mubr.bf16.gmra.mrb[0].mxu0 %v5006
  %v5882 = vpop.f32.mrb[0].mxu0
  %v5883 = vadd.f32 %v4812, %v5882
  %v5884 = vpop.f32.mrb[0].mxu0
  %v5885 = vadd.f32 %v4816, %v5884
  %v5886 = vpop.f32.mrb[0].mxu0
  %v5887 = vadd.f32 %v4812, %v5886
  %v5888 = vpop.f32.mrb[0].mxu0
  %v5889 = vadd.f32 %v4816, %v5888
  %5890 = vmatprep.mubr.bf16.mxu0 0
  %5891 = vmatmul.mubr.bf16.gmra.mrb[0].mxu0 %v5009
  %v5892 = vpop.f32.mrb[0].mxu0
  %v5893 = vadd.f32 %v4812, %v5892
  %v5894 = vpop.f32.mrb[0].mxu0
  %v5895 = vadd.f32 %v4816, %v5894
  %v5896 = vpop.f32.mrb[0].mxu0
  %v5897 = vadd.f32 %v4812, %v5896
  %v5898 = vpop.f32.mrb[0].mxu0
  %v5899 = vadd.f32 %v4816, %v5898
  %5900 = vmatprep.mubr.bf16.mxu0 0
  %5901 = vmatmul.mubr.bf16.gmra.mrb[0].mxu0 %v5012
  %v5902 = vpop.f32.mrb[0].mxu0
  %v5903 = vadd.f32 %v4812, %v5902
  %v5904 = vpop.f32.mrb[0].mxu0
  %v5905 = vadd.f32 %v4816, %v5904
  %v5906 = vpop.f32.mrb[0].mxu0
  %v5907 = vadd.f32 %v4812, %v5906
  %v5908 = vpop.f32.mrb[0].mxu0
  %v5909 = vadd.f32 %v4816, %v5908
  %5910 = vmatprep.mubr.bf16.mxu0 0
  %5911 = vmatmul.mubr.bf16.gmra.mrb[0].mxu0 %v5015
  %v5912 = vpop.f32.mrb[0].mxu0
  %v5913 = vadd.f32 %v4812, %v5912
  %v5914 = vpop.f32.mrb[0].mxu0
  %v5915 = vadd.f32 %v4816, %v5914
  %v5916 = vpop.f32.mrb[0].mxu0
  %v5917 = vadd.f32 %v4812, %v5916
  %v5918 = vpop.f32.mrb[0].mxu0
  %v5919 = vadd.f32 %v4816, %v5918
  %5920 = vdwg.mxu0
  %v5921 = vmax.f32 %v5052, 0.0
  %v5922 = vmax.f32 %v5054, 0.0
  %v5923 = vmax.f32 %v5165, 0.0
  %v5924 = vmax.f32 %v5167, 0.0
  %v5925 = vmax.f32 %v5278, 0.0
  %v5926 = vmax.f32 %v5280, 0.0
  %v5927 = vmax.f32 %v5391, 0.0
  %v5928 = vmax.f32 %v5393, 0.0
  %v5929 = vmax.f32 %v5504, 0.0
  %v5930 = vmax.f32 %v5506, 0.0
  %v5931 = vmax.f32 %v5617, 0.0
  %v5932 = vmax.f32 %v5619, 0.0
  %v5933 = vmax.f32 %v5730, 0.0
  %v5934 = vmax.f32 %v5732, 0.0
  %v5935 = vmax.f32 %v5843, 0.0
  %v5936 = vmax.f32 %v5845, 0.0
  %v5937 = vmax.f32 %v5056, 0.0
  %v5938 = vmax.f32 %v5058, 0.0
  %v5939 = vmax.f32 %v5169, 0.0
  %v5940 = vmax.f32 %v5171, 0.0
  %v5941 = vmax.f32 %v5282, 0.0
  %v5942 = vmax.f32 %v5284, 0.0
  %v5943 = vmax.f32 %v5395, 0.0
  %v5944 = vmax.f32 %v5397, 0.0
  %v5945 = vmax.f32 %v5508, 0.0
  %v5946 = vmax.f32 %v5510, 0.0
  %v5947 = vmax.f32 %v5621, 0.0
  %v5948 = vmax.f32 %v5623, 0.0
  %v5949 = vmax.f32 %v5734, 0.0
  %v5950 = vmax.f32 %v5736, 0.0
  %v5951 = vmax.f32 %v5847, 0.0
  %v5952 = vmax.f32 %v5849, 0.0
  %v5953 = vmax.f32 %v5062, 0.0
  %v5954 = vmax.f32 %v5064, 0.0
  %v5955 = vmax.f32 %v5175, 0.0
  %v5956 = vmax.f32 %v5177, 0.0
  %v5957 = vmax.f32 %v5288, 0.0
  %v5958 = vmax.f32 %v5290, 0.0
  %v5959 = vmax.f32 %v5401, 0.0
  %v5960 = vmax.f32 %v5403, 0.0
  %v5961 = vmax.f32 %v5514, 0.0
  %v5962 = vmax.f32 %v5516, 0.0
  %v5963 = vmax.f32 %v5627, 0.0
  %v5964 = vmax.f32 %v5629, 0.0
  %v5965 = vmax.f32 %v5740, 0.0
  %v5966 = vmax.f32 %v5742, 0.0
  %v5967 = vmax.f32 %v5853, 0.0
  %v5968 = vmax.f32 %v5855, 0.0
  %v5969 = vmax.f32 %v5066, 0.0
  %v5970 = vmax.f32 %v5068, 0.0
  %v5971 = vmax.f32 %v5179, 0.0
  %v5972 = vmax.f32 %v5181, 0.0
  %v5973 = vmax.f32 %v5292, 0.0
  %v5974 = vmax.f32 %v5294, 0.0
  %v5975 = vmax.f32 %v5405, 0.0
  %v5976 = vmax.f32 %v5407, 0.0
  %v5977 = vmax.f32 %v5518, 0.0
  %v5978 = vmax.f32 %v5520, 0.0
  %v5979 = vmax.f32 %v5631, 0.0
  %v5980 = vmax.f32 %v5633, 0.0
  %v5981 = vmax.f32 %v5744, 0.0
  %v5982 = vmax.f32 %v5746, 0.0
  %v5983 = vmax.f32 %v5857, 0.0
  %v5984 = vmax.f32 %v5859, 0.0
  %v5985 = vmax.f32 %v5072, 0.0
  %v5986 = vmax.f32 %v5074, 0.0
  %v5987 = vmax.f32 %v5185, 0.0
  %v5988 = vmax.f32 %v5187, 0.0
  %v5989 = vmax.f32 %v5298, 0.0
  %v5990 = vmax.f32 %v5300, 0.0
  %v5991 = vmax.f32 %v5411, 0.0
  %v5992 = vmax.f32 %v5413, 0.0
  %v5993 = vmax.f32 %v5524, 0.0
  %v5994 = vmax.f32 %v5526, 0.0
  %v5995 = vmax.f32 %v5637, 0.0
  %v5996 = vmax.f32 %v5639, 0.0
  %v5997 = vmax.f32 %v5750, 0.0
  %v5998 = vmax.f32 %v5752, 0.0
  %v5999 = vmax.f32 %v5863, 0.0
  %v6000 = vmax.f32 %v5865, 0.0
  %v6001 = vmax.f32 %v5076, 0.0
  %v6002 = vmax.f32 %v5078, 0.0
  %v6003 = vmax.f32 %v5189, 0.0
  %v6004 = vmax.f32 %v5191, 0.0
  %v6005 = vmax.f32 %v5302, 0.0
  %v6006 = vmax.f32 %v5304, 0.0
  %v6007 = vmax.f32 %v5415, 0.0
  %v6008 = vmax.f32 %v5417, 0.0
  %v6009 = vmax.f32 %v5528, 0.0
  %v6010 = vmax.f32 %v5530, 0.0
  %v6011 = vmax.f32 %v5641, 0.0
  %v6012 = vmax.f32 %v5643, 0.0
  %v6013 = vmax.f32 %v5754, 0.0
  %v6014 = vmax.f32 %v5756, 0.0
  %v6015 = vmax.f32 %v5867, 0.0
  %v6016 = vmax.f32 %v5869, 0.0
  %v6017 = vmax.f32 %v5082, 0.0
  %v6018 = vmax.f32 %v5084, 0.0
  %v6019 = vmax.f32 %v5195, 0.0
  %v6020 = vmax.f32 %v5197, 0.0
  %v6021 = vmax.f32 %v5308, 0.0
  %v6022 = vmax.f32 %v5310, 0.0
  %v6023 = vmax.f32 %v5421, 0.0
  %v6024 = vmax.f32 %v5423, 0.0
  %v6025 = vmax.f32 %v5534, 0.0
  %v6026 = vmax.f32 %v5536, 0.0
  %v6027 = vmax.f32 %v5647, 0.0
  %v6028 = vmax.f32 %v5649, 0.0
  %v6029 = vmax.f32 %v5760, 0.0
  %v6030 = vmax.f32 %v5762, 0.0
  %v6031 = vmax.f32 %v5873, 0.0
  %v6032 = vmax.f32 %v5875, 0.0
  %v6033 = vmax.f32 %v5086, 0.0
  %v6034 = vmax.f32 %v5088, 0.0
  %v6035 = vmax.f32 %v5199, 0.0
  %v6036 = vmax.f32 %v5201, 0.0
  %v6037 = vmax.f32 %v5312, 0.0
  %v6038 = vmax.f32 %v5314, 0.0
  %v6039 = vmax.f32 %v5425, 0.0
  %v6040 = vmax.f32 %v5427, 0.0
  %v6041 = vmax.f32 %v5538, 0.0
  %v6042 = vmax.f32 %v5540, 0.0
  %v6043 = vmax.f32 %v5651, 0.0
  %v6044 = vmax.f32 %v5653, 0.0
  %v6045 = vmax.f32 %v5764, 0.0
  %v6046 = vmax.f32 %v5766, 0.0
  %v6047 = vmax.f32 %v5877, 0.0
  %v6048 = vmax.f32 %v5879, 0.0
  %v6049 = vmax.f32 %v5092, 0.0
  %v6050 = vmax.f32 %v5094, 0.0
  %v6051 = vmax.f32 %v5205, 0.0
  %v6052 = vmax.f32 %v5207, 0.0
  %v6053 = vmax.f32 %v5318, 0.0
  %v6054 = vmax.f32 %v5320, 0.0
  %v6055 = vmax.f32 %v5431, 0.0
  %v6056 = vmax.f32 %v5433, 0.0
  %v6057 = vmax.f32 %v5544, 0.0
  %v6058 = vmax.f32 %v5546, 0.0
  %v6059 = vmax.f32 %v5657, 0.0
  %v6060 = vmax.f32 %v5659, 0.0
  %v6061 = vmax.f32 %v5770, 0.0
  %v6062 = vmax.f32 %v5772, 0.0
  %v6063 = vmax.f32 %v5883, 0.0
  %v6064 = vmax.f32 %v5885, 0.0
  %v6065 = vmax.f32 %v5096, 0.0
  %v6066 = vmax.f32 %v5098, 0.0
  %v6067 = vmax.f32 %v5209, 0.0
  %v6068 = vmax.f32 %v5211, 0.0
  %v6069 = vmax.f32 %v5322, 0.0
  %v6070 = vmax.f32 %v5324, 0.0
  %v6071 = vmax.f32 %v5435, 0.0
  %v6072 = vmax.f32 %v5437, 0.0
  %v6073 = vmax.f32 %v5548, 0.0
  %v6074 = vmax.f32 %v5550, 0.0
  %v6075 = vmax.f32 %v5661, 0.0
  %v6076 = vmax.f32 %v5663, 0.0
  %v6077 = vmax.f32 %v5774, 0.0
  %v6078 = vmax.f32 %v5776, 0.0
  %v6079 = vmax.f32 %v5887, 0.0
  %v6080 = vmax.f32 %v5889, 0.0
  %v6081 = vmax.f32 %v5102, 0.0
  %v6082 = vmax.f32 %v5104, 0.0
  %v6083 = vmax.f32 %v5215, 0.0
  %v6084 = vmax.f32 %v5217, 0.0
  %v6085 = vmax.f32 %v5328, 0.0
  %v6086 = vmax.f32 %v5330, 0.0
  %v6087 = vmax.f32 %v5441, 0.0
  %v6088 = vmax.f32 %v5443, 0.0
  %v6089 = vmax.f32 %v5554, 0.0
  %v6090 = vmax.f32 %v5556, 0.0
  %v6091 = vmax.f32 %v5667, 0.0
  %v6092 = vmax.f32 %v5669, 0.0
  %v6093 = vmax.f32 %v5780, 0.0
  %v6094 = vmax.f32 %v5782, 0.0
  %v6095 = vmax.f32 %v5893, 0.0
  %v6096 = vmax.f32 %v5895, 0.0
  %v6097 = vmax.f32 %v5106, 0.0
  %v6098 = vmax.f32 %v5108, 0.0
  %v6099 = vmax.f32 %v5219, 0.0
  %v6100 = vmax.f32 %v5221, 0.0
  %v6101 = vmax.f32 %v5332, 0.0
  %v6102 = vmax.f32 %v5334, 0.0
  %v6103 = vmax.f32 %v5445, 0.0
  %v6104 = vmax.f32 %v5447, 0.0
  %v6105 = vmax.f32 %v5558, 0.0
  %v6106 = vmax.f32 %v5560, 0.0
  %v6107 = vmax.f32 %v5671, 0.0
  %v6108 = vmax.f32 %v5673, 0.0
  %v6109 = vmax.f32 %v5784, 0.0
  %v6110 = vmax.f32 %v5786, 0.0
  %v6111 = vmax.f32 %v5897, 0.0
  %v6112 = vmax.f32 %v5899, 0.0
  %v6113 = vmax.f32 %v5112, 0.0
  %v6114 = vmax.f32 %v5114, 0.0
  %v6115 = vmax.f32 %v5225, 0.0
  %v6116 = vmax.f32 %v5227, 0.0
  %v6117 = vmax.f32 %v5338, 0.0
  %v6118 = vmax.f32 %v5340, 0.0
  %v6119 = vmax.f32 %v5451, 0.0
  %v6120 = vmax.f32 %v5453, 0.0
  %v6121 = vmax.f32 %v5564, 0.0
  %v6122 = vmax.f32 %v5566, 0.0
  %v6123 = vmax.f32 %v5677, 0.0
  %v6124 = vmax.f32 %v5679, 0.0
  %v6125 = vmax.f32 %v5790, 0.0
  %v6126 = vmax.f32 %v5792, 0.0
  %v6127 = vmax.f32 %v5903, 0.0
  %v6128 = vmax.f32 %v5905, 0.0
  %v6129 = vmax.f32 %v5116, 0.0
  %v6130 = vmax.f32 %v5118, 0.0
  %v6131 = vmax.f32 %v5229, 0.0
  %v6132 = vmax.f32 %v5231, 0.0
  %v6133 = vmax.f32 %v5342, 0.0
  %v6134 = vmax.f32 %v5344, 0.0
  %v6135 = vmax.f32 %v5455, 0.0
  %v6136 = vmax.f32 %v5457, 0.0
  %v6137 = vmax.f32 %v5568, 0.0
  %v6138 = vmax.f32 %v5570, 0.0
  %v6139 = vmax.f32 %v5681, 0.0
  %v6140 = vmax.f32 %v5683, 0.0
  %v6141 = vmax.f32 %v5794, 0.0
  %v6142 = vmax.f32 %v5796, 0.0
  %v6143 = vmax.f32 %v5907, 0.0
  %v6144 = vmax.f32 %v5909, 0.0
  %v6145 = vmax.f32 %v5122, 0.0
  %v6146 = vmax.f32 %v5124, 0.0
  %v6147 = vmax.f32 %v5235, 0.0
  %v6148 = vmax.f32 %v5237, 0.0
  %v6149 = vmax.f32 %v5348, 0.0
  %v6150 = vmax.f32 %v5350, 0.0
  %v6151 = vmax.f32 %v5461, 0.0
  %v6152 = vmax.f32 %v5463, 0.0
  %v6153 = vmax.f32 %v5574, 0.0
  %v6154 = vmax.f32 %v5576, 0.0
  %v6155 = vmax.f32 %v5687, 0.0
  %v6156 = vmax.f32 %v5689, 0.0
  %v6157 = vmax.f32 %v5800, 0.0
  %v6158 = vmax.f32 %v5802, 0.0
  %v6159 = vmax.f32 %v5913, 0.0
  %v6160 = vmax.f32 %v5915, 0.0
  %v6161 = vmax.f32 %v5126, 0.0
  %v6162 = vmax.f32 %v5128, 0.0
  %v6163 = vmax.f32 %v5239, 0.0
  %v6164 = vmax.f32 %v5241, 0.0
  %v6165 = vmax.f32 %v5352, 0.0
  %v6166 = vmax.f32 %v5354, 0.0
  %v6167 = vmax.f32 %v5465, 0.0
  %v6168 = vmax.f32 %v5467, 0.0
  %v6169 = vmax.f32 %v5578, 0.0
  %v6170 = vmax.f32 %v5580, 0.0
  %v6171 = vmax.f32 %v5691, 0.0
  %v6172 = vmax.f32 %v5693, 0.0
  %v6173 = vmax.f32 %v5804, 0.0
  %v6174 = vmax.f32 %v5806, 0.0
  %v6175 = vmax.f32 %v5917, 0.0
  %v6176 = vmax.f32 %v5919, 0.0
  %v6177 = vpack.c.bf16 %v5937, %v5921
  %v6178 = vpack.c.bf16 %v5938, %v5922
  %v6179 = vpack.c.bf16 %v5939, %v5923
  %v6180 = vpack.c.bf16 %v5940, %v5924
  %v6181 = vpack.c.bf16 %v5941, %v5925
  %v6182 = vpack.c.bf16 %v5942, %v5926
  %v6183 = vpack.c.bf16 %v5943, %v5927
  %v6184 = vpack.c.bf16 %v5944, %v5928
  %v6185 = vpack.c.bf16 %v5945, %v5929
  %v6186 = vpack.c.bf16 %v5946, %v5930
  %v6187 = vpack.c.bf16 %v5947, %v5931
  %v6188 = vpack.c.bf16 %v5948, %v5932
  %v6189 = vpack.c.bf16 %v5949, %v5933
  %v6190 = vpack.c.bf16 %v5950, %v5934
  %v6191 = vpack.c.bf16 %v5951, %v5935
  %v6192 = vpack.c.bf16 %v5952, %v5936
  %v6193 = vpack.c.bf16 %v5969, %v5953
  %v6194 = vpack.c.bf16 %v5970, %v5954
  %v6195 = vpack.c.bf16 %v5971, %v5955
  %v6196 = vpack.c.bf16 %v5972, %v5956
  %v6197 = vpack.c.bf16 %v5973, %v5957
  %v6198 = vpack.c.bf16 %v5974, %v5958
  %v6199 = vpack.c.bf16 %v5975, %v5959
  %v6200 = vpack.c.bf16 %v5976, %v5960
  %v6201 = vpack.c.bf16 %v5977, %v5961
  %v6202 = vpack.c.bf16 %v5978, %v5962
  %v6203 = vpack.c.bf16 %v5979, %v5963
  %v6204 = vpack.c.bf16 %v5980, %v5964
  %v6205 = vpack.c.bf16 %v5981, %v5965
  %v6206 = vpack.c.bf16 %v5982, %v5966
  %v6207 = vpack.c.bf16 %v5983, %v5967
  %v6208 = vpack.c.bf16 %v5984, %v5968
  %v6209 = vpack.c.bf16 %v6001, %v5985
  %v6210 = vpack.c.bf16 %v6002, %v5986
  %v6211 = vpack.c.bf16 %v6003, %v5987
  %v6212 = vpack.c.bf16 %v6004, %v5988
  %v6213 = vpack.c.bf16 %v6005, %v5989
  %v6214 = vpack.c.bf16 %v6006, %v5990
  %v6215 = vpack.c.bf16 %v6007, %v5991
  %v6216 = vpack.c.bf16 %v6008, %v5992
  %v6217 = vpack.c.bf16 %v6009, %v5993
  %v6218 = vpack.c.bf16 %v6010, %v5994
  %v6219 = vpack.c.bf16 %v6011, %v5995
  %v6220 = vpack.c.bf16 %v6012, %v5996
  %v6221 = vpack.c.bf16 %v6013, %v5997
  %v6222 = vpack.c.bf16 %v6014, %v5998
  %v6223 = vpack.c.bf16 %v6015, %v5999
  %v6224 = vpack.c.bf16 %v6016, %v6000
  %v6225 = vpack.c.bf16 %v6033, %v6017
  %v6226 = vpack.c.bf16 %v6034, %v6018
  %v6227 = vpack.c.bf16 %v6035, %v6019
  %v6228 = vpack.c.bf16 %v6036, %v6020
  %v6229 = vpack.c.bf16 %v6037, %v6021
  %v6230 = vpack.c.bf16 %v6038, %v6022
  %v6231 = vpack.c.bf16 %v6039, %v6023
  %v6232 = vpack.c.bf16 %v6040, %v6024
  %v6233 = vpack.c.bf16 %v6041, %v6025
  %v6234 = vpack.c.bf16 %v6042, %v6026
  %v6235 = vpack.c.bf16 %v6043, %v6027
  %v6236 = vpack.c.bf16 %v6044, %v6028
  %v6237 = vpack.c.bf16 %v6045, %v6029
  %v6238 = vpack.c.bf16 %v6046, %v6030
  %v6239 = vpack.c.bf16 %v6047, %v6031
  %v6240 = vpack.c.bf16 %v6048, %v6032
  %v6241 = vpack.c.bf16 %v6065, %v6049
  %v6242 = vpack.c.bf16 %v6066, %v6050
  %v6243 = vpack.c.bf16 %v6067, %v6051
  %v6244 = vpack.c.bf16 %v6068, %v6052
  %v6245 = vpack.c.bf16 %v6069, %v6053
  %v6246 = vpack.c.bf16 %v6070, %v6054
  %v6247 = vpack.c.bf16 %v6071, %v6055
  %v6248 = vpack.c.bf16 %v6072, %v6056
  %v6249 = vpack.c.bf16 %v6073, %v6057
  %v6250 = vpack.c.bf16 %v6074, %v6058
  %v6251 = vpack.c.bf16 %v6075, %v6059
  %v6252 = vpack.c.bf16 %v6076, %v6060
  %v6253 = vpack.c.bf16 %v6077, %v6061
  %v6254 = vpack.c.bf16 %v6078, %v6062
  %v6255 = vpack.c.bf16 %v6079, %v6063
  %v6256 = vpack.c.bf16 %v6080, %v6064
  %v6257 = vpack.c.bf16 %v6097, %v6081
  %v6258 = vpack.c.bf16 %v6098, %v6082
  %v6259 = vpack.c.bf16 %v6099, %v6083
  %v6260 = vpack.c.bf16 %v6100, %v6084
  %v6261 = vpack.c.bf16 %v6101, %v6085
  %v6262 = vpack.c.bf16 %v6102, %v6086
  %v6263 = vpack.c.bf16 %v6103, %v6087
  %v6264 = vpack.c.bf16 %v6104, %v6088
  %v6265 = vpack.c.bf16 %v6105, %v6089
  %v6266 = vpack.c.bf16 %v6106, %v6090
  %v6267 = vpack.c.bf16 %v6107, %v6091
  %v6268 = vpack.c.bf16 %v6108, %v6092
  %v6269 = vpack.c.bf16 %v6109, %v6093
  %v6270 = vpack.c.bf16 %v6110, %v6094
  %v6271 = vpack.c.bf16 %v6111, %v6095
  %v6272 = vpack.c.bf16 %v6112, %v6096
  %v6273 = vpack.c.bf16 %v6129, %v6113
  %v6274 = vpack.c.bf16 %v6130, %v6114
  %v6275 = vpack.c.bf16 %v6131, %v6115
  %v6276 = vpack.c.bf16 %v6132, %v6116
  %v6277 = vpack.c.bf16 %v6133, %v6117
  %v6278 = vpack.c.bf16 %v6134, %v6118
  %v6279 = vpack.c.bf16 %v6135, %v6119
  %v6280 = vpack.c.bf16 %v6136, %v6120
  %v6281 = vpack.c.bf16 %v6137, %v6121
  %v6282 = vpack.c.bf16 %v6138, %v6122
  %v6283 = vpack.c.bf16 %v6139, %v6123
  %v6284 = vpack.c.bf16 %v6140, %v6124
  %v6285 = vpack.c.bf16 %v6141, %v6125
  %v6286 = vpack.c.bf16 %v6142, %v6126
  %v6287 = vpack.c.bf16 %v6143, %v6127
  %v6288 = vpack.c.bf16 %v6144, %v6128
  %v6289 = vpack.c.bf16 %v6161, %v6145
  %v6290 = vpack.c.bf16 %v6162, %v6146
  %v6291 = vpack.c.bf16 %v6163, %v6147
  %v6292 = vpack.c.bf16 %v6164, %v6148
  %v6293 = vpack.c.bf16 %v6165, %v6149
  %v6294 = vpack.c.bf16 %v6166, %v6150
  %v6295 = vpack.c.bf16 %v6167, %v6151
  %v6296 = vpack.c.bf16 %v6168, %v6152
  %v6297 = vpack.c.bf16 %v6169, %v6153
  %v6298 = vpack.c.bf16 %v6170, %v6154
  %v6299 = vpack.c.bf16 %v6171, %v6155
  %v6300 = vpack.c.bf16 %v6172, %v6156
  %v6301 = vpack.c.bf16 %v6173, %v6157
  %v6302 = vpack.c.bf16 %v6174, %v6158
  %v6303 = vpack.c.bf16 %v6175, %v6159
  %v6304 = vpack.c.bf16 %v6176, %v6160
  %v6305 = vld [vmem:[%s13] sm:$0xf]
  %v6306 = vld [vmem:[%s13 + $0x4] sm:$0xf]
  %v6307 = vld [vmem:[%s13 + $0x8] sm:$0xf]
  %v6308 = vld [vmem:[%s13 + $0xc] sm:$0xf]
  %v6309 = vld [vmem:[%s13 + $0x10] sm:$0xf]
  %v6310 = vld [vmem:[%s13 + $0x14] sm:$0xf]
  %v6311 = vld [vmem:[%s13 + $0x18] sm:$0xf]
  %v6312 = vld [vmem:[%s13 + $0x1c] sm:$0xf]
  %v6313 = vld [vmem:[%s13 + $0x20] sm:$0xf]
  %v6314 = vld [vmem:[%s13 + $0x24] sm:$0xf]
  %v6315 = vld [vmem:[%s13 + $0x28] sm:$0xf]
  %v6316 = vld [vmem:[%s13 + $0x2c] sm:$0xf]
  %v6317 = vld [vmem:[%s13 + $0x30] sm:$0xf]
  %v6318 = vld [vmem:[%s13 + $0x34] sm:$0xf]
  %v6319 = vld [vmem:[%s13 + $0x38] sm:$0xf]
  %v6320 = vld [vmem:[%s13 + $0x3c] sm:$0xf]
  %v6321 = vld [vmem:[%s13 + $0x40] sm:$0xf]
  %v6322 = vld [vmem:[%s13 + $0x44] sm:$0xf]
  %v6323 = vld [vmem:[%s13 + $0x48] sm:$0xf]
  %v6324 = vld [vmem:[%s13 + $0x4c] sm:$0xf]
  %v6325 = vld [vmem:[%s13 + $0x50] sm:$0xf]
  %v6326 = vld [vmem:[%s13 + $0x54] sm:$0xf]
  %v6327 = vld [vmem:[%s13 + $0x58] sm:$0xf]
  %v6328 = vld [vmem:[%s13 + $0x5c] sm:$0xf]
  %v6329 = vld [vmem:[%s13 + $0x60] sm:$0xf]
  %v6330 = vld [vmem:[%s13 + $0x64] sm:$0xf]
  %v6331 = vld [vmem:[%s13 + $0x68] sm:$0xf]
  %v6332 = vld [vmem:[%s13 + $0x6c] sm:$0xf]
  %v6333 = vld [vmem:[%s13 + $0x70] sm:$0xf]
  %v6334 = vld [vmem:[%s13 + $0x74] sm:$0xf]
  %v6335 = vld [vmem:[%s13 + $0x78] sm:$0xf]
  %v6336 = vld [vmem:[%s13 + $0x7c] sm:$0xf]
  %v6337 = vld [vmem:[%s13 + $0x80] sm:$0xf]
  %v6338 = vld [vmem:[%s13 + $0x84] sm:$0xf]
  %v6339 = vld [vmem:[%s13 + $0x88] sm:$0xf]
  %v6340 = vld [vmem:[%s13 + $0x8c] sm:$0xf]
  %v6341 = vld [vmem:[%s13 + $0x90] sm:$0xf]
  %v6342 = vld [vmem:[%s13 + $0x94] sm:$0xf]
  %v6343 = vld [vmem:[%s13 + $0x98] sm:$0xf]
  %v6344 = vld [vmem:[%s13 + $0x9c] sm:$0xf]
  %v6345 = vld [vmem:[%s13 + $0xa0] sm:$0xf]
  %v6346 = vld [vmem:[%s13 + $0xa4] sm:$0xf]
  %v6347 = vld [vmem:[%s13 + $0xa8] sm:$0xf]
  %v6348 = vld [vmem:[%s13 + $0xac] sm:$0xf]
  %v6349 = vld [vmem:[%s13 + $0xb0] sm:$0xf]
  %v6350 = vld [vmem:[%s13 + $0xb4] sm:$0xf]
  %v6351 = vld [vmem:[%s13 + $0xb8] sm:$0xf]
  %v6352 = vld [vmem:[%s13 + $0xbc] sm:$0xf]
  %v6353 = vld [vmem:[%s13 + $0xc0] sm:$0xf]
  %v6354 = vld [vmem:[%s13 + $0xc4] sm:$0xf]
  %v6355 = vld [vmem:[%s13 + $0xc8] sm:$0xf]
  %v6356 = vld [vmem:[%s13 + $0xcc] sm:$0xf]
  %v6357 = vld [vmem:[%s13 + $0xd0] sm:$0xf]
  %v6358 = vld [vmem:[%s13 + $0xd4] sm:$0xf]
  %v6359 = vld [vmem:[%s13 + $0xd8] sm:$0xf]
  %v6360 = vld [vmem:[%s13 + $0xdc] sm:$0xf]
  %v6361 = vld [vmem:[%s13 + $0xe0] sm:$0xf]
  %v6362 = vld [vmem:[%s13 + $0xe4] sm:$0xf]
  %v6363 = vld [vmem:[%s13 + $0xe8] sm:$0xf]
  %v6364 = vld [vmem:[%s13 + $0xec] sm:$0xf]
  %v6365 = vld [vmem:[%s13 + $0xf0] sm:$0xf]
  %v6366 = vld [vmem:[%s13 + $0xf4] sm:$0xf]
  %v6367 = vld [vmem:[%s13 + $0xf8] sm:$0xf]
  %v6368 = vld [vmem:[%s13 + $0xfc] sm:$0xf]
  %v6369 = vld [vmem:[%s13 + $0x100] sm:$0xf]
  %v6370 = vld [vmem:[%s13 + $0x104] sm:$0xf]
  %v6371 = vld [vmem:[%s13 + $0x108] sm:$0xf]
  %v6372 = vld [vmem:[%s13 + $0x10c] sm:$0xf]
  %v6373 = vld [vmem:[%s13 + $0x110] sm:$0xf]
  %v6374 = vld [vmem:[%s13 + $0x114] sm:$0xf]
  %v6375 = vld [vmem:[%s13 + $0x118] sm:$0xf]
  %v6376 = vld [vmem:[%s13 + $0x11c] sm:$0xf]
  %v6377 = vld [vmem:[%s13 + $0x120] sm:$0xf]
  %v6378 = vld [vmem:[%s13 + $0x124] sm:$0xf]
  %v6379 = vld [vmem:[%s13 + $0x128] sm:$0xf]
  %v6380 = vld [vmem:[%s13 + $0x12c] sm:$0xf]
  %v6381 = vld [vmem:[%s13 + $0x130] sm:$0xf]
  %v6382 = vld [vmem:[%s13 + $0x134] sm:$0xf]
  %v6383 = vld [vmem:[%s13 + $0x138] sm:$0xf]
  %v6384 = vld [vmem:[%s13 + $0x13c] sm:$0xf]
  %v6385 = vld [vmem:[%s13 + $0x140] sm:$0xf]
  %v6386 = vld [vmem:[%s13 + $0x144] sm:$0xf]
  %v6387 = vld [vmem:[%s13 + $0x148] sm:$0xf]
  %v6388 = vld [vmem:[%s13 + $0x14c] sm:$0xf]
  %v6389 = vld [vmem:[%s13 + $0x150] sm:$0xf]
  %v6390 = vld [vmem:[%s13 + $0x154] sm:$0xf]
  %v6391 = vld [vmem:[%s13 + $0x158] sm:$0xf]
  %v6392 = vld [vmem:[%s13 + $0x15c] sm:$0xf]
  %v6393 = vld [vmem:[%s13 + $0x160] sm:$0xf]
  %v6394 = vld [vmem:[%s13 + $0x164] sm:$0xf]
  %v6395 = vld [vmem:[%s13 + $0x168] sm:$0xf]
  %v6396 = vld [vmem:[%s13 + $0x16c] sm:$0xf]
  %v6397 = vld [vmem:[%s13 + $0x170] sm:$0xf]
  %v6398 = vld [vmem:[%s13 + $0x174] sm:$0xf]
  %v6399 = vld [vmem:[%s13 + $0x178] sm:$0xf]
  %v6400 = vld [vmem:[%s13 + $0x17c] sm:$0xf]
  %v6401 = vld [vmem:[%s13 + $0x180] sm:$0xf]
  %v6402 = vld [vmem:[%s13 + $0x184] sm:$0xf]
  %v6403 = vld [vmem:[%s13 + $0x188] sm:$0xf]
  %v6404 = vld [vmem:[%s13 + $0x18c] sm:$0xf]
  %v6405 = vld [vmem:[%s13 + $0x190] sm:$0xf]
  %v6406 = vld [vmem:[%s13 + $0x194] sm:$0xf]
  %v6407 = vld [vmem:[%s13 + $0x198] sm:$0xf]
  %v6408 = vld [vmem:[%s13 + $0x19c] sm:$0xf]
  %v6409 = vld [vmem:[%s13 + $0x1a0] sm:$0xf]
  %v6410 = vld [vmem:[%s13 + $0x1a4] sm:$0xf]
  %v6411 = vld [vmem:[%s13 + $0x1a8] sm:$0xf]
  %v6412 = vld [vmem:[%s13 + $0x1ac] sm:$0xf]
  %v6413 = vld [vmem:[%s13 + $0x1b0] sm:$0xf]
  %v6414 = vld [vmem:[%s13 + $0x1b4] sm:$0xf]
  %v6415 = vld [vmem:[%s13 + $0x1b8] sm:$0xf]
  %v6416 = vld [vmem:[%s13 + $0x1bc] sm:$0xf]
  %v6417 = vld [vmem:[%s13 + $0x1c0] sm:$0xf]
  %v6418 = vld [vmem:[%s13 + $0x1c4] sm:$0xf]
  %v6419 = vld [vmem:[%s13 + $0x1c8] sm:$0xf]
  %v6420 = vld [vmem:[%s13 + $0x1cc] sm:$0xf]
  %v6421 = vld [vmem:[%s13 + $0x1d0] sm:$0xf]
  %v6422 = vld [vmem:[%s13 + $0x1d4] sm:$0xf]
  %v6423 = vld [vmem:[%s13 + $0x1d8] sm:$0xf]
  %v6424 = vld [vmem:[%s13 + $0x1dc] sm:$0xf]
  %v6425 = vld [vmem:[%s13 + $0x1e0] sm:$0xf]
  %v6426 = vld [vmem:[%s13 + $0x1e4] sm:$0xf]
  %v6427 = vld [vmem:[%s13 + $0x1e8] sm:$0xf]
  %v6428 = vld [vmem:[%s13 + $0x1ec] sm:$0xf]
  %v6429 = vld [vmem:[%s13 + $0x1f0] sm:$0xf]
  %v6430 = vld [vmem:[%s13 + $0x1f4] sm:$0xf]
  %v6431 = vld [vmem:[%s13 + $0x1f8] sm:$0xf]
  %v6432 = vld [vmem:[%s13 + $0x1fc] sm:$0xf]
  %v6433 = vld [vmem:[%s13 + $0x200] sm:$0xf]
  %v6434 = vld [vmem:[%s13 + $0x204] sm:$0xf]
  %v6435 = vld [vmem:[%s13 + $0x208] sm:$0xf]
  %v6436 = vld [vmem:[%s13 + $0x20c] sm:$0xf]
  %v6437 = vld [vmem:[%s13 + $0x210] sm:$0xf]
  %v6438 = vld [vmem:[%s13 + $0x214] sm:$0xf]
  %v6439 = vld [vmem:[%s13 + $0x218] sm:$0xf]
  %v6440 = vld [vmem:[%s13 + $0x21c] sm:$0xf]
  %v6441 = vld [vmem:[%s13 + $0x220] sm:$0xf]
  %v6442 = vld [vmem:[%s13 + $0x224] sm:$0xf]
  %v6443 = vld [vmem:[%s13 + $0x228] sm:$0xf]
  %v6444 = vld [vmem:[%s13 + $0x22c] sm:$0xf]
  %v6445 = vld [vmem:[%s13 + $0x230] sm:$0xf]
  %v6446 = vld [vmem:[%s13 + $0x234] sm:$0xf]
  %v6447 = vld [vmem:[%s13 + $0x238] sm:$0xf]
  %v6448 = vld [vmem:[%s13 + $0x23c] sm:$0xf]
  %v6449 = vld [vmem:[%s13 + $0x240] sm:$0xf]
  %v6450 = vld [vmem:[%s13 + $0x244] sm:$0xf]
  %v6451 = vld [vmem:[%s13 + $0x248] sm:$0xf]
  %v6452 = vld [vmem:[%s13 + $0x24c] sm:$0xf]
  %v6453 = vld [vmem:[%s13 + $0x250] sm:$0xf]
  %v6454 = vld [vmem:[%s13 + $0x254] sm:$0xf]
  %v6455 = vld [vmem:[%s13 + $0x258] sm:$0xf]
  %v6456 = vld [vmem:[%s13 + $0x25c] sm:$0xf]
  %v6457 = vld [vmem:[%s13 + $0x260] sm:$0xf]
  %v6458 = vld [vmem:[%s13 + $0x264] sm:$0xf]
  %v6459 = vld [vmem:[%s13 + $0x268] sm:$0xf]
  %v6460 = vld [vmem:[%s13 + $0x26c] sm:$0xf]
  %v6461 = vld [vmem:[%s13 + $0x270] sm:$0xf]
  %v6462 = vld [vmem:[%s13 + $0x274] sm:$0xf]
  %v6463 = vld [vmem:[%s13 + $0x278] sm:$0xf]
  %v6464 = vld [vmem:[%s13 + $0x27c] sm:$0xf]
  %v6465 = vld [vmem:[%s13 + $0x280] sm:$0xf]
  %v6466 = vld [vmem:[%s13 + $0x284] sm:$0xf]
  %v6467 = vld [vmem:[%s13 + $0x288] sm:$0xf]
  %v6468 = vld [vmem:[%s13 + $0x28c] sm:$0xf]
  %v6469 = vld [vmem:[%s13 + $0x290] sm:$0xf]
  %v6470 = vld [vmem:[%s13 + $0x294] sm:$0xf]
  %v6471 = vld [vmem:[%s13 + $0x298] sm:$0xf]
  %v6472 = vld [vmem:[%s13 + $0x29c] sm:$0xf]
  %v6473 = vld [vmem:[%s13 + $0x2a0] sm:$0xf]
  %v6474 = vld [vmem:[%s13 + $0x2a4] sm:$0xf]
  %v6475 = vld [vmem:[%s13 + $0x2a8] sm:$0xf]
  %v6476 = vld [vmem:[%s13 + $0x2ac] sm:$0xf]
  %v6477 = vld [vmem:[%s13 + $0x2b0] sm:$0xf]
  %v6478 = vld [vmem:[%s13 + $0x2b4] sm:$0xf]
  %v6479 = vld [vmem:[%s13 + $0x2b8] sm:$0xf]
  %v6480 = vld [vmem:[%s13 + $0x2bc] sm:$0xf]
  %v6481 = vld [vmem:[%s13 + $0x2c0] sm:$0xf]
  %v6482 = vld [vmem:[%s13 + $0x2c4] sm:$0xf]
  %v6483 = vld [vmem:[%s13 + $0x2c8] sm:$0xf]
  %v6484 = vld [vmem:[%s13 + $0x2cc] sm:$0xf]
  %v6485 = vld [vmem:[%s13 + $0x2d0] sm:$0xf]
  %v6486 = vld [vmem:[%s13 + $0x2d4] sm:$0xf]
  %v6487 = vld [vmem:[%s13 + $0x2d8] sm:$0xf]
  %v6488 = vld [vmem:[%s13 + $0x2dc] sm:$0xf]
  %v6489 = vld [vmem:[%s13 + $0x2e0] sm:$0xf]
  %v6490 = vld [vmem:[%s13 + $0x2e4] sm:$0xf]
  %v6491 = vld [vmem:[%s13 + $0x2e8] sm:$0xf]
  %v6492 = vld [vmem:[%s13 + $0x2ec] sm:$0xf]
  %v6493 = vld [vmem:[%s13 + $0x2f0] sm:$0xf]
  %v6494 = vld [vmem:[%s13 + $0x2f4] sm:$0xf]
  %v6495 = vld [vmem:[%s13 + $0x2f8] sm:$0xf]
  %v6496 = vld [vmem:[%s13 + $0x2fc] sm:$0xf]
  %v6497 = vld [vmem:[%s13 + $0x300] sm:$0xf]
  %v6498 = vld [vmem:[%s13 + $0x304] sm:$0xf]
  %v6499 = vld [vmem:[%s13 + $0x308] sm:$0xf]
  %v6500 = vld [vmem:[%s13 + $0x30c] sm:$0xf]
  %v6501 = vld [vmem:[%s13 + $0x310] sm:$0xf]
  %v6502 = vld [vmem:[%s13 + $0x314] sm:$0xf]
  %v6503 = vld [vmem:[%s13 + $0x318] sm:$0xf]
  %v6504 = vld [vmem:[%s13 + $0x31c] sm:$0xf]
  %v6505 = vld [vmem:[%s13 + $0x320] sm:$0xf]
  %v6506 = vld [vmem:[%s13 + $0x324] sm:$0xf]
  %v6507 = vld [vmem:[%s13 + $0x328] sm:$0xf]
  %v6508 = vld [vmem:[%s13 + $0x32c] sm:$0xf]
  %v6509 = vld [vmem:[%s13 + $0x330] sm:$0xf]
  %v6510 = vld [vmem:[%s13 + $0x334] sm:$0xf]
  %v6511 = vld [vmem:[%s13 + $0x338] sm:$0xf]
  %v6512 = vld [vmem:[%s13 + $0x33c] sm:$0xf]
  %v6513 = vld [vmem:[%s13 + $0x340] sm:$0xf]
  %v6514 = vld [vmem:[%s13 + $0x344] sm:$0xf]
  %v6515 = vld [vmem:[%s13 + $0x348] sm:$0xf]
  %v6516 = vld [vmem:[%s13 + $0x34c] sm:$0xf]
  %v6517 = vld [vmem:[%s13 + $0x350] sm:$0xf]
  %v6518 = vld [vmem:[%s13 + $0x354] sm:$0xf]
  %v6519 = vld [vmem:[%s13 + $0x358] sm:$0xf]
  %v6520 = vld [vmem:[%s13 + $0x35c] sm:$0xf]
  %v6521 = vld [vmem:[%s13 + $0x360] sm:$0xf]
  %v6522 = vld [vmem:[%s13 + $0x364] sm:$0xf]
  %v6523 = vld [vmem:[%s13 + $0x368] sm:$0xf]
  %v6524 = vld [vmem:[%s13 + $0x36c] sm:$0xf]
  %v6525 = vld [vmem:[%s13 + $0x370] sm:$0xf]
  %v6526 = vld [vmem:[%s13 + $0x374] sm:$0xf]
  %v6527 = vld [vmem:[%s13 + $0x378] sm:$0xf]
  %v6528 = vld [vmem:[%s13 + $0x37c] sm:$0xf]
  %v6529 = vld [vmem:[%s13 + $0x380] sm:$0xf]
  %v6530 = vld [vmem:[%s13 + $0x384] sm:$0xf]
  %v6531 = vld [vmem:[%s13 + $0x388] sm:$0xf]
  %v6532 = vld [vmem:[%s13 + $0x38c] sm:$0xf]
  %v6533 = vld [vmem:[%s13 + $0x390] sm:$0xf]
  %v6534 = vld [vmem:[%s13 + $0x394] sm:$0xf]
  %v6535 = vld [vmem:[%s13 + $0x398] sm:$0xf]
  %v6536 = vld [vmem:[%s13 + $0x39c] sm:$0xf]
  %v6537 = vld [vmem:[%s13 + $0x3a0] sm:$0xf]
  %v6538 = vld [vmem:[%s13 + $0x3a4] sm:$0xf]
  %v6539 = vld [vmem:[%s13 + $0x3a8] sm:$0xf]
  %v6540 = vld [vmem:[%s13 + $0x3ac] sm:$0xf]
  %v6541 = vld [vmem:[%s13 + $0x3b0] sm:$0xf]
  %v6542 = vld [vmem:[%s13 + $0x3b4] sm:$0xf]
  %v6543 = vld [vmem:[%s13 + $0x3b8] sm:$0xf]
  %v6544 = vld [vmem:[%s13 + $0x3bc] sm:$0xf]
  %v6545 = vld [vmem:[%s13 + $0x3c0] sm:$0xf]
  %v6546 = vld [vmem:[%s13 + $0x3c4] sm:$0xf]
  %v6547 = vld [vmem:[%s13 + $0x3c8] sm:$0xf]
  %v6548 = vld [vmem:[%s13 + $0x3cc] sm:$0xf]
  %v6549 = vld [vmem:[%s13 + $0x3d0] sm:$0xf]
  %v6550 = vld [vmem:[%s13 + $0x3d4] sm:$0xf]
  %v6551 = vld [vmem:[%s13 + $0x3d8] sm:$0xf]
  %v6552 = vld [vmem:[%s13 + $0x3dc] sm:$0xf]
  %v6553 = vld [vmem:[%s13 + $0x3e0] sm:$0xf]
  %v6554 = vld [vmem:[%s13 + $0x3e4] sm:$0xf]
  %v6555 = vld [vmem:[%s13 + $0x3e8] sm:$0xf]
  %v6556 = vld [vmem:[%s13 + $0x3ec] sm:$0xf]
  %v6557 = vld [vmem:[%s13 + $0x3f0] sm:$0xf]
  %v6558 = vld [vmem:[%s13 + $0x3f4] sm:$0xf]
  %v6559 = vld [vmem:[%s13 + $0x3f8] sm:$0xf]
  %v6560 = vld [vmem:[%s13 + $0x3fc] sm:$0xf]
  %v6561 = vld [vmem:[%s14] sm:$0x1]
  %v6563 = vlaneseq
  %v6564 = vshrl.u32 %v6563, 7
  %v6565 = vsub.s32 0, %v6564
  %v6566 = vrot.slane %v6561, %v6565
  %v6824 = vunpack.c.l.b16 %v6305
  %v6825 = vunpack.c.l.b16 %v6306
  %v6826 = vunpack.c.l.b16 %v6307
  %v6827 = vunpack.c.l.b16 %v6308
  %v6828 = vunpack.c.l.b16 %v6309
  %v6829 = vunpack.c.l.b16 %v6310
  %v6830 = vunpack.c.l.b16 %v6311
  %v6831 = vunpack.c.l.b16 %v6312
  %v6832 = vunpack.c.l.b16 %v6313
  %v6833 = vunpack.c.l.b16 %v6314
  %v6834 = vunpack.c.l.b16 %v6315
  %v6835 = vunpack.c.l.b16 %v6316
  %v6836 = vunpack.c.l.b16 %v6317
  %v6837 = vunpack.c.l.b16 %v6318
  %v6838 = vunpack.c.l.b16 %v6319
  %v6839 = vunpack.c.l.b16 %v6320
  %v6840 = vunpack.c.l.b16 %v6321
  %v6841 = vunpack.c.l.b16 %v6322
  %v6842 = vunpack.c.l.b16 %v6323
  %v6843 = vunpack.c.l.b16 %v6324
  %v6844 = vunpack.c.l.b16 %v6325
  %v6845 = vunpack.c.l.b16 %v6326
  %v6846 = vunpack.c.l.b16 %v6327
  %v6847 = vunpack.c.l.b16 %v6328
  %v6848 = vunpack.c.l.b16 %v6329
  %v6849 = vunpack.c.l.b16 %v6330
  %v6850 = vunpack.c.l.b16 %v6331
  %v6851 = vunpack.c.l.b16 %v6332
  %v6852 = vunpack.c.l.b16 %v6333
  %v6853 = vunpack.c.l.b16 %v6334
  %v6854 = vunpack.c.l.b16 %v6335
  %v6855 = vunpack.c.l.b16 %v6336
  %v6856 = vunpack.c.l.b16 %v6337
  %v6857 = vunpack.c.l.b16 %v6338
  %v6858 = vunpack.c.l.b16 %v6339
  %v6859 = vunpack.c.l.b16 %v6340
  %v6860 = vunpack.c.l.b16 %v6341
  %v6861 = vunpack.c.l.b16 %v6342
  %v6862 = vunpack.c.l.b16 %v6343
  %v6863 = vunpack.c.l.b16 %v6344
  %v6864 = vunpack.c.l.b16 %v6345
  %v6865 = vunpack.c.l.b16 %v6346
  %v6866 = vunpack.c.l.b16 %v6347
  %v6867 = vunpack.c.l.b16 %v6348
  %v6868 = vunpack.c.l.b16 %v6349
  %v6869 = vunpack.c.l.b16 %v6350
  %v6870 = vunpack.c.l.b16 %v6351
  %v6871 = vunpack.c.l.b16 %v6352
  %v6872 = vunpack.c.l.b16 %v6353
  %v6873 = vunpack.c.l.b16 %v6354
  %v6874 = vunpack.c.l.b16 %v6355
  %v6875 = vunpack.c.l.b16 %v6356
  %v6876 = vunpack.c.l.b16 %v6357
  %v6877 = vunpack.c.l.b16 %v6358
  %v6878 = vunpack.c.l.b16 %v6359
  %v6879 = vunpack.c.l.b16 %v6360
  %v6880 = vunpack.c.l.b16 %v6361
  %v6881 = vunpack.c.l.b16 %v6362
  %v6882 = vunpack.c.l.b16 %v6363
  %v6883 = vunpack.c.l.b16 %v6364
  %v6884 = vunpack.c.l.b16 %v6365
  %v6885 = vunpack.c.l.b16 %v6366
  %v6886 = vunpack.c.l.b16 %v6367
  %v6887 = vunpack.c.l.b16 %v6368
  %v6888 = vunpack.c.l.b16 %v6369
  %v6889 = vunpack.c.l.b16 %v6370
  %v6890 = vunpack.c.l.b16 %v6371
  %v6891 = vunpack.c.l.b16 %v6372
  %v6892 = vunpack.c.l.b16 %v6373
  %v6893 = vunpack.c.l.b16 %v6374
  %v6894 = vunpack.c.l.b16 %v6375
  %v6895 = vunpack.c.l.b16 %v6376
  %v6896 = vunpack.c.l.b16 %v6377
  %v6897 = vunpack.c.l.b16 %v6378
  %v6898 = vunpack.c.l.b16 %v6379
  %v6899 = vunpack.c.l.b16 %v6380
  %v6900 = vunpack.c.l.b16 %v6381
  %v6901 = vunpack.c.l.b16 %v6382
  %v6902 = vunpack.c.l.b16 %v6383
  %v6903 = vunpack.c.l.b16 %v6384
  %v6904 = vunpack.c.l.b16 %v6385
  %v6905 = vunpack.c.l.b16 %v6386
  %v6906 = vunpack.c.l.b16 %v6387
  %v6907 = vunpack.c.l.b16 %v6388
  %v6908 = vunpack.c.l.b16 %v6389
  %v6909 = vunpack.c.l.b16 %v6390
  %v6910 = vunpack.c.l.b16 %v6391
  %v6911 = vunpack.c.l.b16 %v6392
  %v6912 = vunpack.c.l.b16 %v6393
  %v6913 = vunpack.c.l.b16 %v6394
  %v6914 = vunpack.c.l.b16 %v6395
  %v6915 = vunpack.c.l.b16 %v6396
  %v6916 = vunpack.c.l.b16 %v6397
  %v6917 = vunpack.c.l.b16 %v6398
  %v6918 = vunpack.c.l.b16 %v6399
  %v6919 = vunpack.c.l.b16 %v6400
  %v6920 = vunpack.c.l.b16 %v6401
  %v6921 = vunpack.c.l.b16 %v6402
  %v6922 = vunpack.c.l.b16 %v6403
  %v6923 = vunpack.c.l.b16 %v6404
  %v6924 = vunpack.c.l.b16 %v6405
  %v6925 = vunpack.c.l.b16 %v6406
  %v6926 = vunpack.c.l.b16 %v6407
  %v6927 = vunpack.c.l.b16 %v6408
  %v6928 = vunpack.c.l.b16 %v6409
  %v6929 = vunpack.c.l.b16 %v6410
  %v6930 = vunpack.c.l.b16 %v6411
  %v6931 = vunpack.c.l.b16 %v6412
  %v6932 = vunpack.c.l.b16 %v6413
  %v6933 = vunpack.c.l.b16 %v6414
  %v6934 = vunpack.c.l.b16 %v6415
  %v6935 = vunpack.c.l.b16 %v6416
  %v6936 = vunpack.c.l.b16 %v6417
  %v6937 = vunpack.c.l.b16 %v6418
  %v6938 = vunpack.c.l.b16 %v6419
  %v6939 = vunpack.c.l.b16 %v6420
  %v6940 = vunpack.c.l.b16 %v6421
  %v6941 = vunpack.c.l.b16 %v6422
  %v6942 = vunpack.c.l.b16 %v6423
  %v6943 = vunpack.c.l.b16 %v6424
  %v6944 = vunpack.c.l.b16 %v6425
  %v6945 = vunpack.c.l.b16 %v6426
  %v6946 = vunpack.c.l.b16 %v6427
  %v6947 = vunpack.c.l.b16 %v6428
  %v6948 = vunpack.c.l.b16 %v6429
  %v6949 = vunpack.c.l.b16 %v6430
  %v6950 = vunpack.c.l.b16 %v6431
  %v6951 = vunpack.c.l.b16 %v6432
  %v6952 = vunpack.c.l.b16 %v6433
  %v6953 = vunpack.c.l.b16 %v6434
  %v6954 = vunpack.c.l.b16 %v6435
  %v6955 = vunpack.c.l.b16 %v6436
  %v6956 = vunpack.c.l.b16 %v6437
  %v6957 = vunpack.c.l.b16 %v6438
  %v6958 = vunpack.c.l.b16 %v6439
  %v6959 = vunpack.c.l.b16 %v6440
  %v6960 = vunpack.c.l.b16 %v6441
  %v6961 = vunpack.c.l.b16 %v6442
  %v6962 = vunpack.c.l.b16 %v6443
  %v6963 = vunpack.c.l.b16 %v6444
  %v6964 = vunpack.c.l.b16 %v6445
  %v6965 = vunpack.c.l.b16 %v6446
  %v6966 = vunpack.c.l.b16 %v6447
  %v6967 = vunpack.c.l.b16 %v6448
  %v6968 = vunpack.c.l.b16 %v6449
  %v6969 = vunpack.c.l.b16 %v6450
  %v6970 = vunpack.c.l.b16 %v6451
  %v6971 = vunpack.c.l.b16 %v6452
  %v6972 = vunpack.c.l.b16 %v6453
  %v6973 = vunpack.c.l.b16 %v6454
  %v6974 = vunpack.c.l.b16 %v6455
  %v6975 = vunpack.c.l.b16 %v6456
  %v6976 = vunpack.c.l.b16 %v6457
  %v6977 = vunpack.c.l.b16 %v6458
  %v6978 = vunpack.c.l.b16 %v6459
  %v6979 = vunpack.c.l.b16 %v6460
  %v6980 = vunpack.c.l.b16 %v6461
  %v6981 = vunpack.c.l.b16 %v6462
  %v6982 = vunpack.c.l.b16 %v6463
  %v6983 = vunpack.c.l.b16 %v6464
  %v6984 = vunpack.c.l.b16 %v6465
  %v6985 = vunpack.c.l.b16 %v6466
  %v6986 = vunpack.c.l.b16 %v6467
  %v6987 = vunpack.c.l.b16 %v6468
  %v6988 = vunpack.c.l.b16 %v6469
  %v6989 = vunpack.c.l.b16 %v6470
  %v6990 = vunpack.c.l.b16 %v6471
  %v6991 = vunpack.c.l.b16 %v6472
  %v6992 = vunpack.c.l.b16 %v6473
  %v6993 = vunpack.c.l.b16 %v6474
  %v6994 = vunpack.c.l.b16 %v6475
  %v6995 = vunpack.c.l.b16 %v6476
  %v6996 = vunpack.c.l.b16 %v6477
  %v6997 = vunpack.c.l.b16 %v6478
  %v6998 = vunpack.c.l.b16 %v6479
  %v6999 = vunpack.c.l.b16 %v6480
  %v7000 = vunpack.c.l.b16 %v6481
  %v7001 = vunpack.c.l.b16 %v6482
  %v7002 = vunpack.c.l.b16 %v6483
  %v7003 = vunpack.c.l.b16 %v6484
  %v7004 = vunpack.c.l.b16 %v6485
  %v7005 = vunpack.c.l.b16 %v6486
  %v7006 = vunpack.c.l.b16 %v6487
  %v7007 = vunpack.c.l.b16 %v6488
  %v7008 = vunpack.c.l.b16 %v6489
  %v7009 = vunpack.c.l.b16 %v6490
  %v7010 = vunpack.c.l.b16 %v6491
  %v7011 = vunpack.c.l.b16 %v6492
  %v7012 = vunpack.c.l.b16 %v6493
  %v7013 = vunpack.c.l.b16 %v6494
  %v7014 = vunpack.c.l.b16 %v6495
  %v7015 = vunpack.c.l.b16 %v6496
  %v7016 = vunpack.c.l.b16 %v6497
  %v7017 = vunpack.c.l.b16 %v6498
  %v7018 = vunpack.c.l.b16 %v6499
  %v7019 = vunpack.c.l.b16 %v6500
  %v7020 = vunpack.c.l.b16 %v6501
  %v7021 = vunpack.c.l.b16 %v6502
  %v7022 = vunpack.c.l.b16 %v6503
  %v7023 = vunpack.c.l.b16 %v6504
  %v7024 = vunpack.c.l.b16 %v6505
  %v7025 = vunpack.c.l.b16 %v6506
  %v7026 = vunpack.c.l.b16 %v6507
  %v7027 = vunpack.c.l.b16 %v6508
  %v7028 = vunpack.c.l.b16 %v6509
  %v7029 = vunpack.c.l.b16 %v6510
  %v7030 = vunpack.c.l.b16 %v6511
  %v7031 = vunpack.c.l.b16 %v6512
  %v7032 = vunpack.c.l.b16 %v6513
  %v7033 = vunpack.c.l.b16 %v6514
  %v7034 = vunpack.c.l.b16 %v6515
  %v7035 = vunpack.c.l.b16 %v6516
  %v7036 = vunpack.c.l.b16 %v6517
  %v7037 = vunpack.c.l.b16 %v6518
  %v7038 = vunpack.c.l.b16 %v6519
  %v7039 = vunpack.c.l.b16 %v6520
  %v7040 = vunpack.c.l.b16 %v6521
  %v7041 = vunpack.c.l.b16 %v6522
  %v7042 = vunpack.c.l.b16 %v6523
  %v7043 = vunpack.c.l.b16 %v6524
  %v7044 = vunpack.c.l.b16 %v6525
  %v7045 = vunpack.c.l.b16 %v6526
  %v7046 = vunpack.c.l.b16 %v6527
  %v7047 = vunpack.c.l.b16 %v6528
  %v7048 = vunpack.c.l.b16 %v6529
  %v7049 = vunpack.c.l.b16 %v6530
  %v7050 = vunpack.c.l.b16 %v6531
  %v7051 = vunpack.c.l.b16 %v6532
  %v7052 = vunpack.c.l.b16 %v6533
  %v7053 = vunpack.c.l.b16 %v6534
  %v7054 = vunpack.c.l.b16 %v6535
  %v7055 = vunpack.c.l.b16 %v6536
  %v7056 = vunpack.c.l.b16 %v6537
  %v7057 = vunpack.c.l.b16 %v6538
  %v7058 = vunpack.c.l.b16 %v6539
  %v7059 = vunpack.c.l.b16 %v6540
  %v7060 = vunpack.c.l.b16 %v6541
  %v7061 = vunpack.c.l.b16 %v6542
  %v7062 = vunpack.c.l.b16 %v6543
  %v7063 = vunpack.c.l.b16 %v6544
  %v7064 = vunpack.c.l.b16 %v6545
  %v7065 = vunpack.c.l.b16 %v6546
  %v7066 = vunpack.c.l.b16 %v6547
  %v7067 = vunpack.c.l.b16 %v6548
  %v7068 = vunpack.c.l.b16 %v6549
  %v7069 = vunpack.c.l.b16 %v6550
  %v7070 = vunpack.c.l.b16 %v6551
  %v7071 = vunpack.c.l.b16 %v6552
  %v7072 = vunpack.c.l.b16 %v6553
  %v7073 = vunpack.c.l.b16 %v6554
  %v7074 = vunpack.c.l.b16 %v6555
  %v7075 = vunpack.c.l.b16 %v6556
  %v7076 = vunpack.c.l.b16 %v6557
  %v7077 = vunpack.c.l.b16 %v6558
  %v7078 = vunpack.c.l.b16 %v6559
  %v7079 = vunpack.c.l.b16 %v6560
  %v7080 = vpack.c.b16 %v6825, %v6824
  %v7081 = vpack.c.b16 %v6827, %v6826
  %v7082 = vpack.c.b16 %v6829, %v6828
  %v7083 = vpack.c.b16 %v6831, %v6830
  %v7084 = vpack.c.b16 %v6833, %v6832
  %v7085 = vpack.c.b16 %v6835, %v6834
  %v7086 = vpack.c.b16 %v6837, %v6836
  %v7087 = vpack.c.b16 %v6839, %v6838
  %v7088 = vpack.c.b16 %v6841, %v6840
  %v7089 = vpack.c.b16 %v6843, %v6842
  %v7090 = vpack.c.b16 %v6845, %v6844
  %v7091 = vpack.c.b16 %v6847, %v6846
  %v7092 = vpack.c.b16 %v6849, %v6848
  %v7093 = vpack.c.b16 %v6851, %v6850
  %v7094 = vpack.c.b16 %v6853, %v6852
  %v7095 = vpack.c.b16 %v6855, %v6854
  %v7096 = vpack.c.b16 %v6857, %v6856
  %v7097 = vpack.c.b16 %v6859, %v6858
  %v7098 = vpack.c.b16 %v6861, %v6860
  %v7099 = vpack.c.b16 %v6863, %v6862
  %v7100 = vpack.c.b16 %v6865, %v6864
  %v7101 = vpack.c.b16 %v6867, %v6866
  %v7102 = vpack.c.b16 %v6869, %v6868
  %v7103 = vpack.c.b16 %v6871, %v6870
  %v7104 = vpack.c.b16 %v6873, %v6872
  %v7105 = vpack.c.b16 %v6875, %v6874
  %v7106 = vpack.c.b16 %v6877, %v6876
  %v7107 = vpack.c.b16 %v6879, %v6878
  %v7108 = vpack.c.b16 %v6881, %v6880
  %v7109 = vpack.c.b16 %v6883, %v6882
  %v7110 = vpack.c.b16 %v6885, %v6884
  %v7111 = vpack.c.b16 %v6887, %v6886
  %v7112 = vpack.c.b16 %v6889, %v6888
  %v7113 = vpack.c.b16 %v6891, %v6890
  %v7114 = vpack.c.b16 %v6893, %v6892
  %v7115 = vpack.c.b16 %v6895, %v6894
  %v7116 = vpack.c.b16 %v6897, %v6896
  %v7117 = vpack.c.b16 %v6899, %v6898
  %v7118 = vpack.c.b16 %v6901, %v6900
  %v7119 = vpack.c.b16 %v6903, %v6902
  %v7120 = vpack.c.b16 %v6905, %v6904
  %v7121 = vpack.c.b16 %v6907, %v6906
  %v7122 = vpack.c.b16 %v6909, %v6908
  %v7123 = vpack.c.b16 %v6911, %v6910
  %v7124 = vpack.c.b16 %v6913, %v6912
  %v7125 = vpack.c.b16 %v6915, %v6914
  %v7126 = vpack.c.b16 %v6917, %v6916
  %v7127 = vpack.c.b16 %v6919, %v6918
  %v7128 = vpack.c.b16 %v6921, %v6920
  %v7129 = vpack.c.b16 %v6923, %v6922
  %v7130 = vpack.c.b16 %v6925, %v6924
  %v7131 = vpack.c.b16 %v6927, %v6926
  %v7132 = vpack.c.b16 %v6929, %v6928
  %v7133 = vpack.c.b16 %v6931, %v6930
  %v7134 = vpack.c.b16 %v6933, %v6932
  %v7135 = vpack.c.b16 %v6935, %v6934
  %v7136 = vpack.c.b16 %v6937, %v6936
  %v7137 = vpack.c.b16 %v6939, %v6938
  %v7138 = vpack.c.b16 %v6941, %v6940
  %v7139 = vpack.c.b16 %v6943, %v6942
  %v7140 = vpack.c.b16 %v6945, %v6944
  %v7141 = vpack.c.b16 %v6947, %v6946
  %v7142 = vpack.c.b16 %v6949, %v6948
  %v7143 = vpack.c.b16 %v6951, %v6950
  %v7144 = vpack.c.b16 %v6953, %v6952
  %v7145 = vpack.c.b16 %v6955, %v6954
  %v7146 = vpack.c.b16 %v6957, %v6956
  %v7147 = vpack.c.b16 %v6959, %v6958
  %v7148 = vpack.c.b16 %v6961, %v6960
  %v7149 = vpack.c.b16 %v6963, %v6962
  %v7150 = vpack.c.b16 %v6965, %v6964
  %v7151 = vpack.c.b16 %v6967, %v6966
  %v7152 = vpack.c.b16 %v6969, %v6968
  %v7153 = vpack.c.b16 %v6971, %v6970
  %v7154 = vpack.c.b16 %v6973, %v6972
  %v7155 = vpack.c.b16 %v6975, %v6974
  %v7156 = vpack.c.b16 %v6977, %v6976
  %v7157 = vpack.c.b16 %v6979, %v6978
  %v7158 = vpack.c.b16 %v6981, %v6980
  %v7159 = vpack.c.b16 %v6983, %v6982
  %v7160 = vpack.c.b16 %v6985, %v6984
  %v7161 = vpack.c.b16 %v6987, %v6986
  %v7162 = vpack.c.b16 %v6989, %v6988
  %v7163 = vpack.c.b16 %v6991, %v6990
  %v7164 = vpack.c.b16 %v6993, %v6992
  %v7165 = vpack.c.b16 %v6995, %v6994
  %v7166 = vpack.c.b16 %v6997, %v6996
  %v7167 = vpack.c.b16 %v6999, %v6998
  %v7168 = vpack.c.b16 %v7001, %v7000
  %v7169 = vpack.c.b16 %v7003, %v7002
  %v7170 = vpack.c.b16 %v7005, %v7004
  %v7171 = vpack.c.b16 %v7007, %v7006
  %v7172 = vpack.c.b16 %v7009, %v7008
  %v7173 = vpack.c.b16 %v7011, %v7010
  %v7174 = vpack.c.b16 %v7013, %v7012
  %v7175 = vpack.c.b16 %v7015, %v7014
  %v7176 = vpack.c.b16 %v7017, %v7016
  %v7177 = vpack.c.b16 %v7019, %v7018
  %v7178 = vpack.c.b16 %v7021, %v7020
  %v7179 = vpack.c.b16 %v7023, %v7022
  %v7180 = vpack.c.b16 %v7025, %v7024
  %v7181 = vpack.c.b16 %v7027, %v7026
  %v7182 = vpack.c.b16 %v7029, %v7028
  %v7183 = vpack.c.b16 %v7031, %v7030
  %v7184 = vpack.c.b16 %v7033, %v7032
  %v7185 = vpack.c.b16 %v7035, %v7034
  %v7186 = vpack.c.b16 %v7037, %v7036
  %v7187 = vpack.c.b16 %v7039, %v7038
  %v7188 = vpack.c.b16 %v7041, %v7040
  %v7189 = vpack.c.b16 %v7043, %v7042
  %v7190 = vpack.c.b16 %v7045, %v7044
  %v7191 = vpack.c.b16 %v7047, %v7046
  %v7192 = vpack.c.b16 %v7049, %v7048
  %v7193 = vpack.c.b16 %v7051, %v7050
  %v7194 = vpack.c.b16 %v7053, %v7052
  %v7195 = vpack.c.b16 %v7055, %v7054
  %v7196 = vpack.c.b16 %v7057, %v7056
  %v7197 = vpack.c.b16 %v7059, %v7058
  %v7198 = vpack.c.b16 %v7061, %v7060
  %v7199 = vpack.c.b16 %v7063, %v7062
  %v7200 = vpack.c.b16 %v7065, %v7064
  %v7201 = vpack.c.b16 %v7067, %v7066
  %v7202 = vpack.c.b16 %v7069, %v7068
  %v7203 = vpack.c.b16 %v7071, %v7070
  %v7204 = vpack.c.b16 %v7073, %v7072
  %v7205 = vpack.c.b16 %v7075, %v7074
  %v7206 = vpack.c.b16 %v7077, %v7076
  %v7207 = vpack.c.b16 %v7079, %v7078
  %7336 = vmatprep.subr.bf16.mxu0 0
  %7337 = vmatpush1.bf16.msra.mxu0 %v7080
  %7338 = vmatprep.subr.bf16.mxu0 0
  %7339 = vmatpush1.bf16.msra.mxu0 %v7081
  %7340 = vmatprep.subr.bf16.mxu0 0
  %7341 = vmatpush1.bf16.msra.mxu0 %v7082
  %7342 = vmatprep.subr.bf16.mxu0 0
  %7343 = vmatpush1.bf16.msra.mxu0 %v7083
  %7344 = vmatprep.subr.bf16.mxu0 0
  %7345 = vmatpush1.bf16.msra.mxu0 %v7084
  %7346 = vmatprep.subr.bf16.mxu0 0
  %7347 = vmatpush1.bf16.msra.mxu0 %v7085
  %7348 = vmatprep.subr.bf16.mxu0 0
  %7349 = vmatpush1.bf16.msra.mxu0 %v7086
  %7350 = vmatprep.subr.bf16.mxu0 0
  %7351 = vmatpush1.bf16.msra.mxu0 %v7087
  %7352 = vmatprep.subr.bf16.mxu0 0
  %7353 = vmatpush1.bf16.msra.mxu0 %v7088
  %7354 = vmatprep.subr.bf16.mxu0 0
  %7355 = vmatpush1.bf16.msra.mxu0 %v7089
  %7356 = vmatprep.subr.bf16.mxu0 0
  %7357 = vmatpush1.bf16.msra.mxu0 %v7090
  %7358 = vmatprep.subr.bf16.mxu0 0
  %7359 = vmatpush1.bf16.msra.mxu0 %v7091
  %7360 = vmatprep.subr.bf16.mxu0 0
  %7361 = vmatpush1.bf16.msra.mxu0 %v7092
  %7362 = vmatprep.subr.bf16.mxu0 0
  %7363 = vmatpush1.bf16.msra.mxu0 %v7093
  %7364 = vmatprep.subr.bf16.mxu0 0
  %7365 = vmatpush1.bf16.msra.mxu0 %v7094
  %7366 = vmatprep.subr.bf16.mxu0 0
  %7367 = vmatpush1.bf16.msra.mxu0 %v7095
  %7368 = vmatprep.mubr.bf16.mxu0 %v6178
  %7369 = vmatmul.mubr.bf16.gmra.mrb[0].mxu0 %v6177
  %v7370 = vpop.f32.mrb[0].mxu0
  %v7371 = vadd.f32 %v6566, %v7370
  %v7372 = vpop.f32.mrb[0].mxu0
  %v7373 = vpop.f32.mrb[0].mxu0
  %v7374 = vadd.f32 %v6566, %v7373
  %v7375 = vpop.f32.mrb[0].mxu0
  %7376 = vmatprep.mubr.bf16.mxu0 %v6194
  %7377 = vmatmul.mubr.bf16.gmra.mrb[0].mxu0 %v6193
  %v7378 = vpop.f32.mrb[0].mxu0
  %v7379 = vadd.f32 %v6566, %v7378
  %v7380 = vpop.f32.mrb[0].mxu0
  %v7381 = vpop.f32.mrb[0].mxu0
  %v7382 = vadd.f32 %v6566, %v7381
  %v7383 = vpop.f32.mrb[0].mxu0
  %7384 = vmatprep.mubr.bf16.mxu0 %v6210
  %7385 = vmatmul.mubr.bf16.gmra.mrb[0].mxu0 %v6209
  %v7386 = vpop.f32.mrb[0].mxu0
  %v7387 = vadd.f32 %v6566, %v7386
  %v7388 = vpop.f32.mrb[0].mxu0
  %v7389 = vpop.f32.mrb[0].mxu0
  %v7390 = vadd.f32 %v6566, %v7389
  %v7391 = vpop.f32.mrb[0].mxu0
  %7392 = vmatprep.mubr.bf16.mxu0 %v6226
  %7393 = vmatmul.mubr.bf16.gmra.mrb[0].mxu0 %v6225
  %v7394 = vpop.f32.mrb[0].mxu0
  %v7395 = vadd.f32 %v6566, %v7394
  %v7396 = vpop.f32.mrb[0].mxu0
  %v7397 = vpop.f32.mrb[0].mxu0
  %v7398 = vadd.f32 %v6566, %v7397
  %v7399 = vpop.f32.mrb[0].mxu0
  %7400 = vmatprep.mubr.bf16.mxu0 %v6242
  %7401 = vmatmul.mubr.bf16.gmra.mrb[0].mxu0 %v6241
  %v7402 = vpop.f32.mrb[0].mxu0
  %v7403 = vadd.f32 %v6566, %v7402
  %v7404 = vpop.f32.mrb[0].mxu0
  %v7405 = vpop.f32.mrb[0].mxu0
  %v7406 = vadd.f32 %v6566, %v7405
  %v7407 = vpop.f32.mrb[0].mxu0
  %7408 = vmatprep.mubr.bf16.mxu0 %v6258
  %7409 = vmatmul.mubr.bf16.gmra.mrb[0].mxu0 %v6257
  %v7410 = vpop.f32.mrb[0].mxu0
  %v7411 = vadd.f32 %v6566, %v7410
  %v7412 = vpop.f32.mrb[0].mxu0
  %v7413 = vpop.f32.mrb[0].mxu0
  %v7414 = vadd.f32 %v6566, %v7413
  %v7415 = vpop.f32.mrb[0].mxu0
  %7416 = vmatprep.mubr.bf16.mxu0 %v6274
  %7417 = vmatmul.mubr.bf16.gmra.mrb[0].mxu0 %v6273
  %v7418 = vpop.f32.mrb[0].mxu0
  %v7419 = vadd.f32 %v6566, %v7418
  %v7420 = vpop.f32.mrb[0].mxu0
  %v7421 = vpop.f32.mrb[0].mxu0
  %v7422 = vadd.f32 %v6566, %v7421
  %v7423 = vpop.f32.mrb[0].mxu0
  %7424 = vmatprep.mubr.bf16.mxu0 %v6290
  %7425 = vmatmul.mubr.bf16.gmra.mrb[0].mxu0 %v6289
  %v7426 = vpop.f32.mrb[0].mxu0
  %v7427 = vadd.f32 %v6566, %v7426
  %v7428 = vpop.f32.mrb[0].mxu0
  %v7429 = vpop.f32.mrb[0].mxu0
  %v7430 = vadd.f32 %v6566, %v7429
  %v7431 = vpop.f32.mrb[0].mxu0
  %7432 = vdwg.mxu0
  %7433 = vmatprep.subr.bf16.mxu0 0
  %7434 = vmatpush1.bf16.msra.mxu0 %v7096
  %7435 = vmatprep.subr.bf16.mxu0 0
  %7436 = vmatpush1.bf16.msra.mxu0 %v7097
  %7437 = vmatprep.subr.bf16.mxu0 0
  %7438 = vmatpush1.bf16.msra.mxu0 %v7098
  %7439 = vmatprep.subr.bf16.mxu0 0
  %7440 = vmatpush1.bf16.msra.mxu0 %v7099
  %7441 = vmatprep.subr.bf16.mxu0 0
  %7442 = vmatpush1.bf16.msra.mxu0 %v7100
  %7443 = vmatprep.subr.bf16.mxu0 0
  %7444 = vmatpush1.bf16.msra.mxu0 %v7101
  %7445 = vmatprep.subr.bf16.mxu0 0
  %7446 = vmatpush1.bf16.msra.mxu0 %v7102
  %7447 = vmatprep.subr.bf16.mxu0 0
  %7448 = vmatpush1.bf16.msra.mxu0 %v7103
  %7449 = vmatprep.subr.bf16.mxu0 0
  %7450 = vmatpush1.bf16.msra.mxu0 %v7104
  %7451 = vmatprep.subr.bf16.mxu0 0
  %7452 = vmatpush1.bf16.msra.mxu0 %v7105
  %7453 = vmatprep.subr.bf16.mxu0 0
  %7454 = vmatpush1.bf16.msra.mxu0 %v7106
  %7455 = vmatprep.subr.bf16.mxu0 0
  %7456 = vmatpush1.bf16.msra.mxu0 %v7107
  %7457 = vmatprep.subr.bf16.mxu0 0
  %7458 = vmatpush1.bf16.msra.mxu0 %v7108
  %7459 = vmatprep.subr.bf16.mxu0 0
  %7460 = vmatpush1.bf16.msra.mxu0 %v7109
  %7461 = vmatprep.subr.bf16.mxu0 0
  %7462 = vmatpush1.bf16.msra.mxu0 %v7110
  %7463 = vmatprep.subr.bf16.mxu0 0
  %7464 = vmatpush1.bf16.msra.mxu0 %v7111
  %7465 = vmatprep.mubr.bf16.mxu0 %v6180
  %7466 = vmatmul.mubr.bf16.gmra.mrb[0].mxu0 %v6179
  %v7467 = vpop.f32.mrb[0].mxu0
  %v7468 = vadd.f32 %v7371, %v7467
  %v7469 = vpop.f32.mrb[0].mxu0
  %v7470 = vpop.f32.mrb[0].mxu0
  %v7471 = vadd.f32 %v7374, %v7470
  %v7472 = vpop.f32.mrb[0].mxu0
  %7473 = vmatprep.mubr.bf16.mxu0 %v6196
  %7474 = vmatmul.mubr.bf16.gmra.mrb[0].mxu0 %v6195
  %v7475 = vpop.f32.mrb[0].mxu0
  %v7476 = vadd.f32 %v7379, %v7475
  %v7477 = vpop.f32.mrb[0].mxu0
  %v7478 = vpop.f32.mrb[0].mxu0
  %v7479 = vadd.f32 %v7382, %v7478
  %v7480 = vpop.f32.mrb[0].mxu0
  %7481 = vmatprep.mubr.bf16.mxu0 %v6212
  %7482 = vmatmul.mubr.bf16.gmra.mrb[0].mxu0 %v6211
  %v7483 = vpop.f32.mrb[0].mxu0
  %v7484 = vadd.f32 %v7387, %v7483
  %v7485 = vpop.f32.mrb[0].mxu0
  %v7486 = vpop.f32.mrb[0].mxu0
  %v7487 = vadd.f32 %v7390, %v7486
  %v7488 = vpop.f32.mrb[0].mxu0
  %7489 = vmatprep.mubr.bf16.mxu0 %v6228
  %7490 = vmatmul.mubr.bf16.gmra.mrb[0].mxu0 %v6227
  %v7491 = vpop.f32.mrb[0].mxu0
  %v7492 = vadd.f32 %v7395, %v7491
  %v7493 = vpop.f32.mrb[0].mxu0
  %v7494 = vpop.f32.mrb[0].mxu0
  %v7495 = vadd.f32 %v7398, %v7494
  %v7496 = vpop.f32.mrb[0].mxu0
  %7497 = vmatprep.mubr.bf16.mxu0 %v6244
  %7498 = vmatmul.mubr.bf16.gmra.mrb[0].mxu0 %v6243
  %v7499 = vpop.f32.mrb[0].mxu0
  %v7500 = vadd.f32 %v7403, %v7499
  %v7501 = vpop.f32.mrb[0].mxu0
  %v7502 = vpop.f32.mrb[0].mxu0
  %v7503 = vadd.f32 %v7406, %v7502
  %v7504 = vpop.f32.mrb[0].mxu0
  %7505 = vmatprep.mubr.bf16.mxu0 %v6260
  %7506 = vmatmul.mubr.bf16.gmra.mrb[0].mxu0 %v6259
  %v7507 = vpop.f32.mrb[0].mxu0
  %v7508 = vadd.f32 %v7411, %v7507
  %v7509 = vpop.f32.mrb[0].mxu0
  %v7510 = vpop.f32.mrb[0].mxu0
  %v7511 = vadd.f32 %v7414, %v7510
  %v7512 = vpop.f32.mrb[0].mxu0
  %7513 = vmatprep.mubr.bf16.mxu0 %v6276
  %7514 = vmatmul.mubr.bf16.gmra.mrb[0].mxu0 %v6275
  %v7515 = vpop.f32.mrb[0].mxu0
  %v7516 = vadd.f32 %v7419, %v7515
  %v7517 = vpop.f32.mrb[0].mxu0
  %v7518 = vpop.f32.mrb[0].mxu0
  %v7519 = vadd.f32 %v7422, %v7518
  %v7520 = vpop.f32.mrb[0].mxu0
  %7521 = vmatprep.mubr.bf16.mxu0 %v6292
  %7522 = vmatmul.mubr.bf16.gmra.mrb[0].mxu0 %v6291
  %v7523 = vpop.f32.mrb[0].mxu0
  %v7524 = vadd.f32 %v7427, %v7523
  %v7525 = vpop.f32.mrb[0].mxu0
  %v7526 = vpop.f32.mrb[0].mxu0
  %v7527 = vadd.f32 %v7430, %v7526
  %v7528 = vpop.f32.mrb[0].mxu0
  %7529 = vdwg.mxu0
  %7530 = vmatprep.subr.bf16.mxu0 0
  %7531 = vmatpush1.bf16.msra.mxu0 %v7112
  %7532 = vmatprep.subr.bf16.mxu0 0
  %7533 = vmatpush1.bf16.msra.mxu0 %v7113
  %7534 = vmatprep.subr.bf16.mxu0 0
  %7535 = vmatpush1.bf16.msra.mxu0 %v7114
  %7536 = vmatprep.subr.bf16.mxu0 0
  %7537 = vmatpush1.bf16.msra.mxu0 %v7115
  %7538 = vmatprep.subr.bf16.mxu0 0
  %7539 = vmatpush1.bf16.msra.mxu0 %v7116
  %7540 = vmatprep.subr.bf16.mxu0 0
  %7541 = vmatpush1.bf16.msra.mxu0 %v7117
  %7542 = vmatprep.subr.bf16.mxu0 0
  %7543 = vmatpush1.bf16.msra.mxu0 %v7118
  %7544 = vmatprep.subr.bf16.mxu0 0
  %7545 = vmatpush1.bf16.msra.mxu0 %v7119
  %7546 = vmatprep.subr.bf16.mxu0 0
  %7547 = vmatpush1.bf16.msra.mxu0 %v7120
  %7548 = vmatprep.subr.bf16.mxu0 0
  %7549 = vmatpush1.bf16.msra.mxu0 %v7121
  %7550 = vmatprep.subr.bf16.mxu0 0
  %7551 = vmatpush1.bf16.msra.mxu0 %v7122
  %7552 = vmatprep.subr.bf16.mxu0 0
  %7553 = vmatpush1.bf16.msra.mxu0 %v7123
  %7554 = vmatprep.subr.bf16.mxu0 0
  %7555 = vmatpush1.bf16.msra.mxu0 %v7124
  %7556 = vmatprep.subr.bf16.mxu0 0
  %7557 = vmatpush1.bf16.msra.mxu0 %v7125
  %7558 = vmatprep.subr.bf16.mxu0 0
  %7559 = vmatpush1.bf16.msra.mxu0 %v7126
  %7560 = vmatprep.subr.bf16.mxu0 0
  %7561 = vmatpush1.bf16.msra.mxu0 %v7127
  %7562 = vmatprep.mubr.bf16.mxu0 %v6182
  %7563 = vmatmul.mubr.bf16.gmra.mrb[0].mxu0 %v6181
  %v7564 = vpop.f32.mrb[0].mxu0
  %v7565 = vadd.f32 %v7468, %v7564
  %v7566 = vpop.f32.mrb[0].mxu0
  %v7567 = vpop.f32.mrb[0].mxu0
  %v7568 = vadd.f32 %v7471, %v7567
  %v7569 = vpop.f32.mrb[0].mxu0
  %7570 = vmatprep.mubr.bf16.mxu0 %v6198
  %7571 = vmatmul.mubr.bf16.gmra.mrb[0].mxu0 %v6197
  %v7572 = vpop.f32.mrb[0].mxu0
  %v7573 = vadd.f32 %v7476, %v7572
  %v7574 = vpop.f32.mrb[0].mxu0
  %v7575 = vpop.f32.mrb[0].mxu0
  %v7576 = vadd.f32 %v7479, %v7575
  %v7577 = vpop.f32.mrb[0].mxu0
  %7578 = vmatprep.mubr.bf16.mxu0 %v6214
  %7579 = vmatmul.mubr.bf16.gmra.mrb[0].mxu0 %v6213
  %v7580 = vpop.f32.mrb[0].mxu0
  %v7581 = vadd.f32 %v7484, %v7580
  %v7582 = vpop.f32.mrb[0].mxu0
  %v7583 = vpop.f32.mrb[0].mxu0
  %v7584 = vadd.f32 %v7487, %v7583
  %v7585 = vpop.f32.mrb[0].mxu0
  %7586 = vmatprep.mubr.bf16.mxu0 %v6230
  %7587 = vmatmul.mubr.bf16.gmra.mrb[0].mxu0 %v6229
  %v7588 = vpop.f32.mrb[0].mxu0
  %v7589 = vadd.f32 %v7492, %v7588
  %v7590 = vpop.f32.mrb[0].mxu0
  %v7591 = vpop.f32.mrb[0].mxu0
  %v7592 = vadd.f32 %v7495, %v7591
  %v7593 = vpop.f32.mrb[0].mxu0
  %7594 = vmatprep.mubr.bf16.mxu0 %v6246
  %7595 = vmatmul.mubr.bf16.gmra.mrb[0].mxu0 %v6245
  %v7596 = vpop.f32.mrb[0].mxu0
  %v7597 = vadd.f32 %v7500, %v7596
  %v7598 = vpop.f32.mrb[0].mxu0
  %v7599 = vpop.f32.mrb[0].mxu0
  %v7600 = vadd.f32 %v7503, %v7599
  %v7601 = vpop.f32.mrb[0].mxu0
  %7602 = vmatprep.mubr.bf16.mxu0 %v6262
  %7603 = vmatmul.mubr.bf16.gmra.mrb[0].mxu0 %v6261
  %v7604 = vpop.f32.mrb[0].mxu0
  %v7605 = vadd.f32 %v7508, %v7604
  %v7606 = vpop.f32.mrb[0].mxu0
  %v7607 = vpop.f32.mrb[0].mxu0
  %v7608 = vadd.f32 %v7511, %v7607
  %v7609 = vpop.f32.mrb[0].mxu0
  %7610 = vmatprep.mubr.bf16.mxu0 %v6278
  %7611 = vmatmul.mubr.bf16.gmra.mrb[0].mxu0 %v6277
  %v7612 = vpop.f32.mrb[0].mxu0
  %v7613 = vadd.f32 %v7516, %v7612
  %v7614 = vpop.f32.mrb[0].mxu0
  %v7615 = vpop.f32.mrb[0].mxu0
  %v7616 = vadd.f32 %v7519, %v7615
  %v7617 = vpop.f32.mrb[0].mxu0
  %7618 = vmatprep.mubr.bf16.mxu0 %v6294
  %7619 = vmatmul.mubr.bf16.gmra.mrb[0].mxu0 %v6293
  %v7620 = vpop.f32.mrb[0].mxu0
  %v7621 = vadd.f32 %v7524, %v7620
  %v7622 = vpop.f32.mrb[0].mxu0
  %v7623 = vpop.f32.mrb[0].mxu0
  %v7624 = vadd.f32 %v7527, %v7623
  %v7625 = vpop.f32.mrb[0].mxu0
  %7626 = vdwg.mxu0
  %7627 = vmatprep.subr.bf16.mxu0 0
  %7628 = vmatpush1.bf16.msra.mxu0 %v7128
  %7629 = vmatprep.subr.bf16.mxu0 0
  %7630 = vmatpush1.bf16.msra.mxu0 %v7129
  %7631 = vmatprep.subr.bf16.mxu0 0
  %7632 = vmatpush1.bf16.msra.mxu0 %v7130
  %7633 = vmatprep.subr.bf16.mxu0 0
  %7634 = vmatpush1.bf16.msra.mxu0 %v7131
  %7635 = vmatprep.subr.bf16.mxu0 0
  %7636 = vmatpush1.bf16.msra.mxu0 %v7132
  %7637 = vmatprep.subr.bf16.mxu0 0
  %7638 = vmatpush1.bf16.msra.mxu0 %v7133
  %7639 = vmatprep.subr.bf16.mxu0 0
  %7640 = vmatpush1.bf16.msra.mxu0 %v7134
  %7641 = vmatprep.subr.bf16.mxu0 0
  %7642 = vmatpush1.bf16.msra.mxu0 %v7135
  %7643 = vmatprep.subr.bf16.mxu0 0
  %7644 = vmatpush1.bf16.msra.mxu0 %v7136
  %7645 = vmatprep.subr.bf16.mxu0 0
  %7646 = vmatpush1.bf16.msra.mxu0 %v7137
  %7647 = vmatprep.subr.bf16.mxu0 0
  %7648 = vmatpush1.bf16.msra.mxu0 %v7138
  %7649 = vmatprep.subr.bf16.mxu0 0
  %7650 = vmatpush1.bf16.msra.mxu0 %v7139
  %7651 = vmatprep.subr.bf16.mxu0 0
  %7652 = vmatpush1.bf16.msra.mxu0 %v7140
  %7653 = vmatprep.subr.bf16.mxu0 0
  %7654 = vmatpush1.bf16.msra.mxu0 %v7141
  %7655 = vmatprep.subr.bf16.mxu0 0
  %7656 = vmatpush1.bf16.msra.mxu0 %v7142
  %7657 = vmatprep.subr.bf16.mxu0 0
  %7658 = vmatpush1.bf16.msra.mxu0 %v7143
  %7659 = vmatprep.mubr.bf16.mxu0 %v6184
  %7660 = vmatmul.mubr.bf16.gmra.mrb[0].mxu0 %v6183
  %v7661 = vpop.f32.mrb[0].mxu0
  %v7662 = vadd.f32 %v7565, %v7661
  %v7663 = vpop.f32.mrb[0].mxu0
  %v7664 = vpop.f32.mrb[0].mxu0
  %v7665 = vadd.f32 %v7568, %v7664
  %v7666 = vpop.f32.mrb[0].mxu0
  %7667 = vmatprep.mubr.bf16.mxu0 %v6200
  %7668 = vmatmul.mubr.bf16.gmra.mrb[0].mxu0 %v6199
  %v7669 = vpop.f32.mrb[0].mxu0
  %v7670 = vadd.f32 %v7573, %v7669
  %v7671 = vpop.f32.mrb[0].mxu0
  %v7672 = vpop.f32.mrb[0].mxu0
  %v7673 = vadd.f32 %v7576, %v7672
  %v7674 = vpop.f32.mrb[0].mxu0
  %7675 = vmatprep.mubr.bf16.mxu0 %v6216
  %7676 = vmatmul.mubr.bf16.gmra.mrb[0].mxu0 %v6215
  %v7677 = vpop.f32.mrb[0].mxu0
  %v7678 = vadd.f32 %v7581, %v7677
  %v7679 = vpop.f32.mrb[0].mxu0
  %v7680 = vpop.f32.mrb[0].mxu0
  %v7681 = vadd.f32 %v7584, %v7680
  %v7682 = vpop.f32.mrb[0].mxu0
  %7683 = vmatprep.mubr.bf16.mxu0 %v6232
  %7684 = vmatmul.mubr.bf16.gmra.mrb[0].mxu0 %v6231
  %v7685 = vpop.f32.mrb[0].mxu0
  %v7686 = vadd.f32 %v7589, %v7685
  %v7687 = vpop.f32.mrb[0].mxu0
  %v7688 = vpop.f32.mrb[0].mxu0
  %v7689 = vadd.f32 %v7592, %v7688
  %v7690 = vpop.f32.mrb[0].mxu0
  %7691 = vmatprep.mubr.bf16.mxu0 %v6248
  %7692 = vmatmul.mubr.bf16.gmra.mrb[0].mxu0 %v6247
  %v7693 = vpop.f32.mrb[0].mxu0
  %v7694 = vadd.f32 %v7597, %v7693
  %v7695 = vpop.f32.mrb[0].mxu0
  %v7696 = vpop.f32.mrb[0].mxu0
  %v7697 = vadd.f32 %v7600, %v7696
  %v7698 = vpop.f32.mrb[0].mxu0
  %7699 = vmatprep.mubr.bf16.mxu0 %v6264
  %7700 = vmatmul.mubr.bf16.gmra.mrb[0].mxu0 %v6263
  %v7701 = vpop.f32.mrb[0].mxu0
  %v7702 = vadd.f32 %v7605, %v7701
  %v7703 = vpop.f32.mrb[0].mxu0
  %v7704 = vpop.f32.mrb[0].mxu0
  %v7705 = vadd.f32 %v7608, %v7704
  %v7706 = vpop.f32.mrb[0].mxu0
  %7707 = vmatprep.mubr.bf16.mxu0 %v6280
  %7708 = vmatmul.mubr.bf16.gmra.mrb[0].mxu0 %v6279
  %v7709 = vpop.f32.mrb[0].mxu0
  %v7710 = vadd.f32 %v7613, %v7709
  %v7711 = vpop.f32.mrb[0].mxu0
  %v7712 = vpop.f32.mrb[0].mxu0
  %v7713 = vadd.f32 %v7616, %v7712
  %v7714 = vpop.f32.mrb[0].mxu0
  %7715 = vmatprep.mubr.bf16.mxu0 %v6296
  %7716 = vmatmul.mubr.bf16.gmra.mrb[0].mxu0 %v6295
  %v7717 = vpop.f32.mrb[0].mxu0
  %v7718 = vadd.f32 %v7621, %v7717
  %v7719 = vpop.f32.mrb[0].mxu0
  %v7720 = vpop.f32.mrb[0].mxu0
  %v7721 = vadd.f32 %v7624, %v7720
  %v7722 = vpop.f32.mrb[0].mxu0
  %7723 = vdwg.mxu0
  %7724 = vmatprep.subr.bf16.mxu0 0
  %7725 = vmatpush1.bf16.msra.mxu0 %v7144
  %7726 = vmatprep.subr.bf16.mxu0 0
  %7727 = vmatpush1.bf16.msra.mxu0 %v7145
  %7728 = vmatprep.subr.bf16.mxu0 0
  %7729 = vmatpush1.bf16.msra.mxu0 %v7146
  %7730 = vmatprep.subr.bf16.mxu0 0
  %7731 = vmatpush1.bf16.msra.mxu0 %v7147
  %7732 = vmatprep.subr.bf16.mxu0 0
  %7733 = vmatpush1.bf16.msra.mxu0 %v7148
  %7734 = vmatprep.subr.bf16.mxu0 0
  %7735 = vmatpush1.bf16.msra.mxu0 %v7149
  %7736 = vmatprep.subr.bf16.mxu0 0
  %7737 = vmatpush1.bf16.msra.mxu0 %v7150
  %7738 = vmatprep.subr.bf16.mxu0 0
  %7739 = vmatpush1.bf16.msra.mxu0 %v7151
  %7740 = vmatprep.subr.bf16.mxu0 0
  %7741 = vmatpush1.bf16.msra.mxu0 %v7152
  %7742 = vmatprep.subr.bf16.mxu0 0
  %7743 = vmatpush1.bf16.msra.mxu0 %v7153
  %7744 = vmatprep.subr.bf16.mxu0 0
  %7745 = vmatpush1.bf16.msra.mxu0 %v7154
  %7746 = vmatprep.subr.bf16.mxu0 0
  %7747 = vmatpush1.bf16.msra.mxu0 %v7155
  %7748 = vmatprep.subr.bf16.mxu0 0
  %7749 = vmatpush1.bf16.msra.mxu0 %v7156
  %7750 = vmatprep.subr.bf16.mxu0 0
  %7751 = vmatpush1.bf16.msra.mxu0 %v7157
  %7752 = vmatprep.subr.bf16.mxu0 0
  %7753 = vmatpush1.bf16.msra.mxu0 %v7158
  %7754 = vmatprep.subr.bf16.mxu0 0
  %7755 = vmatpush1.bf16.msra.mxu0 %v7159
  %7756 = vmatprep.mubr.bf16.mxu0 %v6186
  %7757 = vmatmul.mubr.bf16.gmra.mrb[0].mxu0 %v6185
  %v7758 = vpop.f32.mrb[0].mxu0
  %v7759 = vadd.f32 %v7662, %v7758
  %v7760 = vpop.f32.mrb[0].mxu0
  %v7761 = vpop.f32.mrb[0].mxu0
  %v7762 = vadd.f32 %v7665, %v7761
  %v7763 = vpop.f32.mrb[0].mxu0
  %7764 = vmatprep.mubr.bf16.mxu0 %v6202
  %7765 = vmatmul.mubr.bf16.gmra.mrb[0].mxu0 %v6201
  %v7766 = vpop.f32.mrb[0].mxu0
  %v7767 = vadd.f32 %v7670, %v7766
  %v7768 = vpop.f32.mrb[0].mxu0
  %v7769 = vpop.f32.mrb[0].mxu0
  %v7770 = vadd.f32 %v7673, %v7769
  %v7771 = vpop.f32.mrb[0].mxu0
  %7772 = vmatprep.mubr.bf16.mxu0 %v6218
  %7773 = vmatmul.mubr.bf16.gmra.mrb[0].mxu0 %v6217
  %v7774 = vpop.f32.mrb[0].mxu0
  %v7775 = vadd.f32 %v7678, %v7774
  %v7776 = vpop.f32.mrb[0].mxu0
  %v7777 = vpop.f32.mrb[0].mxu0
  %v7778 = vadd.f32 %v7681, %v7777
  %v7779 = vpop.f32.mrb[0].mxu0
  %7780 = vmatprep.mubr.bf16.mxu0 %v6234
  %7781 = vmatmul.mubr.bf16.gmra.mrb[0].mxu0 %v6233
  %v7782 = vpop.f32.mrb[0].mxu0
  %v7783 = vadd.f32 %v7686, %v7782
  %v7784 = vpop.f32.mrb[0].mxu0
  %v7785 = vpop.f32.mrb[0].mxu0
  %v7786 = vadd.f32 %v7689, %v7785
  %v7787 = vpop.f32.mrb[0].mxu0
  %7788 = vmatprep.mubr.bf16.mxu0 %v6250
  %7789 = vmatmul.mubr.bf16.gmra.mrb[0].mxu0 %v6249
  %v7790 = vpop.f32.mrb[0].mxu0
  %v7791 = vadd.f32 %v7694, %v7790
  %v7792 = vpop.f32.mrb[0].mxu0
  %v7793 = vpop.f32.mrb[0].mxu0
  %v7794 = vadd.f32 %v7697, %v7793
  %v7795 = vpop.f32.mrb[0].mxu0
  %7796 = vmatprep.mubr.bf16.mxu0 %v6266
  %7797 = vmatmul.mubr.bf16.gmra.mrb[0].mxu0 %v6265
  %v7798 = vpop.f32.mrb[0].mxu0
  %v7799 = vadd.f32 %v7702, %v7798
  %v7800 = vpop.f32.mrb[0].mxu0
  %v7801 = vpop.f32.mrb[0].mxu0
  %v7802 = vadd.f32 %v7705, %v7801
  %v7803 = vpop.f32.mrb[0].mxu0
  %7804 = vmatprep.mubr.bf16.mxu0 %v6282
  %7805 = vmatmul.mubr.bf16.gmra.mrb[0].mxu0 %v6281
  %v7806 = vpop.f32.mrb[0].mxu0
  %v7807 = vadd.f32 %v7710, %v7806
  %v7808 = vpop.f32.mrb[0].mxu0
  %v7809 = vpop.f32.mrb[0].mxu0
  %v7810 = vadd.f32 %v7713, %v7809
  %v7811 = vpop.f32.mrb[0].mxu0
  %7812 = vmatprep.mubr.bf16.mxu0 %v6298
  %7813 = vmatmul.mubr.bf16.gmra.mrb[0].mxu0 %v6297
  %v7814 = vpop.f32.mrb[0].mxu0
  %v7815 = vadd.f32 %v7718, %v7814
  %v7816 = vpop.f32.mrb[0].mxu0
  %v7817 = vpop.f32.mrb[0].mxu0
  %v7818 = vadd.f32 %v7721, %v7817
  %v7819 = vpop.f32.mrb[0].mxu0
  %7820 = vdwg.mxu0
  %7821 = vmatprep.subr.bf16.mxu0 0
  %7822 = vmatpush1.bf16.msra.mxu0 %v7160
  %7823 = vmatprep.subr.bf16.mxu0 0
  %7824 = vmatpush1.bf16.msra.mxu0 %v7161
  %7825 = vmatprep.subr.bf16.mxu0 0
  %7826 = vmatpush1.bf16.msra.mxu0 %v7162
  %7827 = vmatprep.subr.bf16.mxu0 0
  %7828 = vmatpush1.bf16.msra.mxu0 %v7163
  %7829 = vmatprep.subr.bf16.mxu0 0
  %7830 = vmatpush1.bf16.msra.mxu0 %v7164
  %7831 = vmatprep.subr.bf16.mxu0 0
  %7832 = vmatpush1.bf16.msra.mxu0 %v7165
  %7833 = vmatprep.subr.bf16.mxu0 0
  %7834 = vmatpush1.bf16.msra.mxu0 %v7166
  %7835 = vmatprep.subr.bf16.mxu0 0
  %7836 = vmatpush1.bf16.msra.mxu0 %v7167
  %7837 = vmatprep.subr.bf16.mxu0 0
  %7838 = vmatpush1.bf16.msra.mxu0 %v7168
  %7839 = vmatprep.subr.bf16.mxu0 0
  %7840 = vmatpush1.bf16.msra.mxu0 %v7169
  %7841 = vmatprep.subr.bf16.mxu0 0
  %7842 = vmatpush1.bf16.msra.mxu0 %v7170
  %7843 = vmatprep.subr.bf16.mxu0 0
  %7844 = vmatpush1.bf16.msra.mxu0 %v7171
  %7845 = vmatprep.subr.bf16.mxu0 0
  %7846 = vmatpush1.bf16.msra.mxu0 %v7172
  %7847 = vmatprep.subr.bf16.mxu0 0
  %7848 = vmatpush1.bf16.msra.mxu0 %v7173
  %7849 = vmatprep.subr.bf16.mxu0 0
  %7850 = vmatpush1.bf16.msra.mxu0 %v7174
  %7851 = vmatprep.subr.bf16.mxu0 0
  %7852 = vmatpush1.bf16.msra.mxu0 %v7175
  %7853 = vmatprep.mubr.bf16.mxu0 %v6188
  %7854 = vmatmul.mubr.bf16.gmra.mrb[0].mxu0 %v6187
  %v7855 = vpop.f32.mrb[0].mxu0
  %v7856 = vadd.f32 %v7759, %v7855
  %v7857 = vpop.f32.mrb[0].mxu0
  %v7858 = vpop.f32.mrb[0].mxu0
  %v7859 = vadd.f32 %v7762, %v7858
  %v7860 = vpop.f32.mrb[0].mxu0
  %7861 = vmatprep.mubr.bf16.mxu0 %v6204
  %7862 = vmatmul.mubr.bf16.gmra.mrb[0].mxu0 %v6203
  %v7863 = vpop.f32.mrb[0].mxu0
  %v7864 = vadd.f32 %v7767, %v7863
  %v7865 = vpop.f32.mrb[0].mxu0
  %v7866 = vpop.f32.mrb[0].mxu0
  %v7867 = vadd.f32 %v7770, %v7866
  %v7868 = vpop.f32.mrb[0].mxu0
  %7869 = vmatprep.mubr.bf16.mxu0 %v6220
  %7870 = vmatmul.mubr.bf16.gmra.mrb[0].mxu0 %v6219
  %v7871 = vpop.f32.mrb[0].mxu0
  %v7872 = vadd.f32 %v7775, %v7871
  %v7873 = vpop.f32.mrb[0].mxu0
  %v7874 = vpop.f32.mrb[0].mxu0
  %v7875 = vadd.f32 %v7778, %v7874
  %v7876 = vpop.f32.mrb[0].mxu0
  %7877 = vmatprep.mubr.bf16.mxu0 %v6236
  %7878 = vmatmul.mubr.bf16.gmra.mrb[0].mxu0 %v6235
  %v7879 = vpop.f32.mrb[0].mxu0
  %v7880 = vadd.f32 %v7783, %v7879
  %v7881 = vpop.f32.mrb[0].mxu0
  %v7882 = vpop.f32.mrb[0].mxu0
  %v7883 = vadd.f32 %v7786, %v7882
  %v7884 = vpop.f32.mrb[0].mxu0
  %7885 = vmatprep.mubr.bf16.mxu0 %v6252
  %7886 = vmatmul.mubr.bf16.gmra.mrb[0].mxu0 %v6251
  %v7887 = vpop.f32.mrb[0].mxu0
  %v7888 = vadd.f32 %v7791, %v7887
  %v7889 = vpop.f32.mrb[0].mxu0
  %v7890 = vpop.f32.mrb[0].mxu0
  %v7891 = vadd.f32 %v7794, %v7890
  %v7892 = vpop.f32.mrb[0].mxu0
  %7893 = vmatprep.mubr.bf16.mxu0 %v6268
  %7894 = vmatmul.mubr.bf16.gmra.mrb[0].mxu0 %v6267
  %v7895 = vpop.f32.mrb[0].mxu0
  %v7896 = vadd.f32 %v7799, %v7895
  %v7897 = vpop.f32.mrb[0].mxu0
  %v7898 = vpop.f32.mrb[0].mxu0
  %v7899 = vadd.f32 %v7802, %v7898
  %v7900 = vpop.f32.mrb[0].mxu0
  %7901 = vmatprep.mubr.bf16.mxu0 %v6284
  %7902 = vmatmul.mubr.bf16.gmra.mrb[0].mxu0 %v6283
  %v7903 = vpop.f32.mrb[0].mxu0
  %v7904 = vadd.f32 %v7807, %v7903
  %v7905 = vpop.f32.mrb[0].mxu0
  %v7906 = vpop.f32.mrb[0].mxu0
  %v7907 = vadd.f32 %v7810, %v7906
  %v7908 = vpop.f32.mrb[0].mxu0
  %7909 = vmatprep.mubr.bf16.mxu0 %v6300
  %7910 = vmatmul.mubr.bf16.gmra.mrb[0].mxu0 %v6299
  %v7911 = vpop.f32.mrb[0].mxu0
  %v7912 = vadd.f32 %v7815, %v7911
  %v7913 = vpop.f32.mrb[0].mxu0
  %v7914 = vpop.f32.mrb[0].mxu0
  %v7915 = vadd.f32 %v7818, %v7914
  %v7916 = vpop.f32.mrb[0].mxu0
  %7917 = vdwg.mxu0
  %7918 = vmatprep.subr.bf16.mxu0 0
  %7919 = vmatpush1.bf16.msra.mxu0 %v7176
  %7920 = vmatprep.subr.bf16.mxu0 0
  %7921 = vmatpush1.bf16.msra.mxu0 %v7177
  %7922 = vmatprep.subr.bf16.mxu0 0
  %7923 = vmatpush1.bf16.msra.mxu0 %v7178
  %7924 = vmatprep.subr.bf16.mxu0 0
  %7925 = vmatpush1.bf16.msra.mxu0 %v7179
  %7926 = vmatprep.subr.bf16.mxu0 0
  %7927 = vmatpush1.bf16.msra.mxu0 %v7180
  %7928 = vmatprep.subr.bf16.mxu0 0
  %7929 = vmatpush1.bf16.msra.mxu0 %v7181
  %7930 = vmatprep.subr.bf16.mxu0 0
  %7931 = vmatpush1.bf16.msra.mxu0 %v7182
  %7932 = vmatprep.subr.bf16.mxu0 0
  %7933 = vmatpush1.bf16.msra.mxu0 %v7183
  %7934 = vmatprep.subr.bf16.mxu0 0
  %7935 = vmatpush1.bf16.msra.mxu0 %v7184
  %7936 = vmatprep.subr.bf16.mxu0 0
  %7937 = vmatpush1.bf16.msra.mxu0 %v7185
  %7938 = vmatprep.subr.bf16.mxu0 0
  %7939 = vmatpush1.bf16.msra.mxu0 %v7186
  %7940 = vmatprep.subr.bf16.mxu0 0
  %7941 = vmatpush1.bf16.msra.mxu0 %v7187
  %7942 = vmatprep.subr.bf16.mxu0 0
  %7943 = vmatpush1.bf16.msra.mxu0 %v7188
  %7944 = vmatprep.subr.bf16.mxu0 0
  %7945 = vmatpush1.bf16.msra.mxu0 %v7189
  %7946 = vmatprep.subr.bf16.mxu0 0
  %7947 = vmatpush1.bf16.msra.mxu0 %v7190
  %7948 = vmatprep.subr.bf16.mxu0 0
  %7949 = vmatpush1.bf16.msra.mxu0 %v7191
  %7950 = vmatprep.mubr.bf16.mxu0 %v6190
  %7951 = vmatmul.mubr.bf16.gmra.mrb[0].mxu0 %v6189
  %v7952 = vpop.f32.mrb[0].mxu0
  %v7953 = vadd.f32 %v7856, %v7952
  %v7954 = vpop.f32.mrb[0].mxu0
  %v7955 = vpop.f32.mrb[0].mxu0
  %v7956 = vadd.f32 %v7859, %v7955
  %v7957 = vpop.f32.mrb[0].mxu0
  %7958 = vmatprep.mubr.bf16.mxu0 %v6206
  %7959 = vmatmul.mubr.bf16.gmra.mrb[0].mxu0 %v6205
  %v7960 = vpop.f32.mrb[0].mxu0
  %v7961 = vadd.f32 %v7864, %v7960
  %v7962 = vpop.f32.mrb[0].mxu0
  %v7963 = vpop.f32.mrb[0].mxu0
  %v7964 = vadd.f32 %v7867, %v7963
  %v7965 = vpop.f32.mrb[0].mxu0
  %7966 = vmatprep.mubr.bf16.mxu0 %v6222
  %7967 = vmatmul.mubr.bf16.gmra.mrb[0].mxu0 %v6221
  %v7968 = vpop.f32.mrb[0].mxu0
  %v7969 = vadd.f32 %v7872, %v7968
  %v7970 = vpop.f32.mrb[0].mxu0
  %v7971 = vpop.f32.mrb[0].mxu0
  %v7972 = vadd.f32 %v7875, %v7971
  %v7973 = vpop.f32.mrb[0].mxu0
  %7974 = vmatprep.mubr.bf16.mxu0 %v6238
  %7975 = vmatmul.mubr.bf16.gmra.mrb[0].mxu0 %v6237
  %v7976 = vpop.f32.mrb[0].mxu0
  %v7977 = vadd.f32 %v7880, %v7976
  %v7978 = vpop.f32.mrb[0].mxu0
  %v7979 = vpop.f32.mrb[0].mxu0
  %v7980 = vadd.f32 %v7883, %v7979
  %v7981 = vpop.f32.mrb[0].mxu0
  %7982 = vmatprep.mubr.bf16.mxu0 %v6254
  %7983 = vmatmul.mubr.bf16.gmra.mrb[0].mxu0 %v6253
  %v7984 = vpop.f32.mrb[0].mxu0
  %v7985 = vadd.f32 %v7888, %v7984
  %v7986 = vpop.f32.mrb[0].mxu0
  %v7987 = vpop.f32.mrb[0].mxu0
  %v7988 = vadd.f32 %v7891, %v7987
  %v7989 = vpop.f32.mrb[0].mxu0
  %7990 = vmatprep.mubr.bf16.mxu0 %v6270
  %7991 = vmatmul.mubr.bf16.gmra.mrb[0].mxu0 %v6269
  %v7992 = vpop.f32.mrb[0].mxu0
  %v7993 = vadd.f32 %v7896, %v7992
  %v7994 = vpop.f32.mrb[0].mxu0
  %v7995 = vpop.f32.mrb[0].mxu0
  %v7996 = vadd.f32 %v7899, %v7995
  %v7997 = vpop.f32.mrb[0].mxu0
  %7998 = vmatprep.mubr.bf16.mxu0 %v6286
  %7999 = vmatmul.mubr.bf16.gmra.mrb[0].mxu0 %v6285
  %v8000 = vpop.f32.mrb[0].mxu0
  %v8001 = vadd.f32 %v7904, %v8000
  %v8002 = vpop.f32.mrb[0].mxu0
  %v8003 = vpop.f32.mrb[0].mxu0
  %v8004 = vadd.f32 %v7907, %v8003
  %v8005 = vpop.f32.mrb[0].mxu0
  %8006 = vmatprep.mubr.bf16.mxu0 %v6302
  %8007 = vmatmul.mubr.bf16.gmra.mrb[0].mxu0 %v6301
  %v8008 = vpop.f32.mrb[0].mxu0
  %v8009 = vadd.f32 %v7912, %v8008
  %v8010 = vpop.f32.mrb[0].mxu0
  %v8011 = vpop.f32.mrb[0].mxu0
  %v8012 = vadd.f32 %v7915, %v8011
  %v8013 = vpop.f32.mrb[0].mxu0
  %8014 = vdwg.mxu0
  %8015 = vmatprep.subr.bf16.mxu0 0
  %8016 = vmatpush1.bf16.msra.mxu0 %v7192
  %8017 = vmatprep.subr.bf16.mxu0 0
  %8018 = vmatpush1.bf16.msra.mxu0 %v7193
  %8019 = vmatprep.subr.bf16.mxu0 0
  %8020 = vmatpush1.bf16.msra.mxu0 %v7194
  %8021 = vmatprep.subr.bf16.mxu0 0
  %8022 = vmatpush1.bf16.msra.mxu0 %v7195
  %8023 = vmatprep.subr.bf16.mxu0 0
  %8024 = vmatpush1.bf16.msra.mxu0 %v7196
  %8025 = vmatprep.subr.bf16.mxu0 0
  %8026 = vmatpush1.bf16.msra.mxu0 %v7197
  %8027 = vmatprep.subr.bf16.mxu0 0
  %8028 = vmatpush1.bf16.msra.mxu0 %v7198
  %8029 = vmatprep.subr.bf16.mxu0 0
  %8030 = vmatpush1.bf16.msra.mxu0 %v7199
  %8031 = vmatprep.subr.bf16.mxu0 0
  %8032 = vmatpush1.bf16.msra.mxu0 %v7200
  %8033 = vmatprep.subr.bf16.mxu0 0
  %8034 = vmatpush1.bf16.msra.mxu0 %v7201
  %8035 = vmatprep.subr.bf16.mxu0 0
  %8036 = vmatpush1.bf16.msra.mxu0 %v7202
  %8037 = vmatprep.subr.bf16.mxu0 0
  %8038 = vmatpush1.bf16.msra.mxu0 %v7203
  %8039 = vmatprep.subr.bf16.mxu0 0
  %8040 = vmatpush1.bf16.msra.mxu0 %v7204
  %8041 = vmatprep.subr.bf16.mxu0 0
  %8042 = vmatpush1.bf16.msra.mxu0 %v7205
  %8043 = vmatprep.subr.bf16.mxu0 0
  %8044 = vmatpush1.bf16.msra.mxu0 %v7206
  %8045 = vmatprep.subr.bf16.mxu0 0
  %8046 = vmatpush1.bf16.msra.mxu0 %v7207
  %8047 = vmatprep.mubr.bf16.mxu0 %v6192
  %8048 = vmatmul.mubr.bf16.gmra.mrb[0].mxu0 %v6191
  %v8049 = vpop.f32.mrb[0].mxu0
  %v8050 = vadd.f32 %v7953, %v8049
  %v8051 = vpop.f32.mrb[0].mxu0
  %v8052 = vpop.f32.mrb[0].mxu0
  %v8053 = vadd.f32 %v7956, %v8052
  %v8054 = vpop.f32.mrb[0].mxu0
  %8055 = vmatprep.mubr.bf16.mxu0 %v6208
  %8056 = vmatmul.mubr.bf16.gmra.mrb[0].mxu0 %v6207
  %v8057 = vpop.f32.mrb[0].mxu0
  %v8058 = vadd.f32 %v7961, %v8057
  %v8059 = vpop.f32.mrb[0].mxu0
  %v8060 = vpop.f32.mrb[0].mxu0
  %v8061 = vadd.f32 %v7964, %v8060
  %v8062 = vpop.f32.mrb[0].mxu0
  %8063 = vmatprep.mubr.bf16.mxu0 %v6224
  %8064 = vmatmul.mubr.bf16.gmra.mrb[0].mxu0 %v6223
  %v8065 = vpop.f32.mrb[0].mxu0
  %v8066 = vadd.f32 %v7969, %v8065
  %v8067 = vpop.f32.mrb[0].mxu0
  %v8068 = vpop.f32.mrb[0].mxu0
  %v8069 = vadd.f32 %v7972, %v8068
  %v8070 = vpop.f32.mrb[0].mxu0
  %8071 = vmatprep.mubr.bf16.mxu0 %v6240
  %8072 = vmatmul.mubr.bf16.gmra.mrb[0].mxu0 %v6239
  %v8073 = vpop.f32.mrb[0].mxu0
  %v8074 = vadd.f32 %v7977, %v8073
  %v8075 = vpop.f32.mrb[0].mxu0
  %v8076 = vpop.f32.mrb[0].mxu0
  %v8077 = vadd.f32 %v7980, %v8076
  %v8078 = vpop.f32.mrb[0].mxu0
  %8079 = vmatprep.mubr.bf16.mxu0 %v6256
  %8080 = vmatmul.mubr.bf16.gmra.mrb[0].mxu0 %v6255
  %v8081 = vpop.f32.mrb[0].mxu0
  %v8082 = vadd.f32 %v7985, %v8081
  %v8083 = vpop.f32.mrb[0].mxu0
  %v8084 = vpop.f32.mrb[0].mxu0
  %v8085 = vadd.f32 %v7988, %v8084
  %v8086 = vpop.f32.mrb[0].mxu0
  %8087 = vmatprep.mubr.bf16.mxu0 %v6272
  %8088 = vmatmul.mubr.bf16.gmra.mrb[0].mxu0 %v6271
  %v8089 = vpop.f32.mrb[0].mxu0
  %v8090 = vadd.f32 %v7993, %v8089
  %v8091 = vpop.f32.mrb[0].mxu0
  %v8092 = vpop.f32.mrb[0].mxu0
  %v8093 = vadd.f32 %v7996, %v8092
  %v8094 = vpop.f32.mrb[0].mxu0
  %8095 = vmatprep.mubr.bf16.mxu0 %v6288
  %8096 = vmatmul.mubr.bf16.gmra.mrb[0].mxu0 %v6287
  %v8097 = vpop.f32.mrb[0].mxu0
  %v8098 = vadd.f32 %v8001, %v8097
  %v8099 = vpop.f32.mrb[0].mxu0
  %v8100 = vpop.f32.mrb[0].mxu0
  %v8101 = vadd.f32 %v8004, %v8100
  %v8102 = vpop.f32.mrb[0].mxu0
  %8103 = vmatprep.mubr.bf16.mxu0 %v6304
  %8104 = vmatmul.mubr.bf16.gmra.mrb[0].mxu0 %v6303
  %v8105 = vpop.f32.mrb[0].mxu0
  %v8106 = vadd.f32 %v8009, %v8105
  %v8107 = vpop.f32.mrb[0].mxu0
  %v8108 = vpop.f32.mrb[0].mxu0
  %v8109 = vadd.f32 %v8012, %v8108
  %v8110 = vpop.f32.mrb[0].mxu0
  %8111 = vdwg.mxu0
  %v8112 = vadd.f32 %v4693, %v8050
  %v8113 = vadd.f32 %v4694, %v8053
  %v8114 = vadd.f32 %v4695, %v8058
  %v8115 = vadd.f32 %v4696, %v8061
  %v8116 = vadd.f32 %v4697, %v8066
  %v8117 = vadd.f32 %v4698, %v8069
  %v8118 = vadd.f32 %v4699, %v8074
  %v8119 = vadd.f32 %v4700, %v8077
  %v8120 = vadd.f32 %v4701, %v8082
  %v8121 = vadd.f32 %v4702, %v8085
  %v8122 = vadd.f32 %v4703, %v8090
  %v8123 = vadd.f32 %v4704, %v8093
  %v8124 = vadd.f32 %v4705, %v8098
  %v8125 = vadd.f32 %v4706, %v8101
  %v8126 = vadd.f32 %v4707, %v8106
  %v8127 = vadd.f32 %v4708, %v8109
  %v8128 = vld [vmem:[%s15] sm:$0x1]
  %v8129 = vld [vmem:[%s16] sm:$0x1]
  %v8130 = vsel %vm161, %v8112, 0.0
  %8131 = vadd.xlane.f32.xlu0 %v8130
  %v8132 = vpop.xlane.xlu0 %8131
  %v8133 = vsel %vm161, %v8113, 0.0
  %8134 = vadd.xlane.f32.xlu0 %v8133
  %v8135 = vpop.xlane.xlu0 %8134
  %v8136 = vsel %vm161, %v8114, 0.0
  %8137 = vadd.xlane.f32.xlu0 %v8136
  %v8138 = vpop.xlane.xlu0 %8137
  %v8139 = vsel %vm161, %v8115, 0.0
  %8140 = vadd.xlane.f32.xlu0 %v8139
  %v8141 = vpop.xlane.xlu0 %8140
  %v8142 = vsel %vm161, %v8116, 0.0
  %8143 = vadd.xlane.f32.xlu0 %v8142
  %v8144 = vpop.xlane.xlu0 %8143
  %v8145 = vsel %vm161, %v8117, 0.0
  %8146 = vadd.xlane.f32.xlu0 %v8145
  %v8147 = vpop.xlane.xlu0 %8146
  %v8148 = vsel %vm161, %v8118, 0.0
  %8149 = vadd.xlane.f32.xlu0 %v8148
  %v8150 = vpop.xlane.xlu0 %8149
  %v8151 = vsel %vm161, %v8119, 0.0
  %8152 = vadd.xlane.f32.xlu0 %v8151
  %v8153 = vpop.xlane.xlu0 %8152
  %v8154 = vsel %vm161, %v8120, 0.0
  %8155 = vadd.xlane.f32.xlu0 %v8154
  %v8156 = vpop.xlane.xlu0 %8155
  %v8157 = vsel %vm161, %v8121, 0.0
  %8158 = vadd.xlane.f32.xlu0 %v8157
  %v8159 = vpop.xlane.xlu0 %8158
  %v8160 = vsel %vm161, %v8122, 0.0
  %8161 = vadd.xlane.f32.xlu0 %v8160
  %v8162 = vpop.xlane.xlu0 %8161
  %v8163 = vsel %vm161, %v8123, 0.0
  %8164 = vadd.xlane.f32.xlu0 %v8163
  %v8165 = vpop.xlane.xlu0 %8164
  %v8166 = vsel %vm161, %v8124, 0.0
  %8167 = vadd.xlane.f32.xlu0 %v8166
  %v8168 = vpop.xlane.xlu0 %8167
  %v8169 = vsel %vm161, %v8125, 0.0
  %8170 = vadd.xlane.f32.xlu0 %v8169
  %v8171 = vpop.xlane.xlu0 %8170
  %v8172 = vsel %vm161, %v8126, 0.0
  %8173 = vadd.xlane.f32.xlu0 %v8172
  %v8174 = vpop.xlane.xlu0 %8173
  %v8175 = vsel %vm161, %v8127, 0.0
  %8176 = vadd.xlane.f32.xlu0 %v8175
  %v8177 = vpop.xlane.xlu0 %8176
  %v8178 = vmul.f32 %v8132, %v4504
  %v8179 = vmul.f32 %v8135, %v4504
  %v8180 = vmul.f32 %v8138, %v4504
  %v8181 = vmul.f32 %v8141, %v4504
  %v8182 = vmul.f32 %v8144, %v4504
  %v8183 = vmul.f32 %v8147, %v4504
  %v8184 = vmul.f32 %v8150, %v4504
  %v8185 = vmul.f32 %v8153, %v4504
  %v8186 = vmul.f32 %v8156, %v4504
  %v8187 = vmul.f32 %v8159, %v4504
  %v8188 = vmul.f32 %v8162, %v4504
  %v8189 = vmul.f32 %v8165, %v4504
  %v8190 = vmul.f32 %v8168, %v4504
  %v8191 = vmul.f32 %v8171, %v4504
  %v8192 = vmul.f32 %v8174, %v4504
  %v8193 = vmul.f32 %v8177, %v4504
  %v8194 = vsub.f32 %v8112, %v8178
  %v8195 = vsub.f32 %v8113, %v8179
  %v8196 = vsub.f32 %v8114, %v8180
  %v8197 = vsub.f32 %v8115, %v8181
  %v8198 = vsub.f32 %v8116, %v8182
  %v8199 = vsub.f32 %v8117, %v8183
  %v8200 = vsub.f32 %v8118, %v8184
  %v8201 = vsub.f32 %v8119, %v8185
  %v8202 = vsub.f32 %v8120, %v8186
  %v8203 = vsub.f32 %v8121, %v8187
  %v8204 = vsub.f32 %v8122, %v8188
  %v8205 = vsub.f32 %v8123, %v8189
  %v8206 = vsub.f32 %v8124, %v8190
  %v8207 = vsub.f32 %v8125, %v8191
  %v8208 = vsub.f32 %v8126, %v8192
  %v8209 = vsub.f32 %v8127, %v8193
  %v8210 = vmul.f32 %v8194, %v8194
  %v8211 = vmul.f32 %v8195, %v8195
  %v8212 = vmul.f32 %v8196, %v8196
  %v8213 = vmul.f32 %v8197, %v8197
  %v8214 = vmul.f32 %v8198, %v8198
  %v8215 = vmul.f32 %v8199, %v8199
  %v8216 = vmul.f32 %v8200, %v8200
  %v8217 = vmul.f32 %v8201, %v8201
  %v8218 = vmul.f32 %v8202, %v8202
  %v8219 = vmul.f32 %v8203, %v8203
  %v8220 = vmul.f32 %v8204, %v8204
  %v8221 = vmul.f32 %v8205, %v8205
  %v8222 = vmul.f32 %v8206, %v8206
  %v8223 = vmul.f32 %v8207, %v8207
  %v8224 = vmul.f32 %v8208, %v8208
  %v8225 = vmul.f32 %v8209, %v8209
  %v8226 = vsel %vm161, %v8210, 0.0
  %8227 = vadd.xlane.f32.xlu0 %v8226
  %v8228 = vpop.xlane.xlu0 %8227
  %v8229 = vsel %vm161, %v8211, 0.0
  %8230 = vadd.xlane.f32.xlu0 %v8229
  %v8231 = vpop.xlane.xlu0 %8230
  %v8232 = vsel %vm161, %v8212, 0.0
  %8233 = vadd.xlane.f32.xlu0 %v8232
  %v8234 = vpop.xlane.xlu0 %8233
  %v8235 = vsel %vm161, %v8213, 0.0
  %8236 = vadd.xlane.f32.xlu0 %v8235
  %v8237 = vpop.xlane.xlu0 %8236
  %v8238 = vsel %vm161, %v8214, 0.0
  %8239 = vadd.xlane.f32.xlu0 %v8238
  %v8240 = vpop.xlane.xlu0 %8239
  %v8241 = vsel %vm161, %v8215, 0.0
  %8242 = vadd.xlane.f32.xlu0 %v8241
  %v8243 = vpop.xlane.xlu0 %8242
  %v8244 = vsel %vm161, %v8216, 0.0
  %8245 = vadd.xlane.f32.xlu0 %v8244
  %v8246 = vpop.xlane.xlu0 %8245
  %v8247 = vsel %vm161, %v8217, 0.0
  %8248 = vadd.xlane.f32.xlu0 %v8247
  %v8249 = vpop.xlane.xlu0 %8248
  %v8250 = vsel %vm161, %v8218, 0.0
  %8251 = vadd.xlane.f32.xlu0 %v8250
  %v8252 = vpop.xlane.xlu0 %8251
  %v8253 = vsel %vm161, %v8219, 0.0
  %8254 = vadd.xlane.f32.xlu0 %v8253
  %v8255 = vpop.xlane.xlu0 %8254
  %v8256 = vsel %vm161, %v8220, 0.0
  %8257 = vadd.xlane.f32.xlu0 %v8256
  %v8258 = vpop.xlane.xlu0 %8257
  %v8259 = vsel %vm161, %v8221, 0.0
  %8260 = vadd.xlane.f32.xlu0 %v8259
  %v8261 = vpop.xlane.xlu0 %8260
  %v8262 = vsel %vm161, %v8222, 0.0
  %8263 = vadd.xlane.f32.xlu0 %v8262
  %v8264 = vpop.xlane.xlu0 %8263
  %v8265 = vsel %vm161, %v8223, 0.0
  %8266 = vadd.xlane.f32.xlu0 %v8265
  %v8267 = vpop.xlane.xlu0 %8266
  %v8268 = vsel %vm161, %v8224, 0.0
  %8269 = vadd.xlane.f32.xlu0 %v8268
  %v8270 = vpop.xlane.xlu0 %8269
  %v8271 = vsel %vm161, %v8225, 0.0
  %8272 = vadd.xlane.f32.xlu0 %v8271
  %v8273 = vpop.xlane.xlu0 %8272
  %v8274 = vmul.f32 %v8228, %v4504
  %v8275 = vmul.f32 %v8231, %v4504
  %v8276 = vmul.f32 %v8234, %v4504
  %v8277 = vmul.f32 %v8237, %v4504
  %v8278 = vmul.f32 %v8240, %v4504
  %v8279 = vmul.f32 %v8243, %v4504
  %v8280 = vmul.f32 %v8246, %v4504
  %v8281 = vmul.f32 %v8249, %v4504
  %v8282 = vmul.f32 %v8252, %v4504
  %v8283 = vmul.f32 %v8255, %v4504
  %v8284 = vmul.f32 %v8258, %v4504
  %v8285 = vmul.f32 %v8261, %v4504
  %v8286 = vmul.f32 %v8264, %v4504
  %v8287 = vmul.f32 %v8267, %v4504
  %v8288 = vmul.f32 %v8270, %v4504
  %v8289 = vmul.f32 %v8273, %v4504
  %v8290 = vadd.f32 %v8274, 1e-05
  %v8291 = vadd.f32 %v8275, 1e-05
  %v8292 = vadd.f32 %v8276, 1e-05
  %v8293 = vadd.f32 %v8277, 1e-05
  %v8294 = vadd.f32 %v8278, 1e-05
  %v8295 = vadd.f32 %v8279, 1e-05
  %v8296 = vadd.f32 %v8280, 1e-05
  %v8297 = vadd.f32 %v8281, 1e-05
  %v8298 = vadd.f32 %v8282, 1e-05
  %v8299 = vadd.f32 %v8283, 1e-05
  %v8300 = vadd.f32 %v8284, 1e-05
  %v8301 = vadd.f32 %v8285, 1e-05
  %v8302 = vadd.f32 %v8286, 1e-05
  %v8303 = vadd.f32 %v8287, 1e-05
  %v8304 = vadd.f32 %v8288, 1e-05
  %v8305 = vadd.f32 %v8289, 1e-05
  %v8306 = vrsqrt.pop %v8290
  %v8307 = vrsqrt.pop %v8291
  %v8308 = vrsqrt.pop %v8292
  %v8309 = vrsqrt.pop %v8293
  %v8310 = vrsqrt.pop %v8294
  %v8311 = vrsqrt.pop %v8295
  %v8312 = vrsqrt.pop %v8296
  %v8313 = vrsqrt.pop %v8297
  %v8314 = vrsqrt.pop %v8298
  %v8315 = vrsqrt.pop %v8299
  %v8316 = vrsqrt.pop %v8300
  %v8317 = vrsqrt.pop %v8301
  %v8318 = vrsqrt.pop %v8302
  %v8319 = vrsqrt.pop %v8303
  %v8320 = vrsqrt.pop %v8304
  %v8321 = vrsqrt.pop %v8305
  %v8322 = vmul.f32 %v8194, %v8306
  %v8323 = vmul.f32 %v8195, %v8307
  %v8324 = vmul.f32 %v8196, %v8308
  %v8325 = vmul.f32 %v8197, %v8309
  %v8326 = vmul.f32 %v8198, %v8310
  %v8327 = vmul.f32 %v8199, %v8311
  %v8328 = vmul.f32 %v8200, %v8312
  %v8329 = vmul.f32 %v8201, %v8313
  %v8330 = vmul.f32 %v8202, %v8314
  %v8331 = vmul.f32 %v8203, %v8315
  %v8332 = vmul.f32 %v8204, %v8316
  %v8333 = vmul.f32 %v8205, %v8317
  %v8334 = vmul.f32 %v8206, %v8318
  %v8335 = vmul.f32 %v8207, %v8319
  %v8336 = vmul.f32 %v8208, %v8320
  %v8337 = vmul.f32 %v8209, %v8321
  %v8339 = vlaneseq
  %v8340 = vshrl.u32 %v8339, 7
  %v8341 = vsub.s32 0, %v8340
  %v8342 = vrot.slane %v8128, %v8341
  %v8344 = vmul.f32 %v8322, %v8342
  %v8345 = vmul.f32 %v8323, %v8342
  %v8346 = vmul.f32 %v8324, %v8342
  %v8347 = vmul.f32 %v8325, %v8342
  %v8348 = vmul.f32 %v8326, %v8342
  %v8349 = vmul.f32 %v8327, %v8342
  %v8350 = vmul.f32 %v8328, %v8342
  %v8351 = vmul.f32 %v8329, %v8342
  %v8352 = vmul.f32 %v8330, %v8342
  %v8353 = vmul.f32 %v8331, %v8342
  %v8354 = vmul.f32 %v8332, %v8342
  %v8355 = vmul.f32 %v8333, %v8342
  %v8356 = vmul.f32 %v8334, %v8342
  %v8357 = vmul.f32 %v8335, %v8342
  %v8358 = vmul.f32 %v8336, %v8342
  %v8359 = vmul.f32 %v8337, %v8342
  %v8361 = vlaneseq
  %v8362 = vshrl.u32 %v8361, 7
  %v8363 = vsub.s32 0, %v8362
  %v8364 = vrot.slane %v8129, %v8363
  %v8366 = vadd.f32 %v8344, %v8364
  %v8367 = vadd.f32 %v8345, %v8364
  %v8368 = vadd.f32 %v8346, %v8364
  %v8369 = vadd.f32 %v8347, %v8364
  %v8370 = vadd.f32 %v8348, %v8364
  %v8371 = vadd.f32 %v8349, %v8364
  %v8372 = vadd.f32 %v8350, %v8364
  %v8373 = vadd.f32 %v8351, %v8364
  %v8374 = vadd.f32 %v8352, %v8364
  %v8375 = vadd.f32 %v8353, %v8364
  %v8376 = vadd.f32 %v8354, %v8364
  %v8377 = vadd.f32 %v8355, %v8364
  %v8378 = vadd.f32 %v8356, %v8364
  %v8379 = vadd.f32 %v8357, %v8364
  %v8380 = vadd.f32 %v8358, %v8364
  %v8381 = vadd.f32 %v8359, %v8364
  %8382 = vxpose.xlu0.b32.start [1/16] %v8366, 128
  %8383 = vxpose.xlu0.b32.cont [2/16] %v8367, 128
  %8384 = vxpose.xlu0.b32.cont [3/16] %v8368, 128
  %8385 = vxpose.xlu0.b32.cont [4/16] %v8369, 128
  %8386 = vxpose.xlu0.b32.cont [5/16] %v8370, 128
  %8387 = vxpose.xlu0.b32.cont [6/16] %v8371, 128
  %8388 = vxpose.xlu0.b32.cont [7/16] %v8372, 128
  %8389 = vxpose.xlu0.b32.cont [8/16] %v8373, 128
  %8390 = vxpose.xlu0.b32.cont [9/16] 0.0, 128
  %8391 = vxpose.xlu0.b32.cont [10/16] 0.0, 128
  %8392 = vxpose.xlu0.b32.cont [11/16] 0.0, 128
  %8393 = vxpose.xlu0.b32.cont [12/16] 0.0, 128
  %8394 = vxpose.xlu0.b32.cont [13/16] 0.0, 128
  %8395 = vxpose.xlu0.b32.cont [14/16] 0.0, 128
  %8396 = vxpose.xlu0.b32.cont [15/16] 0.0, 128
  %8397 = vxpose.xlu0.b32.end [16/16] 0.0, 128
  %v8398 = vpop.trf.xlu0
  %v8399 = vpop.trf.xlu0
  %v8400 = vpop.trf.xlu0
  %v8401 = vpop.trf.xlu0
  %v8402 = vpop.trf.xlu0
  %v8403 = vpop.trf.xlu0
  %v8404 = vpop.trf.xlu0
  %v8405 = vpop.trf.xlu0
  %v8406 = vpop.trf.xlu0
  %v8407 = vpop.trf.xlu0
  %v8408 = vpop.trf.xlu0
  %v8409 = vpop.trf.xlu0
  %v8410 = vpop.trf.xlu0
  %v8411 = vpop.trf.xlu0
  %v8412 = vpop.trf.xlu0
  %v8413 = vpop.trf.xlu0
  %8414 = vst.msk [vmem:[%s17] sm:$0xff] %vm734, %v8398
  %8415 = vst.msk [vmem:[%s17 + $0x8] sm:$0xff] %vm734, %v8399
  %8416 = vst.msk [vmem:[%s17 + $0x10] sm:$0xff] %vm734, %v8400
  %8417 = vst.msk [vmem:[%s17 + $0x18] sm:$0xff] %vm734, %v8401
  %8418 = vxpose.xlu0.b32.start [1/16] %v8374, 128
  %8419 = vxpose.xlu0.b32.cont [2/16] %v8375, 128
  %8420 = vxpose.xlu0.b32.cont [3/16] %v8376, 128
  %8421 = vxpose.xlu0.b32.cont [4/16] %v8377, 128
  %8422 = vxpose.xlu0.b32.cont [5/16] %v8378, 128
  %8423 = vxpose.xlu0.b32.cont [6/16] %v8379, 128
  %8424 = vxpose.xlu0.b32.cont [7/16] %v8380, 128
  %8425 = vxpose.xlu0.b32.cont [8/16] %v8381, 128
  %8426 = vxpose.xlu0.b32.cont [9/16] 0.0, 128
  %8427 = vxpose.xlu0.b32.cont [10/16] 0.0, 128
  %8428 = vxpose.xlu0.b32.cont [11/16] 0.0, 128
  %8429 = vxpose.xlu0.b32.cont [12/16] 0.0, 128
  %8430 = vxpose.xlu0.b32.cont [13/16] 0.0, 128
  %8431 = vxpose.xlu0.b32.cont [14/16] 0.0, 128
  %8432 = vxpose.xlu0.b32.cont [15/16] 0.0, 128
  %8433 = vxpose.xlu0.b32.end [16/16] 0.0, 128
  %v8434 = vpop.trf.xlu0
  %v8435 = vpop.trf.xlu0
  %v8436 = vpop.trf.xlu0
  %v8437 = vpop.trf.xlu0
  %v8438 = vpop.trf.xlu0
  %v8439 = vpop.trf.xlu0
  %v8440 = vpop.trf.xlu0
  %v8441 = vpop.trf.xlu0
  %v8442 = vpop.trf.xlu0
  %v8443 = vpop.trf.xlu0
  %v8444 = vpop.trf.xlu0
  %v8445 = vpop.trf.xlu0
  %v8446 = vpop.trf.xlu0
  %v8447 = vpop.trf.xlu0
  %v8448 = vpop.trf.xlu0
  %v8449 = vpop.trf.xlu0
  %s8450 = scalar_lea.vmem %s17, 32
  %8451 = vst.msk [vmem:[%s8450] sm:$0xff] %vm734, %v8434
  %8452 = vst.msk [vmem:[%s8450 + $0x8] sm:$0xff] %vm734, %v8435
  %8453 = vst.msk [vmem:[%s8450 + $0x10] sm:$0xff] %vm734, %v8436
  %8454 = vst.msk [vmem:[%s8450 + $0x18] sm:$0xff] %vm734, %v8437
  // Predicated region
  $region70: #{transformer_block_forward.1} parent=0 // pred_check
    _
  $region71: #{transformer_block_forward.1} parent=0 // pred_check_branch
    %8456 = sbr.rel (0) target = $region73
  $region72: #{transformer_block_forward.1} parent=0 // pred_region
    _
  $region73: #{transformer_block_forward.1} parent=0 // pred_fallthru
    _
  // Predicated region
  $region74: #{transformer_block_forward.1} parent=0 // pred_check
    _
  $region75: #{transformer_block_forward.1} parent=0 // pred_check_branch
    %8458 = sbr.rel (0) target = $region77
  $region76: #{transformer_block_forward.1} parent=0 // pred_region
    _
  $region77: #{transformer_block_forward.1} parent=0 // pred_fallthru
    _

</llo_original>
